<compile_context>
chip_gen: v6e
topology: v6e:2x2x1
jax: 0.10.0
libtpu: 0.0.40
codegen_flags: <defaults>
</compile_context>

<pallas_src>
import functools

import jax
import jax.numpy as jnp
import numpy as np
from jax import lax
from jax.experimental import pallas as pl
from jax.experimental.pallas import tpu as pltpu

IMG_SIZE = 32            # must be a multiple of 32 (sublane-aligned reshapes)
C1, C2, C3 = 32, 64, 128
HIDDEN, NCLASS = 128, 2

# Conceptual zero-padded coordinate r maps to scratch coordinate r + _OFF, so
# the interior (r = 1..HP) lands at row/col 8 -> (8,.)-aligned stores, and the
# 3x3 window loads start at rows 7/8/9 (cheap small-offset loads).
_OFF = 7


def _tumor_cnn_kernel(col1_ref, w1c_ref, b1c_ref, w2c_ref, b2c_ref,
                      w3c_ref, b3c_ref, wfc1_ref, bfc1_ref, wfc2_ref, bfc2_ref,
                      o_ref,
                      act1p_ref, act2p_ref, hp1_ref, hp2_ref, hp3_ref, flat_ref,
                      *, H1, H2, H3):
    """Whole TumorCNN forward for ONE image, entirely in VMEM."""
    HP1, HP2, HP3 = H1 // 2, H2 // 2, H3 // 2
    bf16 = jnp.bfloat16

    # Only the 1-px halo ring actually needs to be zero (the interior is
    # overwritten below); zero every step so it stays correct when the batch
    # axis is sharded across cores (per-core scratch).
    act1p_ref[...] = jnp.zeros_like(act1p_ref)
    act2p_ref[...] = jnp.zeros_like(act2p_ref)

    def relu_pool(acc, b_ref, hp_ref, Hc, Cout):
        """bias + ReLU + 2x2 max-pool of a (Hc*Hc, Cout) f32 conv result."""
        HPc = Hc // 2
        y = jnp.maximum(acc + b_ref[...], 0.0)
        # H-pool via outer-dim regrouping (layout-trivial)...
        y = y.reshape(HPc, 2, Hc, Cout)
        hp_ref[...] = jnp.maximum(y[:, 0], y[:, 1]).reshape(HPc * Hc, Cout)
        # ...then W-pool via stride-2 sublane reads (even/odd columns).
        even = hp_ref[pl.ds(0, HPc * HPc, 2), :]
        odd = hp_ref[pl.ds(1, HPc * HPc, 2), :]
        return jnp.maximum(even, odd)                      # (HPc*HPc, Cout) f32

    # ---- stage 1: Conv(3->32) as ONE MXU dot on the host-built K=27 im2col ----
    acc1 = jnp.dot(col1_ref[0], w1c_ref[...], preferred_element_type=jnp.float32)
    pooled1 = relu_pool(acc1, b1c_ref, hp1_ref, H1, C1)    # (HP1*HP1, 32)
    act1p_ref[_OFF + 1:_OFF + 1 + HP1, _OFF + 1:_OFF + 1 + HP1, :] = (
        pooled1.reshape(HP1, HP1, C1).astype(bf16))        # aligned interior store

    # ---- stage 2: Conv(32->64): 9 shifted windows, value-accumulated,
    #      no per-tap casts, no scratch read-modify-write ----
    acc2 = jnp.zeros((H2 * H2, C2), jnp.float32)
    for t in range(9):
        kh, kw = t // 3, t % 3
        win = act1p_ref[kh + _OFF:kh + _OFF + H2,
                        kw + _OFF:kw + _OFF + H2, :].reshape(H2 * H2, C1)
        acc2 = acc2 + jnp.dot(win, w2c_ref[t], preferred_element_type=jnp.float32)
    pooled2 = relu_pool(acc2, b2c_ref, hp2_ref, H2, C2)    # (HP2*HP2, 64)
    act2p_ref[_OFF + 1:_OFF + 1 + HP2, _OFF + 1:_OFF + 1 + HP2, :] = (
        pooled2.reshape(HP2, HP2, C2).astype(bf16))

    # ---- stage 3: Conv(64->128) ----
    acc3 = jnp.zeros((H3 * H3, C3), jnp.float32)
    for t in range(9):
        kh, kw = t // 3, t % 3
        win = act2p_ref[kh + _OFF:kh + _OFF + H3,
                        kw + _OFF:kw + _OFF + H3, :].reshape(H3 * H3, C2)
        acc3 = acc3 + jnp.dot(win, w3c_ref[t], preferred_element_type=jnp.float32)
    y3 = jnp.maximum(acc3 + b3c_ref[...], 0.0)
    y3 = y3.reshape(HP3, 2, H3, C3)
    hp3_ref[...] = jnp.maximum(y3[:, 0], y3[:, 1]).reshape(HP3 * H3, C3)

    # ---- stage-3 W-pool fused with NHWC flatten (128-lane-aligned stores) ----
    # flat index = (hp*HP3 + wp)*C3 + c ; w1 rows were pre-permuted to match.
    for p in range(HP3 * HP3):
        row = jnp.maximum(hp3_ref[2 * p:2 * p + 1, :],
                          hp3_ref[2 * p + 1:2 * p + 2, :])          # (1, C3)
        flat_ref[0:1, p * C3:(p + 1) * C3] = row.astype(flat_ref.dtype)

    # ---- classifier: Linear(Fin,128) -> ReLU -> (Dropout=id) -> Linear(128,2) ----
    h = jnp.dot(flat_ref[...], wfc1_ref[...], preferred_element_type=jnp.float32)
    h = jnp.maximum(h + bfc1_ref[...], 0.0)
    # TODO(synk): nn.Dropout(0.5) is identity at inference; training-mode RNG masking not implemented.
    logits = jnp.dot(h.astype(bf16), wfc2_ref[...],
                     preferred_element_type=jnp.float32) + bfc2_ref[...]
    o_ref[0] = logits.astype(o_ref.dtype)


def _prep_kernel_params(params):
    """Host-side (static) re-layout of the PyTorch-shaped parameters."""
    (wc1, bc1), (wc2, bc2), (wc3, bc3) = params["convs"]
    # (Cout, Cin, kh, kw) -> (kh, kw, Cin, Cout) -> tap-major matrices.
    w1c = jnp.transpose(wc1, (2, 3, 1, 0)).reshape(27, C1).astype(jnp.bfloat16)
    w2c = jnp.transpose(wc2, (2, 3, 1, 0)).reshape(9, C1, C2).astype(jnp.bfloat16)
    w3c = jnp.transpose(wc3, (2, 3, 1, 0)).reshape(9, C2, C3).astype(jnp.bfloat16)
    P = (IMG_SIZE // 8) ** 2
    # torch Flatten on NCHW is (c, p)-major; permute w1 rows once so the kernel
    # can flatten in NHWC (p, c) order and skip the NHWC->NCHW transpose.
    wfc1 = (params["w1"].reshape(C3, P, HIDDEN).transpose(1, 0, 2)
            .reshape(P * C3, HIDDEN).astype(jnp.bfloat16))
    return dict(
        w1c=w1c, b1c=bc1.reshape(1, C1).astype(jnp.float32),
        w2c=w2c, b2c=bc2.reshape(1, C2).astype(jnp.float32),
        w3c=w3c, b3c=bc3.reshape(1, C3).astype(jnp.float32),
        wfc1=wfc1, bfc1=params["b1"].reshape(1, HIDDEN).astype(jnp.float32),
        wfc2=params["w2"].astype(jnp.bfloat16),
        bfc2=params["b2"].reshape(1, NCLASS).astype(jnp.float32),
    )


def forward(x_nchw, params):
    """TumorCNN.forward: input NCHW (B, 3, IMG, IMG) -> logits (B, 2)."""
    assert IMG_SIZE % 32 == 0, "spatial dims must stay sublane-aligned through 3 pools"
    B = x_nchw.shape[0]
    H1, H2, H3 = IMG_SIZE, IMG_SIZE // 2, IMG_SIZE // 4
    HP1, HP2, HP3 = H1 // 2, H2 // 2, H3 // 2
    Fin = HP3 * HP3 * C3

    kp = _prep_kernel_params(params)

    # NCHW -> NHWC, then the cheap K=27 stage-1 im2col on the host (plain XLA):
    # Cin=3 would otherwise waste 125/128 lanes on every in-kernel load.
    x = jnp.transpose(x_nchw, (0, 2, 3, 1)).astype(jnp.bfloat16)
    xp = jnp.pad(x, ((0, 0), (1, 1), (1, 1), (0, 0)))
    cols = [xp[:, kh:kh + H1, kw:kw + H1, :] for kh in range(3) for kw in range(3)]
    col1 = jnp.concatenate(cols, axis=-1).reshape(B, H1 * H1, 27)

    kernel = functools.partial(_tumor_cnn_kernel, H1=H1, H2=H2, H3=H3)
    out = pl.pallas_call(
        kernel,
        out_shape=jax.ShapeDtypeStruct((B, 1, NCLASS), jnp.float32),
        grid=(B,),
        in_specs=[
            pl.BlockSpec((1, H1 * H1, 27), lambda i: (i, 0, 0)),   # stage-1 im2col
            pl.BlockSpec((27, C1), lambda i: (0, 0)),
            pl.BlockSpec((1, C1), lambda i: (0, 0)),
            pl.BlockSpec((9, C1, C2), lambda i: (0, 0, 0)),
            pl.BlockSpec((1, C2), lambda i: (0, 0)),
            pl.BlockSpec((9, C2, C3), lambda i: (0, 0, 0)),
            pl.BlockSpec((1, C3), lambda i: (0, 0)),
            pl.BlockSpec((Fin, HIDDEN), lambda i: (0, 0)),
            pl.BlockSpec((1, HIDDEN), lambda i: (0, 0)),
            pl.BlockSpec((HIDDEN, NCLASS), lambda i: (0, 0)),
            pl.BlockSpec((1, NCLASS), lambda i: (0, 0)),
        ],
        out_specs=pl.BlockSpec((1, 1, NCLASS), lambda i: (i, 0, 0)),
        scratch_shapes=[
            pltpu.VMEM((HP1 + 16, HP1 + 16, C1), jnp.bfloat16),  # padded stage-2 input
            pltpu.VMEM((HP2 + 16, HP2 + 16, C2), jnp.bfloat16),  # padded stage-3 input
            pltpu.VMEM((HP1 * H1, C1), jnp.float32),             # H-pooled stage 1
            pltpu.VMEM((HP2 * H2, C2), jnp.float32),             # H-pooled stage 2
            pltpu.VMEM((HP3 * H3, C3), jnp.float32),             # H-pooled stage 3
            pltpu.VMEM((1, Fin), jnp.bfloat16),                  # NHWC-flattened features
        ],
        compiler_params=pltpu.CompilerParams(
            # one fused image per grid step -> one per TensorCore on v7x megacore
            dimension_semantics=("parallel",),
            # actual per-step use is ~3 MiB at IMG=32; 32 MiB is safe on v5e/v6e/v7x
            vmem_limit_bytes=32 * 1024 * 1024,
        ),
    )(col1, kp["w1c"], kp["b1c"], kp["w2c"], kp["b2c"], kp["w3c"], kp["b3c"],
      kp["wfc1"], kp["bfc1"], kp["wfc2"], kp["bfc2"])
    return out.reshape(B, NCLASS)


# ----------------------------------------------------------------------------
# Deterministic synthetic parameters (shapes from TumorCNN.__init__)
# ----------------------------------------------------------------------------
def init_params(key):
    ks = jax.random.split(key, 8)

    def cw(k, cout, cin):
        return jax.random.normal(k, (cout, cin, 3, 3), jnp.float32) * np.sqrt(2.0 / (cin * 9))

    convs = [
        (cw(ks[0], C1, 3), 0.01 * jax.random.normal(ks[1], (C1,), jnp.float32)),
        (cw(ks[2], C2, C1), 0.01 * jax.random.normal(ks[3], (C2,), jnp.float32)),
        (cw(ks[4], C3, C2), 0.01 * jax.random.normal(ks[5], (C3,), jnp.float32)),
    ]
    fin = C3 * (IMG_SIZE // 8) ** 2
    w1 = jax.random.normal(ks[6], (fin, HIDDEN), jnp.float32) * np.sqrt(2.0 / fin)
    b1 = jnp.zeros((HIDDEN,), jnp.float32)
    w2 = jax.random.normal(ks[7], (HIDDEN, NCLASS), jnp.float32) * np.sqrt(2.0 / HIDDEN)
    b2 = jnp.zeros((NCLASS,), jnp.float32)
    return {"convs": convs, "w1": w1, "b1": b1, "w2": w2, "b2": b2}


# ----------------------------------------------------------------------------
# Pure-JAX f32 reference (correctness check only)
# ----------------------------------------------------------------------------
def reference_forward(x_nchw, params):
    x = jnp.transpose(x_nchw, (0, 2, 3, 1))
    for w, b in params["convs"]:
        y = lax.conv_general_dilated(
            x, jnp.transpose(w, (2, 3, 1, 0)), window_strides=(1, 1),
            padding="SAME", dimension_numbers=("NHWC", "HWIO", "NHWC"))
        y = jnp.maximum(y + b, 0.0)
        x = lax.reduce_window(y, -jnp.inf, lax.max, (1, 2, 2, 1), (1, 2, 2, 1), "VALID")
    B = x.shape[0]
    flat = jnp.transpose(x, (0, 3, 1, 2)).reshape(B, -1)   # torch-style NCHW flatten
    h = jnp.maximum(flat @ params["w1"] + params["b1"], 0.0)
    return h @ params["w2"] + params["b2"]


if __name__ == "__main__":
    key = jax.random.PRNGKey(0)
    kx, kp = jax.random.split(key)
    x = jax.random.normal(kx, (2, 3, IMG_SIZE, IMG_SIZE), jnp.float32)
    params = init_params(kp)

    out = jax.jit(forward)(x, params)
    out = jax.block_until_ready(out)
    assert out.shape == (2, NCLASS) and out.dtype == jnp.float32

    ref = reference_forward(x, params)
    # 5e-2 tolerance: kernel path uses bf16 activations / MXU operands
    # (f32 accumulation); reference is pure f32.
    np.testing.assert_allclose(np.asarray(out), np.asarray(ref), rtol=5e-2, atol=5e-2)
    print("KERNEL_OK")
</pallas_src>

<mosaic_0001>
module attributes {stable_mosaic.version = 11 : i64} {
  func.func @_tumor_cnn_kernel(%arg0: i32, %arg1: memref<1x1024x27xbf16, #tpu.memory_space<vmem>>, %arg2: memref<27x32xbf16, #tpu.memory_space<vmem>>, %arg3: memref<1x32xf32, #tpu.memory_space<vmem>>, %arg4: memref<9x32x64xbf16, #tpu.memory_space<vmem>>, %arg5: memref<1x64xf32, #tpu.memory_space<vmem>>, %arg6: memref<9x64x128xbf16, #tpu.memory_space<vmem>>, %arg7: memref<1x128xf32, #tpu.memory_space<vmem>>, %arg8: memref<2048x128xbf16, #tpu.memory_space<vmem>>, %arg9: memref<1x128xf32, #tpu.memory_space<vmem>>, %arg10: memref<128x2xbf16, #tpu.memory_space<vmem>>, %arg11: memref<1x2xf32, #tpu.memory_space<vmem>>, %arg12: memref<1x1x2xf32, #tpu.memory_space<vmem>>, %arg13: memref<32x32x32xbf16, #tpu.memory_space<vmem>>, %arg14: memref<24x24x64xbf16, #tpu.memory_space<vmem>>, %arg15: memref<512x32xf32, #tpu.memory_space<vmem>>, %arg16: memref<128x64xf32, #tpu.memory_space<vmem>>, %arg17: memref<32x128xf32, #tpu.memory_space<vmem>>, %arg18: memref<1x2048xbf16, #tpu.memory_space<vmem>>) attributes {dimension_semantics = [#tpu.dimension_semantics<parallel>], iteration_bounds = array<i64: 2>, scalar_prefetch = 0 : i64, scratch_operands = 6 : i64, tpu.core_type = #tpu.core_type<tc>, window_params = [{transform_indices = @transform_0, window_bounds = array<i64: 1, 1024, 27>}, {pipeline_mode = #tpu.pipeline_mode<synchronous>, transform_indices = @transform_1, window_bounds = array<i64: 27, 32>}, {pipeline_mode = #tpu.pipeline_mode<synchronous>, transform_indices = @transform_2, window_bounds = array<i64: 1, 32>}, {pipeline_mode = #tpu.pipeline_mode<synchronous>, transform_indices = @transform_3, window_bounds = array<i64: 9, 32, 64>}, {pipeline_mode = #tpu.pipeline_mode<synchronous>, transform_indices = @transform_4, window_bounds = array<i64: 1, 64>}, {pipeline_mode = #tpu.pipeline_mode<synchronous>, transform_indices = @transform_5, window_bounds = array<i64: 9, 64, 128>}, {pipeline_mode = #tpu.pipeline_mode<synchronous>, transform_indices = @transform_6, window_bounds = array<i64: 1, 128>}, {pipeline_mode = #tpu.pipeline_mode<synchronous>, transform_indices = @transform_7, window_bounds = array<i64: 2048, 128>}, {pipeline_mode = #tpu.pipeline_mode<synchronous>, transform_indices = @transform_8, window_bounds = array<i64: 1, 128>}, {pipeline_mode = #tpu.pipeline_mode<synchronous>, transform_indices = @transform_9, window_bounds = array<i64: 128, 2>}, {pipeline_mode = #tpu.pipeline_mode<synchronous>, transform_indices = @transform_10, window_bounds = array<i64: 1, 2>}, {transform_indices = @transform_11, window_bounds = array<i64: 1, 1, 2>}]} {
    %cst = arith.constant 0.000000e+00 : bf16
    %0 = vector.broadcast %cst : bf16 to vector<32x32x32xbf16>
    %c0 = arith.constant 0 : index
    %c0_0 = arith.constant 0 : index
    %c0_1 = arith.constant 0 : index
    %1 = vector.load %arg13[%c0, %c0_0, %c0_1] : memref<32x32x32xbf16, #tpu.memory_space<vmem>>, vector<32x32x32xbf16>
    tpu.vector_store %arg13[%c0, %c0_0, %c0_1], %0 {strides = array<i32>} : memref<32x32x32xbf16, #tpu.memory_space<vmem>>, vector<32x32x32xbf16>,
    %cst_2 = arith.constant 0.000000e+00 : bf16
    %2 = vector.broadcast %cst_2 : bf16 to vector<24x24x64xbf16>
    %c0_3 = arith.constant 0 : index
    %c0_4 = arith.constant 0 : index
    %c0_5 = arith.constant 0 : index
    %3 = vector.load %arg14[%c0_3, %c0_4, %c0_5] : memref<24x24x64xbf16, #tpu.memory_space<vmem>>, vector<24x24x64xbf16>
    tpu.vector_store %arg14[%c0_3, %c0_4, %c0_5], %2 {strides = array<i32>} : memref<24x24x64xbf16, #tpu.memory_space<vmem>>, vector<24x24x64xbf16>,
    %c0_6 = arith.constant 0 : index
    %c0_7 = arith.constant 0 : index
    %c0_8 = arith.constant 0 : index
    %4 = vector.load %arg1[%c0_6, %c0_7, %c0_8] : memref<1x1024x27xbf16, #tpu.memory_space<vmem>>, vector<1x1024x27xbf16>
    %5 = vector.shape_cast %4 : vector<1x1024x27xbf16> to vector<1024x27xbf16>
    %c0_9 = arith.constant 0 : index
    %c0_10 = arith.constant 0 : index
    %6 = vector.load %arg2[%c0_9, %c0_10] : memref<27x32xbf16, #tpu.memory_space<vmem>>, vector<27x32xbf16>
    %cst_11 = arith.constant dense<0.000000e+00> : vector<1024x32xf32>
    %7 = tpu.matmul %5, %6, %cst_11 {dimension_numbers = #tpu.dot_dimension_numbers<[1], [0], [0], [1], [0, 0, 1, 1], [], []>} : vector<1024x27xbf16>, vector<27x32xbf16>, vector<1024x32xf32> -> vector<1024x32xf32>
    %c0_12 = arith.constant 0 : index
    %c0_13 = arith.constant 0 : index
    %8 = vector.load %arg3[%c0_12, %c0_13] : memref<1x32xf32, #tpu.memory_space<vmem>>, vector<1x32xf32>
    %9 = vector.broadcast %8 : vector<1x32xf32> to vector<1024x32xf32>
    %10 = arith.addf %7, %9 : vector<1024x32xf32>
    %cst_14 = arith.constant 0.000000e+00 : f32
    %11 = vector.broadcast %cst_14 : f32 to vector<1024x32xf32>
    %12 = arith.maximumf %10, %11 : vector<1024x32xf32>
    %13 = vector.shape_cast %12 : vector<1024x32xf32> to vector<16x2x32x32xf32>
    %14 = vector.extract_strided_slice %13 {offsets = [0, 0, 0, 0], sizes = [16, 1, 32, 32], strides = [1, 1, 1, 1]} : vector<16x2x32x32xf32> to vector<16x1x32x32xf32>
    %15 = vector.shape_cast %14 : vector<16x1x32x32xf32> to vector<16x32x32xf32>
    %16 = vector.extract_strided_slice %13 {offsets = [0, 1, 0, 0], sizes = [16, 1, 32, 32], strides = [1, 1, 1, 1]} : vector<16x2x32x32xf32> to vector<16x1x32x32xf32>
    %17 = vector.shape_cast %16 : vector<16x1x32x32xf32> to vector<16x32x32xf32>
    %18 = arith.maximumf %15, %17 : vector<16x32x32xf32>
    %19 = vector.shape_cast %18 : vector<16x32x32xf32> to vector<512x32xf32>
    %c0_15 = arith.constant 0 : index
    %c0_16 = arith.constant 0 : index
    %20 = vector.load %arg15[%c0_15, %c0_16] : memref<512x32xf32, #tpu.memory_space<vmem>>, vector<512x32xf32>
    tpu.vector_store %arg15[%c0_15, %c0_16], %19 {strides = array<i32>} : memref<512x32xf32, #tpu.memory_space<vmem>>, vector<512x32xf32>,
    %c0_17 = arith.constant 0 : index
    %c0_18 = arith.constant 0 : index
    %21 = tpu.strided_load %arg15[%c0_17, %c0_18] {strides = array<i32: 2, 1>} : memref<512x32xf32, #tpu.memory_space<vmem>>, vector<256x32xf32>
    %c1 = arith.constant 1 : index
    %c0_19 = arith.constant 0 : index
    %22 = tpu.strided_load %arg15[%c1, %c0_19] {strides = array<i32: 2, 1>} : memref<512x32xf32, #tpu.memory_space<vmem>>, vector<256x32xf32>
    %23 = arith.maximumf %21, %22 : vector<256x32xf32>
    %24 = vector.shape_cast %23 : vector<256x32xf32> to vector<16x16x32xf32>
    %25 = arith.truncf %24 : vector<16x16x32xf32> to vector<16x16x32xbf16>
    %c8 = arith.constant 8 : index
    %c8_20 = arith.constant 8 : index
    %c0_21 = arith.constant 0 : index
    %26 = vector.load %arg13[%c8, %c8_20, %c0_21] : memref<32x32x32xbf16, #tpu.memory_space<vmem>>, vector<16x16x32xbf16>
    tpu.vector_store %arg13[%c8, %c8_20, %c0_21], %25 {strides = array<i32>} : memref<32x32x32xbf16, #tpu.memory_space<vmem>>, vector<16x16x32xbf16>,
    %cst_22 = arith.constant 0.000000e+00 : f32
    %27 = vector.broadcast %cst_22 : f32 to vector<256x64xf32>
    %c7 = arith.constant 7 : index
    %c7_23 = arith.constant 7 : index
    %c0_24 = arith.constant 0 : index
    %28 = vector.load %arg13[%c7, %c7_23, %c0_24] : memref<32x32x32xbf16, #tpu.memory_space<vmem>>, vector<16x16x32xbf16>
    %29 = vector.shape_cast %28 : vector<16x16x32xbf16> to vector<256x32xbf16>
    %c0_25 = arith.constant 0 : index
    %c0_26 = arith.constant 0 : index
    %c0_27 = arith.constant 0 : index
    %30 = vector.load %arg4[%c0_25, %c0_26, %c0_27] : memref<9x32x64xbf16, #tpu.memory_space<vmem>>, vector<1x32x64xbf16>
    %31 = vector.shape_cast %30 : vector<1x32x64xbf16> to vector<32x64xbf16>
    %cst_28 = arith.constant dense<0.000000e+00> : vector<256x64xf32>
    %32 = tpu.matmul %29, %31, %cst_28 {dimension_numbers = #tpu.dot_dimension_numbers<[1], [0], [0], [1], [0, 0, 1, 1], [], []>} : vector<256x32xbf16>, vector<32x64xbf16>, vector<256x64xf32> -> vector<256x64xf32>
    %33 = arith.addf %27, %32 : vector<256x64xf32>
    %c7_29 = arith.constant 7 : index
    %c8_30 = arith.constant 8 : index
    %c0_31 = arith.constant 0 : index
    %34 = vector.load %arg13[%c7_29, %c8_30, %c0_31] : memref<32x32x32xbf16, #tpu.memory_space<vmem>>, vector<16x16x32xbf16>
    %35 = vector.shape_cast %34 : vector<16x16x32xbf16> to vector<256x32xbf16>
    %c1_32 = arith.constant 1 : index
    %c0_33 = arith.constant 0 : index
    %c0_34 = arith.constant 0 : index
    %36 = vector.load %arg4[%c1_32, %c0_33, %c0_34] : memref<9x32x64xbf16, #tpu.memory_space<vmem>>, vector<1x32x64xbf16>
    %37 = vector.shape_cast %36 : vector<1x32x64xbf16> to vector<32x64xbf16>
    %cst_35 = arith.constant dense<0.000000e+00> : vector<256x64xf32>
    %38 = tpu.matmul %35, %37, %cst_35 {dimension_numbers = #tpu.dot_dimension_numbers<[1], [0], [0], [1], [0, 0, 1, 1], [], []>} : vector<256x32xbf16>, vector<32x64xbf16>, vector<256x64xf32> -> vector<256x64xf32>
    %39 = arith.addf %33, %38 : vector<256x64xf32>
    %c7_36 = arith.constant 7 : index
    %c9 = arith.constant 9 : index
    %c0_37 = arith.constant 0 : index
    %40 = vector.load %arg13[%c7_36, %c9, %c0_37] : memref<32x32x32xbf16, #tpu.memory_space<vmem>>, vector<16x16x32xbf16>
    %41 = vector.shape_cast %40 : vector<16x16x32xbf16> to vector<256x32xbf16>
    %c2 = arith.constant 2 : index
    %c0_38 = arith.constant 0 : index
    %c0_39 = arith.constant 0 : index
    %42 = vector.load %arg4[%c2, %c0_38, %c0_39] : memref<9x32x64xbf16, #tpu.memory_space<vmem>>, vector<1x32x64xbf16>
    %43 = vector.shape_cast %42 : vector<1x32x64xbf16> to vector<32x64xbf16>
    %cst_40 = arith.constant dense<0.000000e+00> : vector<256x64xf32>
    %44 = tpu.matmul %41, %43, %cst_40 {dimension_numbers = #tpu.dot_dimension_numbers<[1], [0], [0], [1], [0, 0, 1, 1], [], []>} : vector<256x32xbf16>, vector<32x64xbf16>, vector<256x64xf32> -> vector<256x64xf32>
    %45 = arith.addf %39, %44 : vector<256x64xf32>
    %c8_41 = arith.constant 8 : index
    %c7_42 = arith.constant 7 : index
    %c0_43 = arith.constant 0 : index
    %46 = vector.load %arg13[%c8_41, %c7_42, %c0_43] : memref<32x32x32xbf16, #tpu.memory_space<vmem>>, vector<16x16x32xbf16>
    %47 = vector.shape_cast %46 : vector<16x16x32xbf16> to vector<256x32xbf16>
    %c3 = arith.constant 3 : index
    %c0_44 = arith.constant 0 : index
    %c0_45 = arith.constant 0 : index
    %48 = vector.load %arg4[%c3, %c0_44, %c0_45] : memref<9x32x64xbf16, #tpu.memory_space<vmem>>, vector<1x32x64xbf16>
    %49 = vector.shape_cast %48 : vector<1x32x64xbf16> to vector<32x64xbf16>
    %cst_46 = arith.constant dense<0.000000e+00> : vector<256x64xf32>
    %50 = tpu.matmul %47, %49, %cst_46 {dimension_numbers = #tpu.dot_dimension_numbers<[1], [0], [0], [1], [0, 0, 1, 1], [], []>} : vector<256x32xbf16>, vector<32x64xbf16>, vector<256x64xf32> -> vector<256x64xf32>
    %51 = arith.addf %45, %50 : vector<256x64xf32>
    %c8_47 = arith.constant 8 : index
    %c8_48 = arith.constant 8 : index
    %c0_49 = arith.constant 0 : index
    %52 = vector.load %arg13[%c8_47, %c8_48, %c0_49] : memref<32x32x32xbf16, #tpu.memory_space<vmem>>, vector<16x16x32xbf16>
    %53 = vector.shape_cast %52 : vector<16x16x32xbf16> to vector<256x32xbf16>
    %c4 = arith.constant 4 : index
    %c0_50 = arith.constant 0 : index
    %c0_51 = arith.constant 0 : index
    %54 = vector.load %arg4[%c4, %c0_50, %c0_51] : memref<9x32x64xbf16, #tpu.memory_space<vmem>>, vector<1x32x64xbf16>
    %55 = vector.shape_cast %54 : vector<1x32x64xbf16> to vector<32x64xbf16>
    %cst_52 = arith.constant dense<0.000000e+00> : vector<256x64xf32>
    %56 = tpu.matmul %53, %55, %cst_52 {dimension_numbers = #tpu.dot_dimension_numbers<[1], [0], [0], [1], [0, 0, 1, 1], [], []>} : vector<256x32xbf16>, vector<32x64xbf16>, vector<256x64xf32> -> vector<256x64xf32>
    %57 = arith.addf %51, %56 : vector<256x64xf32>
    %c8_53 = arith.constant 8 : index
    %c9_54 = arith.constant 9 : index
    %c0_55 = arith.constant 0 : index
    %58 = vector.load %arg13[%c8_53, %c9_54, %c0_55] : memref<32x32x32xbf16, #tpu.memory_space<vmem>>, vector<16x16x32xbf16>
    %59 = vector.shape_cast %58 : vector<16x16x32xbf16> to vector<256x32xbf16>
    %c5 = arith.constant 5 : index
    %c0_56 = arith.constant 0 : index
    %c0_57 = arith.constant 0 : index
    %60 = vector.load %arg4[%c5, %c0_56, %c0_57] : memref<9x32x64xbf16, #tpu.memory_space<vmem>>, vector<1x32x64xbf16>
    %61 = vector.shape_cast %60 : vector<1x32x64xbf16> to vector<32x64xbf16>
    %cst_58 = arith.constant dense<0.000000e+00> : vector<256x64xf32>
    %62 = tpu.matmul %59, %61, %cst_58 {dimension_numbers = #tpu.dot_dimension_numbers<[1], [0], [0], [1], [0, 0, 1, 1], [], []>} : vector<256x32xbf16>, vector<32x64xbf16>, vector<256x64xf32> -> vector<256x64xf32>
    %63 = arith.addf %57, %62 : vector<256x64xf32>
    %c9_59 = arith.constant 9 : index
    %c7_60 = arith.constant 7 : index
    %c0_61 = arith.constant 0 : index
    %64 = vector.load %arg13[%c9_59, %c7_60, %c0_61] : memref<32x32x32xbf16, #tpu.memory_space<vmem>>, vector<16x16x32xbf16>
    %65 = vector.shape_cast %64 : vector<16x16x32xbf16> to vector<256x32xbf16>
    %c6 = arith.constant 6 : index
    %c0_62 = arith.constant 0 : index
    %c0_63 = arith.constant 0 : index
    %66 = vector.load %arg4[%c6, %c0_62, %c0_63] : memref<9x32x64xbf16, #tpu.memory_space<vmem>>, vector<1x32x64xbf16>
    %67 = vector.shape_cast %66 : vector<1x32x64xbf16> to vector<32x64xbf16>
    %cst_64 = arith.constant dense<0.000000e+00> : vector<256x64xf32>
    %68 = tpu.matmul %65, %67, %cst_64 {dimension_numbers = #tpu.dot_dimension_numbers<[1], [0], [0], [1], [0, 0, 1, 1], [], []>} : vector<256x32xbf16>, vector<32x64xbf16>, vector<256x64xf32> -> vector<256x64xf32>
    %69 = arith.addf %63, %68 : vector<256x64xf32>
    %c9_65 = arith.constant 9 : index
    %c8_66 = arith.constant 8 : index
    %c0_67 = arith.constant 0 : index
    %70 = vector.load %arg13[%c9_65, %c8_66, %c0_67] : memref<32x32x32xbf16, #tpu.memory_space<vmem>>, vector<16x16x32xbf16>
    %71 = vector.shape_cast %70 : vector<16x16x32xbf16> to vector<256x32xbf16>
    %c7_68 = arith.constant 7 : index
    %c0_69 = arith.constant 0 : index
    %c0_70 = arith.constant 0 : index
    %72 = vector.load %arg4[%c7_68, %c0_69, %c0_70] : memref<9x32x64xbf16, #tpu.memory_space<vmem>>, vector<1x32x64xbf16>
    %73 = vector.shape_cast %72 : vector<1x32x64xbf16> to vector<32x64xbf16>
    %cst_71 = arith.constant dense<0.000000e+00> : vector<256x64xf32>
    %74 = tpu.matmul %71, %73, %cst_71 {dimension_numbers = #tpu.dot_dimension_numbers<[1], [0], [0], [1], [0, 0, 1, 1], [], []>} : vector<256x32xbf16>, vector<32x64xbf16>, vector<256x64xf32> -> vector<256x64xf32>
    %75 = arith.addf %69, %74 : vector<256x64xf32>
    %c9_72 = arith.constant 9 : index
    %c9_73 = arith.constant 9 : index
    %c0_74 = arith.constant 0 : index
    %76 = vector.load %arg13[%c9_72, %c9_73, %c0_74] : memref<32x32x32xbf16, #tpu.memory_space<vmem>>, vector<16x16x32xbf16>
    %77 = vector.shape_cast %76 : vector<16x16x32xbf16> to vector<256x32xbf16>
    %c8_75 = arith.constant 8 : index
    %c0_76 = arith.constant 0 : index
    %c0_77 = arith.constant 0 : index
    %78 = vector.load %arg4[%c8_75, %c0_76, %c0_77] : memref<9x32x64xbf16, #tpu.memory_space<vmem>>, vector<1x32x64xbf16>
    %79 = vector.shape_cast %78 : vector<1x32x64xbf16> to vector<32x64xbf16>
    %cst_78 = arith.constant dense<0.000000e+00> : vector<256x64xf32>
    %80 = tpu.matmul %77, %79, %cst_78 {dimension_numbers = #tpu.dot_dimension_numbers<[1], [0], [0], [1], [0, 0, 1, 1], [], []>} : vector<256x32xbf16>, vector<32x64xbf16>, vector<256x64xf32> -> vector<256x64xf32>
    %81 = arith.addf %75, %80 : vector<256x64xf32>
    %c0_79 = arith.constant 0 : index
    %c0_80 = arith.constant 0 : index
    %82 = vector.load %arg5[%c0_79, %c0_80] : memref<1x64xf32, #tpu.memory_space<vmem>>, vector<1x64xf32>
    %83 = vector.broadcast %82 : vector<1x64xf32> to vector<256x64xf32>
    %84 = arith.addf %81, %83 : vector<256x64xf32>
    %cst_81 = arith.constant 0.000000e+00 : f32
    %85 = vector.broadcast %cst_81 : f32 to vector<256x64xf32>
    %86 = arith.maximumf %84, %85 : vector<256x64xf32>
    %87 = vector.shape_cast %86 : vector<256x64xf32> to vector<8x2x16x64xf32>
    %88 = vector.extract_strided_slice %87 {offsets = [0, 0, 0, 0], sizes = [8, 1, 16, 64], strides = [1, 1, 1, 1]} : vector<8x2x16x64xf32> to vector<8x1x16x64xf32>
    %89 = vector.shape_cast %88 : vector<8x1x16x64xf32> to vector<8x16x64xf32>
    %90 = vector.extract_strided_slice %87 {offsets = [0, 1, 0, 0], sizes = [8, 1, 16, 64], strides = [1, 1, 1, 1]} : vector<8x2x16x64xf32> to vector<8x1x16x64xf32>
    %91 = vector.shape_cast %90 : vector<8x1x16x64xf32> to vector<8x16x64xf32>
    %92 = arith.maximumf %89, %91 : vector<8x16x64xf32>
    %93 = vector.shape_cast %92 : vector<8x16x64xf32> to vector<128x64xf32>
    %c0_82 = arith.constant 0 : index
    %c0_83 = arith.constant 0 : index
    %94 = vector.load %arg16[%c0_82, %c0_83] : memref<128x64xf32, #tpu.memory_space<vmem>>, vector<128x64xf32>
    tpu.vector_store %arg16[%c0_82, %c0_83], %93 {strides = array<i32>} : memref<128x64xf32, #tpu.memory_space<vmem>>, vector<128x64xf32>,
    %c0_84 = arith.constant 0 : index
    %c0_85 = arith.constant 0 : index
    %95 = tpu.strided_load %arg16[%c0_84, %c0_85] {strides = array<i32: 2, 1>} : memref<128x64xf32, #tpu.memory_space<vmem>>, vector<64x64xf32>
    %c1_86 = arith.constant 1 : index
    %c0_87 = arith.constant 0 : index
    %96 = tpu.strided_load %arg16[%c1_86, %c0_87] {strides = array<i32: 2, 1>} : memref<128x64xf32, #tpu.memory_space<vmem>>, vector<64x64xf32>
    %97 = arith.maximumf %95, %96 : vector<64x64xf32>
    %98 = vector.shape_cast %97 : vector<64x64xf32> to vector<8x8x64xf32>
    %99 = arith.truncf %98 : vector<8x8x64xf32> to vector<8x8x64xbf16>
    %c8_88 = arith.constant 8 : index
    %c8_89 = arith.constant 8 : index
    %c0_90 = arith.constant 0 : index
    %100 = vector.load %arg14[%c8_88, %c8_89, %c0_90] : memref<24x24x64xbf16, #tpu.memory_space<vmem>>, vector<8x8x64xbf16>
    tpu.vector_store %arg14[%c8_88, %c8_89, %c0_90], %99 {strides = array<i32>} : memref<24x24x64xbf16, #tpu.memory_space<vmem>>, vector<8x8x64xbf16>,
    %cst_91 = arith.constant 0.000000e+00 : f32
    %101 = vector.broadcast %cst_91 : f32 to vector<64x128xf32>
    %c7_92 = arith.constant 7 : index
    %c7_93 = arith.constant 7 : index
    %c0_94 = arith.constant 0 : index
    %102 = vector.load %arg14[%c7_92, %c7_93, %c0_94] : memref<24x24x64xbf16, #tpu.memory_space<vmem>>, vector<8x8x64xbf16>
    %103 = vector.shape_cast %102 : vector<8x8x64xbf16> to vector<64x64xbf16>
    %c0_95 = arith.constant 0 : index
    %c0_96 = arith.constant 0 : index
    %c0_97 = arith.constant 0 : index
    %104 = vector.load %arg6[%c0_95, %c0_96, %c0_97] : memref<9x64x128xbf16, #tpu.memory_space<vmem>>, vector<1x64x128xbf16>
    %105 = vector.shape_cast %104 : vector<1x64x128xbf16> to vector<64x128xbf16>
    %cst_98 = arith.constant dense<0.000000e+00> : vector<64x128xf32>
    %106 = tpu.matmul %103, %105, %cst_98 {dimension_numbers = #tpu.dot_dimension_numbers<[1], [0], [0], [1], [0, 0, 1, 1], [], []>} : vector<64x64xbf16>, vector<64x128xbf16>, vector<64x128xf32> -> vector<64x128xf32>
    %107 = arith.addf %101, %106 : vector<64x128xf32>
    %c7_99 = arith.constant 7 : index
    %c8_100 = arith.constant 8 : index
    %c0_101 = arith.constant 0 : index
    %108 = vector.load %arg14[%c7_99, %c8_100, %c0_101] : memref<24x24x64xbf16, #tpu.memory_space<vmem>>, vector<8x8x64xbf16>
    %109 = vector.shape_cast %108 : vector<8x8x64xbf16> to vector<64x64xbf16>
    %c1_102 = arith.constant 1 : index
    %c0_103 = arith.constant 0 : index
    %c0_104 = arith.constant 0 : index
    %110 = vector.load %arg6[%c1_102, %c0_103, %c0_104] : memref<9x64x128xbf16, #tpu.memory_space<vmem>>, vector<1x64x128xbf16>
    %111 = vector.shape_cast %110 : vector<1x64x128xbf16> to vector<64x128xbf16>
    %cst_105 = arith.constant dense<0.000000e+00> : vector<64x128xf32>
    %112 = tpu.matmul %109, %111, %cst_105 {dimension_numbers = #tpu.dot_dimension_numbers<[1], [0], [0], [1], [0, 0, 1, 1], [], []>} : vector<64x64xbf16>, vector<64x128xbf16>, vector<64x128xf32> -> vector<64x128xf32>
    %113 = arith.addf %107, %112 : vector<64x128xf32>
    %c7_106 = arith.constant 7 : index
    %c9_107 = arith.constant 9 : index
    %c0_108 = arith.constant 0 : index
    %114 = vector.load %arg14[%c7_106, %c9_107, %c0_108] : memref<24x24x64xbf16, #tpu.memory_space<vmem>>, vector<8x8x64xbf16>
    %115 = vector.shape_cast %114 : vector<8x8x64xbf16> to vector<64x64xbf16>
    %c2_109 = arith.constant 2 : index
    %c0_110 = arith.constant 0 : index
    %c0_111 = arith.constant 0 : index
    %116 = vector.load %arg6[%c2_109, %c0_110, %c0_111] : memref<9x64x128xbf16, #tpu.memory_space<vmem>>, vector<1x64x128xbf16>
    %117 = vector.shape_cast %116 : vector<1x64x128xbf16> to vector<64x128xbf16>
    %cst_112 = arith.constant dense<0.000000e+00> : vector<64x128xf32>
    %118 = tpu.matmul %115, %117, %cst_112 {dimension_numbers = #tpu.dot_dimension_numbers<[1], [0], [0], [1], [0, 0, 1, 1], [], []>} : vector<64x64xbf16>, vector<64x128xbf16>, vector<64x128xf32> -> vector<64x128xf32>
    %119 = arith.addf %113, %118 : vector<64x128xf32>
    %c8_113 = arith.constant 8 : index
    %c7_114 = arith.constant 7 : index
    %c0_115 = arith.constant 0 : index
    %120 = vector.load %arg14[%c8_113, %c7_114, %c0_115] : memref<24x24x64xbf16, #tpu.memory_space<vmem>>, vector<8x8x64xbf16>
    %121 = vector.shape_cast %120 : vector<8x8x64xbf16> to vector<64x64xbf16>
    %c3_116 = arith.constant 3 : index
    %c0_117 = arith.constant 0 : index
    %c0_118 = arith.constant 0 : index
    %122 = vector.load %arg6[%c3_116, %c0_117, %c0_118] : memref<9x64x128xbf16, #tpu.memory_space<vmem>>, vector<1x64x128xbf16>
    %123 = vector.shape_cast %122 : vector<1x64x128xbf16> to vector<64x128xbf16>
    %cst_119 = arith.constant dense<0.000000e+00> : vector<64x128xf32>
    %124 = tpu.matmul %121, %123, %cst_119 {dimension_numbers = #tpu.dot_dimension_numbers<[1], [0], [0], [1], [0, 0, 1, 1], [], []>} : vector<64x64xbf16>, vector<64x128xbf16>, vector<64x128xf32> -> vector<64x128xf32>
    %125 = arith.addf %119, %124 : vector<64x128xf32>
    %c8_120 = arith.constant 8 : index
    %c8_121 = arith.constant 8 : index
    %c0_122 = arith.constant 0 : index
    %126 = vector.load %arg14[%c8_120, %c8_121, %c0_122] : memref<24x24x64xbf16, #tpu.memory_space<vmem>>, vector<8x8x64xbf16>
    %127 = vector.shape_cast %126 : vector<8x8x64xbf16> to vector<64x64xbf16>
    %c4_123 = arith.constant 4 : index
    %c0_124 = arith.constant 0 : index
    %c0_125 = arith.constant 0 : index
    %128 = vector.load %arg6[%c4_123, %c0_124, %c0_125] : memref<9x64x128xbf16, #tpu.memory_space<vmem>>, vector<1x64x128xbf16>
    %129 = vector.shape_cast %128 : vector<1x64x128xbf16> to vector<64x128xbf16>
    %cst_126 = arith.constant dense<0.000000e+00> : vector<64x128xf32>
    %130 = tpu.matmul %127, %129, %cst_126 {dimension_numbers = #tpu.dot_dimension_numbers<[1], [0], [0], [1], [0, 0, 1, 1], [], []>} : vector<64x64xbf16>, vector<64x128xbf16>, vector<64x128xf32> -> vector<64x128xf32>
    %131 = arith.addf %125, %130 : vector<64x128xf32>
    %c8_127 = arith.constant 8 : index
    %c9_128 = arith.constant 9 : index
    %c0_129 = arith.constant 0 : index
    %132 = vector.load %arg14[%c8_127, %c9_128, %c0_129] : memref<24x24x64xbf16, #tpu.memory_space<vmem>>, vector<8x8x64xbf16>
    %133 = vector.shape_cast %132 : vector<8x8x64xbf16> to vector<64x64xbf16>
    %c5_130 = arith.constant 5 : index
    %c0_131 = arith.constant 0 : index
    %c0_132 = arith.constant 0 : index
    %134 = vector.load %arg6[%c5_130, %c0_131, %c0_132] : memref<9x64x128xbf16, #tpu.memory_space<vmem>>, vector<1x64x128xbf16>
    %135 = vector.shape_cast %134 : vector<1x64x128xbf16> to vector<64x128xbf16>
    %cst_133 = arith.constant dense<0.000000e+00> : vector<64x128xf32>
    %136 = tpu.matmul %133, %135, %cst_133 {dimension_numbers = #tpu.dot_dimension_numbers<[1], [0], [0], [1], [0, 0, 1, 1], [], []>} : vector<64x64xbf16>, vector<64x128xbf16>, vector<64x128xf32> -> vector<64x128xf32>
    %137 = arith.addf %131, %136 : vector<64x128xf32>
    %c9_134 = arith.constant 9 : index
    %c7_135 = arith.constant 7 : index
    %c0_136 = arith.constant 0 : index
    %138 = vector.load %arg14[%c9_134, %c7_135, %c0_136] : memref<24x24x64xbf16, #tpu.memory_space<vmem>>, vector<8x8x64xbf16>
    %139 = vector.shape_cast %138 : vector<8x8x64xbf16> to vector<64x64xbf16>
    %c6_137 = arith.constant 6 : index
    %c0_138 = arith.constant 0 : index
    %c0_139 = arith.constant 0 : index
    %140 = vector.load %arg6[%c6_137, %c0_138, %c0_139] : memref<9x64x128xbf16, #tpu.memory_space<vmem>>, vector<1x64x128xbf16>
    %141 = vector.shape_cast %140 : vector<1x64x128xbf16> to vector<64x128xbf16>
    %cst_140 = arith.constant dense<0.000000e+00> : vector<64x128xf32>
    %142 = tpu.matmul %139, %141, %cst_140 {dimension_numbers = #tpu.dot_dimension_numbers<[1], [0], [0], [1], [0, 0, 1, 1], [], []>} : vector<64x64xbf16>, vector<64x128xbf16>, vector<64x128xf32> -> vector<64x128xf32>
    %143 = arith.addf %137, %142 : vector<64x128xf32>
    %c9_141 = arith.constant 9 : index
    %c8_142 = arith.constant 8 : index
    %c0_143 = arith.constant 0 : index
    %144 = vector.load %arg14[%c9_141, %c8_142, %c0_143] : memref<24x24x64xbf16, #tpu.memory_space<vmem>>, vector<8x8x64xbf16>
    %145 = vector.shape_cast %144 : vector<8x8x64xbf16> to vector<64x64xbf16>
    %c7_144 = arith.constant 7 : index
    %c0_145 = arith.constant 0 : index
    %c0_146 = arith.constant 0 : index
    %146 = vector.load %arg6[%c7_144, %c0_145, %c0_146] : memref<9x64x128xbf16, #tpu.memory_space<vmem>>, vector<1x64x128xbf16>
    %147 = vector.shape_cast %146 : vector<1x64x128xbf16> to vector<64x128xbf16>
    %cst_147 = arith.constant dense<0.000000e+00> : vector<64x128xf32>
    %148 = tpu.matmul %145, %147, %cst_147 {dimension_numbers = #tpu.dot_dimension_numbers<[1], [0], [0], [1], [0, 0, 1, 1], [], []>} : vector<64x64xbf16>, vector<64x128xbf16>, vector<64x128xf32> -> vector<64x128xf32>
    %149 = arith.addf %143, %148 : vector<64x128xf32>
    %c9_148 = arith.constant 9 : index
    %c9_149 = arith.constant 9 : index
    %c0_150 = arith.constant 0 : index
    %150 = vector.load %arg14[%c9_148, %c9_149, %c0_150] : memref<24x24x64xbf16, #tpu.memory_space<vmem>>, vector<8x8x64xbf16>
    %151 = vector.shape_cast %150 : vector<8x8x64xbf16> to vector<64x64xbf16>
    %c8_151 = arith.constant 8 : index
    %c0_152 = arith.constant 0 : index
    %c0_153 = arith.constant 0 : index
    %152 = vector.load %arg6[%c8_151, %c0_152, %c0_153] : memref<9x64x128xbf16, #tpu.memory_space<vmem>>, vector<1x64x128xbf16>
    %153 = vector.shape_cast %152 : vector<1x64x128xbf16> to vector<64x128xbf16>
    %cst_154 = arith.constant dense<0.000000e+00> : vector<64x128xf32>
    %154 = tpu.matmul %151, %153, %cst_154 {dimension_numbers = #tpu.dot_dimension_numbers<[1], [0], [0], [1], [0, 0, 1, 1], [], []>} : vector<64x64xbf16>, vector<64x128xbf16>, vector<64x128xf32> -> vector<64x128xf32>
    %155 = arith.addf %149, %154 : vector<64x128xf32>
    %c0_155 = arith.constant 0 : index
    %c0_156 = arith.constant 0 : index
    %156 = vector.load %arg7[%c0_155, %c0_156] : memref<1x128xf32, #tpu.memory_space<vmem>>, vector<1x128xf32>
    %157 = vector.broadcast %156 : vector<1x128xf32> to vector<64x128xf32>
    %158 = arith.addf %155, %157 : vector<64x128xf32>
    %cst_157 = arith.constant 0.000000e+00 : f32
    %159 = vector.broadcast %cst_157 : f32 to vector<64x128xf32>
    %160 = arith.maximumf %158, %159 : vector<64x128xf32>
    %161 = vector.shape_cast %160 : vector<64x128xf32> to vector<4x2x8x128xf32>
    %162 = vector.extract_strided_slice %161 {offsets = [0, 0, 0, 0], sizes = [4, 1, 8, 128], strides = [1, 1, 1, 1]} : vector<4x2x8x128xf32> to vector<4x1x8x128xf32>
    %163 = vector.shape_cast %162 : vector<4x1x8x128xf32> to vector<4x8x128xf32>
    %164 = vector.extract_strided_slice %161 {offsets = [0, 1, 0, 0], sizes = [4, 1, 8, 128], strides = [1, 1, 1, 1]} : vector<4x2x8x128xf32> to vector<4x1x8x128xf32>
    %165 = vector.shape_cast %164 : vector<4x1x8x128xf32> to vector<4x8x128xf32>
    %166 = arith.maximumf %163, %165 : vector<4x8x128xf32>
    %167 = vector.shape_cast %166 : vector<4x8x128xf32> to vector<32x128xf32>
    %c0_158 = arith.constant 0 : index
    %c0_159 = arith.constant 0 : index
    %168 = vector.load %arg17[%c0_158, %c0_159] : memref<32x128xf32, #tpu.memory_space<vmem>>, vector<32x128xf32>
    tpu.vector_store %arg17[%c0_158, %c0_159], %167 {strides = array<i32>} : memref<32x128xf32, #tpu.memory_space<vmem>>, vector<32x128xf32>,
    %c0_160 = arith.constant 0 : index
    %c0_161 = arith.constant 0 : index
    %169 = vector.load %arg17[%c0_160, %c0_161] : memref<32x128xf32, #tpu.memory_space<vmem>>, vector<1x128xf32>
    %c1_162 = arith.constant 1 : index
    %c0_163 = arith.constant 0 : index
    %170 = vector.load %arg17[%c1_162, %c0_163] : memref<32x128xf32, #tpu.memory_space<vmem>>, vector<1x128xf32>
    %171 = arith.maximumf %169, %170 : vector<1x128xf32>
    %172 = arith.truncf %171 : vector<1x128xf32> to vector<1x128xbf16>
    %c0_164 = arith.constant 0 : index
    %c0_165 = arith.constant 0 : index
    %173 = vector.load %arg18[%c0_164, %c0_165] : memref<1x2048xbf16, #tpu.memory_space<vmem>>, vector<1x128xbf16>
    tpu.vector_store %arg18[%c0_164, %c0_165], %172 {strides = array<i32>} : memref<1x2048xbf16, #tpu.memory_space<vmem>>, vector<1x128xbf16>,
    %c2_166 = arith.constant 2 : index
    %c0_167 = arith.constant 0 : index
    %174 = vector.load %arg17[%c2_166, %c0_167] : memref<32x128xf32, #tpu.memory_space<vmem>>, vector<1x128xf32>
    %c3_168 = arith.constant 3 : index
    %c0_169 = arith.constant 0 : index
    %175 = vector.load %arg17[%c3_168, %c0_169] : memref<32x128xf32, #tpu.memory_space<vmem>>, vector<1x128xf32>
    %176 = arith.maximumf %174, %175 : vector<1x128xf32>
    %177 = arith.truncf %176 : vector<1x128xf32> to vector<1x128xbf16>
    %c0_170 = arith.constant 0 : index
    %c128 = arith.constant 128 : index
    %178 = vector.load %arg18[%c0_170, %c128] : memref<1x2048xbf16, #tpu.memory_space<vmem>>, vector<1x128xbf16>
    tpu.vector_store %arg18[%c0_170, %c128], %177 {strides = array<i32>} : memref<1x2048xbf16, #tpu.memory_space<vmem>>, vector<1x128xbf16>,
    %c4_171 = arith.constant 4 : index
    %c0_172 = arith.constant 0 : index
    %179 = vector.load %arg17[%c4_171, %c0_172] : memref<32x128xf32, #tpu.memory_space<vmem>>, vector<1x128xf32>
    %c5_173 = arith.constant 5 : index
    %c0_174 = arith.constant 0 : index
    %180 = vector.load %arg17[%c5_173, %c0_174] : memref<32x128xf32, #tpu.memory_space<vmem>>, vector<1x128xf32>
    %181 = arith.maximumf %179, %180 : vector<1x128xf32>
    %182 = arith.truncf %181 : vector<1x128xf32> to vector<1x128xbf16>
    %c0_175 = arith.constant 0 : index
    %c256 = arith.constant 256 : index
    %183 = vector.load %arg18[%c0_175, %c256] : memref<1x2048xbf16, #tpu.memory_space<vmem>>, vector<1x128xbf16>
    tpu.vector_store %arg18[%c0_175, %c256], %182 {strides = array<i32>} : memref<1x2048xbf16, #tpu.memory_space<vmem>>, vector<1x128xbf16>,
    %c6_176 = arith.constant 6 : index
    %c0_177 = arith.constant 0 : index
    %184 = vector.load %arg17[%c6_176, %c0_177] : memref<32x128xf32, #tpu.memory_space<vmem>>, vector<1x128xf32>
    %c7_178 = arith.constant 7 : index
    %c0_179 = arith.constant 0 : index
    %185 = vector.load %arg17[%c7_178, %c0_179] : memref<32x128xf32, #tpu.memory_space<vmem>>, vector<1x128xf32>
    %186 = arith.maximumf %184, %185 : vector<1x128xf32>
    %187 = arith.truncf %186 : vector<1x128xf32> to vector<1x128xbf16>
    %c0_180 = arith.constant 0 : index
    %c384 = arith.constant 384 : index
    %188 = vector.load %arg18[%c0_180, %c384] : memref<1x2048xbf16, #tpu.memory_space<vmem>>, vector<1x128xbf16>
    tpu.vector_store %arg18[%c0_180, %c384], %187 {strides = array<i32>} : memref<1x2048xbf16, #tpu.memory_space<vmem>>, vector<1x128xbf16>,
    %c8_181 = arith.constant 8 : index
    %c0_182 = arith.constant 0 : index
    %189 = vector.load %arg17[%c8_181, %c0_182] : memref<32x128xf32, #tpu.memory_space<vmem>>, vector<1x128xf32>
    %c9_183 = arith.constant 9 : index
    %c0_184 = arith.constant 0 : index
    %190 = vector.load %arg17[%c9_183, %c0_184] : memref<32x128xf32, #tpu.memory_space<vmem>>, vector<1x128xf32>
    %191 = arith.maximumf %189, %190 : vector<1x128xf32>
    %192 = arith.truncf %191 : vector<1x128xf32> to vector<1x128xbf16>
    %c0_185 = arith.constant 0 : index
    %c512 = arith.constant 512 : index
    %193 = vector.load %arg18[%c0_185, %c512] : memref<1x2048xbf16, #tpu.memory_space<vmem>>, vector<1x128xbf16>
    tpu.vector_store %arg18[%c0_185, %c512], %192 {strides = array<i32>} : memref<1x2048xbf16, #tpu.memory_space<vmem>>, vector<1x128xbf16>,
    %c10 = arith.constant 10 : index
    %c0_186 = arith.constant 0 : index
    %194 = vector.load %arg17[%c10, %c0_186] : memref<32x128xf32, #tpu.memory_space<vmem>>, vector<1x128xf32>
    %c11 = arith.constant 11 : index
    %c0_187 = arith.constant 0 : index
    %195 = vector.load %arg17[%c11, %c0_187] : memref<32x128xf32, #tpu.memory_space<vmem>>, vector<1x128xf32>
    %196 = arith.maximumf %194, %195 : vector<1x128xf32>
    %197 = arith.truncf %196 : vector<1x128xf32> to vector<1x128xbf16>
    %c0_188 = arith.constant 0 : index
    %c640 = arith.constant 640 : index
    %198 = vector.load %arg18[%c0_188, %c640] : memref<1x2048xbf16, #tpu.memory_space<vmem>>, vector<1x128xbf16>
    tpu.vector_store %arg18[%c0_188, %c640], %197 {strides = array<i32>} : memref<1x2048xbf16, #tpu.memory_space<vmem>>, vector<1x128xbf16>,
    %c12 = arith.constant 12 : index
    %c0_189 = arith.constant 0 : index
    %199 = vector.load %arg17[%c12, %c0_189] : memref<32x128xf32, #tpu.memory_space<vmem>>, vector<1x128xf32>
    %c13 = arith.constant 13 : index
    %c0_190 = arith.constant 0 : index
    %200 = vector.load %arg17[%c13, %c0_190] : memref<32x128xf32, #tpu.memory_space<vmem>>, vector<1x128xf32>
    %201 = arith.maximumf %199, %200 : vector<1x128xf32>
    %202 = arith.truncf %201 : vector<1x128xf32> to vector<1x128xbf16>
    %c0_191 = arith.constant 0 : index
    %c768 = arith.constant 768 : index
    %203 = vector.load %arg18[%c0_191, %c768] : memref<1x2048xbf16, #tpu.memory_space<vmem>>, vector<1x128xbf16>
    tpu.vector_store %arg18[%c0_191, %c768], %202 {strides = array<i32>} : memref<1x2048xbf16, #tpu.memory_space<vmem>>, vector<1x128xbf16>,
    %c14 = arith.constant 14 : index
    %c0_192 = arith.constant 0 : index
    %204 = vector.load %arg17[%c14, %c0_192] : memref<32x128xf32, #tpu.memory_space<vmem>>, vector<1x128xf32>
    %c15 = arith.constant 15 : index
    %c0_193 = arith.constant 0 : index
    %205 = vector.load %arg17[%c15, %c0_193] : memref<32x128xf32, #tpu.memory_space<vmem>>, vector<1x128xf32>
    %206 = arith.maximumf %204, %205 : vector<1x128xf32>
    %207 = arith.truncf %206 : vector<1x128xf32> to vector<1x128xbf16>
    %c0_194 = arith.constant 0 : index
    %c896 = arith.constant 896 : index
    %208 = vector.load %arg18[%c0_194, %c896] : memref<1x2048xbf16, #tpu.memory_space<vmem>>, vector<1x128xbf16>
    tpu.vector_store %arg18[%c0_194, %c896], %207 {strides = array<i32>} : memref<1x2048xbf16, #tpu.memory_space<vmem>>, vector<1x128xbf16>,
    %c16 = arith.constant 16 : index
    %c0_195 = arith.constant 0 : index
    %209 = vector.load %arg17[%c16, %c0_195] : memref<32x128xf32, #tpu.memory_space<vmem>>, vector<1x128xf32>
    %c17 = arith.constant 17 : index
    %c0_196 = arith.constant 0 : index
    %210 = vector.load %arg17[%c17, %c0_196] : memref<32x128xf32, #tpu.memory_space<vmem>>, vector<1x128xf32>
    %211 = arith.maximumf %209, %210 : vector<1x128xf32>
    %212 = arith.truncf %211 : vector<1x128xf32> to vector<1x128xbf16>
    %c0_197 = arith.constant 0 : index
    %c1024 = arith.constant 1024 : index
    %213 = vector.load %arg18[%c0_197, %c1024] : memref<1x2048xbf16, #tpu.memory_space<vmem>>, vector<1x128xbf16>
    tpu.vector_store %arg18[%c0_197, %c1024], %212 {strides = array<i32>} : memref<1x2048xbf16, #tpu.memory_space<vmem>>, vector<1x128xbf16>,
    %c18 = arith.constant 18 : index
    %c0_198 = arith.constant 0 : index
    %214 = vector.load %arg17[%c18, %c0_198] : memref<32x128xf32, #tpu.memory_space<vmem>>, vector<1x128xf32>
    %c19 = arith.constant 19 : index
    %c0_199 = arith.constant 0 : index
    %215 = vector.load %arg17[%c19, %c0_199] : memref<32x128xf32, #tpu.memory_space<vmem>>, vector<1x128xf32>
    %216 = arith.maximumf %214, %215 : vector<1x128xf32>
    %217 = arith.truncf %216 : vector<1x128xf32> to vector<1x128xbf16>
    %c0_200 = arith.constant 0 : index
    %c1152 = arith.constant 1152 : index
    %218 = vector.load %arg18[%c0_200, %c1152] : memref<1x2048xbf16, #tpu.memory_space<vmem>>, vector<1x128xbf16>
    tpu.vector_store %arg18[%c0_200, %c1152], %217 {strides = array<i32>} : memref<1x2048xbf16, #tpu.memory_space<vmem>>, vector<1x128xbf16>,
    %c20 = arith.constant 20 : index
    %c0_201 = arith.constant 0 : index
    %219 = vector.load %arg17[%c20, %c0_201] : memref<32x128xf32, #tpu.memory_space<vmem>>, vector<1x128xf32>
    %c21 = arith.constant 21 : index
    %c0_202 = arith.constant 0 : index
    %220 = vector.load %arg17[%c21, %c0_202] : memref<32x128xf32, #tpu.memory_space<vmem>>, vector<1x128xf32>
    %221 = arith.maximumf %219, %220 : vector<1x128xf32>
    %222 = arith.truncf %221 : vector<1x128xf32> to vector<1x128xbf16>
    %c0_203 = arith.constant 0 : index
    %c1280 = arith.constant 1280 : index
    %223 = vector.load %arg18[%c0_203, %c1280] : memref<1x2048xbf16, #tpu.memory_space<vmem>>, vector<1x128xbf16>
    tpu.vector_store %arg18[%c0_203, %c1280], %222 {strides = array<i32>} : memref<1x2048xbf16, #tpu.memory_space<vmem>>, vector<1x128xbf16>,
    %c22 = arith.constant 22 : index
    %c0_204 = arith.constant 0 : index
    %224 = vector.load %arg17[%c22, %c0_204] : memref<32x128xf32, #tpu.memory_space<vmem>>, vector<1x128xf32>
    %c23 = arith.constant 23 : index
    %c0_205 = arith.constant 0 : index
    %225 = vector.load %arg17[%c23, %c0_205] : memref<32x128xf32, #tpu.memory_space<vmem>>, vector<1x128xf32>
    %226 = arith.maximumf %224, %225 : vector<1x128xf32>
    %227 = arith.truncf %226 : vector<1x128xf32> to vector<1x128xbf16>
    %c0_206 = arith.constant 0 : index
    %c1408 = arith.constant 1408 : index
    %228 = vector.load %arg18[%c0_206, %c1408] : memref<1x2048xbf16, #tpu.memory_space<vmem>>, vector<1x128xbf16>
    tpu.vector_store %arg18[%c0_206, %c1408], %227 {strides = array<i32>} : memref<1x2048xbf16, #tpu.memory_space<vmem>>, vector<1x128xbf16>,
    %c24 = arith.constant 24 : index
    %c0_207 = arith.constant 0 : index
    %229 = vector.load %arg17[%c24, %c0_207] : memref<32x128xf32, #tpu.memory_space<vmem>>, vector<1x128xf32>
    %c25 = arith.constant 25 : index
    %c0_208 = arith.constant 0 : index
    %230 = vector.load %arg17[%c25, %c0_208] : memref<32x128xf32, #tpu.memory_space<vmem>>, vector<1x128xf32>
    %231 = arith.maximumf %229, %230 : vector<1x128xf32>
    %232 = arith.truncf %231 : vector<1x128xf32> to vector<1x128xbf16>
    %c0_209 = arith.constant 0 : index
    %c1536 = arith.constant 1536 : index
    %233 = vector.load %arg18[%c0_209, %c1536] : memref<1x2048xbf16, #tpu.memory_space<vmem>>, vector<1x128xbf16>
    tpu.vector_store %arg18[%c0_209, %c1536], %232 {strides = array<i32>} : memref<1x2048xbf16, #tpu.memory_space<vmem>>, vector<1x128xbf16>,
    %c26 = arith.constant 26 : index
    %c0_210 = arith.constant 0 : index
    %234 = vector.load %arg17[%c26, %c0_210] : memref<32x128xf32, #tpu.memory_space<vmem>>, vector<1x128xf32>
    %c27 = arith.constant 27 : index
    %c0_211 = arith.constant 0 : index
    %235 = vector.load %arg17[%c27, %c0_211] : memref<32x128xf32, #tpu.memory_space<vmem>>, vector<1x128xf32>
    %236 = arith.maximumf %234, %235 : vector<1x128xf32>
    %237 = arith.truncf %236 : vector<1x128xf32> to vector<1x128xbf16>
    %c0_212 = arith.constant 0 : index
    %c1664 = arith.constant 1664 : index
    %238 = vector.load %arg18[%c0_212, %c1664] : memref<1x2048xbf16, #tpu.memory_space<vmem>>, vector<1x128xbf16>
    tpu.vector_store %arg18[%c0_212, %c1664], %237 {strides = array<i32>} : memref<1x2048xbf16, #tpu.memory_space<vmem>>, vector<1x128xbf16>,
    %c28 = arith.constant 28 : index
    %c0_213 = arith.constant 0 : index
    %239 = vector.load %arg17[%c28, %c0_213] : memref<32x128xf32, #tpu.memory_space<vmem>>, vector<1x128xf32>
    %c29 = arith.constant 29 : index
    %c0_214 = arith.constant 0 : index
    %240 = vector.load %arg17[%c29, %c0_214] : memref<32x128xf32, #tpu.memory_space<vmem>>, vector<1x128xf32>
    %241 = arith.maximumf %239, %240 : vector<1x128xf32>
    %242 = arith.truncf %241 : vector<1x128xf32> to vector<1x128xbf16>
    %c0_215 = arith.constant 0 : index
    %c1792 = arith.constant 1792 : index
    %243 = vector.load %arg18[%c0_215, %c1792] : memref<1x2048xbf16, #tpu.memory_space<vmem>>, vector<1x128xbf16>
    tpu.vector_store %arg18[%c0_215, %c1792], %242 {strides = array<i32>} : memref<1x2048xbf16, #tpu.memory_space<vmem>>, vector<1x128xbf16>,
    %c30 = arith.constant 30 : index
    %c0_216 = arith.constant 0 : index
    %244 = vector.load %arg17[%c30, %c0_216] : memref<32x128xf32, #tpu.memory_space<vmem>>, vector<1x128xf32>
    %c31 = arith.constant 31 : index
    %c0_217 = arith.constant 0 : index
    %245 = vector.load %arg17[%c31, %c0_217] : memref<32x128xf32, #tpu.memory_space<vmem>>, vector<1x128xf32>
    %246 = arith.maximumf %244, %245 : vector<1x128xf32>
    %247 = arith.truncf %246 : vector<1x128xf32> to vector<1x128xbf16>
    %c0_218 = arith.constant 0 : index
    %c1920 = arith.constant 1920 : index
    %248 = vector.load %arg18[%c0_218, %c1920] : memref<1x2048xbf16, #tpu.memory_space<vmem>>, vector<1x128xbf16>
    tpu.vector_store %arg18[%c0_218, %c1920], %247 {strides = array<i32>} : memref<1x2048xbf16, #tpu.memory_space<vmem>>, vector<1x128xbf16>,
    %c0_219 = arith.constant 0 : index
    %c0_220 = arith.constant 0 : index
    %249 = vector.load %arg18[%c0_219, %c0_220] : memref<1x2048xbf16, #tpu.memory_space<vmem>>, vector<1x2048xbf16>
    %c0_221 = arith.constant 0 : index
    %c0_222 = arith.constant 0 : index
    %250 = vector.load %arg8[%c0_221, %c0_222] : memref<2048x128xbf16, #tpu.memory_space<vmem>>, vector<2048x128xbf16>
    %cst_223 = arith.constant dense<0.000000e+00> : vector<1x128xf32>
    %251 = tpu.matmul %249, %250, %cst_223 {dimension_numbers = #tpu.dot_dimension_numbers<[1], [0], [0], [1], [0, 0, 1, 1], [], []>} : vector<1x2048xbf16>, vector<2048x128xbf16>, vector<1x128xf32> -> vector<1x128xf32>
    %c0_224 = arith.constant 0 : index
    %c0_225 = arith.constant 0 : index
    %252 = vector.load %arg9[%c0_224, %c0_225] : memref<1x128xf32, #tpu.memory_space<vmem>>, vector<1x128xf32>
    %253 = arith.addf %251, %252 : vector<1x128xf32>
    %cst_226 = arith.constant 0.000000e+00 : f32
    %254 = vector.broadcast %cst_226 : f32 to vector<1x128xf32>
    %255 = arith.maximumf %253, %254 : vector<1x128xf32>
    %256 = arith.truncf %255 : vector<1x128xf32> to vector<1x128xbf16>
    %c0_227 = arith.constant 0 : index
    %c0_228 = arith.constant 0 : index
    %257 = vector.load %arg10[%c0_227, %c0_228] : memref<128x2xbf16, #tpu.memory_space<vmem>>, vector<128x2xbf16>
    %cst_229 = arith.constant dense<0.000000e+00> : vector<1x2xf32>
    %258 = tpu.matmul %256, %257, %cst_229 {dimension_numbers = #tpu.dot_dimension_numbers<[1], [0], [0], [1], [0, 0, 1, 1], [], []>} : vector<1x128xbf16>, vector<128x2xbf16>, vector<1x2xf32> -> vector<1x2xf32>
    %c0_230 = arith.constant 0 : index
    %c0_231 = arith.constant 0 : index
    %259 = vector.load %arg11[%c0_230, %c0_231] : memref<1x2xf32, #tpu.memory_space<vmem>>, vector<1x2xf32>
    %260 = arith.addf %258, %259 : vector<1x2xf32>
    %c0_232 = arith.constant 0 : index
    %c0_233 = arith.constant 0 : index
    %c0_234 = arith.constant 0 : index
    %261 = vector.load %arg12[%c0_232, %c0_233, %c0_234] : memref<1x1x2xf32, #tpu.memory_space<vmem>>, vector<1x1x2xf32>
    %262 = vector.shape_cast %261 : vector<1x1x2xf32> to vector<1x2xf32>
    %263 = vector.shape_cast %260 : vector<1x2xf32> to vector<1x1x2xf32>
    tpu.vector_store %arg12[%c0_232, %c0_233, %c0_234], %263 {strides = array<i32>} : memref<1x1x2xf32, #tpu.memory_space<vmem>>, vector<1x1x2xf32>,
    return
  }
  func.func @transform_0(%arg0: i32) -> (i32, i32, i32) {
    %c0_i32 = arith.constant 0 : i32
    %c0_i32_0 = arith.constant 0 : i32
    %c0_i32_1 = arith.constant 0 : i32
    return %arg0, %c0_i32, %c0_i32_0 : i32, i32, i32
  }
  func.func @transform_1(%arg0: i32) -> (i32, i32) {
    %c0_i32 = arith.constant 0 : i32
    %c0_i32_0 = arith.constant 0 : i32
    %c0_i32_1 = arith.constant 0 : i32
    return %c0_i32, %c0_i32_0 : i32, i32
  }
  func.func @transform_2(%arg0: i32) -> (i32, i32) {
    %c0_i32 = arith.constant 0 : i32
    %c0_i32_0 = arith.constant 0 : i32
    %c0_i32_1 = arith.constant 0 : i32
    return %c0_i32, %c0_i32_0 : i32, i32
  }
  func.func @transform_3(%arg0: i32) -> (i32, i32, i32) {
    %c0_i32 = arith.constant 0 : i32
    %c0_i32_0 = arith.constant 0 : i32
    %c0_i32_1 = arith.constant 0 : i32
    %c0_i32_2 = arith.constant 0 : i32
    return %c0_i32, %c0_i32_0, %c0_i32_1 : i32, i32, i32
  }
  func.func @transform_4(%arg0: i32) -> (i32, i32) {
    %c0_i32 = arith.constant 0 : i32
    %c0_i32_0 = arith.constant 0 : i32
    %c0_i32_1 = arith.constant 0 : i32
    return %c0_i32, %c0_i32_0 : i32, i32
  }
  func.func @transform_5(%arg0: i32) -> (i32, i32, i32) {
    %c0_i32 = arith.constant 0 : i32
    %c0_i32_0 = arith.constant 0 : i32
    %c0_i32_1 = arith.constant 0 : i32
    %c0_i32_2 = arith.constant 0 : i32
    return %c0_i32, %c0_i32_0, %c0_i32_1 : i32, i32, i32
  }
  func.func @transform_6(%arg0: i32) -> (i32, i32) {
    %c0_i32 = arith.constant 0 : i32
    %c0_i32_0 = arith.constant 0 : i32
    %c0_i32_1 = arith.constant 0 : i32
    return %c0_i32, %c0_i32_0 : i32, i32
  }
  func.func @transform_7(%arg0: i32) -> (i32, i32) {
    %c0_i32 = arith.constant 0 : i32
    %c0_i32_0 = arith.constant 0 : i32
    %c0_i32_1 = arith.constant 0 : i32
    return %c0_i32, %c0_i32_0 : i32, i32
  }
  func.func @transform_8(%arg0: i32) -> (i32, i32) {
    %c0_i32 = arith.constant 0 : i32
    %c0_i32_0 = arith.constant 0 : i32
    %c0_i32_1 = arith.constant 0 : i32
    return %c0_i32, %c0_i32_0 : i32, i32
  }
  func.func @transform_9(%arg0: i32) -> (i32, i32) {
    %c0_i32 = arith.constant 0 : i32
    %c0_i32_0 = arith.constant 0 : i32
    %c0_i32_1 = arith.constant 0 : i32
    return %c0_i32, %c0_i32_0 : i32, i32
  }
  func.func @transform_10(%arg0: i32) -> (i32, i32) {
    %c0_i32 = arith.constant 0 : i32
    %c0_i32_0 = arith.constant 0 : i32
    %c0_i32_1 = arith.constant 0 : i32
    return %c0_i32, %c0_i32_0 : i32, i32
  }
  func.func @transform_11(%arg0: i32) -> (i32, i32, i32) {
    %c0_i32 = arith.constant 0 : i32
    %c0_i32_0 = arith.constant 0 : i32
    %c0_i32_1 = arith.constant 0 : i32
    return %arg0, %c0_i32, %c0_i32_0 : i32, i32, i32
  }
}

</mosaic_0001>

<llo_original>
// kernel: forward.1
$region0: #{forward.1}
  #allocation0 [shape = 'u32[]', space=smem, size = 0x4, offset = 0x4, fixed_abs, tag = 'smem constant byte address 0x4 - core index']
  #allocation1 [shape = 'u32[144,128]{1,0:T(1,128)}', space=vmem, size = 0x12000, scoped, tag = 'internal scratch']
  #allocation2 [shape = 'bf16[32,32,32]{2,1,0:T(8,128)(2,1)}', space=vmem, size = 0x40000, scoped, tag = 'scratch operand']
  #allocation3 [shape = 'bf16[24,24,64]{2,1,0:T(8,128)(2,1)}', space=vmem, size = 0x24000, scoped, tag = 'scratch operand']
  #allocation4 [shape = 'f32[512,32]{1,0:T(8,128)}', space=vmem, size = 0x40000, scoped, tag = 'scratch operand']
  #allocation5 [shape = 'f32[128,64]{1,0:T(8,128)}', space=vmem, size = 0x10000, scoped, tag = 'scratch operand']
  #allocation6 [shape = 'f32[32,128]{1,0:T(8,128)}', space=vmem, size = 0x4000, scoped, tag = 'scratch operand']
  #allocation7 [shape = 'bf16[1,2048]{1,0:T(2,128)(2,1)}', space=vmem, size = 0x2000, scoped, tag = 'scratch operand']
  %s0 = inlined_call_operand.vmem [shape: bf16[2,1024,27], index: 0, kind: input, shape index: {}]
  %s1 = inlined_call_operand.vmem [shape: bf16[27,32], index: 1, kind: input, shape index: {}]
  %s2 = inlined_call_operand.vmem [shape: f32[1,32], index: 2, kind: input, shape index: {}]
  %s3 = inlined_call_operand.vmem [shape: bf16[9,32,64], index: 3, kind: input, shape index: {}]
  %s4 = inlined_call_operand.vmem [shape: f32[1,64], index: 4, kind: input, shape index: {}]
  %s5 = inlined_call_operand.vmem [shape: bf16[9,64,128], index: 5, kind: input, shape index: {}]
  %s6 = inlined_call_operand.vmem [shape: f32[1,128], index: 6, kind: input, shape index: {}]
  %s7 = inlined_call_operand.vmem [shape: bf16[2048,128], index: 7, kind: input, shape index: {}]
  %s8 = inlined_call_operand.vmem [shape: f32[1,128], index: 8, kind: input, shape index: {}]
  %s9 = inlined_call_operand.vmem [shape: bf16[128,2], index: 9, kind: input, shape index: {}]
  %s10 = inlined_call_operand.vmem [shape: f32[1,2], index: 10, kind: input, shape index: {}]
  %s11 = inlined_call_operand.hbm [shape: f32[2,1,2], index: 11, kind: output, shape index: {}]
  %s12 = sld [smem:[#allocation0]]
  $region77: #{forward.1} parent=0
    _
  %s14 = ssub.s32 1, %s12
  %s15 = scalar_select 0, %s14, %s12
  $region1: #{forward.1} parent=0
    #allocation8 [shape = 'u8[1024]{0}', space=vmem, size = 0x400, scoped, tag = 'output window, operand 0']
    #allocation9 [shape = 's32[2]{0}', space=sflag, size = 0x8, scoped, tag = 'scoped memory for forward.1']
    %16 = vsyncpa [#allocation9], 0
    %s17 = scalar_lea.sflag [#allocation9], 1
    %18 = vsyncpa %s17, 0
    loop: start=0, step=1, limit=4
    $region2: #{forward.1} parent=1 // loop_pre_header
      _
    $region3: #{forward.1} parent=1 // loop_header
      %s20 = sphi 0, %s24
      %p21 = scmp.ge.s32.totalorder %s20, 4
      %s30 = sphi 0, %s32
      %s33 = sphi 0, %s30
      %s34 = sphi 0, %s33
      %s50 = sphi 0, %s34
      %s54 = sphi 0, %s54
      %s56 = sphi 0, %s54
      %s57 = sphi 0, %s56
      %s71 = sphi 0, %s57
      %s75 = sphi 0, %s75
      %s77 = sphi 0, %s75
      %s78 = sphi 0, %s77
      %s92 = sphi 0, %s78
      %s96 = sphi 0, %s96
      %s98 = sphi 0, %s96
      %s99 = sphi 0, %s98
      %s113 = sphi 0, %s99
      %s117 = sphi 0, %s117
      %s119 = sphi 0, %s117
      %s120 = sphi 0, %s119
      %s134 = sphi 0, %s120
      %s138 = sphi 0, %s138
      %s140 = sphi 0, %s138
      %s141 = sphi 0, %s140
      %s155 = sphi 0, %s141
      %s159 = sphi 0, %s159
      %s161 = sphi 0, %s159
      %s162 = sphi 0, %s161
      %s176 = sphi 0, %s162
      %s180 = sphi 0, %s180
      %s182 = sphi 0, %s180
      %s183 = sphi 0, %s182
      %s197 = sphi 0, %s183
      %s201 = sphi 0, %s201
      %s203 = sphi 0, %s201
      %s204 = sphi 0, %s203
      %s218 = sphi 0, %s204
      %s222 = sphi 0, %s222
      %s224 = sphi 0, %s222
      %s225 = sphi 0, %s224
      %s239 = sphi 0, %s225
      %s243 = sphi 0, %s243
      %s245 = sphi 0, %s243
      %s246 = sphi 0, %s245
      %s260 = sphi 0, %s246
      %s266 = sphi 0, %s268
      %s269 = sphi 0, %s266
      %s270 = sphi 0, %s269
      %s286 = sphi 0, %s270
    $region4: #{forward.1} parent=1 // loop_header_branch
      %23 = sbr.rel (%p21) target = $region8
    $region5: #{forward.1} parent=1 // loop_body
      %s25 = ssub.s32 %s20, 1
      %s26 = ssub.s32 %s20, 2
      %s27 = sadd.s32 %s20, 1
      %s28 = ssub.s32 %s20, %s27
      %p29 = scmp.eq.s32.totalorder %s28, 0
      %s31 = sadd.s32 %s30, 1
      %s32 = scalar_select %p29, %s30, %s31
      %p35 = pneg %p29
      %p36 = scmp.eq.s32.totalorder %s20, 1
      %p37 = por %p35, %p36
      %p38 = scmp.ne.s32.totalorder %s30, %s33
      %p39 = scmp.eq.s32.totalorder %s20, 0
      %p40 = por %p38, %p39
      %p41 = scmp.ne.s32.totalorder %s30, %s33
      %p42 = scmp.eq.s32.totalorder %s25, 1
      %p43 = por %p41, %p42
      %p44 = scmp.ne.s32.totalorder %s33, %s34
      %p45 = scmp.eq.s32.totalorder %s25, 0
      %p46 = por %p44, %p45
      %p47 = scmp.ne.s32.totalorder %s33, %s34
      %p48 = scmp.eq.s32.totalorder %s26, 1
      %p49 = por %p47, %p48
      %p51 = scmp.ne.s32.totalorder %s34, %s50
      %p52 = scmp.eq.s32.totalorder %s26, 0
      %p53 = por %p51, %p52
      %s55 = sadd.s32 %s54, 1
      %p58 = scmp.eq.s32.totalorder %s20, 1
      %p59 = scmp.ne.s32.totalorder %s54, %s56
      %p60 = scmp.eq.s32.totalorder %s20, 0
      %p61 = por %p59, %p60
      %p62 = scmp.ne.s32.totalorder %s54, %s56
      %p63 = scmp.eq.s32.totalorder %s25, 1
      %p64 = por %p62, %p63
      %p65 = scmp.ne.s32.totalorder %s56, %s57
      %p66 = scmp.eq.s32.totalorder %s25, 0
      %p67 = por %p65, %p66
      %p68 = scmp.ne.s32.totalorder %s56, %s57
      %p69 = scmp.eq.s32.totalorder %s26, 1
      %p70 = por %p68, %p69
      %p72 = scmp.ne.s32.totalorder %s57, %s71
      %p73 = scmp.eq.s32.totalorder %s26, 0
      %p74 = por %p72, %p73
      %s76 = sadd.s32 %s75, 1
      %p79 = scmp.eq.s32.totalorder %s20, 1
      %p80 = scmp.ne.s32.totalorder %s75, %s77
      %p81 = scmp.eq.s32.totalorder %s20, 0
      %p82 = por %p80, %p81
      %p83 = scmp.ne.s32.totalorder %s75, %s77
      %p84 = scmp.eq.s32.totalorder %s25, 1
      %p85 = por %p83, %p84
      %p86 = scmp.ne.s32.totalorder %s77, %s78
      %p87 = scmp.eq.s32.totalorder %s25, 0
      %p88 = por %p86, %p87
      %p89 = scmp.ne.s32.totalorder %s77, %s78
      %p90 = scmp.eq.s32.totalorder %s26, 1
      %p91 = por %p89, %p90
      %p93 = scmp.ne.s32.totalorder %s78, %s92
      %p94 = scmp.eq.s32.totalorder %s26, 0
      %p95 = por %p93, %p94
      %s97 = sadd.s32 %s96, 1
      %p100 = scmp.eq.s32.totalorder %s20, 1
      %p101 = scmp.ne.s32.totalorder %s96, %s98
      %p102 = scmp.eq.s32.totalorder %s20, 0
      %p103 = por %p101, %p102
      %p104 = scmp.ne.s32.totalorder %s96, %s98
      %p105 = scmp.eq.s32.totalorder %s25, 1
      %p106 = por %p104, %p105
      %p107 = scmp.ne.s32.totalorder %s98, %s99
      %p108 = scmp.eq.s32.totalorder %s25, 0
      %p109 = por %p107, %p108
      %p110 = scmp.ne.s32.totalorder %s98, %s99
      %p111 = scmp.eq.s32.totalorder %s26, 1
      %p112 = por %p110, %p111
      %p114 = scmp.ne.s32.totalorder %s99, %s113
      %p115 = scmp.eq.s32.totalorder %s26, 0
      %p116 = por %p114, %p115
      %s118 = sadd.s32 %s117, 1
      %p121 = scmp.eq.s32.totalorder %s20, 1
      %p122 = scmp.ne.s32.totalorder %s117, %s119
      %p123 = scmp.eq.s32.totalorder %s20, 0
      %p124 = por %p122, %p123
      %p125 = scmp.ne.s32.totalorder %s117, %s119
      %p126 = scmp.eq.s32.totalorder %s25, 1
      %p127 = por %p125, %p126
      %p128 = scmp.ne.s32.totalorder %s119, %s120
      %p129 = scmp.eq.s32.totalorder %s25, 0
      %p130 = por %p128, %p129
      %p131 = scmp.ne.s32.totalorder %s119, %s120
      %p132 = scmp.eq.s32.totalorder %s26, 1
      %p133 = por %p131, %p132
      %p135 = scmp.ne.s32.totalorder %s120, %s134
      %p136 = scmp.eq.s32.totalorder %s26, 0
      %p137 = por %p135, %p136
      %s139 = sadd.s32 %s138, 1
      %p142 = scmp.eq.s32.totalorder %s20, 1
      %p143 = scmp.ne.s32.totalorder %s138, %s140
      %p144 = scmp.eq.s32.totalorder %s20, 0
      %p145 = por %p143, %p144
      %p146 = scmp.ne.s32.totalorder %s138, %s140
      %p147 = scmp.eq.s32.totalorder %s25, 1
      %p148 = por %p146, %p147
      %p149 = scmp.ne.s32.totalorder %s140, %s141
      %p150 = scmp.eq.s32.totalorder %s25, 0
      %p151 = por %p149, %p150
      %p152 = scmp.ne.s32.totalorder %s140, %s141
      %p153 = scmp.eq.s32.totalorder %s26, 1
      %p154 = por %p152, %p153
      %p156 = scmp.ne.s32.totalorder %s141, %s155
      %p157 = scmp.eq.s32.totalorder %s26, 0
      %p158 = por %p156, %p157
      %s160 = sadd.s32 %s159, 1
      %p163 = scmp.eq.s32.totalorder %s20, 1
      %p164 = scmp.ne.s32.totalorder %s159, %s161
      %p165 = scmp.eq.s32.totalorder %s20, 0
      %p166 = por %p164, %p165
      %p167 = scmp.ne.s32.totalorder %s159, %s161
      %p168 = scmp.eq.s32.totalorder %s25, 1
      %p169 = por %p167, %p168
      %p170 = scmp.ne.s32.totalorder %s161, %s162
      %p171 = scmp.eq.s32.totalorder %s25, 0
      %p172 = por %p170, %p171
      %p173 = scmp.ne.s32.totalorder %s161, %s162
      %p174 = scmp.eq.s32.totalorder %s26, 1
      %p175 = por %p173, %p174
      %p177 = scmp.ne.s32.totalorder %s162, %s176
      %p178 = scmp.eq.s32.totalorder %s26, 0
      %p179 = por %p177, %p178
      %s181 = sadd.s32 %s180, 1
      %p184 = scmp.eq.s32.totalorder %s20, 1
      %p185 = scmp.ne.s32.totalorder %s180, %s182
      %p186 = scmp.eq.s32.totalorder %s20, 0
      %p187 = por %p185, %p186
      %p188 = scmp.ne.s32.totalorder %s180, %s182
      %p189 = scmp.eq.s32.totalorder %s25, 1
      %p190 = por %p188, %p189
      %p191 = scmp.ne.s32.totalorder %s182, %s183
      %p192 = scmp.eq.s32.totalorder %s25, 0
      %p193 = por %p191, %p192
      %p194 = scmp.ne.s32.totalorder %s182, %s183
      %p195 = scmp.eq.s32.totalorder %s26, 1
      %p196 = por %p194, %p195
      %p198 = scmp.ne.s32.totalorder %s183, %s197
      %p199 = scmp.eq.s32.totalorder %s26, 0
      %p200 = por %p198, %p199
      %s202 = sadd.s32 %s201, 1
      %p205 = scmp.eq.s32.totalorder %s20, 1
      %p206 = scmp.ne.s32.totalorder %s201, %s203
      %p207 = scmp.eq.s32.totalorder %s20, 0
      %p208 = por %p206, %p207
      %p209 = scmp.ne.s32.totalorder %s201, %s203
      %p210 = scmp.eq.s32.totalorder %s25, 1
      %p211 = por %p209, %p210
      %p212 = scmp.ne.s32.totalorder %s203, %s204
      %p213 = scmp.eq.s32.totalorder %s25, 0
      %p214 = por %p212, %p213
      %p215 = scmp.ne.s32.totalorder %s203, %s204
      %p216 = scmp.eq.s32.totalorder %s26, 1
      %p217 = por %p215, %p216
      %p219 = scmp.ne.s32.totalorder %s204, %s218
      %p220 = scmp.eq.s32.totalorder %s26, 0
      %p221 = por %p219, %p220
      %s223 = sadd.s32 %s222, 1
      %p226 = scmp.eq.s32.totalorder %s20, 1
      %p227 = scmp.ne.s32.totalorder %s222, %s224
      %p228 = scmp.eq.s32.totalorder %s20, 0
      %p229 = por %p227, %p228
      %p230 = scmp.ne.s32.totalorder %s222, %s224
      %p231 = scmp.eq.s32.totalorder %s25, 1
      %p232 = por %p230, %p231
      %p233 = scmp.ne.s32.totalorder %s224, %s225
      %p234 = scmp.eq.s32.totalorder %s25, 0
      %p235 = por %p233, %p234
      %p236 = scmp.ne.s32.totalorder %s224, %s225
      %p237 = scmp.eq.s32.totalorder %s26, 1
      %p238 = por %p236, %p237
      %p240 = scmp.ne.s32.totalorder %s225, %s239
      %p241 = scmp.eq.s32.totalorder %s26, 0
      %p242 = por %p240, %p241
      %s244 = sadd.s32 %s243, 1
      %p247 = scmp.eq.s32.totalorder %s20, 1
      %p248 = scmp.ne.s32.totalorder %s243, %s245
      %p249 = scmp.eq.s32.totalorder %s20, 0
      %p250 = por %p248, %p249
      %p251 = scmp.ne.s32.totalorder %s243, %s245
      %p252 = scmp.eq.s32.totalorder %s25, 1
      %p253 = por %p251, %p252
      %p254 = scmp.ne.s32.totalorder %s245, %s246
      %p255 = scmp.eq.s32.totalorder %s25, 0
      %p256 = por %p254, %p255
      %p257 = scmp.ne.s32.totalorder %s245, %s246
      %p258 = scmp.eq.s32.totalorder %s26, 1
      %p259 = por %p257, %p258
      %p261 = scmp.ne.s32.totalorder %s246, %s260
      %p262 = scmp.eq.s32.totalorder %s26, 0
      %p263 = por %p261, %p262
      %s264 = ssub.s32 %s20, %s27
      %p265 = scmp.eq.s32.totalorder %s264, 0
      %s267 = sadd.s32 %s266, 1
      %s268 = scalar_select %p265, %s266, %s267
      %p271 = pneg %p265
      %p272 = scmp.eq.s32.totalorder %s20, 1
      %p273 = por %p271, %p272
      %p274 = scmp.ne.s32.totalorder %s266, %s269
      %p275 = scmp.eq.s32.totalorder %s20, 0
      %p276 = por %p274, %p275
      %p277 = scmp.ne.s32.totalorder %s266, %s269
      %p278 = scmp.eq.s32.totalorder %s25, 1
      %p279 = por %p277, %p278
      %p280 = scmp.ne.s32.totalorder %s269, %s270
      %p281 = scmp.eq.s32.totalorder %s25, 0
      %p282 = por %p280, %p281
      %p283 = scmp.ne.s32.totalorder %s269, %s270
      %p284 = scmp.eq.s32.totalorder %s26, 1
      %p285 = por %p283, %p284
      %p287 = scmp.ne.s32.totalorder %s270, %s286
      %p288 = scmp.eq.s32.totalorder %s26, 0
      %p289 = por %p287, %p288
      %p290 = scmp.le.s32.totalorder 1, %s20
      %p291 = scmp.lt.s32.totalorder %s20, 3
      %p292 = pnand %p290, %p291
      %p293 = pneg %p292
      // Predicated region
      $region9: #{forward.1} parent=5 // pred_check
        _
      $region10: #{forward.1} parent=5 // pred_check_branch
        %295 = sbr.rel (%p292) target = $region12
      $region11: #{forward.1} parent=5 // pred_region
        %s296 = ssub.s32 %s20, 1
        // Predicated region
        $region13: #{forward.1} parent=11 // pred_check
          %p297 = pneg %p67
        $region14: #{forward.1} parent=11 // pred_check_branch
          %299 = sbr.rel (%p297) target = $region16
        $region15: #{forward.1} parent=11 // pred_region
          _
        $region16: #{forward.1} parent=11 // pred_fallthru
          _
        // Predicated region
        $region17: #{forward.1} parent=11 // pred_check
          %p300 = pneg %p88
        $region18: #{forward.1} parent=11 // pred_check_branch
          %302 = sbr.rel (%p300) target = $region20
        $region19: #{forward.1} parent=11 // pred_region
          _
        $region20: #{forward.1} parent=11 // pred_fallthru
          _
        // Predicated region
        $region21: #{forward.1} parent=11 // pred_check
          %p303 = pneg %p109
        $region22: #{forward.1} parent=11 // pred_check_branch
          %305 = sbr.rel (%p303) target = $region24
        $region23: #{forward.1} parent=11 // pred_region
          _
        $region24: #{forward.1} parent=11 // pred_fallthru
          _
        // Predicated region
        $region25: #{forward.1} parent=11 // pred_check
          %p306 = pneg %p130
        $region26: #{forward.1} parent=11 // pred_check_branch
          %308 = sbr.rel (%p306) target = $region28
        $region27: #{forward.1} parent=11 // pred_region
          _
        $region28: #{forward.1} parent=11 // pred_fallthru
          _
        // Predicated region
        $region29: #{forward.1} parent=11 // pred_check
          %p309 = pneg %p151
        $region30: #{forward.1} parent=11 // pred_check_branch
          %311 = sbr.rel (%p309) target = $region32
        $region31: #{forward.1} parent=11 // pred_region
          _
        $region32: #{forward.1} parent=11 // pred_fallthru
          _
        // Predicated region
        $region33: #{forward.1} parent=11 // pred_check
          %p312 = pneg %p172
        $region34: #{forward.1} parent=11 // pred_check_branch
          %314 = sbr.rel (%p312) target = $region36
        $region35: #{forward.1} parent=11 // pred_region
          _
        $region36: #{forward.1} parent=11 // pred_fallthru
          _
        // Predicated region
        $region37: #{forward.1} parent=11 // pred_check
          %p315 = pneg %p193
        $region38: #{forward.1} parent=11 // pred_check_branch
          %317 = sbr.rel (%p315) target = $region40
        $region39: #{forward.1} parent=11 // pred_region
          _
        $region40: #{forward.1} parent=11 // pred_fallthru
          _
        // Predicated region
        $region41: #{forward.1} parent=11 // pred_check
          %p318 = pneg %p214
        $region42: #{forward.1} parent=11 // pred_check_branch
          %320 = sbr.rel (%p318) target = $region44
        $region43: #{forward.1} parent=11 // pred_region
          _
        $region44: #{forward.1} parent=11 // pred_fallthru
          _
        // Predicated region
        $region45: #{forward.1} parent=11 // pred_check
          %p321 = pneg %p235
        $region46: #{forward.1} parent=11 // pred_check_branch
          %323 = sbr.rel (%p321) target = $region48
        $region47: #{forward.1} parent=11 // pred_region
          _
        $region48: #{forward.1} parent=11 // pred_fallthru
          _
        // Predicated region
        $region49: #{forward.1} parent=11 // pred_check
          %p324 = pneg %p256
        $region50: #{forward.1} parent=11 // pred_check_branch
          %326 = sbr.rel (%p324) target = $region52
        $region51: #{forward.1} parent=11 // pred_region
          _
        $region52: #{forward.1} parent=11 // pred_fallthru
          _
      $region12: #{forward.1} parent=5 // pred_fallthru
        _
      %p327 = scmp.lt.s32.totalorder %s20, 2
      // Predicated region
      $region53: #{forward.1} parent=5 // pred_check
        %p328 = pneg %p327
      $region54: #{forward.1} parent=5 // pred_check_branch
        %330 = sbr.rel (%p328) target = $region56
      $region55: #{forward.1} parent=5 // pred_region
        // Predicated region
        $region57: #{forward.1} parent=55 // pred_check
          %p331 = pneg %p40
        $region58: #{forward.1} parent=55 // pred_check_branch
          %333 = sbr.rel (%p331) target = $region60
        $region59: #{forward.1} parent=55 // pred_region
          %p334 = scmp.lt.s32.totalorder %s20, 1
          %s335 = scalar_select %p334, %s20, 1
          %s336 = smul.addr %s335, 128
          %s337 = smul.addr %s336, 4
          %s338 = scalar_lea.vmem %s0, %s337
        $region60: #{forward.1} parent=55 // pred_fallthru
          _
      $region56: #{forward.1} parent=5 // pred_fallthru
        _
      %p339 = scmp.le.s32.totalorder 1, %s20
      %p340 = scmp.lt.s32.totalorder %s20, 3
      %p341 = pnand %p339, %p340
      %p342 = pneg %p341
      // Predicated region
      $region61: #{forward.1} parent=5 // pred_check
        _
      $region62: #{forward.1} parent=5 // pred_check_branch
        %344 = sbr.rel (%p341) target = $region64
      $region63: #{forward.1} parent=5 // pred_region
        %s345 = ssub.s32 %s20, 1
        %p346 = scmp.lt.s32.totalorder %s25, 1
        %s347 = scalar_select %p346, %s25, 1
        %s348 = smul.addr %s347, 128
        %s349 = smul.addr %s348, 4
        %s350 = scalar_lea.vmem %s0, %s349
        %p351 = pneg %p46
        %p352 = pneg %p43
        %p353 = pneg %p67
        %p354 = pneg %p64
        %p355 = pneg %p88
        %p356 = pneg %p85
        %p357 = pneg %p109
        %p358 = pneg %p106
        %p359 = pneg %p130
        %p360 = pneg %p127
        %p361 = pneg %p151
        %p362 = pneg %p148
        %p363 = pneg %p172
        %p364 = pneg %p169
        %p365 = pneg %p193
        %p366 = pneg %p190
        %p367 = pneg %p214
        %p368 = pneg %p211
        %p369 = pneg %p235
        %p370 = pneg %p232
        %p371 = pneg %p256
        %p372 = pneg %p253
        %p373 = pneg %p282
        %p374 = pneg %p279
        %s375 = sand.u32 %s269, 1
        %s376 = scalar_lea.sflag [#allocation9], %s375
        %s377 = sand.u32 %s269, 1
        %s378 = scalar_lea.vmem [#allocation8], %s377
        %p379 = scmp.lt.s32.totalorder %s25, 1
        %s380 = scalar_select %p379, %s25, 1
        %s381 = smul.addr %s380, 128
        %s382 = smul.addr %s381, 4
        %s383 = scalar_lea.vmem %s0, %s382
        %vm385 = vcmask 257024
        %386 = vst.msk [vmem:[#allocation2] sm:$0xf] %vm385, 0
        %387 = vst.msk [vmem:[#allocation2 + $0x4] sm:$0xf] %vm385, 0
        %388 = vst.msk [vmem:[#allocation2 + $0x8] sm:$0xf] %vm385, 0
        %389 = vst.msk [vmem:[#allocation2 + $0xc] sm:$0xf] %vm385, 0
        %390 = vst.msk [vmem:[#allocation2 + $0x10] sm:$0xf] %vm385, 0
        %391 = vst.msk [vmem:[#allocation2 + $0x14] sm:$0xf] %vm385, 0
        %392 = vst.msk [vmem:[#allocation2 + $0x18] sm:$0xf] %vm385, 0
        %393 = vst.msk [vmem:[#allocation2 + $0x1c] sm:$0xf] %vm385, 0
        %394 = vst.msk [vmem:[#allocation2 + $0x20] sm:$0xf] %vm385, 0
        %395 = vst.msk [vmem:[#allocation2 + $0x24] sm:$0xf] %vm385, 0
        %396 = vst.msk [vmem:[#allocation2 + $0x28] sm:$0xf] %vm385, 0
        %397 = vst.msk [vmem:[#allocation2 + $0x2c] sm:$0xf] %vm385, 0
        %398 = vst.msk [vmem:[#allocation2 + $0x30] sm:$0xf] %vm385, 0
        %399 = vst.msk [vmem:[#allocation2 + $0x34] sm:$0xf] %vm385, 0
        %400 = vst.msk [vmem:[#allocation2 + $0x38] sm:$0xf] %vm385, 0
        %401 = vst.msk [vmem:[#allocation2 + $0x3c] sm:$0xf] %vm385, 0
        %402 = vst.msk [vmem:[#allocation2 + $0x40] sm:$0xf] %vm385, 0
        %403 = vst.msk [vmem:[#allocation2 + $0x44] sm:$0xf] %vm385, 0
        %404 = vst.msk [vmem:[#allocation2 + $0x48] sm:$0xf] %vm385, 0
        %405 = vst.msk [vmem:[#allocation2 + $0x4c] sm:$0xf] %vm385, 0
        %406 = vst.msk [vmem:[#allocation2 + $0x50] sm:$0xf] %vm385, 0
        %407 = vst.msk [vmem:[#allocation2 + $0x54] sm:$0xf] %vm385, 0
        %408 = vst.msk [vmem:[#allocation2 + $0x58] sm:$0xf] %vm385, 0
        %409 = vst.msk [vmem:[#allocation2 + $0x5c] sm:$0xf] %vm385, 0
        %410 = vst.msk [vmem:[#allocation2 + $0x60] sm:$0xf] %vm385, 0
        %411 = vst.msk [vmem:[#allocation2 + $0x64] sm:$0xf] %vm385, 0
        %412 = vst.msk [vmem:[#allocation2 + $0x68] sm:$0xf] %vm385, 0
        %413 = vst.msk [vmem:[#allocation2 + $0x6c] sm:$0xf] %vm385, 0
        %414 = vst.msk [vmem:[#allocation2 + $0x70] sm:$0xf] %vm385, 0
        %415 = vst.msk [vmem:[#allocation2 + $0x74] sm:$0xf] %vm385, 0
        %416 = vst.msk [vmem:[#allocation2 + $0x78] sm:$0xf] %vm385, 0
        %417 = vst.msk [vmem:[#allocation2 + $0x7c] sm:$0xf] %vm385, 0
        %418 = vst.msk [vmem:[#allocation2 + $0x80] sm:$0xf] %vm385, 0
        %419 = vst.msk [vmem:[#allocation2 + $0x84] sm:$0xf] %vm385, 0
        %420 = vst.msk [vmem:[#allocation2 + $0x88] sm:$0xf] %vm385, 0
        %421 = vst.msk [vmem:[#allocation2 + $0x8c] sm:$0xf] %vm385, 0
        %422 = vst.msk [vmem:[#allocation2 + $0x90] sm:$0xf] %vm385, 0
        %423 = vst.msk [vmem:[#allocation2 + $0x94] sm:$0xf] %vm385, 0
        %424 = vst.msk [vmem:[#allocation2 + $0x98] sm:$0xf] %vm385, 0
        %425 = vst.msk [vmem:[#allocation2 + $0x9c] sm:$0xf] %vm385, 0
        %426 = vst.msk [vmem:[#allocation2 + $0xa0] sm:$0xf] %vm385, 0
        %427 = vst.msk [vmem:[#allocation2 + $0xa4] sm:$0xf] %vm385, 0
        %428 = vst.msk [vmem:[#allocation2 + $0xa8] sm:$0xf] %vm385, 0
        %429 = vst.msk [vmem:[#allocation2 + $0xac] sm:$0xf] %vm385, 0
        %430 = vst.msk [vmem:[#allocation2 + $0xb0] sm:$0xf] %vm385, 0
        %431 = vst.msk [vmem:[#allocation2 + $0xb4] sm:$0xf] %vm385, 0
        %432 = vst.msk [vmem:[#allocation2 + $0xb8] sm:$0xf] %vm385, 0
        %433 = vst.msk [vmem:[#allocation2 + $0xbc] sm:$0xf] %vm385, 0
        %434 = vst.msk [vmem:[#allocation2 + $0xc0] sm:$0xf] %vm385, 0
        %435 = vst.msk [vmem:[#allocation2 + $0xc4] sm:$0xf] %vm385, 0
        %436 = vst.msk [vmem:[#allocation2 + $0xc8] sm:$0xf] %vm385, 0
        %437 = vst.msk [vmem:[#allocation2 + $0xcc] sm:$0xf] %vm385, 0
        %438 = vst.msk [vmem:[#allocation2 + $0xd0] sm:$0xf] %vm385, 0
        %439 = vst.msk [vmem:[#allocation2 + $0xd4] sm:$0xf] %vm385, 0
        %440 = vst.msk [vmem:[#allocation2 + $0xd8] sm:$0xf] %vm385, 0
        %441 = vst.msk [vmem:[#allocation2 + $0xdc] sm:$0xf] %vm385, 0
        %442 = vst.msk [vmem:[#allocation2 + $0xe0] sm:$0xf] %vm385, 0
        %443 = vst.msk [vmem:[#allocation2 + $0xe4] sm:$0xf] %vm385, 0
        %444 = vst.msk [vmem:[#allocation2 + $0xe8] sm:$0xf] %vm385, 0
        %445 = vst.msk [vmem:[#allocation2 + $0xec] sm:$0xf] %vm385, 0
        %446 = vst.msk [vmem:[#allocation2 + $0xf0] sm:$0xf] %vm385, 0
        %447 = vst.msk [vmem:[#allocation2 + $0xf4] sm:$0xf] %vm385, 0
        %448 = vst.msk [vmem:[#allocation2 + $0xf8] sm:$0xf] %vm385, 0
        %449 = vst.msk [vmem:[#allocation2 + $0xfc] sm:$0xf] %vm385, 0
        %450 = vst.msk [vmem:[#allocation2 + $0x100] sm:$0xf] %vm385, 0
        %451 = vst.msk [vmem:[#allocation2 + $0x104] sm:$0xf] %vm385, 0
        %452 = vst.msk [vmem:[#allocation2 + $0x108] sm:$0xf] %vm385, 0
        %453 = vst.msk [vmem:[#allocation2 + $0x10c] sm:$0xf] %vm385, 0
        %454 = vst.msk [vmem:[#allocation2 + $0x110] sm:$0xf] %vm385, 0
        %455 = vst.msk [vmem:[#allocation2 + $0x114] sm:$0xf] %vm385, 0
        %456 = vst.msk [vmem:[#allocation2 + $0x118] sm:$0xf] %vm385, 0
        %457 = vst.msk [vmem:[#allocation2 + $0x11c] sm:$0xf] %vm385, 0
        %458 = vst.msk [vmem:[#allocation2 + $0x120] sm:$0xf] %vm385, 0
        %459 = vst.msk [vmem:[#allocation2 + $0x124] sm:$0xf] %vm385, 0
        %460 = vst.msk [vmem:[#allocation2 + $0x128] sm:$0xf] %vm385, 0
        %461 = vst.msk [vmem:[#allocation2 + $0x12c] sm:$0xf] %vm385, 0
        %462 = vst.msk [vmem:[#allocation2 + $0x130] sm:$0xf] %vm385, 0
        %463 = vst.msk [vmem:[#allocation2 + $0x134] sm:$0xf] %vm385, 0
        %464 = vst.msk [vmem:[#allocation2 + $0x138] sm:$0xf] %vm385, 0
        %465 = vst.msk [vmem:[#allocation2 + $0x13c] sm:$0xf] %vm385, 0
        %466 = vst.msk [vmem:[#allocation2 + $0x140] sm:$0xf] %vm385, 0
        %467 = vst.msk [vmem:[#allocation2 + $0x144] sm:$0xf] %vm385, 0
        %468 = vst.msk [vmem:[#allocation2 + $0x148] sm:$0xf] %vm385, 0
        %469 = vst.msk [vmem:[#allocation2 + $0x14c] sm:$0xf] %vm385, 0
        %470 = vst.msk [vmem:[#allocation2 + $0x150] sm:$0xf] %vm385, 0
        %471 = vst.msk [vmem:[#allocation2 + $0x154] sm:$0xf] %vm385, 0
        %472 = vst.msk [vmem:[#allocation2 + $0x158] sm:$0xf] %vm385, 0
        %473 = vst.msk [vmem:[#allocation2 + $0x15c] sm:$0xf] %vm385, 0
        %474 = vst.msk [vmem:[#allocation2 + $0x160] sm:$0xf] %vm385, 0
        %475 = vst.msk [vmem:[#allocation2 + $0x164] sm:$0xf] %vm385, 0
        %476 = vst.msk [vmem:[#allocation2 + $0x168] sm:$0xf] %vm385, 0
        %477 = vst.msk [vmem:[#allocation2 + $0x16c] sm:$0xf] %vm385, 0
        %478 = vst.msk [vmem:[#allocation2 + $0x170] sm:$0xf] %vm385, 0
        %479 = vst.msk [vmem:[#allocation2 + $0x174] sm:$0xf] %vm385, 0
        %480 = vst.msk [vmem:[#allocation2 + $0x178] sm:$0xf] %vm385, 0
        %481 = vst.msk [vmem:[#allocation2 + $0x17c] sm:$0xf] %vm385, 0
        %482 = vst.msk [vmem:[#allocation2 + $0x180] sm:$0xf] %vm385, 0
        %483 = vst.msk [vmem:[#allocation2 + $0x184] sm:$0xf] %vm385, 0
        %484 = vst.msk [vmem:[#allocation2 + $0x188] sm:$0xf] %vm385, 0
        %485 = vst.msk [vmem:[#allocation2 + $0x18c] sm:$0xf] %vm385, 0
        %486 = vst.msk [vmem:[#allocation2 + $0x190] sm:$0xf] %vm385, 0
        %487 = vst.msk [vmem:[#allocation2 + $0x194] sm:$0xf] %vm385, 0
        %488 = vst.msk [vmem:[#allocation2 + $0x198] sm:$0xf] %vm385, 0
        %489 = vst.msk [vmem:[#allocation2 + $0x19c] sm:$0xf] %vm385, 0
        %490 = vst.msk [vmem:[#allocation2 + $0x1a0] sm:$0xf] %vm385, 0
        %491 = vst.msk [vmem:[#allocation2 + $0x1a4] sm:$0xf] %vm385, 0
        %492 = vst.msk [vmem:[#allocation2 + $0x1a8] sm:$0xf] %vm385, 0
        %493 = vst.msk [vmem:[#allocation2 + $0x1ac] sm:$0xf] %vm385, 0
        %494 = vst.msk [vmem:[#allocation2 + $0x1b0] sm:$0xf] %vm385, 0
        %495 = vst.msk [vmem:[#allocation2 + $0x1b4] sm:$0xf] %vm385, 0
        %496 = vst.msk [vmem:[#allocation2 + $0x1b8] sm:$0xf] %vm385, 0
        %497 = vst.msk [vmem:[#allocation2 + $0x1bc] sm:$0xf] %vm385, 0
        %498 = vst.msk [vmem:[#allocation2 + $0x1c0] sm:$0xf] %vm385, 0
        %499 = vst.msk [vmem:[#allocation2 + $0x1c4] sm:$0xf] %vm385, 0
        %500 = vst.msk [vmem:[#allocation2 + $0x1c8] sm:$0xf] %vm385, 0
        %501 = vst.msk [vmem:[#allocation2 + $0x1cc] sm:$0xf] %vm385, 0
        %502 = vst.msk [vmem:[#allocation2 + $0x1d0] sm:$0xf] %vm385, 0
        %503 = vst.msk [vmem:[#allocation2 + $0x1d4] sm:$0xf] %vm385, 0
        %504 = vst.msk [vmem:[#allocation2 + $0x1d8] sm:$0xf] %vm385, 0
        %505 = vst.msk [vmem:[#allocation2 + $0x1dc] sm:$0xf] %vm385, 0
        %506 = vst.msk [vmem:[#allocation2 + $0x1e0] sm:$0xf] %vm385, 0
        %507 = vst.msk [vmem:[#allocation2 + $0x1e4] sm:$0xf] %vm385, 0
        %508 = vst.msk [vmem:[#allocation2 + $0x1e8] sm:$0xf] %vm385, 0
        %509 = vst.msk [vmem:[#allocation2 + $0x1ec] sm:$0xf] %vm385, 0
        %510 = vst.msk [vmem:[#allocation2 + $0x1f0] sm:$0xf] %vm385, 0
        %511 = vst.msk [vmem:[#allocation2 + $0x1f4] sm:$0xf] %vm385, 0
        %512 = vst.msk [vmem:[#allocation2 + $0x1f8] sm:$0xf] %vm385, 0
        %513 = vst.msk [vmem:[#allocation2 + $0x1fc] sm:$0xf] %vm385, 0
        %vm514 = vcmask 519168
        %515 = vst.msk [vmem:[#allocation3] sm:$0xf] %vm514, 0
        %516 = vst.msk [vmem:[#allocation3 + $0x4] sm:$0xf] %vm514, 0
        %517 = vst.msk [vmem:[#allocation3 + $0x8] sm:$0xf] %vm514, 0
        %518 = vst.msk [vmem:[#allocation3 + $0xc] sm:$0xf] %vm514, 0
        %519 = vst.msk [vmem:[#allocation3 + $0x10] sm:$0xf] %vm514, 0
        %520 = vst.msk [vmem:[#allocation3 + $0x14] sm:$0xf] %vm514, 0
        %521 = vst.msk [vmem:[#allocation3 + $0x18] sm:$0xf] %vm514, 0
        %522 = vst.msk [vmem:[#allocation3 + $0x1c] sm:$0xf] %vm514, 0
        %523 = vst.msk [vmem:[#allocation3 + $0x20] sm:$0xf] %vm514, 0
        %524 = vst.msk [vmem:[#allocation3 + $0x24] sm:$0xf] %vm514, 0
        %525 = vst.msk [vmem:[#allocation3 + $0x28] sm:$0xf] %vm514, 0
        %526 = vst.msk [vmem:[#allocation3 + $0x2c] sm:$0xf] %vm514, 0
        %527 = vst.msk [vmem:[#allocation3 + $0x30] sm:$0xf] %vm514, 0
        %528 = vst.msk [vmem:[#allocation3 + $0x34] sm:$0xf] %vm514, 0
        %529 = vst.msk [vmem:[#allocation3 + $0x38] sm:$0xf] %vm514, 0
        %530 = vst.msk [vmem:[#allocation3 + $0x3c] sm:$0xf] %vm514, 0
        %531 = vst.msk [vmem:[#allocation3 + $0x40] sm:$0xf] %vm514, 0
        %532 = vst.msk [vmem:[#allocation3 + $0x44] sm:$0xf] %vm514, 0
        %533 = vst.msk [vmem:[#allocation3 + $0x48] sm:$0xf] %vm514, 0
        %534 = vst.msk [vmem:[#allocation3 + $0x4c] sm:$0xf] %vm514, 0
        %535 = vst.msk [vmem:[#allocation3 + $0x50] sm:$0xf] %vm514, 0
        %536 = vst.msk [vmem:[#allocation3 + $0x54] sm:$0xf] %vm514, 0
        %537 = vst.msk [vmem:[#allocation3 + $0x58] sm:$0xf] %vm514, 0
        %538 = vst.msk [vmem:[#allocation3 + $0x5c] sm:$0xf] %vm514, 0
        %539 = vst.msk [vmem:[#allocation3 + $0x60] sm:$0xf] %vm514, 0
        %540 = vst.msk [vmem:[#allocation3 + $0x64] sm:$0xf] %vm514, 0
        %541 = vst.msk [vmem:[#allocation3 + $0x68] sm:$0xf] %vm514, 0
        %542 = vst.msk [vmem:[#allocation3 + $0x6c] sm:$0xf] %vm514, 0
        %543 = vst.msk [vmem:[#allocation3 + $0x70] sm:$0xf] %vm514, 0
        %544 = vst.msk [vmem:[#allocation3 + $0x74] sm:$0xf] %vm514, 0
        %545 = vst.msk [vmem:[#allocation3 + $0x78] sm:$0xf] %vm514, 0
        %546 = vst.msk [vmem:[#allocation3 + $0x7c] sm:$0xf] %vm514, 0
        %547 = vst.msk [vmem:[#allocation3 + $0x80] sm:$0xf] %vm514, 0
        %548 = vst.msk [vmem:[#allocation3 + $0x84] sm:$0xf] %vm514, 0
        %549 = vst.msk [vmem:[#allocation3 + $0x88] sm:$0xf] %vm514, 0
        %550 = vst.msk [vmem:[#allocation3 + $0x8c] sm:$0xf] %vm514, 0
        %551 = vst.msk [vmem:[#allocation3 + $0x90] sm:$0xf] %vm514, 0
        %552 = vst.msk [vmem:[#allocation3 + $0x94] sm:$0xf] %vm514, 0
        %553 = vst.msk [vmem:[#allocation3 + $0x98] sm:$0xf] %vm514, 0
        %554 = vst.msk [vmem:[#allocation3 + $0x9c] sm:$0xf] %vm514, 0
        %555 = vst.msk [vmem:[#allocation3 + $0xa0] sm:$0xf] %vm514, 0
        %556 = vst.msk [vmem:[#allocation3 + $0xa4] sm:$0xf] %vm514, 0
        %557 = vst.msk [vmem:[#allocation3 + $0xa8] sm:$0xf] %vm514, 0
        %558 = vst.msk [vmem:[#allocation3 + $0xac] sm:$0xf] %vm514, 0
        %559 = vst.msk [vmem:[#allocation3 + $0xb0] sm:$0xf] %vm514, 0
        %560 = vst.msk [vmem:[#allocation3 + $0xb4] sm:$0xf] %vm514, 0
        %561 = vst.msk [vmem:[#allocation3 + $0xb8] sm:$0xf] %vm514, 0
        %562 = vst.msk [vmem:[#allocation3 + $0xbc] sm:$0xf] %vm514, 0
        %563 = vst.msk [vmem:[#allocation3 + $0xc0] sm:$0xf] %vm514, 0
        %564 = vst.msk [vmem:[#allocation3 + $0xc4] sm:$0xf] %vm514, 0
        %565 = vst.msk [vmem:[#allocation3 + $0xc8] sm:$0xf] %vm514, 0
        %566 = vst.msk [vmem:[#allocation3 + $0xcc] sm:$0xf] %vm514, 0
        %567 = vst.msk [vmem:[#allocation3 + $0xd0] sm:$0xf] %vm514, 0
        %568 = vst.msk [vmem:[#allocation3 + $0xd4] sm:$0xf] %vm514, 0
        %569 = vst.msk [vmem:[#allocation3 + $0xd8] sm:$0xf] %vm514, 0
        %570 = vst.msk [vmem:[#allocation3 + $0xdc] sm:$0xf] %vm514, 0
        %571 = vst.msk [vmem:[#allocation3 + $0xe0] sm:$0xf] %vm514, 0
        %572 = vst.msk [vmem:[#allocation3 + $0xe4] sm:$0xf] %vm514, 0
        %573 = vst.msk [vmem:[#allocation3 + $0xe8] sm:$0xf] %vm514, 0
        %574 = vst.msk [vmem:[#allocation3 + $0xec] sm:$0xf] %vm514, 0
        %575 = vst.msk [vmem:[#allocation3 + $0xf0] sm:$0xf] %vm514, 0
        %576 = vst.msk [vmem:[#allocation3 + $0xf4] sm:$0xf] %vm514, 0
        %577 = vst.msk [vmem:[#allocation3 + $0xf8] sm:$0xf] %vm514, 0
        %578 = vst.msk [vmem:[#allocation3 + $0xfc] sm:$0xf] %vm514, 0
        %579 = vst.msk [vmem:[#allocation3 + $0x100] sm:$0xf] %vm514, 0
        %580 = vst.msk [vmem:[#allocation3 + $0x104] sm:$0xf] %vm514, 0
        %581 = vst.msk [vmem:[#allocation3 + $0x108] sm:$0xf] %vm514, 0
        %582 = vst.msk [vmem:[#allocation3 + $0x10c] sm:$0xf] %vm514, 0
        %583 = vst.msk [vmem:[#allocation3 + $0x110] sm:$0xf] %vm514, 0
        %584 = vst.msk [vmem:[#allocation3 + $0x114] sm:$0xf] %vm514, 0
        %585 = vst.msk [vmem:[#allocation3 + $0x118] sm:$0xf] %vm514, 0
        %586 = vst.msk [vmem:[#allocation3 + $0x11c] sm:$0xf] %vm514, 0
        %v587 = vld [vmem:[%s383] sm:$0xf]
        %v588 = vld [vmem:[%s383 + $0x4] sm:$0xf]
        %v589 = vld [vmem:[%s383 + $0x8] sm:$0xf]
        %v590 = vld [vmem:[%s383 + $0xc] sm:$0xf]
        %v591 = vld [vmem:[%s383 + $0x10] sm:$0xf]
        %v592 = vld [vmem:[%s383 + $0x14] sm:$0xf]
        %v593 = vld [vmem:[%s383 + $0x18] sm:$0xf]
        %v594 = vld [vmem:[%s383 + $0x1c] sm:$0xf]
        %v595 = vld [vmem:[%s383 + $0x20] sm:$0xf]
        %v596 = vld [vmem:[%s383 + $0x24] sm:$0xf]
        %v597 = vld [vmem:[%s383 + $0x28] sm:$0xf]
        %v598 = vld [vmem:[%s383 + $0x2c] sm:$0xf]
        %v599 = vld [vmem:[%s383 + $0x30] sm:$0xf]
        %v600 = vld [vmem:[%s383 + $0x34] sm:$0xf]
        %v601 = vld [vmem:[%s383 + $0x38] sm:$0xf]
        %v602 = vld [vmem:[%s383 + $0x3c] sm:$0xf]
        %v603 = vld [vmem:[%s383 + $0x40] sm:$0xf]
        %v604 = vld [vmem:[%s383 + $0x44] sm:$0xf]
        %v605 = vld [vmem:[%s383 + $0x48] sm:$0xf]
        %v606 = vld [vmem:[%s383 + $0x4c] sm:$0xf]
        %v607 = vld [vmem:[%s383 + $0x50] sm:$0xf]
        %v608 = vld [vmem:[%s383 + $0x54] sm:$0xf]
        %v609 = vld [vmem:[%s383 + $0x58] sm:$0xf]
        %v610 = vld [vmem:[%s383 + $0x5c] sm:$0xf]
        %v611 = vld [vmem:[%s383 + $0x60] sm:$0xf]
        %v612 = vld [vmem:[%s383 + $0x64] sm:$0xf]
        %v613 = vld [vmem:[%s383 + $0x68] sm:$0xf]
        %v614 = vld [vmem:[%s383 + $0x6c] sm:$0xf]
        %v615 = vld [vmem:[%s383 + $0x70] sm:$0xf]
        %v616 = vld [vmem:[%s383 + $0x74] sm:$0xf]
        %v617 = vld [vmem:[%s383 + $0x78] sm:$0xf]
        %v618 = vld [vmem:[%s383 + $0x7c] sm:$0xf]
        %v619 = vld [vmem:[%s383 + $0x80] sm:$0xf]
        %v620 = vld [vmem:[%s383 + $0x84] sm:$0xf]
        %v621 = vld [vmem:[%s383 + $0x88] sm:$0xf]
        %v622 = vld [vmem:[%s383 + $0x8c] sm:$0xf]
        %v623 = vld [vmem:[%s383 + $0x90] sm:$0xf]
        %v624 = vld [vmem:[%s383 + $0x94] sm:$0xf]
        %v625 = vld [vmem:[%s383 + $0x98] sm:$0xf]
        %v626 = vld [vmem:[%s383 + $0x9c] sm:$0xf]
        %v627 = vld [vmem:[%s383 + $0xa0] sm:$0xf]
        %v628 = vld [vmem:[%s383 + $0xa4] sm:$0xf]
        %v629 = vld [vmem:[%s383 + $0xa8] sm:$0xf]
        %v630 = vld [vmem:[%s383 + $0xac] sm:$0xf]
        %v631 = vld [vmem:[%s383 + $0xb0] sm:$0xf]
        %v632 = vld [vmem:[%s383 + $0xb4] sm:$0xf]
        %v633 = vld [vmem:[%s383 + $0xb8] sm:$0xf]
        %v634 = vld [vmem:[%s383 + $0xbc] sm:$0xf]
        %v635 = vld [vmem:[%s383 + $0xc0] sm:$0xf]
        %v636 = vld [vmem:[%s383 + $0xc4] sm:$0xf]
        %v637 = vld [vmem:[%s383 + $0xc8] sm:$0xf]
        %v638 = vld [vmem:[%s383 + $0xcc] sm:$0xf]
        %v639 = vld [vmem:[%s383 + $0xd0] sm:$0xf]
        %v640 = vld [vmem:[%s383 + $0xd4] sm:$0xf]
        %v641 = vld [vmem:[%s383 + $0xd8] sm:$0xf]
        %v642 = vld [vmem:[%s383 + $0xdc] sm:$0xf]
        %v643 = vld [vmem:[%s383 + $0xe0] sm:$0xf]
        %v644 = vld [vmem:[%s383 + $0xe4] sm:$0xf]
        %v645 = vld [vmem:[%s383 + $0xe8] sm:$0xf]
        %v646 = vld [vmem:[%s383 + $0xec] sm:$0xf]
        %v647 = vld [vmem:[%s383 + $0xf0] sm:$0xf]
        %v648 = vld [vmem:[%s383 + $0xf4] sm:$0xf]
        %v649 = vld [vmem:[%s383 + $0xf8] sm:$0xf]
        %v650 = vld [vmem:[%s383 + $0xfc] sm:$0xf]
        %v651 = vld [vmem:[%s383 + $0x100] sm:$0xf]
        %v652 = vld [vmem:[%s383 + $0x104] sm:$0xf]
        %v653 = vld [vmem:[%s383 + $0x108] sm:$0xf]
        %v654 = vld [vmem:[%s383 + $0x10c] sm:$0xf]
        %v655 = vld [vmem:[%s383 + $0x110] sm:$0xf]
        %v656 = vld [vmem:[%s383 + $0x114] sm:$0xf]
        %v657 = vld [vmem:[%s383 + $0x118] sm:$0xf]
        %v658 = vld [vmem:[%s383 + $0x11c] sm:$0xf]
        %v659 = vld [vmem:[%s383 + $0x120] sm:$0xf]
        %v660 = vld [vmem:[%s383 + $0x124] sm:$0xf]
        %v661 = vld [vmem:[%s383 + $0x128] sm:$0xf]
        %v662 = vld [vmem:[%s383 + $0x12c] sm:$0xf]
        %v663 = vld [vmem:[%s383 + $0x130] sm:$0xf]
        %v664 = vld [vmem:[%s383 + $0x134] sm:$0xf]
        %v665 = vld [vmem:[%s383 + $0x138] sm:$0xf]
        %v666 = vld [vmem:[%s383 + $0x13c] sm:$0xf]
        %v667 = vld [vmem:[%s383 + $0x140] sm:$0xf]
        %v668 = vld [vmem:[%s383 + $0x144] sm:$0xf]
        %v669 = vld [vmem:[%s383 + $0x148] sm:$0xf]
        %v670 = vld [vmem:[%s383 + $0x14c] sm:$0xf]
        %v671 = vld [vmem:[%s383 + $0x150] sm:$0xf]
        %v672 = vld [vmem:[%s383 + $0x154] sm:$0xf]
        %v673 = vld [vmem:[%s383 + $0x158] sm:$0xf]
        %v674 = vld [vmem:[%s383 + $0x15c] sm:$0xf]
        %v675 = vld [vmem:[%s383 + $0x160] sm:$0xf]
        %v676 = vld [vmem:[%s383 + $0x164] sm:$0xf]
        %v677 = vld [vmem:[%s383 + $0x168] sm:$0xf]
        %v678 = vld [vmem:[%s383 + $0x16c] sm:$0xf]
        %v679 = vld [vmem:[%s383 + $0x170] sm:$0xf]
        %v680 = vld [vmem:[%s383 + $0x174] sm:$0xf]
        %v681 = vld [vmem:[%s383 + $0x178] sm:$0xf]
        %v682 = vld [vmem:[%s383 + $0x17c] sm:$0xf]
        %v683 = vld [vmem:[%s383 + $0x180] sm:$0xf]
        %v684 = vld [vmem:[%s383 + $0x184] sm:$0xf]
        %v685 = vld [vmem:[%s383 + $0x188] sm:$0xf]
        %v686 = vld [vmem:[%s383 + $0x18c] sm:$0xf]
        %v687 = vld [vmem:[%s383 + $0x190] sm:$0xf]
        %v688 = vld [vmem:[%s383 + $0x194] sm:$0xf]
        %v689 = vld [vmem:[%s383 + $0x198] sm:$0xf]
        %v690 = vld [vmem:[%s383 + $0x19c] sm:$0xf]
        %v691 = vld [vmem:[%s383 + $0x1a0] sm:$0xf]
        %v692 = vld [vmem:[%s383 + $0x1a4] sm:$0xf]
        %v693 = vld [vmem:[%s383 + $0x1a8] sm:$0xf]
        %v694 = vld [vmem:[%s383 + $0x1ac] sm:$0xf]
        %v695 = vld [vmem:[%s383 + $0x1b0] sm:$0xf]
        %v696 = vld [vmem:[%s383 + $0x1b4] sm:$0xf]
        %v697 = vld [vmem:[%s383 + $0x1b8] sm:$0xf]
        %v698 = vld [vmem:[%s383 + $0x1bc] sm:$0xf]
        %v699 = vld [vmem:[%s383 + $0x1c0] sm:$0xf]
        %v700 = vld [vmem:[%s383 + $0x1c4] sm:$0xf]
        %v701 = vld [vmem:[%s383 + $0x1c8] sm:$0xf]
        %v702 = vld [vmem:[%s383 + $0x1cc] sm:$0xf]
        %v703 = vld [vmem:[%s383 + $0x1d0] sm:$0xf]
        %v704 = vld [vmem:[%s383 + $0x1d4] sm:$0xf]
        %v705 = vld [vmem:[%s383 + $0x1d8] sm:$0xf]
        %v706 = vld [vmem:[%s383 + $0x1dc] sm:$0xf]
        %v707 = vld [vmem:[%s383 + $0x1e0] sm:$0xf]
        %v708 = vld [vmem:[%s383 + $0x1e4] sm:$0xf]
        %v709 = vld [vmem:[%s383 + $0x1e8] sm:$0xf]
        %v710 = vld [vmem:[%s383 + $0x1ec] sm:$0xf]
        %v711 = vld [vmem:[%s383 + $0x1f0] sm:$0xf]
        %v712 = vld [vmem:[%s383 + $0x1f4] sm:$0xf]
        %v713 = vld [vmem:[%s383 + $0x1f8] sm:$0xf]
        %v714 = vld [vmem:[%s383 + $0x1fc] sm:$0xf]
        %v715 = vld [vmem:[%s1] sm:$0xf]
        %v716 = vld [vmem:[%s1 + $0x4] sm:$0xf]
        %v717 = vld [vmem:[%s1 + $0x8] sm:$0xf]
        %v718 = vld [vmem:[%s1 + $0xc] sm:$0x3]
        %v719 = vld [vmem:[%s2] sm:$0x1]
        %v721 = vlaneseq
        %v722 = vshrl.u32 %v721, 7
        %v723 = vsub.s32 0, %v722
        %v724 = vrot.slane %v719, %v723
        %v854 = vunpack.c.l.b16 %v587
        %v855 = vunpack.c.l.b16 %v588
        %v856 = vunpack.c.l.b16 %v589
        %v857 = vunpack.c.l.b16 %v590
        %v858 = vunpack.c.l.b16 %v591
        %v859 = vunpack.c.l.b16 %v592
        %v860 = vunpack.c.l.b16 %v593
        %v861 = vunpack.c.l.b16 %v594
        %v862 = vunpack.c.l.b16 %v595
        %v863 = vunpack.c.l.b16 %v596
        %v864 = vunpack.c.l.b16 %v597
        %v865 = vunpack.c.l.b16 %v598
        %v866 = vunpack.c.l.b16 %v599
        %v867 = vunpack.c.l.b16 %v600
        %v868 = vunpack.c.l.b16 %v601
        %v869 = vunpack.c.l.b16 %v602
        %v870 = vunpack.c.l.b16 %v603
        %v871 = vunpack.c.l.b16 %v604
        %v872 = vunpack.c.l.b16 %v605
        %v873 = vunpack.c.l.b16 %v606
        %v874 = vunpack.c.l.b16 %v607
        %v875 = vunpack.c.l.b16 %v608
        %v876 = vunpack.c.l.b16 %v609
        %v877 = vunpack.c.l.b16 %v610
        %v878 = vunpack.c.l.b16 %v611
        %v879 = vunpack.c.l.b16 %v612
        %v880 = vunpack.c.l.b16 %v613
        %v881 = vunpack.c.l.b16 %v614
        %v882 = vunpack.c.l.b16 %v615
        %v883 = vunpack.c.l.b16 %v616
        %v884 = vunpack.c.l.b16 %v617
        %v885 = vunpack.c.l.b16 %v618
        %v886 = vunpack.c.l.b16 %v619
        %v887 = vunpack.c.l.b16 %v620
        %v888 = vunpack.c.l.b16 %v621
        %v889 = vunpack.c.l.b16 %v622
        %v890 = vunpack.c.l.b16 %v623
        %v891 = vunpack.c.l.b16 %v624
        %v892 = vunpack.c.l.b16 %v625
        %v893 = vunpack.c.l.b16 %v626
        %v894 = vunpack.c.l.b16 %v627
        %v895 = vunpack.c.l.b16 %v628
        %v896 = vunpack.c.l.b16 %v629
        %v897 = vunpack.c.l.b16 %v630
        %v898 = vunpack.c.l.b16 %v631
        %v899 = vunpack.c.l.b16 %v632
        %v900 = vunpack.c.l.b16 %v633
        %v901 = vunpack.c.l.b16 %v634
        %v902 = vunpack.c.l.b16 %v635
        %v903 = vunpack.c.l.b16 %v636
        %v904 = vunpack.c.l.b16 %v637
        %v905 = vunpack.c.l.b16 %v638
        %v906 = vunpack.c.l.b16 %v639
        %v907 = vunpack.c.l.b16 %v640
        %v908 = vunpack.c.l.b16 %v641
        %v909 = vunpack.c.l.b16 %v642
        %v910 = vunpack.c.l.b16 %v643
        %v911 = vunpack.c.l.b16 %v644
        %v912 = vunpack.c.l.b16 %v645
        %v913 = vunpack.c.l.b16 %v646
        %v914 = vunpack.c.l.b16 %v647
        %v915 = vunpack.c.l.b16 %v648
        %v916 = vunpack.c.l.b16 %v649
        %v917 = vunpack.c.l.b16 %v650
        %v918 = vunpack.c.l.b16 %v651
        %v919 = vunpack.c.l.b16 %v652
        %v920 = vunpack.c.l.b16 %v653
        %v921 = vunpack.c.l.b16 %v654
        %v922 = vunpack.c.l.b16 %v655
        %v923 = vunpack.c.l.b16 %v656
        %v924 = vunpack.c.l.b16 %v657
        %v925 = vunpack.c.l.b16 %v658
        %v926 = vunpack.c.l.b16 %v659
        %v927 = vunpack.c.l.b16 %v660
        %v928 = vunpack.c.l.b16 %v661
        %v929 = vunpack.c.l.b16 %v662
        %v930 = vunpack.c.l.b16 %v663
        %v931 = vunpack.c.l.b16 %v664
        %v932 = vunpack.c.l.b16 %v665
        %v933 = vunpack.c.l.b16 %v666
        %v934 = vunpack.c.l.b16 %v667
        %v935 = vunpack.c.l.b16 %v668
        %v936 = vunpack.c.l.b16 %v669
        %v937 = vunpack.c.l.b16 %v670
        %v938 = vunpack.c.l.b16 %v671
        %v939 = vunpack.c.l.b16 %v672
        %v940 = vunpack.c.l.b16 %v673
        %v941 = vunpack.c.l.b16 %v674
        %v942 = vunpack.c.l.b16 %v675
        %v943 = vunpack.c.l.b16 %v676
        %v944 = vunpack.c.l.b16 %v677
        %v945 = vunpack.c.l.b16 %v678
        %v946 = vunpack.c.l.b16 %v679
        %v947 = vunpack.c.l.b16 %v680
        %v948 = vunpack.c.l.b16 %v681
        %v949 = vunpack.c.l.b16 %v682
        %v950 = vunpack.c.l.b16 %v683
        %v951 = vunpack.c.l.b16 %v684
        %v952 = vunpack.c.l.b16 %v685
        %v953 = vunpack.c.l.b16 %v686
        %v954 = vunpack.c.l.b16 %v687
        %v955 = vunpack.c.l.b16 %v688
        %v956 = vunpack.c.l.b16 %v689
        %v957 = vunpack.c.l.b16 %v690
        %v958 = vunpack.c.l.b16 %v691
        %v959 = vunpack.c.l.b16 %v692
        %v960 = vunpack.c.l.b16 %v693
        %v961 = vunpack.c.l.b16 %v694
        %v962 = vunpack.c.l.b16 %v695
        %v963 = vunpack.c.l.b16 %v696
        %v964 = vunpack.c.l.b16 %v697
        %v965 = vunpack.c.l.b16 %v698
        %v966 = vunpack.c.l.b16 %v699
        %v967 = vunpack.c.l.b16 %v700
        %v968 = vunpack.c.l.b16 %v701
        %v969 = vunpack.c.l.b16 %v702
        %v970 = vunpack.c.l.b16 %v703
        %v971 = vunpack.c.l.b16 %v704
        %v972 = vunpack.c.l.b16 %v705
        %v973 = vunpack.c.l.b16 %v706
        %v974 = vunpack.c.l.b16 %v707
        %v975 = vunpack.c.l.b16 %v708
        %v976 = vunpack.c.l.b16 %v709
        %v977 = vunpack.c.l.b16 %v710
        %v978 = vunpack.c.l.b16 %v711
        %v979 = vunpack.c.l.b16 %v712
        %v980 = vunpack.c.l.b16 %v713
        %v981 = vunpack.c.l.b16 %v714
        %v982 = vpack.c.b16 %v855, %v854
        %v983 = vpack.c.b16 %v857, %v856
        %v984 = vpack.c.b16 %v859, %v858
        %v985 = vpack.c.b16 %v861, %v860
        %v986 = vpack.c.b16 %v863, %v862
        %v987 = vpack.c.b16 %v865, %v864
        %v988 = vpack.c.b16 %v867, %v866
        %v989 = vpack.c.b16 %v869, %v868
        %v990 = vpack.c.b16 %v871, %v870
        %v991 = vpack.c.b16 %v873, %v872
        %v992 = vpack.c.b16 %v875, %v874
        %v993 = vpack.c.b16 %v877, %v876
        %v994 = vpack.c.b16 %v879, %v878
        %v995 = vpack.c.b16 %v881, %v880
        %v996 = vpack.c.b16 %v883, %v882
        %v997 = vpack.c.b16 %v885, %v884
        %v998 = vpack.c.b16 %v887, %v886
        %v999 = vpack.c.b16 %v889, %v888
        %v1000 = vpack.c.b16 %v891, %v890
        %v1001 = vpack.c.b16 %v893, %v892
        %v1002 = vpack.c.b16 %v895, %v894
        %v1003 = vpack.c.b16 %v897, %v896
        %v1004 = vpack.c.b16 %v899, %v898
        %v1005 = vpack.c.b16 %v901, %v900
        %v1006 = vpack.c.b16 %v903, %v902
        %v1007 = vpack.c.b16 %v905, %v904
        %v1008 = vpack.c.b16 %v907, %v906
        %v1009 = vpack.c.b16 %v909, %v908
        %v1010 = vpack.c.b16 %v911, %v910
        %v1011 = vpack.c.b16 %v913, %v912
        %v1012 = vpack.c.b16 %v915, %v914
        %v1013 = vpack.c.b16 %v917, %v916
        %v1014 = vpack.c.b16 %v919, %v918
        %v1015 = vpack.c.b16 %v921, %v920
        %v1016 = vpack.c.b16 %v923, %v922
        %v1017 = vpack.c.b16 %v925, %v924
        %v1018 = vpack.c.b16 %v927, %v926
        %v1019 = vpack.c.b16 %v929, %v928
        %v1020 = vpack.c.b16 %v931, %v930
        %v1021 = vpack.c.b16 %v933, %v932
        %v1022 = vpack.c.b16 %v935, %v934
        %v1023 = vpack.c.b16 %v937, %v936
        %v1024 = vpack.c.b16 %v939, %v938
        %v1025 = vpack.c.b16 %v941, %v940
        %v1026 = vpack.c.b16 %v943, %v942
        %v1027 = vpack.c.b16 %v945, %v944
        %v1028 = vpack.c.b16 %v947, %v946
        %v1029 = vpack.c.b16 %v949, %v948
        %v1030 = vpack.c.b16 %v951, %v950
        %v1031 = vpack.c.b16 %v953, %v952
        %v1032 = vpack.c.b16 %v955, %v954
        %v1033 = vpack.c.b16 %v957, %v956
        %v1034 = vpack.c.b16 %v959, %v958
        %v1035 = vpack.c.b16 %v961, %v960
        %v1036 = vpack.c.b16 %v963, %v962
        %v1037 = vpack.c.b16 %v965, %v964
        %v1038 = vpack.c.b16 %v967, %v966
        %v1039 = vpack.c.b16 %v969, %v968
        %v1040 = vpack.c.b16 %v971, %v970
        %v1041 = vpack.c.b16 %v973, %v972
        %v1042 = vpack.c.b16 %v975, %v974
        %v1043 = vpack.c.b16 %v977, %v976
        %v1044 = vpack.c.b16 %v979, %v978
        %v1045 = vpack.c.b16 %v981, %v980
        %v1050 = vunpack.c.l.b16 %v715
        %v1051 = vunpack.c.l.b16 %v716
        %v1052 = vunpack.c.l.b16 %v717
        %v1053 = vunpack.c.l.b16 %v718
        %v1054 = vpack.c.b16 %v1051, %v1050
        %v1055 = vpack.c.b16 %v1053, %v1052
        %vm1057 = vcmask 220160
        %v1059 = vsel %vm1057, %v982, 0
        %v1062 = vsel %vm1057, %v983, 0
        %v1065 = vsel %vm1057, %v984, 0
        %v1068 = vsel %vm1057, %v985, 0
        %v1071 = vsel %vm1057, %v986, 0
        %v1074 = vsel %vm1057, %v987, 0
        %v1077 = vsel %vm1057, %v988, 0
        %v1080 = vsel %vm1057, %v989, 0
        %v1083 = vsel %vm1057, %v990, 0
        %v1086 = vsel %vm1057, %v991, 0
        %v1089 = vsel %vm1057, %v992, 0
        %v1092 = vsel %vm1057, %v993, 0
        %v1095 = vsel %vm1057, %v994, 0
        %v1098 = vsel %vm1057, %v995, 0
        %v1101 = vsel %vm1057, %v996, 0
        %v1104 = vsel %vm1057, %v997, 0
        %v1107 = vsel %vm1057, %v998, 0
        %v1110 = vsel %vm1057, %v999, 0
        %v1113 = vsel %vm1057, %v1000, 0
        %v1116 = vsel %vm1057, %v1001, 0
        %v1119 = vsel %vm1057, %v1002, 0
        %v1122 = vsel %vm1057, %v1003, 0
        %v1125 = vsel %vm1057, %v1004, 0
        %v1128 = vsel %vm1057, %v1005, 0
        %v1131 = vsel %vm1057, %v1006, 0
        %v1134 = vsel %vm1057, %v1007, 0
        %v1137 = vsel %vm1057, %v1008, 0
        %v1140 = vsel %vm1057, %v1009, 0
        %v1143 = vsel %vm1057, %v1010, 0
        %v1146 = vsel %vm1057, %v1011, 0
        %v1149 = vsel %vm1057, %v1012, 0
        %v1152 = vsel %vm1057, %v1013, 0
        %v1155 = vsel %vm1057, %v1014, 0
        %v1158 = vsel %vm1057, %v1015, 0
        %v1161 = vsel %vm1057, %v1016, 0
        %v1164 = vsel %vm1057, %v1017, 0
        %v1167 = vsel %vm1057, %v1018, 0
        %v1170 = vsel %vm1057, %v1019, 0
        %v1173 = vsel %vm1057, %v1020, 0
        %v1176 = vsel %vm1057, %v1021, 0
        %v1179 = vsel %vm1057, %v1022, 0
        %v1182 = vsel %vm1057, %v1023, 0
        %v1185 = vsel %vm1057, %v1024, 0
        %v1188 = vsel %vm1057, %v1025, 0
        %v1191 = vsel %vm1057, %v1026, 0
        %v1194 = vsel %vm1057, %v1027, 0
        %v1197 = vsel %vm1057, %v1028, 0
        %v1200 = vsel %vm1057, %v1029, 0
        %v1203 = vsel %vm1057, %v1030, 0
        %v1206 = vsel %vm1057, %v1031, 0
        %v1209 = vsel %vm1057, %v1032, 0
        %v1212 = vsel %vm1057, %v1033, 0
        %v1215 = vsel %vm1057, %v1034, 0
        %v1218 = vsel %vm1057, %v1035, 0
        %v1221 = vsel %vm1057, %v1036, 0
        %v1224 = vsel %vm1057, %v1037, 0
        %v1227 = vsel %vm1057, %v1038, 0
        %v1230 = vsel %vm1057, %v1039, 0
        %v1233 = vsel %vm1057, %v1040, 0
        %v1236 = vsel %vm1057, %v1041, 0
        %v1239 = vsel %vm1057, %v1042, 0
        %v1242 = vsel %vm1057, %v1043, 0
        %v1245 = vsel %vm1057, %v1044, 0
        %v1248 = vsel %vm1057, %v1045, 0
        %vm1250 = vcmask 1044480
        %vm1251 = vcmask 1045504
        %v1252 = vsel %vm1250, 4294967295, 65535
        %v1253 = vsel %vm1251, %v1252, 0
        %v1255 = vand.u32 %v1055, %v1253
        %1257 = vmatprep.subr.bf16.mxu0 0
        %1258 = vmatpush1.bf16.msra.mxu0 0
        %1259 = vmatprep.subr.bf16.mxu0 0
        %1260 = vmatpush1.bf16.msra.mxu0 0
        %1261 = vmatprep.subr.bf16.mxu0 0
        %1262 = vmatpush1.bf16.msra.mxu0 0
        %1263 = vmatprep.subr.bf16.mxu0 0
        %1264 = vmatpush1.bf16.msra.mxu0 0
        %1265 = vmatprep.subr.bf16.mxu0 0
        %1266 = vmatpush1.bf16.msra.mxu0 0
        %1267 = vmatprep.subr.bf16.mxu0 0
        %1268 = vmatpush1.bf16.msra.mxu0 0
        %1269 = vmatprep.subr.bf16.mxu0 0
        %1270 = vmatpush1.bf16.msra.mxu0 %v1255
        %1271 = vmatprep.subr.bf16.mxu0 0
        %1272 = vmatpush1.bf16.msra.mxu0 %v1054
        %1273 = vmatprep.subr.bf16.mxu0 0
        %1274 = vmatpush2.bf16.msra.mxu0 0
        %1275 = vmatprep.subr.bf16.mxu0 0
        %1276 = vmatpush2.bf16.msra.mxu0 0
        %1277 = vmatprep.subr.bf16.mxu0 0
        %1278 = vmatpush2.bf16.msra.mxu0 0
        %1279 = vmatprep.subr.bf16.mxu0 0
        %1280 = vmatpush2.bf16.msra.mxu0 0
        %1281 = vmatprep.subr.bf16.mxu0 0
        %1282 = vmatpush2.bf16.msra.mxu0 0
        %1283 = vmatprep.subr.bf16.mxu0 0
        %1284 = vmatpush2.bf16.msra.mxu0 0
        %1285 = vmatprep.subr.bf16.mxu0 0
        %1286 = vmatpush2.bf16.msra.mxu0 0
        %1287 = vmatprep.subr.bf16.mxu0 0
        %1288 = vmatpush2.bf16.msra.mxu0 0
        %1289 = vmatprep.mubr.bf16.mxu0 0
        %1290 = vmatmul.mubr.bf16.gmra.mxu0 %v1059
        %v1291 = vpop.f32.mrf.mxu0
        %v1292 = vadd.f32 %v724, %v1291
        %v1293 = vpop.f32.mrf.mxu0
        %v1294 = vpop.f32.mrf.mxu0
        %v1295 = vadd.f32 %v724, %v1294
        %v1296 = vpop.f32.mrf.mxu0
        %1297 = vmatprep.mubr.bf16.mxu0 0
        %1298 = vmatmul.mubr.bf16.gmra.mxu0 %v1062
        %v1299 = vpop.f32.mrf.mxu0
        %v1300 = vadd.f32 %v724, %v1299
        %v1301 = vpop.f32.mrf.mxu0
        %v1302 = vpop.f32.mrf.mxu0
        %v1303 = vadd.f32 %v724, %v1302
        %v1304 = vpop.f32.mrf.mxu0
        %1305 = vmatprep.mubr.bf16.mxu0 0
        %1306 = vmatmul.mubr.bf16.gmra.mxu0 %v1065
        %v1307 = vpop.f32.mrf.mxu0
        %v1308 = vadd.f32 %v724, %v1307
        %v1309 = vpop.f32.mrf.mxu0
        %v1310 = vpop.f32.mrf.mxu0
        %v1311 = vadd.f32 %v724, %v1310
        %v1312 = vpop.f32.mrf.mxu0
        %1313 = vmatprep.mubr.bf16.mxu0 0
        %1314 = vmatmul.mubr.bf16.gmra.mxu0 %v1068
        %v1315 = vpop.f32.mrf.mxu0
        %v1316 = vadd.f32 %v724, %v1315
        %v1317 = vpop.f32.mrf.mxu0
        %v1318 = vpop.f32.mrf.mxu0
        %v1319 = vadd.f32 %v724, %v1318
        %v1320 = vpop.f32.mrf.mxu0
        %1321 = vmatprep.mubr.bf16.mxu0 0
        %1322 = vmatmul.mubr.bf16.gmra.mxu0 %v1071
        %v1323 = vpop.f32.mrf.mxu0
        %v1324 = vadd.f32 %v724, %v1323
        %v1325 = vpop.f32.mrf.mxu0
        %v1326 = vpop.f32.mrf.mxu0
        %v1327 = vadd.f32 %v724, %v1326
        %v1328 = vpop.f32.mrf.mxu0
        %1329 = vmatprep.mubr.bf16.mxu0 0
        %1330 = vmatmul.mubr.bf16.gmra.mxu0 %v1074
        %v1331 = vpop.f32.mrf.mxu0
        %v1332 = vadd.f32 %v724, %v1331
        %v1333 = vpop.f32.mrf.mxu0
        %v1334 = vpop.f32.mrf.mxu0
        %v1335 = vadd.f32 %v724, %v1334
        %v1336 = vpop.f32.mrf.mxu0
        %1337 = vmatprep.mubr.bf16.mxu0 0
        %1338 = vmatmul.mubr.bf16.gmra.mxu0 %v1077
        %v1339 = vpop.f32.mrf.mxu0
        %v1340 = vadd.f32 %v724, %v1339
        %v1341 = vpop.f32.mrf.mxu0
        %v1342 = vpop.f32.mrf.mxu0
        %v1343 = vadd.f32 %v724, %v1342
        %v1344 = vpop.f32.mrf.mxu0
        %1345 = vmatprep.mubr.bf16.mxu0 0
        %1346 = vmatmul.mubr.bf16.gmra.mxu0 %v1080
        %v1347 = vpop.f32.mrf.mxu0
        %v1348 = vadd.f32 %v724, %v1347
        %v1349 = vpop.f32.mrf.mxu0
        %v1350 = vpop.f32.mrf.mxu0
        %v1351 = vadd.f32 %v724, %v1350
        %v1352 = vpop.f32.mrf.mxu0
        %1353 = vmatprep.mubr.bf16.mxu0 0
        %1354 = vmatmul.mubr.bf16.gmra.mxu0 %v1083
        %v1355 = vpop.f32.mrf.mxu0
        %v1356 = vadd.f32 %v724, %v1355
        %v1357 = vpop.f32.mrf.mxu0
        %v1358 = vpop.f32.mrf.mxu0
        %v1359 = vadd.f32 %v724, %v1358
        %v1360 = vpop.f32.mrf.mxu0
        %1361 = vmatprep.mubr.bf16.mxu0 0
        %1362 = vmatmul.mubr.bf16.gmra.mxu0 %v1086
        %v1363 = vpop.f32.mrf.mxu0
        %v1364 = vadd.f32 %v724, %v1363
        %v1365 = vpop.f32.mrf.mxu0
        %v1366 = vpop.f32.mrf.mxu0
        %v1367 = vadd.f32 %v724, %v1366
        %v1368 = vpop.f32.mrf.mxu0
        %1369 = vmatprep.mubr.bf16.mxu0 0
        %1370 = vmatmul.mubr.bf16.gmra.mxu0 %v1089
        %v1371 = vpop.f32.mrf.mxu0
        %v1372 = vadd.f32 %v724, %v1371
        %v1373 = vpop.f32.mrf.mxu0
        %v1374 = vpop.f32.mrf.mxu0
        %v1375 = vadd.f32 %v724, %v1374
        %v1376 = vpop.f32.mrf.mxu0
        %1377 = vmatprep.mubr.bf16.mxu0 0
        %1378 = vmatmul.mubr.bf16.gmra.mxu0 %v1092
        %v1379 = vpop.f32.mrf.mxu0
        %v1380 = vadd.f32 %v724, %v1379
        %v1381 = vpop.f32.mrf.mxu0
        %v1382 = vpop.f32.mrf.mxu0
        %v1383 = vadd.f32 %v724, %v1382
        %v1384 = vpop.f32.mrf.mxu0
        %1385 = vmatprep.mubr.bf16.mxu0 0
        %1386 = vmatmul.mubr.bf16.gmra.mxu0 %v1095
        %v1387 = vpop.f32.mrf.mxu0
        %v1388 = vadd.f32 %v724, %v1387
        %v1389 = vpop.f32.mrf.mxu0
        %v1390 = vpop.f32.mrf.mxu0
        %v1391 = vadd.f32 %v724, %v1390
        %v1392 = vpop.f32.mrf.mxu0
        %1393 = vmatprep.mubr.bf16.mxu0 0
        %1394 = vmatmul.mubr.bf16.gmra.mxu0 %v1098
        %v1395 = vpop.f32.mrf.mxu0
        %v1396 = vadd.f32 %v724, %v1395
        %v1397 = vpop.f32.mrf.mxu0
        %v1398 = vpop.f32.mrf.mxu0
        %v1399 = vadd.f32 %v724, %v1398
        %v1400 = vpop.f32.mrf.mxu0
        %1401 = vmatprep.mubr.bf16.mxu0 0
        %1402 = vmatmul.mubr.bf16.gmra.mxu0 %v1101
        %v1403 = vpop.f32.mrf.mxu0
        %v1404 = vadd.f32 %v724, %v1403
        %v1405 = vpop.f32.mrf.mxu0
        %v1406 = vpop.f32.mrf.mxu0
        %v1407 = vadd.f32 %v724, %v1406
        %v1408 = vpop.f32.mrf.mxu0
        %1409 = vmatprep.mubr.bf16.mxu0 0
        %1410 = vmatmul.mubr.bf16.gmra.mxu0 %v1104
        %v1411 = vpop.f32.mrf.mxu0
        %v1412 = vadd.f32 %v724, %v1411
        %v1413 = vpop.f32.mrf.mxu0
        %v1414 = vpop.f32.mrf.mxu0
        %v1415 = vadd.f32 %v724, %v1414
        %v1416 = vpop.f32.mrf.mxu0
        %1417 = vmatprep.mubr.bf16.mxu0 0
        %1418 = vmatmul.mubr.bf16.gmra.mxu0 %v1107
        %v1419 = vpop.f32.mrf.mxu0
        %v1420 = vadd.f32 %v724, %v1419
        %v1421 = vpop.f32.mrf.mxu0
        %v1422 = vpop.f32.mrf.mxu0
        %v1423 = vadd.f32 %v724, %v1422
        %v1424 = vpop.f32.mrf.mxu0
        %1425 = vmatprep.mubr.bf16.mxu0 0
        %1426 = vmatmul.mubr.bf16.gmra.mxu0 %v1110
        %v1427 = vpop.f32.mrf.mxu0
        %v1428 = vadd.f32 %v724, %v1427
        %v1429 = vpop.f32.mrf.mxu0
        %v1430 = vpop.f32.mrf.mxu0
        %v1431 = vadd.f32 %v724, %v1430
        %v1432 = vpop.f32.mrf.mxu0
        %1433 = vmatprep.mubr.bf16.mxu0 0
        %1434 = vmatmul.mubr.bf16.gmra.mxu0 %v1113
        %v1435 = vpop.f32.mrf.mxu0
        %v1436 = vadd.f32 %v724, %v1435
        %v1437 = vpop.f32.mrf.mxu0
        %v1438 = vpop.f32.mrf.mxu0
        %v1439 = vadd.f32 %v724, %v1438
        %v1440 = vpop.f32.mrf.mxu0
        %1441 = vmatprep.mubr.bf16.mxu0 0
        %1442 = vmatmul.mubr.bf16.gmra.mxu0 %v1116
        %v1443 = vpop.f32.mrf.mxu0
        %v1444 = vadd.f32 %v724, %v1443
        %v1445 = vpop.f32.mrf.mxu0
        %v1446 = vpop.f32.mrf.mxu0
        %v1447 = vadd.f32 %v724, %v1446
        %v1448 = vpop.f32.mrf.mxu0
        %1449 = vmatprep.mubr.bf16.mxu0 0
        %1450 = vmatmul.mubr.bf16.gmra.mxu0 %v1119
        %v1451 = vpop.f32.mrf.mxu0
        %v1452 = vadd.f32 %v724, %v1451
        %v1453 = vpop.f32.mrf.mxu0
        %v1454 = vpop.f32.mrf.mxu0
        %v1455 = vadd.f32 %v724, %v1454
        %v1456 = vpop.f32.mrf.mxu0
        %1457 = vmatprep.mubr.bf16.mxu0 0
        %1458 = vmatmul.mubr.bf16.gmra.mxu0 %v1122
        %v1459 = vpop.f32.mrf.mxu0
        %v1460 = vadd.f32 %v724, %v1459
        %v1461 = vpop.f32.mrf.mxu0
        %v1462 = vpop.f32.mrf.mxu0
        %v1463 = vadd.f32 %v724, %v1462
        %v1464 = vpop.f32.mrf.mxu0
        %1465 = vmatprep.mubr.bf16.mxu0 0
        %1466 = vmatmul.mubr.bf16.gmra.mxu0 %v1125
        %v1467 = vpop.f32.mrf.mxu0
        %v1468 = vadd.f32 %v724, %v1467
        %v1469 = vpop.f32.mrf.mxu0
        %v1470 = vpop.f32.mrf.mxu0
        %v1471 = vadd.f32 %v724, %v1470
        %v1472 = vpop.f32.mrf.mxu0
        %1473 = vmatprep.mubr.bf16.mxu0 0
        %1474 = vmatmul.mubr.bf16.gmra.mxu0 %v1128
        %v1475 = vpop.f32.mrf.mxu0
        %v1476 = vadd.f32 %v724, %v1475
        %v1477 = vpop.f32.mrf.mxu0
        %v1478 = vpop.f32.mrf.mxu0
        %v1479 = vadd.f32 %v724, %v1478
        %v1480 = vpop.f32.mrf.mxu0
        %1481 = vmatprep.mubr.bf16.mxu0 0
        %1482 = vmatmul.mubr.bf16.gmra.mxu0 %v1131
        %v1483 = vpop.f32.mrf.mxu0
        %v1484 = vadd.f32 %v724, %v1483
        %v1485 = vpop.f32.mrf.mxu0
        %v1486 = vpop.f32.mrf.mxu0
        %v1487 = vadd.f32 %v724, %v1486
        %v1488 = vpop.f32.mrf.mxu0
        %1489 = vmatprep.mubr.bf16.mxu0 0
        %1490 = vmatmul.mubr.bf16.gmra.mxu0 %v1134
        %v1491 = vpop.f32.mrf.mxu0
        %v1492 = vadd.f32 %v724, %v1491
        %v1493 = vpop.f32.mrf.mxu0
        %v1494 = vpop.f32.mrf.mxu0
        %v1495 = vadd.f32 %v724, %v1494
        %v1496 = vpop.f32.mrf.mxu0
        %1497 = vmatprep.mubr.bf16.mxu0 0
        %1498 = vmatmul.mubr.bf16.gmra.mxu0 %v1137
        %v1499 = vpop.f32.mrf.mxu0
        %v1500 = vadd.f32 %v724, %v1499
        %v1501 = vpop.f32.mrf.mxu0
        %v1502 = vpop.f32.mrf.mxu0
        %v1503 = vadd.f32 %v724, %v1502
        %v1504 = vpop.f32.mrf.mxu0
        %1505 = vmatprep.mubr.bf16.mxu0 0
        %1506 = vmatmul.mubr.bf16.gmra.mxu0 %v1140
        %v1507 = vpop.f32.mrf.mxu0
        %v1508 = vadd.f32 %v724, %v1507
        %v1509 = vpop.f32.mrf.mxu0
        %v1510 = vpop.f32.mrf.mxu0
        %v1511 = vadd.f32 %v724, %v1510
        %v1512 = vpop.f32.mrf.mxu0
        %1513 = vmatprep.mubr.bf16.mxu0 0
        %1514 = vmatmul.mubr.bf16.gmra.mxu0 %v1143
        %v1515 = vpop.f32.mrf.mxu0
        %v1516 = vadd.f32 %v724, %v1515
        %v1517 = vpop.f32.mrf.mxu0
        %v1518 = vpop.f32.mrf.mxu0
        %v1519 = vadd.f32 %v724, %v1518
        %v1520 = vpop.f32.mrf.mxu0
        %1521 = vmatprep.mubr.bf16.mxu0 0
        %1522 = vmatmul.mubr.bf16.gmra.mxu0 %v1146
        %v1523 = vpop.f32.mrf.mxu0
        %v1524 = vadd.f32 %v724, %v1523
        %v1525 = vpop.f32.mrf.mxu0
        %v1526 = vpop.f32.mrf.mxu0
        %v1527 = vadd.f32 %v724, %v1526
        %v1528 = vpop.f32.mrf.mxu0
        %1529 = vmatprep.mubr.bf16.mxu0 0
        %1530 = vmatmul.mubr.bf16.gmra.mxu0 %v1149
        %v1531 = vpop.f32.mrf.mxu0
        %v1532 = vadd.f32 %v724, %v1531
        %v1533 = vpop.f32.mrf.mxu0
        %v1534 = vpop.f32.mrf.mxu0
        %v1535 = vadd.f32 %v724, %v1534
        %v1536 = vpop.f32.mrf.mxu0
        %1537 = vmatprep.mubr.bf16.mxu0 0
        %1538 = vmatmul.mubr.bf16.gmra.mxu0 %v1152
        %v1539 = vpop.f32.mrf.mxu0
        %v1540 = vadd.f32 %v724, %v1539
        %v1541 = vpop.f32.mrf.mxu0
        %v1542 = vpop.f32.mrf.mxu0
        %v1543 = vadd.f32 %v724, %v1542
        %v1544 = vpop.f32.mrf.mxu0
        %1545 = vmatprep.mubr.bf16.mxu0 0
        %1546 = vmatmul.mubr.bf16.gmra.mxu0 %v1155
        %v1547 = vpop.f32.mrf.mxu0
        %v1548 = vadd.f32 %v724, %v1547
        %v1549 = vpop.f32.mrf.mxu0
        %v1550 = vpop.f32.mrf.mxu0
        %v1551 = vadd.f32 %v724, %v1550
        %v1552 = vpop.f32.mrf.mxu0
        %1553 = vmatprep.mubr.bf16.mxu0 0
        %1554 = vmatmul.mubr.bf16.gmra.mxu0 %v1158
        %v1555 = vpop.f32.mrf.mxu0
        %v1556 = vadd.f32 %v724, %v1555
        %v1557 = vpop.f32.mrf.mxu0
        %v1558 = vpop.f32.mrf.mxu0
        %v1559 = vadd.f32 %v724, %v1558
        %v1560 = vpop.f32.mrf.mxu0
        %1561 = vmatprep.mubr.bf16.mxu0 0
        %1562 = vmatmul.mubr.bf16.gmra.mxu0 %v1161
        %v1563 = vpop.f32.mrf.mxu0
        %v1564 = vadd.f32 %v724, %v1563
        %v1565 = vpop.f32.mrf.mxu0
        %v1566 = vpop.f32.mrf.mxu0
        %v1567 = vadd.f32 %v724, %v1566
        %v1568 = vpop.f32.mrf.mxu0
        %1569 = vmatprep.mubr.bf16.mxu0 0
        %1570 = vmatmul.mubr.bf16.gmra.mxu0 %v1164
        %v1571 = vpop.f32.mrf.mxu0
        %v1572 = vadd.f32 %v724, %v1571
        %v1573 = vpop.f32.mrf.mxu0
        %v1574 = vpop.f32.mrf.mxu0
        %v1575 = vadd.f32 %v724, %v1574
        %v1576 = vpop.f32.mrf.mxu0
        %1577 = vmatprep.mubr.bf16.mxu0 0
        %1578 = vmatmul.mubr.bf16.gmra.mxu0 %v1167
        %v1579 = vpop.f32.mrf.mxu0
        %v1580 = vadd.f32 %v724, %v1579
        %v1581 = vpop.f32.mrf.mxu0
        %v1582 = vpop.f32.mrf.mxu0
        %v1583 = vadd.f32 %v724, %v1582
        %v1584 = vpop.f32.mrf.mxu0
        %1585 = vmatprep.mubr.bf16.mxu0 0
        %1586 = vmatmul.mubr.bf16.gmra.mxu0 %v1170
        %v1587 = vpop.f32.mrf.mxu0
        %v1588 = vadd.f32 %v724, %v1587
        %v1589 = vpop.f32.mrf.mxu0
        %v1590 = vpop.f32.mrf.mxu0
        %v1591 = vadd.f32 %v724, %v1590
        %v1592 = vpop.f32.mrf.mxu0
        %1593 = vmatprep.mubr.bf16.mxu0 0
        %1594 = vmatmul.mubr.bf16.gmra.mxu0 %v1173
        %v1595 = vpop.f32.mrf.mxu0
        %v1596 = vadd.f32 %v724, %v1595
        %v1597 = vpop.f32.mrf.mxu0
        %v1598 = vpop.f32.mrf.mxu0
        %v1599 = vadd.f32 %v724, %v1598
        %v1600 = vpop.f32.mrf.mxu0
        %1601 = vmatprep.mubr.bf16.mxu0 0
        %1602 = vmatmul.mubr.bf16.gmra.mxu0 %v1176
        %v1603 = vpop.f32.mrf.mxu0
        %v1604 = vadd.f32 %v724, %v1603
        %v1605 = vpop.f32.mrf.mxu0
        %v1606 = vpop.f32.mrf.mxu0
        %v1607 = vadd.f32 %v724, %v1606
        %v1608 = vpop.f32.mrf.mxu0
        %1609 = vmatprep.mubr.bf16.mxu0 0
        %1610 = vmatmul.mubr.bf16.gmra.mxu0 %v1179
        %v1611 = vpop.f32.mrf.mxu0
        %v1612 = vadd.f32 %v724, %v1611
        %v1613 = vpop.f32.mrf.mxu0
        %v1614 = vpop.f32.mrf.mxu0
        %v1615 = vadd.f32 %v724, %v1614
        %v1616 = vpop.f32.mrf.mxu0
        %1617 = vmatprep.mubr.bf16.mxu0 0
        %1618 = vmatmul.mubr.bf16.gmra.mxu0 %v1182
        %v1619 = vpop.f32.mrf.mxu0
        %v1620 = vadd.f32 %v724, %v1619
        %v1621 = vpop.f32.mrf.mxu0
        %v1622 = vpop.f32.mrf.mxu0
        %v1623 = vadd.f32 %v724, %v1622
        %v1624 = vpop.f32.mrf.mxu0
        %1625 = vmatprep.mubr.bf16.mxu0 0
        %1626 = vmatmul.mubr.bf16.gmra.mxu0 %v1185
        %v1627 = vpop.f32.mrf.mxu0
        %v1628 = vadd.f32 %v724, %v1627
        %v1629 = vpop.f32.mrf.mxu0
        %v1630 = vpop.f32.mrf.mxu0
        %v1631 = vadd.f32 %v724, %v1630
        %v1632 = vpop.f32.mrf.mxu0
        %1633 = vmatprep.mubr.bf16.mxu0 0
        %1634 = vmatmul.mubr.bf16.gmra.mxu0 %v1188
        %v1635 = vpop.f32.mrf.mxu0
        %v1636 = vadd.f32 %v724, %v1635
        %v1637 = vpop.f32.mrf.mxu0
        %v1638 = vpop.f32.mrf.mxu0
        %v1639 = vadd.f32 %v724, %v1638
        %v1640 = vpop.f32.mrf.mxu0
        %1641 = vmatprep.mubr.bf16.mxu0 0
        %1642 = vmatmul.mubr.bf16.gmra.mxu0 %v1191
        %v1643 = vpop.f32.mrf.mxu0
        %v1644 = vadd.f32 %v724, %v1643
        %v1645 = vpop.f32.mrf.mxu0
        %v1646 = vpop.f32.mrf.mxu0
        %v1647 = vadd.f32 %v724, %v1646
        %v1648 = vpop.f32.mrf.mxu0
        %1649 = vmatprep.mubr.bf16.mxu0 0
        %1650 = vmatmul.mubr.bf16.gmra.mxu0 %v1194
        %v1651 = vpop.f32.mrf.mxu0
        %v1652 = vadd.f32 %v724, %v1651
        %v1653 = vpop.f32.mrf.mxu0
        %v1654 = vpop.f32.mrf.mxu0
        %v1655 = vadd.f32 %v724, %v1654
        %v1656 = vpop.f32.mrf.mxu0
        %1657 = vmatprep.mubr.bf16.mxu0 0
        %1658 = vmatmul.mubr.bf16.gmra.mxu0 %v1197
        %v1659 = vpop.f32.mrf.mxu0
        %v1660 = vadd.f32 %v724, %v1659
        %v1661 = vpop.f32.mrf.mxu0
        %v1662 = vpop.f32.mrf.mxu0
        %v1663 = vadd.f32 %v724, %v1662
        %v1664 = vpop.f32.mrf.mxu0
        %1665 = vmatprep.mubr.bf16.mxu0 0
        %1666 = vmatmul.mubr.bf16.gmra.mxu0 %v1200
        %v1667 = vpop.f32.mrf.mxu0
        %v1668 = vadd.f32 %v724, %v1667
        %v1669 = vpop.f32.mrf.mxu0
        %v1670 = vpop.f32.mrf.mxu0
        %v1671 = vadd.f32 %v724, %v1670
        %v1672 = vpop.f32.mrf.mxu0
        %1673 = vmatprep.mubr.bf16.mxu0 0
        %1674 = vmatmul.mubr.bf16.gmra.mxu0 %v1203
        %v1675 = vpop.f32.mrf.mxu0
        %v1676 = vadd.f32 %v724, %v1675
        %v1677 = vpop.f32.mrf.mxu0
        %v1678 = vpop.f32.mrf.mxu0
        %v1679 = vadd.f32 %v724, %v1678
        %v1680 = vpop.f32.mrf.mxu0
        %1681 = vmatprep.mubr.bf16.mxu0 0
        %1682 = vmatmul.mubr.bf16.gmra.mxu0 %v1206
        %v1683 = vpop.f32.mrf.mxu0
        %v1684 = vadd.f32 %v724, %v1683
        %v1685 = vpop.f32.mrf.mxu0
        %v1686 = vpop.f32.mrf.mxu0
        %v1687 = vadd.f32 %v724, %v1686
        %v1688 = vpop.f32.mrf.mxu0
        %1689 = vmatprep.mubr.bf16.mxu0 0
        %1690 = vmatmul.mubr.bf16.gmra.mxu0 %v1209
        %v1691 = vpop.f32.mrf.mxu0
        %v1692 = vadd.f32 %v724, %v1691
        %v1693 = vpop.f32.mrf.mxu0
        %v1694 = vpop.f32.mrf.mxu0
        %v1695 = vadd.f32 %v724, %v1694
        %v1696 = vpop.f32.mrf.mxu0
        %1697 = vmatprep.mubr.bf16.mxu0 0
        %1698 = vmatmul.mubr.bf16.gmra.mxu0 %v1212
        %v1699 = vpop.f32.mrf.mxu0
        %v1700 = vadd.f32 %v724, %v1699
        %v1701 = vpop.f32.mrf.mxu0
        %v1702 = vpop.f32.mrf.mxu0
        %v1703 = vadd.f32 %v724, %v1702
        %v1704 = vpop.f32.mrf.mxu0
        %1705 = vmatprep.mubr.bf16.mxu0 0
        %1706 = vmatmul.mubr.bf16.gmra.mxu0 %v1215
        %v1707 = vpop.f32.mrf.mxu0
        %v1708 = vadd.f32 %v724, %v1707
        %v1709 = vpop.f32.mrf.mxu0
        %v1710 = vpop.f32.mrf.mxu0
        %v1711 = vadd.f32 %v724, %v1710
        %v1712 = vpop.f32.mrf.mxu0
        %1713 = vmatprep.mubr.bf16.mxu0 0
        %1714 = vmatmul.mubr.bf16.gmra.mxu0 %v1218
        %v1715 = vpop.f32.mrf.mxu0
        %v1716 = vadd.f32 %v724, %v1715
        %v1717 = vpop.f32.mrf.mxu0
        %v1718 = vpop.f32.mrf.mxu0
        %v1719 = vadd.f32 %v724, %v1718
        %v1720 = vpop.f32.mrf.mxu0
        %1721 = vmatprep.mubr.bf16.mxu0 0
        %1722 = vmatmul.mubr.bf16.gmra.mxu0 %v1221
        %v1723 = vpop.f32.mrf.mxu0
        %v1724 = vadd.f32 %v724, %v1723
        %v1725 = vpop.f32.mrf.mxu0
        %v1726 = vpop.f32.mrf.mxu0
        %v1727 = vadd.f32 %v724, %v1726
        %v1728 = vpop.f32.mrf.mxu0
        %1729 = vmatprep.mubr.bf16.mxu0 0
        %1730 = vmatmul.mubr.bf16.gmra.mxu0 %v1224
        %v1731 = vpop.f32.mrf.mxu0
        %v1732 = vadd.f32 %v724, %v1731
        %v1733 = vpop.f32.mrf.mxu0
        %v1734 = vpop.f32.mrf.mxu0
        %v1735 = vadd.f32 %v724, %v1734
        %v1736 = vpop.f32.mrf.mxu0
        %1737 = vmatprep.mubr.bf16.mxu0 0
        %1738 = vmatmul.mubr.bf16.gmra.mxu0 %v1227
        %v1739 = vpop.f32.mrf.mxu0
        %v1740 = vadd.f32 %v724, %v1739
        %v1741 = vpop.f32.mrf.mxu0
        %v1742 = vpop.f32.mrf.mxu0
        %v1743 = vadd.f32 %v724, %v1742
        %v1744 = vpop.f32.mrf.mxu0
        %1745 = vmatprep.mubr.bf16.mxu0 0
        %1746 = vmatmul.mubr.bf16.gmra.mxu0 %v1230
        %v1747 = vpop.f32.mrf.mxu0
        %v1748 = vadd.f32 %v724, %v1747
        %v1749 = vpop.f32.mrf.mxu0
        %v1750 = vpop.f32.mrf.mxu0
        %v1751 = vadd.f32 %v724, %v1750
        %v1752 = vpop.f32.mrf.mxu0
        %1753 = vmatprep.mubr.bf16.mxu0 0
        %1754 = vmatmul.mubr.bf16.gmra.mxu0 %v1233
        %v1755 = vpop.f32.mrf.mxu0
        %v1756 = vadd.f32 %v724, %v1755
        %v1757 = vpop.f32.mrf.mxu0
        %v1758 = vpop.f32.mrf.mxu0
        %v1759 = vadd.f32 %v724, %v1758
        %v1760 = vpop.f32.mrf.mxu0
        %1761 = vmatprep.mubr.bf16.mxu0 0
        %1762 = vmatmul.mubr.bf16.gmra.mxu0 %v1236
        %v1763 = vpop.f32.mrf.mxu0
        %v1764 = vadd.f32 %v724, %v1763
        %v1765 = vpop.f32.mrf.mxu0
        %v1766 = vpop.f32.mrf.mxu0
        %v1767 = vadd.f32 %v724, %v1766
        %v1768 = vpop.f32.mrf.mxu0
        %1769 = vmatprep.mubr.bf16.mxu0 0
        %1770 = vmatmul.mubr.bf16.gmra.mxu0 %v1239
        %v1771 = vpop.f32.mrf.mxu0
        %v1772 = vadd.f32 %v724, %v1771
        %v1773 = vpop.f32.mrf.mxu0
        %v1774 = vpop.f32.mrf.mxu0
        %v1775 = vadd.f32 %v724, %v1774
        %v1776 = vpop.f32.mrf.mxu0
        %1777 = vmatprep.mubr.bf16.mxu0 0
        %1778 = vmatmul.mubr.bf16.gmra.mxu0 %v1242
        %v1779 = vpop.f32.mrf.mxu0
        %v1780 = vadd.f32 %v724, %v1779
        %v1781 = vpop.f32.mrf.mxu0
        %v1782 = vpop.f32.mrf.mxu0
        %v1783 = vadd.f32 %v724, %v1782
        %v1784 = vpop.f32.mrf.mxu0
        %1785 = vmatprep.mubr.bf16.mxu0 0
        %1786 = vmatmul.mubr.bf16.gmra.mxu0 %v1245
        %v1787 = vpop.f32.mrf.mxu0
        %v1788 = vadd.f32 %v724, %v1787
        %v1789 = vpop.f32.mrf.mxu0
        %v1790 = vpop.f32.mrf.mxu0
        %v1791 = vadd.f32 %v724, %v1790
        %v1792 = vpop.f32.mrf.mxu0
        %1793 = vmatprep.mubr.bf16.mxu0 0
        %1794 = vmatmul.mubr.bf16.gmra.mxu0 %v1248
        %v1795 = vpop.f32.mrf.mxu0
        %v1796 = vadd.f32 %v724, %v1795
        %v1797 = vpop.f32.mrf.mxu0
        %v1798 = vpop.f32.mrf.mxu0
        %v1799 = vadd.f32 %v724, %v1798
        %v1800 = vpop.f32.mrf.mxu0
        %1801 = vdwg.mxu0
        %v1802 = vmax.f32 %v1292, 0.0
        %v1803 = vmax.f32 %v1295, 0.0
        %v1804 = vmax.f32 %v1300, 0.0
        %v1805 = vmax.f32 %v1303, 0.0
        %v1806 = vmax.f32 %v1308, 0.0
        %v1807 = vmax.f32 %v1311, 0.0
        %v1808 = vmax.f32 %v1316, 0.0
        %v1809 = vmax.f32 %v1319, 0.0
        %v1810 = vmax.f32 %v1324, 0.0
        %v1811 = vmax.f32 %v1327, 0.0
        %v1812 = vmax.f32 %v1332, 0.0
        %v1813 = vmax.f32 %v1335, 0.0
        %v1814 = vmax.f32 %v1340, 0.0
        %v1815 = vmax.f32 %v1343, 0.0
        %v1816 = vmax.f32 %v1348, 0.0
        %v1817 = vmax.f32 %v1351, 0.0
        %v1818 = vmax.f32 %v1356, 0.0
        %v1819 = vmax.f32 %v1359, 0.0
        %v1820 = vmax.f32 %v1364, 0.0
        %v1821 = vmax.f32 %v1367, 0.0
        %v1822 = vmax.f32 %v1372, 0.0
        %v1823 = vmax.f32 %v1375, 0.0
        %v1824 = vmax.f32 %v1380, 0.0
        %v1825 = vmax.f32 %v1383, 0.0
        %v1826 = vmax.f32 %v1388, 0.0
        %v1827 = vmax.f32 %v1391, 0.0
        %v1828 = vmax.f32 %v1396, 0.0
        %v1829 = vmax.f32 %v1399, 0.0
        %v1830 = vmax.f32 %v1404, 0.0
        %v1831 = vmax.f32 %v1407, 0.0
        %v1832 = vmax.f32 %v1412, 0.0
        %v1833 = vmax.f32 %v1415, 0.0
        %v1834 = vmax.f32 %v1420, 0.0
        %v1835 = vmax.f32 %v1423, 0.0
        %v1836 = vmax.f32 %v1428, 0.0
        %v1837 = vmax.f32 %v1431, 0.0
        %v1838 = vmax.f32 %v1436, 0.0
        %v1839 = vmax.f32 %v1439, 0.0
        %v1840 = vmax.f32 %v1444, 0.0
        %v1841 = vmax.f32 %v1447, 0.0
        %v1842 = vmax.f32 %v1452, 0.0
        %v1843 = vmax.f32 %v1455, 0.0
        %v1844 = vmax.f32 %v1460, 0.0
        %v1845 = vmax.f32 %v1463, 0.0
        %v1846 = vmax.f32 %v1468, 0.0
        %v1847 = vmax.f32 %v1471, 0.0
        %v1848 = vmax.f32 %v1476, 0.0
        %v1849 = vmax.f32 %v1479, 0.0
        %v1850 = vmax.f32 %v1484, 0.0
        %v1851 = vmax.f32 %v1487, 0.0
        %v1852 = vmax.f32 %v1492, 0.0
        %v1853 = vmax.f32 %v1495, 0.0
        %v1854 = vmax.f32 %v1500, 0.0
        %v1855 = vmax.f32 %v1503, 0.0
        %v1856 = vmax.f32 %v1508, 0.0
        %v1857 = vmax.f32 %v1511, 0.0
        %v1858 = vmax.f32 %v1516, 0.0
        %v1859 = vmax.f32 %v1519, 0.0
        %v1860 = vmax.f32 %v1524, 0.0
        %v1861 = vmax.f32 %v1527, 0.0
        %v1862 = vmax.f32 %v1532, 0.0
        %v1863 = vmax.f32 %v1535, 0.0
        %v1864 = vmax.f32 %v1540, 0.0
        %v1865 = vmax.f32 %v1543, 0.0
        %v1866 = vmax.f32 %v1548, 0.0
        %v1867 = vmax.f32 %v1551, 0.0
        %v1868 = vmax.f32 %v1556, 0.0
        %v1869 = vmax.f32 %v1559, 0.0
        %v1870 = vmax.f32 %v1564, 0.0
        %v1871 = vmax.f32 %v1567, 0.0
        %v1872 = vmax.f32 %v1572, 0.0
        %v1873 = vmax.f32 %v1575, 0.0
        %v1874 = vmax.f32 %v1580, 0.0
        %v1875 = vmax.f32 %v1583, 0.0
        %v1876 = vmax.f32 %v1588, 0.0
        %v1877 = vmax.f32 %v1591, 0.0
        %v1878 = vmax.f32 %v1596, 0.0
        %v1879 = vmax.f32 %v1599, 0.0
        %v1880 = vmax.f32 %v1604, 0.0
        %v1881 = vmax.f32 %v1607, 0.0
        %v1882 = vmax.f32 %v1612, 0.0
        %v1883 = vmax.f32 %v1615, 0.0
        %v1884 = vmax.f32 %v1620, 0.0
        %v1885 = vmax.f32 %v1623, 0.0
        %v1886 = vmax.f32 %v1628, 0.0
        %v1887 = vmax.f32 %v1631, 0.0
        %v1888 = vmax.f32 %v1636, 0.0
        %v1889 = vmax.f32 %v1639, 0.0
        %v1890 = vmax.f32 %v1644, 0.0
        %v1891 = vmax.f32 %v1647, 0.0
        %v1892 = vmax.f32 %v1652, 0.0
        %v1893 = vmax.f32 %v1655, 0.0
        %v1894 = vmax.f32 %v1660, 0.0
        %v1895 = vmax.f32 %v1663, 0.0
        %v1896 = vmax.f32 %v1668, 0.0
        %v1897 = vmax.f32 %v1671, 0.0
        %v1898 = vmax.f32 %v1676, 0.0
        %v1899 = vmax.f32 %v1679, 0.0
        %v1900 = vmax.f32 %v1684, 0.0
        %v1901 = vmax.f32 %v1687, 0.0
        %v1902 = vmax.f32 %v1692, 0.0
        %v1903 = vmax.f32 %v1695, 0.0
        %v1904 = vmax.f32 %v1700, 0.0
        %v1905 = vmax.f32 %v1703, 0.0
        %v1906 = vmax.f32 %v1708, 0.0
        %v1907 = vmax.f32 %v1711, 0.0
        %v1908 = vmax.f32 %v1716, 0.0
        %v1909 = vmax.f32 %v1719, 0.0
        %v1910 = vmax.f32 %v1724, 0.0
        %v1911 = vmax.f32 %v1727, 0.0
        %v1912 = vmax.f32 %v1732, 0.0
        %v1913 = vmax.f32 %v1735, 0.0
        %v1914 = vmax.f32 %v1740, 0.0
        %v1915 = vmax.f32 %v1743, 0.0
        %v1916 = vmax.f32 %v1748, 0.0
        %v1917 = vmax.f32 %v1751, 0.0
        %v1918 = vmax.f32 %v1756, 0.0
        %v1919 = vmax.f32 %v1759, 0.0
        %v1920 = vmax.f32 %v1764, 0.0
        %v1921 = vmax.f32 %v1767, 0.0
        %v1922 = vmax.f32 %v1772, 0.0
        %v1923 = vmax.f32 %v1775, 0.0
        %v1924 = vmax.f32 %v1780, 0.0
        %v1925 = vmax.f32 %v1783, 0.0
        %v1926 = vmax.f32 %v1788, 0.0
        %v1927 = vmax.f32 %v1791, 0.0
        %v1928 = vmax.f32 %v1796, 0.0
        %v1929 = vmax.f32 %v1799, 0.0
        %v1930 = vmax.f32 %v1802, %v1806
        %v1931 = vmax.f32 %v1803, %v1807
        %v1932 = vmax.f32 %v1804, %v1808
        %v1933 = vmax.f32 %v1805, %v1809
        %v1934 = vmax.f32 %v1810, %v1814
        %v1935 = vmax.f32 %v1811, %v1815
        %v1936 = vmax.f32 %v1812, %v1816
        %v1937 = vmax.f32 %v1813, %v1817
        %v1938 = vmax.f32 %v1818, %v1822
        %v1939 = vmax.f32 %v1819, %v1823
        %v1940 = vmax.f32 %v1820, %v1824
        %v1941 = vmax.f32 %v1821, %v1825
        %v1942 = vmax.f32 %v1826, %v1830
        %v1943 = vmax.f32 %v1827, %v1831
        %v1944 = vmax.f32 %v1828, %v1832
        %v1945 = vmax.f32 %v1829, %v1833
        %v1946 = vmax.f32 %v1834, %v1838
        %v1947 = vmax.f32 %v1835, %v1839
        %v1948 = vmax.f32 %v1836, %v1840
        %v1949 = vmax.f32 %v1837, %v1841
        %v1950 = vmax.f32 %v1842, %v1846
        %v1951 = vmax.f32 %v1843, %v1847
        %v1952 = vmax.f32 %v1844, %v1848
        %v1953 = vmax.f32 %v1845, %v1849
        %v1954 = vmax.f32 %v1850, %v1854
        %v1955 = vmax.f32 %v1851, %v1855
        %v1956 = vmax.f32 %v1852, %v1856
        %v1957 = vmax.f32 %v1853, %v1857
        %v1958 = vmax.f32 %v1858, %v1862
        %v1959 = vmax.f32 %v1859, %v1863
        %v1960 = vmax.f32 %v1860, %v1864
        %v1961 = vmax.f32 %v1861, %v1865
        %v1962 = vmax.f32 %v1866, %v1870
        %v1963 = vmax.f32 %v1867, %v1871
        %v1964 = vmax.f32 %v1868, %v1872
        %v1965 = vmax.f32 %v1869, %v1873
        %v1966 = vmax.f32 %v1874, %v1878
        %v1967 = vmax.f32 %v1875, %v1879
        %v1968 = vmax.f32 %v1876, %v1880
        %v1969 = vmax.f32 %v1877, %v1881
        %v1970 = vmax.f32 %v1882, %v1886
        %v1971 = vmax.f32 %v1883, %v1887
        %v1972 = vmax.f32 %v1884, %v1888
        %v1973 = vmax.f32 %v1885, %v1889
        %v1974 = vmax.f32 %v1890, %v1894
        %v1975 = vmax.f32 %v1891, %v1895
        %v1976 = vmax.f32 %v1892, %v1896
        %v1977 = vmax.f32 %v1893, %v1897
        %v1978 = vmax.f32 %v1898, %v1902
        %v1979 = vmax.f32 %v1899, %v1903
        %v1980 = vmax.f32 %v1900, %v1904
        %v1981 = vmax.f32 %v1901, %v1905
        %v1982 = vmax.f32 %v1906, %v1910
        %v1983 = vmax.f32 %v1907, %v1911
        %v1984 = vmax.f32 %v1908, %v1912
        %v1985 = vmax.f32 %v1909, %v1913
        %v1986 = vmax.f32 %v1914, %v1918
        %v1987 = vmax.f32 %v1915, %v1919
        %v1988 = vmax.f32 %v1916, %v1920
        %v1989 = vmax.f32 %v1917, %v1921
        %v1990 = vmax.f32 %v1922, %v1926
        %v1991 = vmax.f32 %v1923, %v1927
        %v1992 = vmax.f32 %v1924, %v1928
        %v1993 = vmax.f32 %v1925, %v1929
        %vm1994 = vcmask 261120
        %1995 = vst.msk [vmem:[#allocation4] sm:$0xff] %vm1994, %v1930
        %1996 = vst.msk [vmem:[#allocation4 + $0x8] sm:$0xff] %vm1994, %v1931
        %1997 = vst.msk [vmem:[#allocation4 + $0x10] sm:$0xff] %vm1994, %v1932
        %1998 = vst.msk [vmem:[#allocation4 + $0x18] sm:$0xff] %vm1994, %v1933
        %1999 = vst.msk [vmem:[#allocation4 + $0x20] sm:$0xff] %vm1994, %v1934
        %2000 = vst.msk [vmem:[#allocation4 + $0x28] sm:$0xff] %vm1994, %v1935
        %2001 = vst.msk [vmem:[#allocation4 + $0x30] sm:$0xff] %vm1994, %v1936
        %2002 = vst.msk [vmem:[#allocation4 + $0x38] sm:$0xff] %vm1994, %v1937
        %2003 = vst.msk [vmem:[#allocation4 + $0x40] sm:$0xff] %vm1994, %v1938
        %2004 = vst.msk [vmem:[#allocation4 + $0x48] sm:$0xff] %vm1994, %v1939
        %2005 = vst.msk [vmem:[#allocation4 + $0x50] sm:$0xff] %vm1994, %v1940
        %2006 = vst.msk [vmem:[#allocation4 + $0x58] sm:$0xff] %vm1994, %v1941
        %2007 = vst.msk [vmem:[#allocation4 + $0x60] sm:$0xff] %vm1994, %v1942
        %2008 = vst.msk [vmem:[#allocation4 + $0x68] sm:$0xff] %vm1994, %v1943
        %2009 = vst.msk [vmem:[#allocation4 + $0x70] sm:$0xff] %vm1994, %v1944
        %2010 = vst.msk [vmem:[#allocation4 + $0x78] sm:$0xff] %vm1994, %v1945
        %2011 = vst.msk [vmem:[#allocation4 + $0x80] sm:$0xff] %vm1994, %v1946
        %2012 = vst.msk [vmem:[#allocation4 + $0x88] sm:$0xff] %vm1994, %v1947
        %2013 = vst.msk [vmem:[#allocation4 + $0x90] sm:$0xff] %vm1994, %v1948
        %2014 = vst.msk [vmem:[#allocation4 + $0x98] sm:$0xff] %vm1994, %v1949
        %2015 = vst.msk [vmem:[#allocation4 + $0xa0] sm:$0xff] %vm1994, %v1950
        %2016 = vst.msk [vmem:[#allocation4 + $0xa8] sm:$0xff] %vm1994, %v1951
        %2017 = vst.msk [vmem:[#allocation4 + $0xb0] sm:$0xff] %vm1994, %v1952
        %2018 = vst.msk [vmem:[#allocation4 + $0xb8] sm:$0xff] %vm1994, %v1953
        %2019 = vst.msk [vmem:[#allocation4 + $0xc0] sm:$0xff] %vm1994, %v1954
        %2020 = vst.msk [vmem:[#allocation4 + $0xc8] sm:$0xff] %vm1994, %v1955
        %2021 = vst.msk [vmem:[#allocation4 + $0xd0] sm:$0xff] %vm1994, %v1956
        %2022 = vst.msk [vmem:[#allocation4 + $0xd8] sm:$0xff] %vm1994, %v1957
        %2023 = vst.msk [vmem:[#allocation4 + $0xe0] sm:$0xff] %vm1994, %v1958
        %2024 = vst.msk [vmem:[#allocation4 + $0xe8] sm:$0xff] %vm1994, %v1959
        %2025 = vst.msk [vmem:[#allocation4 + $0xf0] sm:$0xff] %vm1994, %v1960
        %2026 = vst.msk [vmem:[#allocation4 + $0xf8] sm:$0xff] %vm1994, %v1961
        %2027 = vst.msk [vmem:[#allocation4 + $0x100] sm:$0xff] %vm1994, %v1962
        %2028 = vst.msk [vmem:[#allocation4 + $0x108] sm:$0xff] %vm1994, %v1963
        %2029 = vst.msk [vmem:[#allocation4 + $0x110] sm:$0xff] %vm1994, %v1964
        %2030 = vst.msk [vmem:[#allocation4 + $0x118] sm:$0xff] %vm1994, %v1965
        %2031 = vst.msk [vmem:[#allocation4 + $0x120] sm:$0xff] %vm1994, %v1966
        %2032 = vst.msk [vmem:[#allocation4 + $0x128] sm:$0xff] %vm1994, %v1967
        %2033 = vst.msk [vmem:[#allocation4 + $0x130] sm:$0xff] %vm1994, %v1968
        %2034 = vst.msk [vmem:[#allocation4 + $0x138] sm:$0xff] %vm1994, %v1969
        %2035 = vst.msk [vmem:[#allocation4 + $0x140] sm:$0xff] %vm1994, %v1970
        %2036 = vst.msk [vmem:[#allocation4 + $0x148] sm:$0xff] %vm1994, %v1971
        %2037 = vst.msk [vmem:[#allocation4 + $0x150] sm:$0xff] %vm1994, %v1972
        %2038 = vst.msk [vmem:[#allocation4 + $0x158] sm:$0xff] %vm1994, %v1973
        %2039 = vst.msk [vmem:[#allocation4 + $0x160] sm:$0xff] %vm1994, %v1974
        %2040 = vst.msk [vmem:[#allocation4 + $0x168] sm:$0xff] %vm1994, %v1975
        %2041 = vst.msk [vmem:[#allocation4 + $0x170] sm:$0xff] %vm1994, %v1976
        %2042 = vst.msk [vmem:[#allocation4 + $0x178] sm:$0xff] %vm1994, %v1977
        %2043 = vst.msk [vmem:[#allocation4 + $0x180] sm:$0xff] %vm1994, %v1978
        %2044 = vst.msk [vmem:[#allocation4 + $0x188] sm:$0xff] %vm1994, %v1979
        %2045 = vst.msk [vmem:[#allocation4 + $0x190] sm:$0xff] %vm1994, %v1980
        %2046 = vst.msk [vmem:[#allocation4 + $0x198] sm:$0xff] %vm1994, %v1981
        %2047 = vst.msk [vmem:[#allocation4 + $0x1a0] sm:$0xff] %vm1994, %v1982
        %2048 = vst.msk [vmem:[#allocation4 + $0x1a8] sm:$0xff] %vm1994, %v1983
        %2049 = vst.msk [vmem:[#allocation4 + $0x1b0] sm:$0xff] %vm1994, %v1984
        %2050 = vst.msk [vmem:[#allocation4 + $0x1b8] sm:$0xff] %vm1994, %v1985
        %2051 = vst.msk [vmem:[#allocation4 + $0x1c0] sm:$0xff] %vm1994, %v1986
        %2052 = vst.msk [vmem:[#allocation4 + $0x1c8] sm:$0xff] %vm1994, %v1987
        %2053 = vst.msk [vmem:[#allocation4 + $0x1d0] sm:$0xff] %vm1994, %v1988
        %2054 = vst.msk [vmem:[#allocation4 + $0x1d8] sm:$0xff] %vm1994, %v1989
        %2055 = vst.msk [vmem:[#allocation4 + $0x1e0] sm:$0xff] %vm1994, %v1990
        %2056 = vst.msk [vmem:[#allocation4 + $0x1e8] sm:$0xff] %vm1994, %v1991
        %2057 = vst.msk [vmem:[#allocation4 + $0x1f0] sm:$0xff] %vm1994, %v1992
        %2058 = vst.msk [vmem:[#allocation4 + $0x1f8] sm:$0xff] %vm1994, %v1993
        %v2059 = vld [vmem:[#allocation4] ss:$2 sm:$0xff]
        %s2060 = scalar_lea.vmem [#allocation4], 16
        %v2061 = vld [vmem:[%s2060] ss:$2 sm:$0xff]
        %s2062 = scalar_lea.vmem [#allocation4], 32
        %v2063 = vld [vmem:[%s2062] ss:$2 sm:$0xff]
        %s2064 = scalar_lea.vmem [#allocation4], 48
        %v2065 = vld [vmem:[%s2064] ss:$2 sm:$0xff]
        %s2066 = scalar_lea.vmem [#allocation4], 64
        %v2067 = vld [vmem:[%s2066] ss:$2 sm:$0xff]
        %s2068 = scalar_lea.vmem [#allocation4], 80
        %v2069 = vld [vmem:[%s2068] ss:$2 sm:$0xff]
        %s2070 = scalar_lea.vmem [#allocation4], 96
        %v2071 = vld [vmem:[%s2070] ss:$2 sm:$0xff]
        %s2072 = scalar_lea.vmem [#allocation4], 112
        %v2073 = vld [vmem:[%s2072] ss:$2 sm:$0xff]
        %s2074 = scalar_lea.vmem [#allocation4], 128
        %v2075 = vld [vmem:[%s2074] ss:$2 sm:$0xff]
        %s2076 = scalar_lea.vmem [#allocation4], 144
        %v2077 = vld [vmem:[%s2076] ss:$2 sm:$0xff]
        %s2078 = scalar_lea.vmem [#allocation4], 160
        %v2079 = vld [vmem:[%s2078] ss:$2 sm:$0xff]
        %s2080 = scalar_lea.vmem [#allocation4], 176
        %v2081 = vld [vmem:[%s2080] ss:$2 sm:$0xff]
        %s2082 = scalar_lea.vmem [#allocation4], 192
        %v2083 = vld [vmem:[%s2082] ss:$2 sm:$0xff]
        %s2084 = scalar_lea.vmem [#allocation4], 208
        %v2085 = vld [vmem:[%s2084] ss:$2 sm:$0xff]
        %s2086 = scalar_lea.vmem [#allocation4], 224
        %v2087 = vld [vmem:[%s2086] ss:$2 sm:$0xff]
        %s2088 = scalar_lea.vmem [#allocation4], 240
        %v2089 = vld [vmem:[%s2088] ss:$2 sm:$0xff]
        %s2090 = scalar_lea.vmem [#allocation4], 256
        %v2091 = vld [vmem:[%s2090] ss:$2 sm:$0xff]
        %s2092 = scalar_lea.vmem [#allocation4], 272
        %v2093 = vld [vmem:[%s2092] ss:$2 sm:$0xff]
        %s2094 = scalar_lea.vmem [#allocation4], 288
        %v2095 = vld [vmem:[%s2094] ss:$2 sm:$0xff]
        %s2096 = scalar_lea.vmem [#allocation4], 304
        %v2097 = vld [vmem:[%s2096] ss:$2 sm:$0xff]
        %s2098 = scalar_lea.vmem [#allocation4], 320
        %v2099 = vld [vmem:[%s2098] ss:$2 sm:$0xff]
        %s2100 = scalar_lea.vmem [#allocation4], 336
        %v2101 = vld [vmem:[%s2100] ss:$2 sm:$0xff]
        %s2102 = scalar_lea.vmem [#allocation4], 352
        %v2103 = vld [vmem:[%s2102] ss:$2 sm:$0xff]
        %s2104 = scalar_lea.vmem [#allocation4], 368
        %v2105 = vld [vmem:[%s2104] ss:$2 sm:$0xff]
        %s2106 = scalar_lea.vmem [#allocation4], 384
        %v2107 = vld [vmem:[%s2106] ss:$2 sm:$0xff]
        %s2108 = scalar_lea.vmem [#allocation4], 400
        %v2109 = vld [vmem:[%s2108] ss:$2 sm:$0xff]
        %s2110 = scalar_lea.vmem [#allocation4], 416
        %v2111 = vld [vmem:[%s2110] ss:$2 sm:$0xff]
        %s2112 = scalar_lea.vmem [#allocation4], 432
        %v2113 = vld [vmem:[%s2112] ss:$2 sm:$0xff]
        %s2114 = scalar_lea.vmem [#allocation4], 448
        %v2115 = vld [vmem:[%s2114] ss:$2 sm:$0xff]
        %s2116 = scalar_lea.vmem [#allocation4], 464
        %v2117 = vld [vmem:[%s2116] ss:$2 sm:$0xff]
        %s2118 = scalar_lea.vmem [#allocation4], 480
        %v2119 = vld [vmem:[%s2118] ss:$2 sm:$0xff]
        %s2120 = scalar_lea.vmem [#allocation4], 496
        %v2121 = vld [vmem:[%s2120] ss:$2 sm:$0xff]
        %s2122 = scalar_lea.vmem [#allocation4], 1
        %v2123 = vld [vmem:[%s2122] ss:$2 sm:$0xff]
        %s2124 = scalar_lea.vmem [#allocation4], 17
        %v2125 = vld [vmem:[%s2124] ss:$2 sm:$0xff]
        %s2126 = scalar_lea.vmem [#allocation4], 33
        %v2127 = vld [vmem:[%s2126] ss:$2 sm:$0xff]
        %s2128 = scalar_lea.vmem [#allocation4], 49
        %v2129 = vld [vmem:[%s2128] ss:$2 sm:$0xff]
        %s2130 = scalar_lea.vmem [#allocation4], 65
        %v2131 = vld [vmem:[%s2130] ss:$2 sm:$0xff]
        %s2132 = scalar_lea.vmem [#allocation4], 81
        %v2133 = vld [vmem:[%s2132] ss:$2 sm:$0xff]
        %s2134 = scalar_lea.vmem [#allocation4], 97
        %v2135 = vld [vmem:[%s2134] ss:$2 sm:$0xff]
        %s2136 = scalar_lea.vmem [#allocation4], 113
        %v2137 = vld [vmem:[%s2136] ss:$2 sm:$0xff]
        %s2138 = scalar_lea.vmem [#allocation4], 129
        %v2139 = vld [vmem:[%s2138] ss:$2 sm:$0xff]
        %s2140 = scalar_lea.vmem [#allocation4], 145
        %v2141 = vld [vmem:[%s2140] ss:$2 sm:$0xff]
        %s2142 = scalar_lea.vmem [#allocation4], 161
        %v2143 = vld [vmem:[%s2142] ss:$2 sm:$0xff]
        %s2144 = scalar_lea.vmem [#allocation4], 177
        %v2145 = vld [vmem:[%s2144] ss:$2 sm:$0xff]
        %s2146 = scalar_lea.vmem [#allocation4], 193
        %v2147 = vld [vmem:[%s2146] ss:$2 sm:$0xff]
        %s2148 = scalar_lea.vmem [#allocation4], 209
        %v2149 = vld [vmem:[%s2148] ss:$2 sm:$0xff]
        %s2150 = scalar_lea.vmem [#allocation4], 225
        %v2151 = vld [vmem:[%s2150] ss:$2 sm:$0xff]
        %s2152 = scalar_lea.vmem [#allocation4], 241
        %v2153 = vld [vmem:[%s2152] ss:$2 sm:$0xff]
        %s2154 = scalar_lea.vmem [#allocation4], 257
        %v2155 = vld [vmem:[%s2154] ss:$2 sm:$0xff]
        %s2156 = scalar_lea.vmem [#allocation4], 273
        %v2157 = vld [vmem:[%s2156] ss:$2 sm:$0xff]
        %s2158 = scalar_lea.vmem [#allocation4], 289
        %v2159 = vld [vmem:[%s2158] ss:$2 sm:$0xff]
        %s2160 = scalar_lea.vmem [#allocation4], 305
        %v2161 = vld [vmem:[%s2160] ss:$2 sm:$0xff]
        %s2162 = scalar_lea.vmem [#allocation4], 321
        %v2163 = vld [vmem:[%s2162] ss:$2 sm:$0xff]
        %s2164 = scalar_lea.vmem [#allocation4], 337
        %v2165 = vld [vmem:[%s2164] ss:$2 sm:$0xff]
        %s2166 = scalar_lea.vmem [#allocation4], 353
        %v2167 = vld [vmem:[%s2166] ss:$2 sm:$0xff]
        %s2168 = scalar_lea.vmem [#allocation4], 369
        %v2169 = vld [vmem:[%s2168] ss:$2 sm:$0xff]
        %s2170 = scalar_lea.vmem [#allocation4], 385
        %v2171 = vld [vmem:[%s2170] ss:$2 sm:$0xff]
        %s2172 = scalar_lea.vmem [#allocation4], 401
        %v2173 = vld [vmem:[%s2172] ss:$2 sm:$0xff]
        %s2174 = scalar_lea.vmem [#allocation4], 417
        %v2175 = vld [vmem:[%s2174] ss:$2 sm:$0xff]
        %s2176 = scalar_lea.vmem [#allocation4], 433
        %v2177 = vld [vmem:[%s2176] ss:$2 sm:$0xff]
        %s2178 = scalar_lea.vmem [#allocation4], 449
        %v2179 = vld [vmem:[%s2178] ss:$2 sm:$0xff]
        %s2180 = scalar_lea.vmem [#allocation4], 465
        %v2181 = vld [vmem:[%s2180] ss:$2 sm:$0xff]
        %s2182 = scalar_lea.vmem [#allocation4], 481
        %v2183 = vld [vmem:[%s2182] ss:$2 sm:$0xff]
        %s2184 = scalar_lea.vmem [#allocation4], 497
        %v2185 = vld [vmem:[%s2184] ss:$2 sm:$0xff]
        %v2186 = vmax.f32 %v2059, %v2123
        %v2187 = vmax.f32 %v2061, %v2125
        %v2188 = vmax.f32 %v2063, %v2127
        %v2189 = vmax.f32 %v2065, %v2129
        %v2190 = vmax.f32 %v2067, %v2131
        %v2191 = vmax.f32 %v2069, %v2133
        %v2192 = vmax.f32 %v2071, %v2135
        %v2193 = vmax.f32 %v2073, %v2137
        %v2194 = vmax.f32 %v2075, %v2139
        %v2195 = vmax.f32 %v2077, %v2141
        %v2196 = vmax.f32 %v2079, %v2143
        %v2197 = vmax.f32 %v2081, %v2145
        %v2198 = vmax.f32 %v2083, %v2147
        %v2199 = vmax.f32 %v2085, %v2149
        %v2200 = vmax.f32 %v2087, %v2151
        %v2201 = vmax.f32 %v2089, %v2153
        %v2202 = vmax.f32 %v2091, %v2155
        %v2203 = vmax.f32 %v2093, %v2157
        %v2204 = vmax.f32 %v2095, %v2159
        %v2205 = vmax.f32 %v2097, %v2161
        %v2206 = vmax.f32 %v2099, %v2163
        %v2207 = vmax.f32 %v2101, %v2165
        %v2208 = vmax.f32 %v2103, %v2167
        %v2209 = vmax.f32 %v2105, %v2169
        %v2210 = vmax.f32 %v2107, %v2171
        %v2211 = vmax.f32 %v2109, %v2173
        %v2212 = vmax.f32 %v2111, %v2175
        %v2213 = vmax.f32 %v2113, %v2177
        %v2214 = vmax.f32 %v2115, %v2179
        %v2215 = vmax.f32 %v2117, %v2181
        %v2216 = vmax.f32 %v2119, %v2183
        %v2217 = vmax.f32 %v2121, %v2185
        %v2218 = vpack.c.bf16 %v2187, %v2186
        %v2219 = vpack.c.bf16 %v2189, %v2188
        %v2220 = vpack.c.bf16 %v2191, %v2190
        %v2221 = vpack.c.bf16 %v2193, %v2192
        %v2222 = vpack.c.bf16 %v2195, %v2194
        %v2223 = vpack.c.bf16 %v2197, %v2196
        %v2224 = vpack.c.bf16 %v2199, %v2198
        %v2225 = vpack.c.bf16 %v2201, %v2200
        %v2226 = vpack.c.bf16 %v2203, %v2202
        %v2227 = vpack.c.bf16 %v2205, %v2204
        %v2228 = vpack.c.bf16 %v2207, %v2206
        %v2229 = vpack.c.bf16 %v2209, %v2208
        %v2230 = vpack.c.bf16 %v2211, %v2210
        %v2231 = vpack.c.bf16 %v2213, %v2212
        %v2232 = vpack.c.bf16 %v2215, %v2214
        %v2233 = vpack.c.bf16 %v2217, %v2216
        %v2250 = vunpack.c.l.b16 %v2218
        %v2251 = vunpack.c.h.b16 %v2218
        %v2252 = vunpack.c.l.b16 %v2219
        %v2253 = vunpack.c.h.b16 %v2219
        %v2254 = vunpack.c.l.b16 %v2220
        %v2255 = vunpack.c.h.b16 %v2220
        %v2256 = vunpack.c.l.b16 %v2221
        %v2257 = vunpack.c.h.b16 %v2221
        %v2258 = vunpack.c.l.b16 %v2222
        %v2259 = vunpack.c.h.b16 %v2222
        %v2260 = vunpack.c.l.b16 %v2223
        %v2261 = vunpack.c.h.b16 %v2223
        %v2262 = vunpack.c.l.b16 %v2224
        %v2263 = vunpack.c.h.b16 %v2224
        %v2264 = vunpack.c.l.b16 %v2225
        %v2265 = vunpack.c.h.b16 %v2225
        %v2266 = vunpack.c.l.b16 %v2226
        %v2267 = vunpack.c.h.b16 %v2226
        %v2268 = vunpack.c.l.b16 %v2227
        %v2269 = vunpack.c.h.b16 %v2227
        %v2270 = vunpack.c.l.b16 %v2228
        %v2271 = vunpack.c.h.b16 %v2228
        %v2272 = vunpack.c.l.b16 %v2229
        %v2273 = vunpack.c.h.b16 %v2229
        %v2274 = vunpack.c.l.b16 %v2230
        %v2275 = vunpack.c.h.b16 %v2230
        %v2276 = vunpack.c.l.b16 %v2231
        %v2277 = vunpack.c.h.b16 %v2231
        %v2278 = vunpack.c.l.b16 %v2232
        %v2279 = vunpack.c.h.b16 %v2232
        %v2280 = vunpack.c.l.b16 %v2233
        %v2281 = vunpack.c.h.b16 %v2233
        %v2282 = vpack.c.b16 %v2250, %v2250
        %v2283 = vpack.c.b16 %v2251, %v2251
        %v2284 = vpack.c.b16 %v2252, %v2252
        %v2285 = vpack.c.b16 %v2253, %v2253
        %v2286 = vpack.c.b16 %v2254, %v2254
        %v2287 = vpack.c.b16 %v2255, %v2255
        %v2288 = vpack.c.b16 %v2256, %v2256
        %v2289 = vpack.c.b16 %v2257, %v2257
        %v2290 = vpack.c.b16 %v2258, %v2258
        %v2291 = vpack.c.b16 %v2259, %v2259
        %v2292 = vpack.c.b16 %v2260, %v2260
        %v2293 = vpack.c.b16 %v2261, %v2261
        %v2294 = vpack.c.b16 %v2262, %v2262
        %v2295 = vpack.c.b16 %v2263, %v2263
        %v2296 = vpack.c.b16 %v2264, %v2264
        %v2297 = vpack.c.b16 %v2265, %v2265
        %v2298 = vpack.c.b16 %v2266, %v2266
        %v2299 = vpack.c.b16 %v2267, %v2267
        %v2300 = vpack.c.b16 %v2268, %v2268
        %v2301 = vpack.c.b16 %v2269, %v2269
        %v2302 = vpack.c.b16 %v2270, %v2270
        %v2303 = vpack.c.b16 %v2271, %v2271
        %v2304 = vpack.c.b16 %v2272, %v2272
        %v2305 = vpack.c.b16 %v2273, %v2273
        %v2306 = vpack.c.b16 %v2274, %v2274
        %v2307 = vpack.c.b16 %v2275, %v2275
        %v2308 = vpack.c.b16 %v2276, %v2276
        %v2309 = vpack.c.b16 %v2277, %v2277
        %v2310 = vpack.c.b16 %v2278, %v2278
        %v2311 = vpack.c.b16 %v2279, %v2279
        %v2312 = vpack.c.b16 %v2280, %v2280
        %v2313 = vpack.c.b16 %v2281, %v2281
        %s2346 = scalar_lea.vmem [#allocation2], 128
        %2347 = vst.msk [vmem:[%s2346 + $0x4] sm:$0xf] %vm385, %v2282
        %2348 = vst.msk [vmem:[%s2346 + $0x8] sm:$0xf] %vm385, %v2283
        %2349 = vst.msk [vmem:[%s2346 + $0x14] sm:$0xf] %vm385, %v2284
        %2350 = vst.msk [vmem:[%s2346 + $0x18] sm:$0xf] %vm385, %v2285
        %2351 = vst.msk [vmem:[%s2346 + $0x24] sm:$0xf] %vm385, %v2286
        %2352 = vst.msk [vmem:[%s2346 + $0x28] sm:$0xf] %vm385, %v2287
        %2353 = vst.msk [vmem:[%s2346 + $0x34] sm:$0xf] %vm385, %v2288
        %2354 = vst.msk [vmem:[%s2346 + $0x38] sm:$0xf] %vm385, %v2289
        %2355 = vst.msk [vmem:[%s2346 + $0x44] sm:$0xf] %vm385, %v2290
        %2356 = vst.msk [vmem:[%s2346 + $0x48] sm:$0xf] %vm385, %v2291
        %2357 = vst.msk [vmem:[%s2346 + $0x54] sm:$0xf] %vm385, %v2292
        %2358 = vst.msk [vmem:[%s2346 + $0x58] sm:$0xf] %vm385, %v2293
        %2359 = vst.msk [vmem:[%s2346 + $0x64] sm:$0xf] %vm385, %v2294
        %2360 = vst.msk [vmem:[%s2346 + $0x68] sm:$0xf] %vm385, %v2295
        %2361 = vst.msk [vmem:[%s2346 + $0x74] sm:$0xf] %vm385, %v2296
        %2362 = vst.msk [vmem:[%s2346 + $0x78] sm:$0xf] %vm385, %v2297
        %2363 = vst.msk [vmem:[%s2346 + $0x84] sm:$0xf] %vm385, %v2298
        %2364 = vst.msk [vmem:[%s2346 + $0x88] sm:$0xf] %vm385, %v2299
        %2365 = vst.msk [vmem:[%s2346 + $0x94] sm:$0xf] %vm385, %v2300
        %2366 = vst.msk [vmem:[%s2346 + $0x98] sm:$0xf] %vm385, %v2301
        %2367 = vst.msk [vmem:[%s2346 + $0xa4] sm:$0xf] %vm385, %v2302
        %2368 = vst.msk [vmem:[%s2346 + $0xa8] sm:$0xf] %vm385, %v2303
        %2369 = vst.msk [vmem:[%s2346 + $0xb4] sm:$0xf] %vm385, %v2304
        %2370 = vst.msk [vmem:[%s2346 + $0xb8] sm:$0xf] %vm385, %v2305
        %2371 = vst.msk [vmem:[%s2346 + $0xc4] sm:$0xf] %vm385, %v2306
        %2372 = vst.msk [vmem:[%s2346 + $0xc8] sm:$0xf] %vm385, %v2307
        %2373 = vst.msk [vmem:[%s2346 + $0xd4] sm:$0xf] %vm385, %v2308
        %2374 = vst.msk [vmem:[%s2346 + $0xd8] sm:$0xf] %vm385, %v2309
        %2375 = vst.msk [vmem:[%s2346 + $0xe4] sm:$0xf] %vm385, %v2310
        %2376 = vst.msk [vmem:[%s2346 + $0xe8] sm:$0xf] %vm385, %v2311
        %2377 = vst.msk [vmem:[%s2346 + $0xf4] sm:$0xf] %vm385, %v2312
        %2378 = vst.msk [vmem:[%s2346 + $0xf8] sm:$0xf] %vm385, %v2313
        %s2379 = scalar_lea.vmem [#allocation2], 112
        %v2380 = vld [vmem:[%s2379] sm:$0x8]
        %v2381 = vld [vmem:[%s2379 + $0x4] sm:$0xf]
        %v2382 = vld [vmem:[%s2379 + $0x8] sm:$0xf]
        %v2383 = vld [vmem:[%s2379 + $0x10] sm:$0x8]
        %v2384 = vld [vmem:[%s2379 + $0x14] sm:$0xf]
        %v2385 = vld [vmem:[%s2379 + $0x18] sm:$0xf]
        %v2386 = vld [vmem:[%s2379 + $0x20] sm:$0x8]
        %v2387 = vld [vmem:[%s2379 + $0x24] sm:$0xf]
        %v2388 = vld [vmem:[%s2379 + $0x28] sm:$0xf]
        %v2389 = vld [vmem:[%s2379 + $0x30] sm:$0x8]
        %v2390 = vld [vmem:[%s2379 + $0x34] sm:$0xf]
        %v2391 = vld [vmem:[%s2379 + $0x38] sm:$0xf]
        %v2392 = vld [vmem:[%s2379 + $0x40] sm:$0x8]
        %v2393 = vld [vmem:[%s2379 + $0x44] sm:$0xf]
        %v2394 = vld [vmem:[%s2379 + $0x48] sm:$0xf]
        %v2395 = vld [vmem:[%s2379 + $0x50] sm:$0x8]
        %v2396 = vld [vmem:[%s2379 + $0x54] sm:$0xf]
        %v2397 = vld [vmem:[%s2379 + $0x58] sm:$0xf]
        %v2398 = vld [vmem:[%s2379 + $0x60] sm:$0x8]
        %v2399 = vld [vmem:[%s2379 + $0x64] sm:$0xf]
        %v2400 = vld [vmem:[%s2379 + $0x68] sm:$0xf]
        %v2401 = vld [vmem:[%s2379 + $0x70] sm:$0x8]
        %v2402 = vld [vmem:[%s2379 + $0x74] sm:$0xf]
        %v2403 = vld [vmem:[%s2379 + $0x78] sm:$0xf]
        %v2404 = vld [vmem:[%s2379 + $0x80] sm:$0x8]
        %v2405 = vld [vmem:[%s2379 + $0x84] sm:$0xf]
        %v2406 = vld [vmem:[%s2379 + $0x88] sm:$0xf]
        %v2407 = vld [vmem:[%s2379 + $0x90] sm:$0x8]
        %v2408 = vld [vmem:[%s2379 + $0x94] sm:$0xf]
        %v2409 = vld [vmem:[%s2379 + $0x98] sm:$0xf]
        %v2410 = vld [vmem:[%s2379 + $0xa0] sm:$0x8]
        %v2411 = vld [vmem:[%s2379 + $0xa4] sm:$0xf]
        %v2412 = vld [vmem:[%s2379 + $0xa8] sm:$0xf]
        %v2413 = vld [vmem:[%s2379 + $0xb0] sm:$0x8]
        %v2414 = vld [vmem:[%s2379 + $0xb4] sm:$0xf]
        %v2415 = vld [vmem:[%s2379 + $0xb8] sm:$0xf]
        %v2416 = vld [vmem:[%s2379 + $0xc0] sm:$0x8]
        %v2417 = vld [vmem:[%s2379 + $0xc4] sm:$0xf]
        %v2418 = vld [vmem:[%s2379 + $0xc8] sm:$0xf]
        %v2419 = vld [vmem:[%s2379 + $0xd0] sm:$0x8]
        %v2420 = vld [vmem:[%s2379 + $0xd4] sm:$0xf]
        %v2421 = vld [vmem:[%s2379 + $0xd8] sm:$0xf]
        %v2422 = vld [vmem:[%s2379 + $0xe0] sm:$0x8]
        %v2423 = vld [vmem:[%s2379 + $0xe4] sm:$0xf]
        %v2424 = vld [vmem:[%s2379 + $0xe8] sm:$0xf]
        %v2425 = vld [vmem:[%s2379 + $0xf0] sm:$0x8]
        %v2426 = vld [vmem:[%s2379 + $0xf4] sm:$0xf]
        %v2427 = vld [vmem:[%s2379 + $0xf8] sm:$0xf]
        %vm2428 = vsmask.f32 256
        %vm2429 = vsmask.f32 4368
        %vm2430 = vmor %vm2428, %vm2429
        %v2432 = vshrl.u32 %v2380, 16
        %v2434 = vrot.slane %v2432, 7
        %v2435 = vrot.slane %v2434, 4
        %v2437 = vshrl.u32 %v2381, 16
        %v2439 = vrot.slane %v2437, 7
        %v2440 = vshll.u32 %v2381, 16
        %v2442 = vor.u32 %v2439, %v2440
        %v2443 = vsel %vm2430, %v2435, %v2442
        %v2444 = vrot.slane %v2439, 4
        %v2446 = vshrl.u32 %v2382, 16
        %v2448 = vrot.slane %v2446, 7
        %v2449 = vshll.u32 %v2382, 16
        %v2451 = vor.u32 %v2448, %v2449
        %v2452 = vsel %vm2430, %v2444, %v2451
        %v2454 = vshrl.u32 %v2383, 16
        %v2456 = vrot.slane %v2454, 7
        %v2457 = vrot.slane %v2456, 4
        %v2459 = vshrl.u32 %v2384, 16
        %v2461 = vrot.slane %v2459, 7
        %v2462 = vshll.u32 %v2384, 16
        %v2464 = vor.u32 %v2461, %v2462
        %v2465 = vsel %vm2430, %v2457, %v2464
        %v2466 = vrot.slane %v2461, 4
        %v2468 = vshrl.u32 %v2385, 16
        %v2470 = vrot.slane %v2468, 7
        %v2471 = vshll.u32 %v2385, 16
        %v2473 = vor.u32 %v2470, %v2471
        %v2474 = vsel %vm2430, %v2466, %v2473
        %v2476 = vshrl.u32 %v2386, 16
        %v2478 = vrot.slane %v2476, 7
        %v2479 = vrot.slane %v2478, 4
        %v2481 = vshrl.u32 %v2387, 16
        %v2483 = vrot.slane %v2481, 7
        %v2484 = vshll.u32 %v2387, 16
        %v2486 = vor.u32 %v2483, %v2484
        %v2487 = vsel %vm2430, %v2479, %v2486
        %v2488 = vrot.slane %v2483, 4
        %v2490 = vshrl.u32 %v2388, 16
        %v2492 = vrot.slane %v2490, 7
        %v2493 = vshll.u32 %v2388, 16
        %v2495 = vor.u32 %v2492, %v2493
        %v2496 = vsel %vm2430, %v2488, %v2495
        %v2498 = vshrl.u32 %v2389, 16
        %v2500 = vrot.slane %v2498, 7
        %v2501 = vrot.slane %v2500, 4
        %v2503 = vshrl.u32 %v2390, 16
        %v2505 = vrot.slane %v2503, 7
        %v2506 = vshll.u32 %v2390, 16
        %v2508 = vor.u32 %v2505, %v2506
        %v2509 = vsel %vm2430, %v2501, %v2508
        %v2510 = vrot.slane %v2505, 4
        %v2512 = vshrl.u32 %v2391, 16
        %v2514 = vrot.slane %v2512, 7
        %v2515 = vshll.u32 %v2391, 16
        %v2517 = vor.u32 %v2514, %v2515
        %v2518 = vsel %vm2430, %v2510, %v2517
        %v2520 = vshrl.u32 %v2392, 16
        %v2522 = vrot.slane %v2520, 7
        %v2523 = vrot.slane %v2522, 4
        %v2525 = vshrl.u32 %v2393, 16
        %v2527 = vrot.slane %v2525, 7
        %v2528 = vshll.u32 %v2393, 16
        %v2530 = vor.u32 %v2527, %v2528
        %v2531 = vsel %vm2430, %v2523, %v2530
        %v2532 = vrot.slane %v2527, 4
        %v2534 = vshrl.u32 %v2394, 16
        %v2536 = vrot.slane %v2534, 7
        %v2537 = vshll.u32 %v2394, 16
        %v2539 = vor.u32 %v2536, %v2537
        %v2540 = vsel %vm2430, %v2532, %v2539
        %v2542 = vshrl.u32 %v2395, 16
        %v2544 = vrot.slane %v2542, 7
        %v2545 = vrot.slane %v2544, 4
        %v2547 = vshrl.u32 %v2396, 16
        %v2549 = vrot.slane %v2547, 7
        %v2550 = vshll.u32 %v2396, 16
        %v2552 = vor.u32 %v2549, %v2550
        %v2553 = vsel %vm2430, %v2545, %v2552
        %v2554 = vrot.slane %v2549, 4
        %v2556 = vshrl.u32 %v2397, 16
        %v2558 = vrot.slane %v2556, 7
        %v2559 = vshll.u32 %v2397, 16
        %v2561 = vor.u32 %v2558, %v2559
        %v2562 = vsel %vm2430, %v2554, %v2561
        %v2564 = vshrl.u32 %v2398, 16
        %v2566 = vrot.slane %v2564, 7
        %v2567 = vrot.slane %v2566, 4
        %v2569 = vshrl.u32 %v2399, 16
        %v2571 = vrot.slane %v2569, 7
        %v2572 = vshll.u32 %v2399, 16
        %v2574 = vor.u32 %v2571, %v2572
        %v2575 = vsel %vm2430, %v2567, %v2574
        %v2576 = vrot.slane %v2571, 4
        %v2578 = vshrl.u32 %v2400, 16
        %v2580 = vrot.slane %v2578, 7
        %v2581 = vshll.u32 %v2400, 16
        %v2583 = vor.u32 %v2580, %v2581
        %v2584 = vsel %vm2430, %v2576, %v2583
        %v2586 = vshrl.u32 %v2401, 16
        %v2588 = vrot.slane %v2586, 7
        %v2589 = vrot.slane %v2588, 4
        %v2591 = vshrl.u32 %v2402, 16
        %v2593 = vrot.slane %v2591, 7
        %v2594 = vshll.u32 %v2402, 16
        %v2596 = vor.u32 %v2593, %v2594
        %v2597 = vsel %vm2430, %v2589, %v2596
        %v2598 = vrot.slane %v2593, 4
        %v2600 = vshrl.u32 %v2403, 16
        %v2602 = vrot.slane %v2600, 7
        %v2603 = vshll.u32 %v2403, 16
        %v2605 = vor.u32 %v2602, %v2603
        %v2606 = vsel %vm2430, %v2598, %v2605
        %v2608 = vshrl.u32 %v2404, 16
        %v2610 = vrot.slane %v2608, 7
        %v2611 = vrot.slane %v2610, 4
        %v2613 = vshrl.u32 %v2405, 16
        %v2615 = vrot.slane %v2613, 7
        %v2616 = vshll.u32 %v2405, 16
        %v2618 = vor.u32 %v2615, %v2616
        %v2619 = vsel %vm2430, %v2611, %v2618
        %v2620 = vrot.slane %v2615, 4
        %v2622 = vshrl.u32 %v2406, 16
        %v2624 = vrot.slane %v2622, 7
        %v2625 = vshll.u32 %v2406, 16
        %v2627 = vor.u32 %v2624, %v2625
        %v2628 = vsel %vm2430, %v2620, %v2627
        %v2630 = vshrl.u32 %v2407, 16
        %v2632 = vrot.slane %v2630, 7
        %v2633 = vrot.slane %v2632, 4
        %v2635 = vshrl.u32 %v2408, 16
        %v2637 = vrot.slane %v2635, 7
        %v2638 = vshll.u32 %v2408, 16
        %v2640 = vor.u32 %v2637, %v2638
        %v2641 = vsel %vm2430, %v2633, %v2640
        %v2642 = vrot.slane %v2637, 4
        %v2644 = vshrl.u32 %v2409, 16
        %v2646 = vrot.slane %v2644, 7
        %v2647 = vshll.u32 %v2409, 16
        %v2649 = vor.u32 %v2646, %v2647
        %v2650 = vsel %vm2430, %v2642, %v2649
        %v2652 = vshrl.u32 %v2410, 16
        %v2654 = vrot.slane %v2652, 7
        %v2655 = vrot.slane %v2654, 4
        %v2657 = vshrl.u32 %v2411, 16
        %v2659 = vrot.slane %v2657, 7
        %v2660 = vshll.u32 %v2411, 16
        %v2662 = vor.u32 %v2659, %v2660
        %v2663 = vsel %vm2430, %v2655, %v2662
        %v2664 = vrot.slane %v2659, 4
        %v2666 = vshrl.u32 %v2412, 16
        %v2668 = vrot.slane %v2666, 7
        %v2669 = vshll.u32 %v2412, 16
        %v2671 = vor.u32 %v2668, %v2669
        %v2672 = vsel %vm2430, %v2664, %v2671
        %v2674 = vshrl.u32 %v2413, 16
        %v2676 = vrot.slane %v2674, 7
        %v2677 = vrot.slane %v2676, 4
        %v2679 = vshrl.u32 %v2414, 16
        %v2681 = vrot.slane %v2679, 7
        %v2682 = vshll.u32 %v2414, 16
        %v2684 = vor.u32 %v2681, %v2682
        %v2685 = vsel %vm2430, %v2677, %v2684
        %v2686 = vrot.slane %v2681, 4
        %v2688 = vshrl.u32 %v2415, 16
        %v2690 = vrot.slane %v2688, 7
        %v2691 = vshll.u32 %v2415, 16
        %v2693 = vor.u32 %v2690, %v2691
        %v2694 = vsel %vm2430, %v2686, %v2693
        %v2696 = vshrl.u32 %v2416, 16
        %v2698 = vrot.slane %v2696, 7
        %v2699 = vrot.slane %v2698, 4
        %v2701 = vshrl.u32 %v2417, 16
        %v2703 = vrot.slane %v2701, 7
        %v2704 = vshll.u32 %v2417, 16
        %v2706 = vor.u32 %v2703, %v2704
        %v2707 = vsel %vm2430, %v2699, %v2706
        %v2708 = vrot.slane %v2703, 4
        %v2710 = vshrl.u32 %v2418, 16
        %v2712 = vrot.slane %v2710, 7
        %v2713 = vshll.u32 %v2418, 16
        %v2715 = vor.u32 %v2712, %v2713
        %v2716 = vsel %vm2430, %v2708, %v2715
        %v2718 = vshrl.u32 %v2419, 16
        %v2720 = vrot.slane %v2718, 7
        %v2721 = vrot.slane %v2720, 4
        %v2723 = vshrl.u32 %v2420, 16
        %v2725 = vrot.slane %v2723, 7
        %v2726 = vshll.u32 %v2420, 16
        %v2728 = vor.u32 %v2725, %v2726
        %v2729 = vsel %vm2430, %v2721, %v2728
        %v2730 = vrot.slane %v2725, 4
        %v2732 = vshrl.u32 %v2421, 16
        %v2734 = vrot.slane %v2732, 7
        %v2735 = vshll.u32 %v2421, 16
        %v2737 = vor.u32 %v2734, %v2735
        %v2738 = vsel %vm2430, %v2730, %v2737
        %v2740 = vshrl.u32 %v2422, 16
        %v2742 = vrot.slane %v2740, 7
        %v2743 = vrot.slane %v2742, 4
        %v2745 = vshrl.u32 %v2423, 16
        %v2747 = vrot.slane %v2745, 7
        %v2748 = vshll.u32 %v2423, 16
        %v2750 = vor.u32 %v2747, %v2748
        %v2751 = vsel %vm2430, %v2743, %v2750
        %v2752 = vrot.slane %v2747, 4
        %v2754 = vshrl.u32 %v2424, 16
        %v2756 = vrot.slane %v2754, 7
        %v2757 = vshll.u32 %v2424, 16
        %v2759 = vor.u32 %v2756, %v2757
        %v2760 = vsel %vm2430, %v2752, %v2759
        %v2762 = vshrl.u32 %v2425, 16
        %v2764 = vrot.slane %v2762, 7
        %v2765 = vrot.slane %v2764, 4
        %v2767 = vshrl.u32 %v2426, 16
        %v2769 = vrot.slane %v2767, 7
        %v2770 = vshll.u32 %v2426, 16
        %v2772 = vor.u32 %v2769, %v2770
        %v2773 = vsel %vm2430, %v2765, %v2772
        %v2774 = vrot.slane %v2769, 4
        %v2776 = vshrl.u32 %v2427, 16
        %v2778 = vrot.slane %v2776, 7
        %v2779 = vshll.u32 %v2427, 16
        %v2781 = vor.u32 %v2778, %v2779
        %v2782 = vsel %vm2430, %v2774, %v2781
        %v2783 = vld [vmem:[%s3] sm:$0xf]
        %v2784 = vld [vmem:[%s3 + $0x4] sm:$0xf]
        %v2785 = vld [vmem:[%s3 + $0x8] sm:$0xf]
        %v2786 = vld [vmem:[%s3 + $0xc] sm:$0xf]
        %s2787 = scalar_lea.vmem %s3, 16
        %v2788 = vld [vmem:[%s2787] sm:$0xf]
        %v2789 = vld [vmem:[%s2787 + $0x4] sm:$0xf]
        %v2790 = vld [vmem:[%s2787 + $0x8] sm:$0xf]
        %v2791 = vld [vmem:[%s2787 + $0xc] sm:$0xf]
        %v2824 = vunpack.c.l.b16 %v2381
        %v2825 = vunpack.c.l.b16 %v2382
        %v2826 = vunpack.c.l.b16 %v2384
        %v2827 = vunpack.c.l.b16 %v2385
        %v2828 = vunpack.c.l.b16 %v2387
        %v2829 = vunpack.c.l.b16 %v2388
        %v2830 = vunpack.c.l.b16 %v2390
        %v2831 = vunpack.c.l.b16 %v2391
        %v2832 = vunpack.c.l.b16 %v2393
        %v2833 = vunpack.c.l.b16 %v2394
        %v2834 = vunpack.c.l.b16 %v2396
        %v2835 = vunpack.c.l.b16 %v2397
        %v2836 = vunpack.c.l.b16 %v2399
        %v2837 = vunpack.c.l.b16 %v2400
        %v2838 = vunpack.c.l.b16 %v2402
        %v2839 = vunpack.c.l.b16 %v2403
        %v2840 = vunpack.c.l.b16 %v2405
        %v2841 = vunpack.c.l.b16 %v2406
        %v2842 = vunpack.c.l.b16 %v2408
        %v2843 = vunpack.c.l.b16 %v2409
        %v2844 = vunpack.c.l.b16 %v2411
        %v2845 = vunpack.c.l.b16 %v2412
        %v2846 = vunpack.c.l.b16 %v2414
        %v2847 = vunpack.c.l.b16 %v2415
        %v2848 = vunpack.c.l.b16 %v2417
        %v2849 = vunpack.c.l.b16 %v2418
        %v2850 = vunpack.c.l.b16 %v2420
        %v2851 = vunpack.c.l.b16 %v2421
        %v2852 = vunpack.c.l.b16 %v2423
        %v2853 = vunpack.c.l.b16 %v2424
        %v2854 = vunpack.c.l.b16 %v2426
        %v2855 = vunpack.c.l.b16 %v2427
        %v2856 = vpack.c.b16 %v2825, %v2824
        %v2857 = vpack.c.b16 %v2827, %v2826
        %v2858 = vpack.c.b16 %v2829, %v2828
        %v2859 = vpack.c.b16 %v2831, %v2830
        %v2860 = vpack.c.b16 %v2833, %v2832
        %v2861 = vpack.c.b16 %v2835, %v2834
        %v2862 = vpack.c.b16 %v2837, %v2836
        %v2863 = vpack.c.b16 %v2839, %v2838
        %v2864 = vpack.c.b16 %v2841, %v2840
        %v2865 = vpack.c.b16 %v2843, %v2842
        %v2866 = vpack.c.b16 %v2845, %v2844
        %v2867 = vpack.c.b16 %v2847, %v2846
        %v2868 = vpack.c.b16 %v2849, %v2848
        %v2869 = vpack.c.b16 %v2851, %v2850
        %v2870 = vpack.c.b16 %v2853, %v2852
        %v2871 = vpack.c.b16 %v2855, %v2854
        %v2876 = vunpack.c.l.b16 %v2788
        %v2877 = vunpack.c.l.b16 %v2789
        %v2878 = vunpack.c.l.b16 %v2790
        %v2879 = vunpack.c.l.b16 %v2791
        %v2880 = vpack.c.b16 %v2877, %v2876
        %v2881 = vpack.c.b16 %v2879, %v2878
        %v2885 = vsel %vm1994, %v2856, 0
        %v2888 = vsel %vm1994, %v2857, 0
        %v2891 = vsel %vm1994, %v2858, 0
        %v2894 = vsel %vm1994, %v2859, 0
        %v2897 = vsel %vm1994, %v2860, 0
        %v2900 = vsel %vm1994, %v2861, 0
        %v2903 = vsel %vm1994, %v2862, 0
        %v2906 = vsel %vm1994, %v2863, 0
        %v2909 = vsel %vm1994, %v2864, 0
        %v2912 = vsel %vm1994, %v2865, 0
        %v2915 = vsel %vm1994, %v2866, 0
        %v2918 = vsel %vm1994, %v2867, 0
        %v2921 = vsel %vm1994, %v2868, 0
        %v2924 = vsel %vm1994, %v2869, 0
        %v2927 = vsel %vm1994, %v2870, 0
        %v2930 = vsel %vm1994, %v2871, 0
        %2932 = vmatprep.subr.bf16.mxu0 0
        %2933 = vmatpush1.bf16.msra.mxu0 0
        %2934 = vmatprep.subr.bf16.mxu0 0
        %2935 = vmatpush1.bf16.msra.mxu0 0
        %2936 = vmatprep.subr.bf16.mxu0 0
        %2937 = vmatpush1.bf16.msra.mxu0 0
        %2938 = vmatprep.subr.bf16.mxu0 0
        %2939 = vmatpush1.bf16.msra.mxu0 0
        %2940 = vmatprep.subr.bf16.mxu0 0
        %2941 = vmatpush1.bf16.msra.mxu0 0
        %2942 = vmatprep.subr.bf16.mxu0 0
        %2943 = vmatpush1.bf16.msra.mxu0 0
        %2944 = vmatprep.subr.bf16.mxu0 0
        %2945 = vmatpush1.bf16.msra.mxu0 %v2881
        %2946 = vmatprep.subr.bf16.mxu0 0
        %2947 = vmatpush1.bf16.msra.mxu0 %v2880
        %2948 = vmatprep.subr.bf16.mxu0 0
        %2949 = vmatpush2.bf16.msra.mxu0 0
        %2950 = vmatprep.subr.bf16.mxu0 0
        %2951 = vmatpush2.bf16.msra.mxu0 0
        %2952 = vmatprep.subr.bf16.mxu0 0
        %2953 = vmatpush2.bf16.msra.mxu0 0
        %2954 = vmatprep.subr.bf16.mxu0 0
        %2955 = vmatpush2.bf16.msra.mxu0 0
        %2956 = vmatprep.subr.bf16.mxu0 0
        %2957 = vmatpush2.bf16.msra.mxu0 0
        %2958 = vmatprep.subr.bf16.mxu0 0
        %2959 = vmatpush2.bf16.msra.mxu0 0
        %2960 = vmatprep.subr.bf16.mxu0 0
        %2961 = vmatpush2.bf16.msra.mxu0 0
        %2962 = vmatprep.subr.bf16.mxu0 0
        %2963 = vmatpush2.bf16.msra.mxu0 0
        %2964 = vmatprep.mubr.bf16.mxu0 0
        %2965 = vmatmul.mubr.bf16.gmra.mxu0 %v2885
        %v2966 = vpop.f32.mrf.mxu0
        %v2967 = vadd.f32 0.0, %v2966
        %v2968 = vpop.f32.mrf.mxu0
        %v2969 = vpop.f32.mrf.mxu0
        %v2970 = vadd.f32 0.0, %v2969
        %v2971 = vpop.f32.mrf.mxu0
        %2972 = vmatprep.mubr.bf16.mxu0 0
        %2973 = vmatmul.mubr.bf16.gmra.mxu0 %v2888
        %v2974 = vpop.f32.mrf.mxu0
        %v2975 = vadd.f32 0.0, %v2974
        %v2976 = vpop.f32.mrf.mxu0
        %v2977 = vpop.f32.mrf.mxu0
        %v2978 = vadd.f32 0.0, %v2977
        %v2979 = vpop.f32.mrf.mxu0
        %2980 = vmatprep.mubr.bf16.mxu0 0
        %2981 = vmatmul.mubr.bf16.gmra.mxu0 %v2891
        %v2982 = vpop.f32.mrf.mxu0
        %v2983 = vadd.f32 0.0, %v2982
        %v2984 = vpop.f32.mrf.mxu0
        %v2985 = vpop.f32.mrf.mxu0
        %v2986 = vadd.f32 0.0, %v2985
        %v2987 = vpop.f32.mrf.mxu0
        %2988 = vmatprep.mubr.bf16.mxu0 0
        %2989 = vmatmul.mubr.bf16.gmra.mxu0 %v2894
        %v2990 = vpop.f32.mrf.mxu0
        %v2991 = vadd.f32 0.0, %v2990
        %v2992 = vpop.f32.mrf.mxu0
        %v2993 = vpop.f32.mrf.mxu0
        %v2994 = vadd.f32 0.0, %v2993
        %v2995 = vpop.f32.mrf.mxu0
        %2996 = vmatprep.mubr.bf16.mxu0 0
        %2997 = vmatmul.mubr.bf16.gmra.mxu0 %v2897
        %v2998 = vpop.f32.mrf.mxu0
        %v2999 = vadd.f32 0.0, %v2998
        %v3000 = vpop.f32.mrf.mxu0
        %v3001 = vpop.f32.mrf.mxu0
        %v3002 = vadd.f32 0.0, %v3001
        %v3003 = vpop.f32.mrf.mxu0
        %3004 = vmatprep.mubr.bf16.mxu0 0
        %3005 = vmatmul.mubr.bf16.gmra.mxu0 %v2900
        %v3006 = vpop.f32.mrf.mxu0
        %v3007 = vadd.f32 0.0, %v3006
        %v3008 = vpop.f32.mrf.mxu0
        %v3009 = vpop.f32.mrf.mxu0
        %v3010 = vadd.f32 0.0, %v3009
        %v3011 = vpop.f32.mrf.mxu0
        %3012 = vmatprep.mubr.bf16.mxu0 0
        %3013 = vmatmul.mubr.bf16.gmra.mxu0 %v2903
        %v3014 = vpop.f32.mrf.mxu0
        %v3015 = vadd.f32 0.0, %v3014
        %v3016 = vpop.f32.mrf.mxu0
        %v3017 = vpop.f32.mrf.mxu0
        %v3018 = vadd.f32 0.0, %v3017
        %v3019 = vpop.f32.mrf.mxu0
        %3020 = vmatprep.mubr.bf16.mxu0 0
        %3021 = vmatmul.mubr.bf16.gmra.mxu0 %v2906
        %v3022 = vpop.f32.mrf.mxu0
        %v3023 = vadd.f32 0.0, %v3022
        %v3024 = vpop.f32.mrf.mxu0
        %v3025 = vpop.f32.mrf.mxu0
        %v3026 = vadd.f32 0.0, %v3025
        %v3027 = vpop.f32.mrf.mxu0
        %3028 = vmatprep.mubr.bf16.mxu0 0
        %3029 = vmatmul.mubr.bf16.gmra.mxu0 %v2909
        %v3030 = vpop.f32.mrf.mxu0
        %v3031 = vadd.f32 0.0, %v3030
        %v3032 = vpop.f32.mrf.mxu0
        %v3033 = vpop.f32.mrf.mxu0
        %v3034 = vadd.f32 0.0, %v3033
        %v3035 = vpop.f32.mrf.mxu0
        %3036 = vmatprep.mubr.bf16.mxu0 0
        %3037 = vmatmul.mubr.bf16.gmra.mxu0 %v2912
        %v3038 = vpop.f32.mrf.mxu0
        %v3039 = vadd.f32 0.0, %v3038
        %v3040 = vpop.f32.mrf.mxu0
        %v3041 = vpop.f32.mrf.mxu0
        %v3042 = vadd.f32 0.0, %v3041
        %v3043 = vpop.f32.mrf.mxu0
        %3044 = vmatprep.mubr.bf16.mxu0 0
        %3045 = vmatmul.mubr.bf16.gmra.mxu0 %v2915
        %v3046 = vpop.f32.mrf.mxu0
        %v3047 = vadd.f32 0.0, %v3046
        %v3048 = vpop.f32.mrf.mxu0
        %v3049 = vpop.f32.mrf.mxu0
        %v3050 = vadd.f32 0.0, %v3049
        %v3051 = vpop.f32.mrf.mxu0
        %3052 = vmatprep.mubr.bf16.mxu0 0
        %3053 = vmatmul.mubr.bf16.gmra.mxu0 %v2918
        %v3054 = vpop.f32.mrf.mxu0
        %v3055 = vadd.f32 0.0, %v3054
        %v3056 = vpop.f32.mrf.mxu0
        %v3057 = vpop.f32.mrf.mxu0
        %v3058 = vadd.f32 0.0, %v3057
        %v3059 = vpop.f32.mrf.mxu0
        %3060 = vmatprep.mubr.bf16.mxu0 0
        %3061 = vmatmul.mubr.bf16.gmra.mxu0 %v2921
        %v3062 = vpop.f32.mrf.mxu0
        %v3063 = vadd.f32 0.0, %v3062
        %v3064 = vpop.f32.mrf.mxu0
        %v3065 = vpop.f32.mrf.mxu0
        %v3066 = vadd.f32 0.0, %v3065
        %v3067 = vpop.f32.mrf.mxu0
        %3068 = vmatprep.mubr.bf16.mxu0 0
        %3069 = vmatmul.mubr.bf16.gmra.mxu0 %v2924
        %v3070 = vpop.f32.mrf.mxu0
        %v3071 = vadd.f32 0.0, %v3070
        %v3072 = vpop.f32.mrf.mxu0
        %v3073 = vpop.f32.mrf.mxu0
        %v3074 = vadd.f32 0.0, %v3073
        %v3075 = vpop.f32.mrf.mxu0
        %3076 = vmatprep.mubr.bf16.mxu0 0
        %3077 = vmatmul.mubr.bf16.gmra.mxu0 %v2927
        %v3078 = vpop.f32.mrf.mxu0
        %v3079 = vadd.f32 0.0, %v3078
        %v3080 = vpop.f32.mrf.mxu0
        %v3081 = vpop.f32.mrf.mxu0
        %v3082 = vadd.f32 0.0, %v3081
        %v3083 = vpop.f32.mrf.mxu0
        %3084 = vmatprep.mubr.bf16.mxu0 0
        %3085 = vmatmul.mubr.bf16.gmra.mxu0 %v2930
        %v3086 = vpop.f32.mrf.mxu0
        %v3087 = vadd.f32 0.0, %v3086
        %v3088 = vpop.f32.mrf.mxu0
        %v3089 = vpop.f32.mrf.mxu0
        %v3090 = vadd.f32 0.0, %v3089
        %v3091 = vpop.f32.mrf.mxu0
        %3092 = vdwg.mxu0
        %v3093 = vunpack.c.l.b16 %v2443
        %v3094 = vunpack.c.l.b16 %v2452
        %v3095 = vunpack.c.l.b16 %v2465
        %v3096 = vunpack.c.l.b16 %v2474
        %v3097 = vunpack.c.l.b16 %v2487
        %v3098 = vunpack.c.l.b16 %v2496
        %v3099 = vunpack.c.l.b16 %v2509
        %v3100 = vunpack.c.l.b16 %v2518
        %v3101 = vunpack.c.l.b16 %v2531
        %v3102 = vunpack.c.l.b16 %v2540
        %v3103 = vunpack.c.l.b16 %v2553
        %v3104 = vunpack.c.l.b16 %v2562
        %v3105 = vunpack.c.l.b16 %v2575
        %v3106 = vunpack.c.l.b16 %v2584
        %v3107 = vunpack.c.l.b16 %v2597
        %v3108 = vunpack.c.l.b16 %v2606
        %v3109 = vunpack.c.l.b16 %v2619
        %v3110 = vunpack.c.l.b16 %v2628
        %v3111 = vunpack.c.l.b16 %v2641
        %v3112 = vunpack.c.l.b16 %v2650
        %v3113 = vunpack.c.l.b16 %v2663
        %v3114 = vunpack.c.l.b16 %v2672
        %v3115 = vunpack.c.l.b16 %v2685
        %v3116 = vunpack.c.l.b16 %v2694
        %v3117 = vunpack.c.l.b16 %v2707
        %v3118 = vunpack.c.l.b16 %v2716
        %v3119 = vunpack.c.l.b16 %v2729
        %v3120 = vunpack.c.l.b16 %v2738
        %v3121 = vunpack.c.l.b16 %v2751
        %v3122 = vunpack.c.l.b16 %v2760
        %v3123 = vunpack.c.l.b16 %v2773
        %v3124 = vunpack.c.l.b16 %v2782
        %v3125 = vpack.c.b16 %v3094, %v3093
        %v3126 = vpack.c.b16 %v3096, %v3095
        %v3127 = vpack.c.b16 %v3098, %v3097
        %v3128 = vpack.c.b16 %v3100, %v3099
        %v3129 = vpack.c.b16 %v3102, %v3101
        %v3130 = vpack.c.b16 %v3104, %v3103
        %v3131 = vpack.c.b16 %v3106, %v3105
        %v3132 = vpack.c.b16 %v3108, %v3107
        %v3133 = vpack.c.b16 %v3110, %v3109
        %v3134 = vpack.c.b16 %v3112, %v3111
        %v3135 = vpack.c.b16 %v3114, %v3113
        %v3136 = vpack.c.b16 %v3116, %v3115
        %v3137 = vpack.c.b16 %v3118, %v3117
        %v3138 = vpack.c.b16 %v3120, %v3119
        %v3139 = vpack.c.b16 %v3122, %v3121
        %v3140 = vpack.c.b16 %v3124, %v3123
        %v3145 = vunpack.c.l.b16 %v2783
        %v3146 = vunpack.c.l.b16 %v2784
        %v3147 = vunpack.c.l.b16 %v2785
        %v3148 = vunpack.c.l.b16 %v2786
        %v3149 = vpack.c.b16 %v3146, %v3145
        %v3150 = vpack.c.b16 %v3148, %v3147
        %v3154 = vsel %vm1994, %v3125, 0
        %v3157 = vsel %vm1994, %v3126, 0
        %v3160 = vsel %vm1994, %v3127, 0
        %v3163 = vsel %vm1994, %v3128, 0
        %v3166 = vsel %vm1994, %v3129, 0
        %v3169 = vsel %vm1994, %v3130, 0
        %v3172 = vsel %vm1994, %v3131, 0
        %v3175 = vsel %vm1994, %v3132, 0
        %v3178 = vsel %vm1994, %v3133, 0
        %v3181 = vsel %vm1994, %v3134, 0
        %v3184 = vsel %vm1994, %v3135, 0
        %v3187 = vsel %vm1994, %v3136, 0
        %v3190 = vsel %vm1994, %v3137, 0
        %v3193 = vsel %vm1994, %v3138, 0
        %v3196 = vsel %vm1994, %v3139, 0
        %v3199 = vsel %vm1994, %v3140, 0
        %3201 = vmatprep.subr.bf16.mxu0 0
        %3202 = vmatpush1.bf16.msra.mxu0 0
        %3203 = vmatprep.subr.bf16.mxu0 0
        %3204 = vmatpush1.bf16.msra.mxu0 0
        %3205 = vmatprep.subr.bf16.mxu0 0
        %3206 = vmatpush1.bf16.msra.mxu0 0
        %3207 = vmatprep.subr.bf16.mxu0 0
        %3208 = vmatpush1.bf16.msra.mxu0 0
        %3209 = vmatprep.subr.bf16.mxu0 0
        %3210 = vmatpush1.bf16.msra.mxu0 0
        %3211 = vmatprep.subr.bf16.mxu0 0
        %3212 = vmatpush1.bf16.msra.mxu0 0
        %3213 = vmatprep.subr.bf16.mxu0 0
        %3214 = vmatpush1.bf16.msra.mxu0 %v3150
        %3215 = vmatprep.subr.bf16.mxu0 0
        %3216 = vmatpush1.bf16.msra.mxu0 %v3149
        %3217 = vmatprep.subr.bf16.mxu0 0
        %3218 = vmatpush2.bf16.msra.mxu0 0
        %3219 = vmatprep.subr.bf16.mxu0 0
        %3220 = vmatpush2.bf16.msra.mxu0 0
        %3221 = vmatprep.subr.bf16.mxu0 0
        %3222 = vmatpush2.bf16.msra.mxu0 0
        %3223 = vmatprep.subr.bf16.mxu0 0
        %3224 = vmatpush2.bf16.msra.mxu0 0
        %3225 = vmatprep.subr.bf16.mxu0 0
        %3226 = vmatpush2.bf16.msra.mxu0 0
        %3227 = vmatprep.subr.bf16.mxu0 0
        %3228 = vmatpush2.bf16.msra.mxu0 0
        %3229 = vmatprep.subr.bf16.mxu0 0
        %3230 = vmatpush2.bf16.msra.mxu0 0
        %3231 = vmatprep.subr.bf16.mxu0 0
        %3232 = vmatpush2.bf16.msra.mxu0 0
        %3233 = vmatprep.mubr.bf16.mxu0 0
        %3234 = vmatmul.mubr.bf16.gmra.mxu0 %v3154
        %v3235 = vpop.f32.mrf.mxu0
        %v3236 = vadd.f32 %v2967, %v3235
        %v3237 = vpop.f32.mrf.mxu0
        %v3238 = vpop.f32.mrf.mxu0
        %v3239 = vadd.f32 %v2970, %v3238
        %v3240 = vpop.f32.mrf.mxu0
        %3241 = vmatprep.mubr.bf16.mxu0 0
        %3242 = vmatmul.mubr.bf16.gmra.mxu0 %v3157
        %v3243 = vpop.f32.mrf.mxu0
        %v3244 = vadd.f32 %v2975, %v3243
        %v3245 = vpop.f32.mrf.mxu0
        %v3246 = vpop.f32.mrf.mxu0
        %v3247 = vadd.f32 %v2978, %v3246
        %v3248 = vpop.f32.mrf.mxu0
        %3249 = vmatprep.mubr.bf16.mxu0 0
        %3250 = vmatmul.mubr.bf16.gmra.mxu0 %v3160
        %v3251 = vpop.f32.mrf.mxu0
        %v3252 = vadd.f32 %v2983, %v3251
        %v3253 = vpop.f32.mrf.mxu0
        %v3254 = vpop.f32.mrf.mxu0
        %v3255 = vadd.f32 %v2986, %v3254
        %v3256 = vpop.f32.mrf.mxu0
        %3257 = vmatprep.mubr.bf16.mxu0 0
        %3258 = vmatmul.mubr.bf16.gmra.mxu0 %v3163
        %v3259 = vpop.f32.mrf.mxu0
        %v3260 = vadd.f32 %v2991, %v3259
        %v3261 = vpop.f32.mrf.mxu0
        %v3262 = vpop.f32.mrf.mxu0
        %v3263 = vadd.f32 %v2994, %v3262
        %v3264 = vpop.f32.mrf.mxu0
        %3265 = vmatprep.mubr.bf16.mxu0 0
        %3266 = vmatmul.mubr.bf16.gmra.mxu0 %v3166
        %v3267 = vpop.f32.mrf.mxu0
        %v3268 = vadd.f32 %v2999, %v3267
        %v3269 = vpop.f32.mrf.mxu0
        %v3270 = vpop.f32.mrf.mxu0
        %v3271 = vadd.f32 %v3002, %v3270
        %v3272 = vpop.f32.mrf.mxu0
        %3273 = vmatprep.mubr.bf16.mxu0 0
        %3274 = vmatmul.mubr.bf16.gmra.mxu0 %v3169
        %v3275 = vpop.f32.mrf.mxu0
        %v3276 = vadd.f32 %v3007, %v3275
        %v3277 = vpop.f32.mrf.mxu0
        %v3278 = vpop.f32.mrf.mxu0
        %v3279 = vadd.f32 %v3010, %v3278
        %v3280 = vpop.f32.mrf.mxu0
        %3281 = vmatprep.mubr.bf16.mxu0 0
        %3282 = vmatmul.mubr.bf16.gmra.mxu0 %v3172
        %v3283 = vpop.f32.mrf.mxu0
        %v3284 = vadd.f32 %v3015, %v3283
        %v3285 = vpop.f32.mrf.mxu0
        %v3286 = vpop.f32.mrf.mxu0
        %v3287 = vadd.f32 %v3018, %v3286
        %v3288 = vpop.f32.mrf.mxu0
        %3289 = vmatprep.mubr.bf16.mxu0 0
        %3290 = vmatmul.mubr.bf16.gmra.mxu0 %v3175
        %v3291 = vpop.f32.mrf.mxu0
        %v3292 = vadd.f32 %v3023, %v3291
        %v3293 = vpop.f32.mrf.mxu0
        %v3294 = vpop.f32.mrf.mxu0
        %v3295 = vadd.f32 %v3026, %v3294
        %v3296 = vpop.f32.mrf.mxu0
        %3297 = vmatprep.mubr.bf16.mxu0 0
        %3298 = vmatmul.mubr.bf16.gmra.mxu0 %v3178
        %v3299 = vpop.f32.mrf.mxu0
        %v3300 = vadd.f32 %v3031, %v3299
        %v3301 = vpop.f32.mrf.mxu0
        %v3302 = vpop.f32.mrf.mxu0
        %v3303 = vadd.f32 %v3034, %v3302
        %v3304 = vpop.f32.mrf.mxu0
        %3305 = vmatprep.mubr.bf16.mxu0 0
        %3306 = vmatmul.mubr.bf16.gmra.mxu0 %v3181
        %v3307 = vpop.f32.mrf.mxu0
        %v3308 = vadd.f32 %v3039, %v3307
        %v3309 = vpop.f32.mrf.mxu0
        %v3310 = vpop.f32.mrf.mxu0
        %v3311 = vadd.f32 %v3042, %v3310
        %v3312 = vpop.f32.mrf.mxu0
        %3313 = vmatprep.mubr.bf16.mxu0 0
        %3314 = vmatmul.mubr.bf16.gmra.mxu0 %v3184
        %v3315 = vpop.f32.mrf.mxu0
        %v3316 = vadd.f32 %v3047, %v3315
        %v3317 = vpop.f32.mrf.mxu0
        %v3318 = vpop.f32.mrf.mxu0
        %v3319 = vadd.f32 %v3050, %v3318
        %v3320 = vpop.f32.mrf.mxu0
        %3321 = vmatprep.mubr.bf16.mxu0 0
        %3322 = vmatmul.mubr.bf16.gmra.mxu0 %v3187
        %v3323 = vpop.f32.mrf.mxu0
        %v3324 = vadd.f32 %v3055, %v3323
        %v3325 = vpop.f32.mrf.mxu0
        %v3326 = vpop.f32.mrf.mxu0
        %v3327 = vadd.f32 %v3058, %v3326
        %v3328 = vpop.f32.mrf.mxu0
        %3329 = vmatprep.mubr.bf16.mxu0 0
        %3330 = vmatmul.mubr.bf16.gmra.mxu0 %v3190
        %v3331 = vpop.f32.mrf.mxu0
        %v3332 = vadd.f32 %v3063, %v3331
        %v3333 = vpop.f32.mrf.mxu0
        %v3334 = vpop.f32.mrf.mxu0
        %v3335 = vadd.f32 %v3066, %v3334
        %v3336 = vpop.f32.mrf.mxu0
        %3337 = vmatprep.mubr.bf16.mxu0 0
        %3338 = vmatmul.mubr.bf16.gmra.mxu0 %v3193
        %v3339 = vpop.f32.mrf.mxu0
        %v3340 = vadd.f32 %v3071, %v3339
        %v3341 = vpop.f32.mrf.mxu0
        %v3342 = vpop.f32.mrf.mxu0
        %v3343 = vadd.f32 %v3074, %v3342
        %v3344 = vpop.f32.mrf.mxu0
        %3345 = vmatprep.mubr.bf16.mxu0 0
        %3346 = vmatmul.mubr.bf16.gmra.mxu0 %v3196
        %v3347 = vpop.f32.mrf.mxu0
        %v3348 = vadd.f32 %v3079, %v3347
        %v3349 = vpop.f32.mrf.mxu0
        %v3350 = vpop.f32.mrf.mxu0
        %v3351 = vadd.f32 %v3082, %v3350
        %v3352 = vpop.f32.mrf.mxu0
        %3353 = vmatprep.mubr.bf16.mxu0 0
        %3354 = vmatmul.mubr.bf16.gmra.mxu0 %v3199
        %v3355 = vpop.f32.mrf.mxu0
        %v3356 = vadd.f32 %v3087, %v3355
        %v3357 = vpop.f32.mrf.mxu0
        %v3358 = vpop.f32.mrf.mxu0
        %v3359 = vadd.f32 %v3090, %v3358
        %v3360 = vpop.f32.mrf.mxu0
        %3361 = vdwg.mxu0
        %v3362 = vld [vmem:[%s2379 + $0x4] sm:$0xf]
        %v3363 = vld [vmem:[%s2379 + $0x8] sm:$0xf]
        %v3364 = vld [vmem:[%s2379 + $0xc] sm:$0x1]
        %v3365 = vld [vmem:[%s2379 + $0x14] sm:$0xf]
        %v3366 = vld [vmem:[%s2379 + $0x18] sm:$0xf]
        %v3367 = vld [vmem:[%s2379 + $0x1c] sm:$0x1]
        %v3368 = vld [vmem:[%s2379 + $0x24] sm:$0xf]
        %v3369 = vld [vmem:[%s2379 + $0x28] sm:$0xf]
        %v3370 = vld [vmem:[%s2379 + $0x2c] sm:$0x1]
        %v3371 = vld [vmem:[%s2379 + $0x34] sm:$0xf]
        %v3372 = vld [vmem:[%s2379 + $0x38] sm:$0xf]
        %v3373 = vld [vmem:[%s2379 + $0x3c] sm:$0x1]
        %v3374 = vld [vmem:[%s2379 + $0x44] sm:$0xf]
        %v3375 = vld [vmem:[%s2379 + $0x48] sm:$0xf]
        %v3376 = vld [vmem:[%s2379 + $0x4c] sm:$0x1]
        %v3377 = vld [vmem:[%s2379 + $0x54] sm:$0xf]
        %v3378 = vld [vmem:[%s2379 + $0x58] sm:$0xf]
        %v3379 = vld [vmem:[%s2379 + $0x5c] sm:$0x1]
        %v3380 = vld [vmem:[%s2379 + $0x64] sm:$0xf]
        %v3381 = vld [vmem:[%s2379 + $0x68] sm:$0xf]
        %v3382 = vld [vmem:[%s2379 + $0x6c] sm:$0x1]
        %v3383 = vld [vmem:[%s2379 + $0x74] sm:$0xf]
        %v3384 = vld [vmem:[%s2379 + $0x78] sm:$0xf]
        %v3385 = vld [vmem:[%s2379 + $0x7c] sm:$0x1]
        %v3386 = vld [vmem:[%s2379 + $0x84] sm:$0xf]
        %v3387 = vld [vmem:[%s2379 + $0x88] sm:$0xf]
        %v3388 = vld [vmem:[%s2379 + $0x8c] sm:$0x1]
        %v3389 = vld [vmem:[%s2379 + $0x94] sm:$0xf]
        %v3390 = vld [vmem:[%s2379 + $0x98] sm:$0xf]
        %v3391 = vld [vmem:[%s2379 + $0x9c] sm:$0x1]
        %v3392 = vld [vmem:[%s2379 + $0xa4] sm:$0xf]
        %v3393 = vld [vmem:[%s2379 + $0xa8] sm:$0xf]
        %v3394 = vld [vmem:[%s2379 + $0xac] sm:$0x1]
        %v3395 = vld [vmem:[%s2379 + $0xb4] sm:$0xf]
        %v3396 = vld [vmem:[%s2379 + $0xb8] sm:$0xf]
        %v3397 = vld [vmem:[%s2379 + $0xbc] sm:$0x1]
        %v3398 = vld [vmem:[%s2379 + $0xc4] sm:$0xf]
        %v3399 = vld [vmem:[%s2379 + $0xc8] sm:$0xf]
        %v3400 = vld [vmem:[%s2379 + $0xcc] sm:$0x1]
        %v3401 = vld [vmem:[%s2379 + $0xd4] sm:$0xf]
        %v3402 = vld [vmem:[%s2379 + $0xd8] sm:$0xf]
        %v3403 = vld [vmem:[%s2379 + $0xdc] sm:$0x1]
        %v3404 = vld [vmem:[%s2379 + $0xe4] sm:$0xf]
        %v3405 = vld [vmem:[%s2379 + $0xe8] sm:$0xf]
        %v3406 = vld [vmem:[%s2379 + $0xec] sm:$0x1]
        %v3407 = vld [vmem:[%s2379 + $0xf4] sm:$0xf]
        %v3408 = vld [vmem:[%s2379 + $0xf8] sm:$0xf]
        %v3409 = vld [vmem:[%s2379 + $0xfc] sm:$0x1]
        %vm3410 = vsmask.f32 3328
        %vm3411 = vsmask.f32 7440
        %vm3412 = vmor %vm3410, %vm3411
        %v3414 = vshrl.u32 %v3362, 16
        %v3416 = vrot.slane %v3414, 4
        %v3417 = vshll.u32 %v3362, 16
        %v3419 = vrot.slane %v3417, 5
        %v3420 = vor.u32 %v3416, %v3419
        %v3421 = vrot.slane %v3420, 4
        %v3423 = vshll.u32 %v3363, 16
        %v3425 = vrot.slane %v3423, 5
        %v3426 = vsel %vm3412, %v3421, %v3425
        %v3427 = vshrl.u32 %v3363, 16
        %v3429 = vrot.slane %v3427, 4
        %v3430 = vor.u32 %v3429, %v3425
        %v3431 = vrot.slane %v3430, 4
        %v3433 = vshll.u32 %v3364, 16
        %v3435 = vrot.slane %v3433, 5
        %v3436 = vsel %vm3412, %v3431, %v3435
        %v3438 = vshrl.u32 %v3365, 16
        %v3440 = vrot.slane %v3438, 4
        %v3441 = vshll.u32 %v3365, 16
        %v3443 = vrot.slane %v3441, 5
        %v3444 = vor.u32 %v3440, %v3443
        %v3445 = vrot.slane %v3444, 4
        %v3447 = vshll.u32 %v3366, 16
        %v3449 = vrot.slane %v3447, 5
        %v3450 = vsel %vm3412, %v3445, %v3449
        %v3451 = vshrl.u32 %v3366, 16
        %v3453 = vrot.slane %v3451, 4
        %v3454 = vor.u32 %v3453, %v3449
        %v3455 = vrot.slane %v3454, 4
        %v3457 = vshll.u32 %v3367, 16
        %v3459 = vrot.slane %v3457, 5
        %v3460 = vsel %vm3412, %v3455, %v3459
        %v3462 = vshrl.u32 %v3368, 16
        %v3464 = vrot.slane %v3462, 4
        %v3465 = vshll.u32 %v3368, 16
        %v3467 = vrot.slane %v3465, 5
        %v3468 = vor.u32 %v3464, %v3467
        %v3469 = vrot.slane %v3468, 4
        %v3471 = vshll.u32 %v3369, 16
        %v3473 = vrot.slane %v3471, 5
        %v3474 = vsel %vm3412, %v3469, %v3473
        %v3475 = vshrl.u32 %v3369, 16
        %v3477 = vrot.slane %v3475, 4
        %v3478 = vor.u32 %v3477, %v3473
        %v3479 = vrot.slane %v3478, 4
        %v3481 = vshll.u32 %v3370, 16
        %v3483 = vrot.slane %v3481, 5
        %v3484 = vsel %vm3412, %v3479, %v3483
        %v3486 = vshrl.u32 %v3371, 16
        %v3488 = vrot.slane %v3486, 4
        %v3489 = vshll.u32 %v3371, 16
        %v3491 = vrot.slane %v3489, 5
        %v3492 = vor.u32 %v3488, %v3491
        %v3493 = vrot.slane %v3492, 4
        %v3495 = vshll.u32 %v3372, 16
        %v3497 = vrot.slane %v3495, 5
        %v3498 = vsel %vm3412, %v3493, %v3497
        %v3499 = vshrl.u32 %v3372, 16
        %v3501 = vrot.slane %v3499, 4
        %v3502 = vor.u32 %v3501, %v3497
        %v3503 = vrot.slane %v3502, 4
        %v3505 = vshll.u32 %v3373, 16
        %v3507 = vrot.slane %v3505, 5
        %v3508 = vsel %vm3412, %v3503, %v3507
        %v3510 = vshrl.u32 %v3374, 16
        %v3512 = vrot.slane %v3510, 4
        %v3513 = vshll.u32 %v3374, 16
        %v3515 = vrot.slane %v3513, 5
        %v3516 = vor.u32 %v3512, %v3515
        %v3517 = vrot.slane %v3516, 4
        %v3519 = vshll.u32 %v3375, 16
        %v3521 = vrot.slane %v3519, 5
        %v3522 = vsel %vm3412, %v3517, %v3521
        %v3523 = vshrl.u32 %v3375, 16
        %v3525 = vrot.slane %v3523, 4
        %v3526 = vor.u32 %v3525, %v3521
        %v3527 = vrot.slane %v3526, 4
        %v3529 = vshll.u32 %v3376, 16
        %v3531 = vrot.slane %v3529, 5
        %v3532 = vsel %vm3412, %v3527, %v3531
        %v3534 = vshrl.u32 %v3377, 16
        %v3536 = vrot.slane %v3534, 4
        %v3537 = vshll.u32 %v3377, 16
        %v3539 = vrot.slane %v3537, 5
        %v3540 = vor.u32 %v3536, %v3539
        %v3541 = vrot.slane %v3540, 4
        %v3543 = vshll.u32 %v3378, 16
        %v3545 = vrot.slane %v3543, 5
        %v3546 = vsel %vm3412, %v3541, %v3545
        %v3547 = vshrl.u32 %v3378, 16
        %v3549 = vrot.slane %v3547, 4
        %v3550 = vor.u32 %v3549, %v3545
        %v3551 = vrot.slane %v3550, 4
        %v3553 = vshll.u32 %v3379, 16
        %v3555 = vrot.slane %v3553, 5
        %v3556 = vsel %vm3412, %v3551, %v3555
        %v3558 = vshrl.u32 %v3380, 16
        %v3560 = vrot.slane %v3558, 4
        %v3561 = vshll.u32 %v3380, 16
        %v3563 = vrot.slane %v3561, 5
        %v3564 = vor.u32 %v3560, %v3563
        %v3565 = vrot.slane %v3564, 4
        %v3567 = vshll.u32 %v3381, 16
        %v3569 = vrot.slane %v3567, 5
        %v3570 = vsel %vm3412, %v3565, %v3569
        %v3571 = vshrl.u32 %v3381, 16
        %v3573 = vrot.slane %v3571, 4
        %v3574 = vor.u32 %v3573, %v3569
        %v3575 = vrot.slane %v3574, 4
        %v3577 = vshll.u32 %v3382, 16
        %v3579 = vrot.slane %v3577, 5
        %v3580 = vsel %vm3412, %v3575, %v3579
        %v3582 = vshrl.u32 %v3383, 16
        %v3584 = vrot.slane %v3582, 4
        %v3585 = vshll.u32 %v3383, 16
        %v3587 = vrot.slane %v3585, 5
        %v3588 = vor.u32 %v3584, %v3587
        %v3589 = vrot.slane %v3588, 4
        %v3591 = vshll.u32 %v3384, 16
        %v3593 = vrot.slane %v3591, 5
        %v3594 = vsel %vm3412, %v3589, %v3593
        %v3595 = vshrl.u32 %v3384, 16
        %v3597 = vrot.slane %v3595, 4
        %v3598 = vor.u32 %v3597, %v3593
        %v3599 = vrot.slane %v3598, 4
        %v3601 = vshll.u32 %v3385, 16
        %v3603 = vrot.slane %v3601, 5
        %v3604 = vsel %vm3412, %v3599, %v3603
        %v3606 = vshrl.u32 %v3386, 16
        %v3608 = vrot.slane %v3606, 4
        %v3609 = vshll.u32 %v3386, 16
        %v3611 = vrot.slane %v3609, 5
        %v3612 = vor.u32 %v3608, %v3611
        %v3613 = vrot.slane %v3612, 4
        %v3615 = vshll.u32 %v3387, 16
        %v3617 = vrot.slane %v3615, 5
        %v3618 = vsel %vm3412, %v3613, %v3617
        %v3619 = vshrl.u32 %v3387, 16
        %v3621 = vrot.slane %v3619, 4
        %v3622 = vor.u32 %v3621, %v3617
        %v3623 = vrot.slane %v3622, 4
        %v3625 = vshll.u32 %v3388, 16
        %v3627 = vrot.slane %v3625, 5
        %v3628 = vsel %vm3412, %v3623, %v3627
        %v3630 = vshrl.u32 %v3389, 16
        %v3632 = vrot.slane %v3630, 4
        %v3633 = vshll.u32 %v3389, 16
        %v3635 = vrot.slane %v3633, 5
        %v3636 = vor.u32 %v3632, %v3635
        %v3637 = vrot.slane %v3636, 4
        %v3639 = vshll.u32 %v3390, 16
        %v3641 = vrot.slane %v3639, 5
        %v3642 = vsel %vm3412, %v3637, %v3641
        %v3643 = vshrl.u32 %v3390, 16
        %v3645 = vrot.slane %v3643, 4
        %v3646 = vor.u32 %v3645, %v3641
        %v3647 = vrot.slane %v3646, 4
        %v3649 = vshll.u32 %v3391, 16
        %v3651 = vrot.slane %v3649, 5
        %v3652 = vsel %vm3412, %v3647, %v3651
        %v3654 = vshrl.u32 %v3392, 16
        %v3656 = vrot.slane %v3654, 4
        %v3657 = vshll.u32 %v3392, 16
        %v3659 = vrot.slane %v3657, 5
        %v3660 = vor.u32 %v3656, %v3659
        %v3661 = vrot.slane %v3660, 4
        %v3663 = vshll.u32 %v3393, 16
        %v3665 = vrot.slane %v3663, 5
        %v3666 = vsel %vm3412, %v3661, %v3665
        %v3667 = vshrl.u32 %v3393, 16
        %v3669 = vrot.slane %v3667, 4
        %v3670 = vor.u32 %v3669, %v3665
        %v3671 = vrot.slane %v3670, 4
        %v3673 = vshll.u32 %v3394, 16
        %v3675 = vrot.slane %v3673, 5
        %v3676 = vsel %vm3412, %v3671, %v3675
        %v3678 = vshrl.u32 %v3395, 16
        %v3680 = vrot.slane %v3678, 4
        %v3681 = vshll.u32 %v3395, 16
        %v3683 = vrot.slane %v3681, 5
        %v3684 = vor.u32 %v3680, %v3683
        %v3685 = vrot.slane %v3684, 4
        %v3687 = vshll.u32 %v3396, 16
        %v3689 = vrot.slane %v3687, 5
        %v3690 = vsel %vm3412, %v3685, %v3689
        %v3691 = vshrl.u32 %v3396, 16
        %v3693 = vrot.slane %v3691, 4
        %v3694 = vor.u32 %v3693, %v3689
        %v3695 = vrot.slane %v3694, 4
        %v3697 = vshll.u32 %v3397, 16
        %v3699 = vrot.slane %v3697, 5
        %v3700 = vsel %vm3412, %v3695, %v3699
        %v3702 = vshrl.u32 %v3398, 16
        %v3704 = vrot.slane %v3702, 4
        %v3705 = vshll.u32 %v3398, 16
        %v3707 = vrot.slane %v3705, 5
        %v3708 = vor.u32 %v3704, %v3707
        %v3709 = vrot.slane %v3708, 4
        %v3711 = vshll.u32 %v3399, 16
        %v3713 = vrot.slane %v3711, 5
        %v3714 = vsel %vm3412, %v3709, %v3713
        %v3715 = vshrl.u32 %v3399, 16
        %v3717 = vrot.slane %v3715, 4
        %v3718 = vor.u32 %v3717, %v3713
        %v3719 = vrot.slane %v3718, 4
        %v3721 = vshll.u32 %v3400, 16
        %v3723 = vrot.slane %v3721, 5
        %v3724 = vsel %vm3412, %v3719, %v3723
        %v3726 = vshrl.u32 %v3401, 16
        %v3728 = vrot.slane %v3726, 4
        %v3729 = vshll.u32 %v3401, 16
        %v3731 = vrot.slane %v3729, 5
        %v3732 = vor.u32 %v3728, %v3731
        %v3733 = vrot.slane %v3732, 4
        %v3735 = vshll.u32 %v3402, 16
        %v3737 = vrot.slane %v3735, 5
        %v3738 = vsel %vm3412, %v3733, %v3737
        %v3739 = vshrl.u32 %v3402, 16
        %v3741 = vrot.slane %v3739, 4
        %v3742 = vor.u32 %v3741, %v3737
        %v3743 = vrot.slane %v3742, 4
        %v3745 = vshll.u32 %v3403, 16
        %v3747 = vrot.slane %v3745, 5
        %v3748 = vsel %vm3412, %v3743, %v3747
        %v3750 = vshrl.u32 %v3404, 16
        %v3752 = vrot.slane %v3750, 4
        %v3753 = vshll.u32 %v3404, 16
        %v3755 = vrot.slane %v3753, 5
        %v3756 = vor.u32 %v3752, %v3755
        %v3757 = vrot.slane %v3756, 4
        %v3759 = vshll.u32 %v3405, 16
        %v3761 = vrot.slane %v3759, 5
        %v3762 = vsel %vm3412, %v3757, %v3761
        %v3763 = vshrl.u32 %v3405, 16
        %v3765 = vrot.slane %v3763, 4
        %v3766 = vor.u32 %v3765, %v3761
        %v3767 = vrot.slane %v3766, 4
        %v3769 = vshll.u32 %v3406, 16
        %v3771 = vrot.slane %v3769, 5
        %v3772 = vsel %vm3412, %v3767, %v3771
        %v3774 = vshrl.u32 %v3407, 16
        %v3776 = vrot.slane %v3774, 4
        %v3777 = vshll.u32 %v3407, 16
        %v3779 = vrot.slane %v3777, 5
        %v3780 = vor.u32 %v3776, %v3779
        %v3781 = vrot.slane %v3780, 4
        %v3783 = vshll.u32 %v3408, 16
        %v3785 = vrot.slane %v3783, 5
        %v3786 = vsel %vm3412, %v3781, %v3785
        %v3787 = vshrl.u32 %v3408, 16
        %v3789 = vrot.slane %v3787, 4
        %v3790 = vor.u32 %v3789, %v3785
        %v3791 = vrot.slane %v3790, 4
        %v3793 = vshll.u32 %v3409, 16
        %v3795 = vrot.slane %v3793, 5
        %v3796 = vsel %vm3412, %v3791, %v3795
        %s3797 = scalar_lea.vmem %s3, 32
        %v3798 = vld [vmem:[%s3797] sm:$0xf]
        %v3799 = vld [vmem:[%s3797 + $0x4] sm:$0xf]
        %v3800 = vld [vmem:[%s3797 + $0x8] sm:$0xf]
        %v3801 = vld [vmem:[%s3797 + $0xc] sm:$0xf]
        %v3802 = vunpack.c.l.b16 %v3426
        %v3803 = vunpack.c.l.b16 %v3436
        %v3804 = vunpack.c.l.b16 %v3450
        %v3805 = vunpack.c.l.b16 %v3460
        %v3806 = vunpack.c.l.b16 %v3474
        %v3807 = vunpack.c.l.b16 %v3484
        %v3808 = vunpack.c.l.b16 %v3498
        %v3809 = vunpack.c.l.b16 %v3508
        %v3810 = vunpack.c.l.b16 %v3522
        %v3811 = vunpack.c.l.b16 %v3532
        %v3812 = vunpack.c.l.b16 %v3546
        %v3813 = vunpack.c.l.b16 %v3556
        %v3814 = vunpack.c.l.b16 %v3570
        %v3815 = vunpack.c.l.b16 %v3580
        %v3816 = vunpack.c.l.b16 %v3594
        %v3817 = vunpack.c.l.b16 %v3604
        %v3818 = vunpack.c.l.b16 %v3618
        %v3819 = vunpack.c.l.b16 %v3628
        %v3820 = vunpack.c.l.b16 %v3642
        %v3821 = vunpack.c.l.b16 %v3652
        %v3822 = vunpack.c.l.b16 %v3666
        %v3823 = vunpack.c.l.b16 %v3676
        %v3824 = vunpack.c.l.b16 %v3690
        %v3825 = vunpack.c.l.b16 %v3700
        %v3826 = vunpack.c.l.b16 %v3714
        %v3827 = vunpack.c.l.b16 %v3724
        %v3828 = vunpack.c.l.b16 %v3738
        %v3829 = vunpack.c.l.b16 %v3748
        %v3830 = vunpack.c.l.b16 %v3762
        %v3831 = vunpack.c.l.b16 %v3772
        %v3832 = vunpack.c.l.b16 %v3786
        %v3833 = vunpack.c.l.b16 %v3796
        %v3834 = vpack.c.b16 %v3803, %v3802
        %v3835 = vpack.c.b16 %v3805, %v3804
        %v3836 = vpack.c.b16 %v3807, %v3806
        %v3837 = vpack.c.b16 %v3809, %v3808
        %v3838 = vpack.c.b16 %v3811, %v3810
        %v3839 = vpack.c.b16 %v3813, %v3812
        %v3840 = vpack.c.b16 %v3815, %v3814
        %v3841 = vpack.c.b16 %v3817, %v3816
        %v3842 = vpack.c.b16 %v3819, %v3818
        %v3843 = vpack.c.b16 %v3821, %v3820
        %v3844 = vpack.c.b16 %v3823, %v3822
        %v3845 = vpack.c.b16 %v3825, %v3824
        %v3846 = vpack.c.b16 %v3827, %v3826
        %v3847 = vpack.c.b16 %v3829, %v3828
        %v3848 = vpack.c.b16 %v3831, %v3830
        %v3849 = vpack.c.b16 %v3833, %v3832
        %v3854 = vunpack.c.l.b16 %v3798
        %v3855 = vunpack.c.l.b16 %v3799
        %v3856 = vunpack.c.l.b16 %v3800
        %v3857 = vunpack.c.l.b16 %v3801
        %v3858 = vpack.c.b16 %v3855, %v3854
        %v3859 = vpack.c.b16 %v3857, %v3856
        %v3863 = vsel %vm1994, %v3834, 0
        %v3866 = vsel %vm1994, %v3835, 0
        %v3869 = vsel %vm1994, %v3836, 0
        %v3872 = vsel %vm1994, %v3837, 0
        %v3875 = vsel %vm1994, %v3838, 0
        %v3878 = vsel %vm1994, %v3839, 0
        %v3881 = vsel %vm1994, %v3840, 0
        %v3884 = vsel %vm1994, %v3841, 0
        %v3887 = vsel %vm1994, %v3842, 0
        %v3890 = vsel %vm1994, %v3843, 0
        %v3893 = vsel %vm1994, %v3844, 0
        %v3896 = vsel %vm1994, %v3845, 0
        %v3899 = vsel %vm1994, %v3846, 0
        %v3902 = vsel %vm1994, %v3847, 0
        %v3905 = vsel %vm1994, %v3848, 0
        %v3908 = vsel %vm1994, %v3849, 0
        %3910 = vmatprep.subr.bf16.mxu0 0
        %3911 = vmatpush1.bf16.msra.mxu0 0
        %3912 = vmatprep.subr.bf16.mxu0 0
        %3913 = vmatpush1.bf16.msra.mxu0 0
        %3914 = vmatprep.subr.bf16.mxu0 0
        %3915 = vmatpush1.bf16.msra.mxu0 0
        %3916 = vmatprep.subr.bf16.mxu0 0
        %3917 = vmatpush1.bf16.msra.mxu0 0
        %3918 = vmatprep.subr.bf16.mxu0 0
        %3919 = vmatpush1.bf16.msra.mxu0 0
        %3920 = vmatprep.subr.bf16.mxu0 0
        %3921 = vmatpush1.bf16.msra.mxu0 0
        %3922 = vmatprep.subr.bf16.mxu0 0
        %3923 = vmatpush1.bf16.msra.mxu0 %v3859
        %3924 = vmatprep.subr.bf16.mxu0 0
        %3925 = vmatpush1.bf16.msra.mxu0 %v3858
        %3926 = vmatprep.subr.bf16.mxu0 0
        %3927 = vmatpush2.bf16.msra.mxu0 0
        %3928 = vmatprep.subr.bf16.mxu0 0
        %3929 = vmatpush2.bf16.msra.mxu0 0
        %3930 = vmatprep.subr.bf16.mxu0 0
        %3931 = vmatpush2.bf16.msra.mxu0 0
        %3932 = vmatprep.subr.bf16.mxu0 0
        %3933 = vmatpush2.bf16.msra.mxu0 0
        %3934 = vmatprep.subr.bf16.mxu0 0
        %3935 = vmatpush2.bf16.msra.mxu0 0
        %3936 = vmatprep.subr.bf16.mxu0 0
        %3937 = vmatpush2.bf16.msra.mxu0 0
        %3938 = vmatprep.subr.bf16.mxu0 0
        %3939 = vmatpush2.bf16.msra.mxu0 0
        %3940 = vmatprep.subr.bf16.mxu0 0
        %3941 = vmatpush2.bf16.msra.mxu0 0
        %3942 = vmatprep.mubr.bf16.mxu0 0
        %3943 = vmatmul.mubr.bf16.gmra.mxu0 %v3863
        %v3944 = vpop.f32.mrf.mxu0
        %v3945 = vadd.f32 0.0, %v3944
        %v3946 = vpop.f32.mrf.mxu0
        %v3947 = vpop.f32.mrf.mxu0
        %v3948 = vadd.f32 0.0, %v3947
        %v3949 = vpop.f32.mrf.mxu0
        %3950 = vmatprep.mubr.bf16.mxu0 0
        %3951 = vmatmul.mubr.bf16.gmra.mxu0 %v3866
        %v3952 = vpop.f32.mrf.mxu0
        %v3953 = vadd.f32 0.0, %v3952
        %v3954 = vpop.f32.mrf.mxu0
        %v3955 = vpop.f32.mrf.mxu0
        %v3956 = vadd.f32 0.0, %v3955
        %v3957 = vpop.f32.mrf.mxu0
        %3958 = vmatprep.mubr.bf16.mxu0 0
        %3959 = vmatmul.mubr.bf16.gmra.mxu0 %v3869
        %v3960 = vpop.f32.mrf.mxu0
        %v3961 = vadd.f32 0.0, %v3960
        %v3962 = vpop.f32.mrf.mxu0
        %v3963 = vpop.f32.mrf.mxu0
        %v3964 = vadd.f32 0.0, %v3963
        %v3965 = vpop.f32.mrf.mxu0
        %3966 = vmatprep.mubr.bf16.mxu0 0
        %3967 = vmatmul.mubr.bf16.gmra.mxu0 %v3872
        %v3968 = vpop.f32.mrf.mxu0
        %v3969 = vadd.f32 0.0, %v3968
        %v3970 = vpop.f32.mrf.mxu0
        %v3971 = vpop.f32.mrf.mxu0
        %v3972 = vadd.f32 0.0, %v3971
        %v3973 = vpop.f32.mrf.mxu0
        %3974 = vmatprep.mubr.bf16.mxu0 0
        %3975 = vmatmul.mubr.bf16.gmra.mxu0 %v3875
        %v3976 = vpop.f32.mrf.mxu0
        %v3977 = vadd.f32 0.0, %v3976
        %v3978 = vpop.f32.mrf.mxu0
        %v3979 = vpop.f32.mrf.mxu0
        %v3980 = vadd.f32 0.0, %v3979
        %v3981 = vpop.f32.mrf.mxu0
        %3982 = vmatprep.mubr.bf16.mxu0 0
        %3983 = vmatmul.mubr.bf16.gmra.mxu0 %v3878
        %v3984 = vpop.f32.mrf.mxu0
        %v3985 = vadd.f32 0.0, %v3984
        %v3986 = vpop.f32.mrf.mxu0
        %v3987 = vpop.f32.mrf.mxu0
        %v3988 = vadd.f32 0.0, %v3987
        %v3989 = vpop.f32.mrf.mxu0
        %3990 = vmatprep.mubr.bf16.mxu0 0
        %3991 = vmatmul.mubr.bf16.gmra.mxu0 %v3881
        %v3992 = vpop.f32.mrf.mxu0
        %v3993 = vadd.f32 0.0, %v3992
        %v3994 = vpop.f32.mrf.mxu0
        %v3995 = vpop.f32.mrf.mxu0
        %v3996 = vadd.f32 0.0, %v3995
        %v3997 = vpop.f32.mrf.mxu0
        %3998 = vmatprep.mubr.bf16.mxu0 0
        %3999 = vmatmul.mubr.bf16.gmra.mxu0 %v3884
        %v4000 = vpop.f32.mrf.mxu0
        %v4001 = vadd.f32 0.0, %v4000
        %v4002 = vpop.f32.mrf.mxu0
        %v4003 = vpop.f32.mrf.mxu0
        %v4004 = vadd.f32 0.0, %v4003
        %v4005 = vpop.f32.mrf.mxu0
        %4006 = vmatprep.mubr.bf16.mxu0 0
        %4007 = vmatmul.mubr.bf16.gmra.mxu0 %v3887
        %v4008 = vpop.f32.mrf.mxu0
        %v4009 = vadd.f32 0.0, %v4008
        %v4010 = vpop.f32.mrf.mxu0
        %v4011 = vpop.f32.mrf.mxu0
        %v4012 = vadd.f32 0.0, %v4011
        %v4013 = vpop.f32.mrf.mxu0
        %4014 = vmatprep.mubr.bf16.mxu0 0
        %4015 = vmatmul.mubr.bf16.gmra.mxu0 %v3890
        %v4016 = vpop.f32.mrf.mxu0
        %v4017 = vadd.f32 0.0, %v4016
        %v4018 = vpop.f32.mrf.mxu0
        %v4019 = vpop.f32.mrf.mxu0
        %v4020 = vadd.f32 0.0, %v4019
        %v4021 = vpop.f32.mrf.mxu0
        %4022 = vmatprep.mubr.bf16.mxu0 0
        %4023 = vmatmul.mubr.bf16.gmra.mxu0 %v3893
        %v4024 = vpop.f32.mrf.mxu0
        %v4025 = vadd.f32 0.0, %v4024
        %v4026 = vpop.f32.mrf.mxu0
        %v4027 = vpop.f32.mrf.mxu0
        %v4028 = vadd.f32 0.0, %v4027
        %v4029 = vpop.f32.mrf.mxu0
        %4030 = vmatprep.mubr.bf16.mxu0 0
        %4031 = vmatmul.mubr.bf16.gmra.mxu0 %v3896
        %v4032 = vpop.f32.mrf.mxu0
        %v4033 = vadd.f32 0.0, %v4032
        %v4034 = vpop.f32.mrf.mxu0
        %v4035 = vpop.f32.mrf.mxu0
        %v4036 = vadd.f32 0.0, %v4035
        %v4037 = vpop.f32.mrf.mxu0
        %4038 = vmatprep.mubr.bf16.mxu0 0
        %4039 = vmatmul.mubr.bf16.gmra.mxu0 %v3899
        %v4040 = vpop.f32.mrf.mxu0
        %v4041 = vadd.f32 0.0, %v4040
        %v4042 = vpop.f32.mrf.mxu0
        %v4043 = vpop.f32.mrf.mxu0
        %v4044 = vadd.f32 0.0, %v4043
        %v4045 = vpop.f32.mrf.mxu0
        %4046 = vmatprep.mubr.bf16.mxu0 0
        %4047 = vmatmul.mubr.bf16.gmra.mxu0 %v3902
        %v4048 = vpop.f32.mrf.mxu0
        %v4049 = vadd.f32 0.0, %v4048
        %v4050 = vpop.f32.mrf.mxu0
        %v4051 = vpop.f32.mrf.mxu0
        %v4052 = vadd.f32 0.0, %v4051
        %v4053 = vpop.f32.mrf.mxu0
        %4054 = vmatprep.mubr.bf16.mxu0 0
        %4055 = vmatmul.mubr.bf16.gmra.mxu0 %v3905
        %v4056 = vpop.f32.mrf.mxu0
        %v4057 = vadd.f32 0.0, %v4056
        %v4058 = vpop.f32.mrf.mxu0
        %v4059 = vpop.f32.mrf.mxu0
        %v4060 = vadd.f32 0.0, %v4059
        %v4061 = vpop.f32.mrf.mxu0
        %4062 = vmatprep.mubr.bf16.mxu0 0
        %4063 = vmatmul.mubr.bf16.gmra.mxu0 %v3908
        %v4064 = vpop.f32.mrf.mxu0
        %v4065 = vadd.f32 0.0, %v4064
        %v4066 = vpop.f32.mrf.mxu0
        %v4067 = vpop.f32.mrf.mxu0
        %v4068 = vadd.f32 0.0, %v4067
        %v4069 = vpop.f32.mrf.mxu0
        %4070 = vdwg.mxu0
        %v4071 = vadd.f32 %v3236, %v3945
        %v4072 = vadd.f32 %v3239, %v3948
        %v4073 = vadd.f32 %v3244, %v3953
        %v4074 = vadd.f32 %v3247, %v3956
        %v4075 = vadd.f32 %v3252, %v3961
        %v4076 = vadd.f32 %v3255, %v3964
        %v4077 = vadd.f32 %v3260, %v3969
        %v4078 = vadd.f32 %v3263, %v3972
        %v4079 = vadd.f32 %v3268, %v3977
        %v4080 = vadd.f32 %v3271, %v3980
        %v4081 = vadd.f32 %v3276, %v3985
        %v4082 = vadd.f32 %v3279, %v3988
        %v4083 = vadd.f32 %v3284, %v3993
        %v4084 = vadd.f32 %v3287, %v3996
        %v4085 = vadd.f32 %v3292, %v4001
        %v4086 = vadd.f32 %v3295, %v4004
        %v4087 = vadd.f32 %v3300, %v4009
        %v4088 = vadd.f32 %v3303, %v4012
        %v4089 = vadd.f32 %v3308, %v4017
        %v4090 = vadd.f32 %v3311, %v4020
        %v4091 = vadd.f32 %v3316, %v4025
        %v4092 = vadd.f32 %v3319, %v4028
        %v4093 = vadd.f32 %v3324, %v4033
        %v4094 = vadd.f32 %v3327, %v4036
        %v4095 = vadd.f32 %v3332, %v4041
        %v4096 = vadd.f32 %v3335, %v4044
        %v4097 = vadd.f32 %v3340, %v4049
        %v4098 = vadd.f32 %v3343, %v4052
        %v4099 = vadd.f32 %v3348, %v4057
        %v4100 = vadd.f32 %v3351, %v4060
        %v4101 = vadd.f32 %v3356, %v4065
        %v4102 = vadd.f32 %v3359, %v4068
        %v4103 = vld [vmem:[%s2346] sm:$0x8]
        %v4104 = vld [vmem:[%s2346 + $0x4] sm:$0xf]
        %v4105 = vld [vmem:[%s2346 + $0x8] sm:$0xf]
        %v4106 = vld [vmem:[%s2346 + $0x10] sm:$0x8]
        %v4107 = vld [vmem:[%s2346 + $0x14] sm:$0xf]
        %v4108 = vld [vmem:[%s2346 + $0x18] sm:$0xf]
        %v4109 = vld [vmem:[%s2346 + $0x20] sm:$0x8]
        %v4110 = vld [vmem:[%s2346 + $0x24] sm:$0xf]
        %v4111 = vld [vmem:[%s2346 + $0x28] sm:$0xf]
        %v4112 = vld [vmem:[%s2346 + $0x30] sm:$0x8]
        %v4113 = vld [vmem:[%s2346 + $0x34] sm:$0xf]
        %v4114 = vld [vmem:[%s2346 + $0x38] sm:$0xf]
        %v4115 = vld [vmem:[%s2346 + $0x40] sm:$0x8]
        %v4116 = vld [vmem:[%s2346 + $0x44] sm:$0xf]
        %v4117 = vld [vmem:[%s2346 + $0x48] sm:$0xf]
        %v4118 = vld [vmem:[%s2346 + $0x50] sm:$0x8]
        %v4119 = vld [vmem:[%s2346 + $0x54] sm:$0xf]
        %v4120 = vld [vmem:[%s2346 + $0x58] sm:$0xf]
        %v4121 = vld [vmem:[%s2346 + $0x60] sm:$0x8]
        %v4122 = vld [vmem:[%s2346 + $0x64] sm:$0xf]
        %v4123 = vld [vmem:[%s2346 + $0x68] sm:$0xf]
        %v4124 = vld [vmem:[%s2346 + $0x70] sm:$0x8]
        %v4125 = vld [vmem:[%s2346 + $0x74] sm:$0xf]
        %v4126 = vld [vmem:[%s2346 + $0x78] sm:$0xf]
        %v4127 = vld [vmem:[%s2346 + $0x80] sm:$0x8]
        %v4128 = vld [vmem:[%s2346 + $0x84] sm:$0xf]
        %v4129 = vld [vmem:[%s2346 + $0x88] sm:$0xf]
        %v4130 = vld [vmem:[%s2346 + $0x90] sm:$0x8]
        %v4131 = vld [vmem:[%s2346 + $0x94] sm:$0xf]
        %v4132 = vld [vmem:[%s2346 + $0x98] sm:$0xf]
        %v4133 = vld [vmem:[%s2346 + $0xa0] sm:$0x8]
        %v4134 = vld [vmem:[%s2346 + $0xa4] sm:$0xf]
        %v4135 = vld [vmem:[%s2346 + $0xa8] sm:$0xf]
        %v4136 = vld [vmem:[%s2346 + $0xb0] sm:$0x8]
        %v4137 = vld [vmem:[%s2346 + $0xb4] sm:$0xf]
        %v4138 = vld [vmem:[%s2346 + $0xb8] sm:$0xf]
        %v4139 = vld [vmem:[%s2346 + $0xc0] sm:$0x8]
        %v4140 = vld [vmem:[%s2346 + $0xc4] sm:$0xf]
        %v4141 = vld [vmem:[%s2346 + $0xc8] sm:$0xf]
        %v4142 = vld [vmem:[%s2346 + $0xd0] sm:$0x8]
        %v4143 = vld [vmem:[%s2346 + $0xd4] sm:$0xf]
        %v4144 = vld [vmem:[%s2346 + $0xd8] sm:$0xf]
        %v4145 = vld [vmem:[%s2346 + $0xe0] sm:$0x8]
        %v4146 = vld [vmem:[%s2346 + $0xe4] sm:$0xf]
        %v4147 = vld [vmem:[%s2346 + $0xe8] sm:$0xf]
        %v4148 = vld [vmem:[%s2346 + $0xf0] sm:$0x8]
        %v4149 = vld [vmem:[%s2346 + $0xf4] sm:$0xf]
        %v4150 = vld [vmem:[%s2346 + $0xf8] sm:$0xf]
        %v4152 = vshrl.u32 %v4103, 16
        %v4154 = vrot.slane %v4152, 7
        %v4155 = vrot.slane %v4154, 4
        %v4157 = vshrl.u32 %v4104, 16
        %v4159 = vrot.slane %v4157, 7
        %v4160 = vshll.u32 %v4104, 16
        %v4162 = vor.u32 %v4159, %v4160
        %v4163 = vsel %vm2430, %v4155, %v4162
        %v4164 = vrot.slane %v4159, 4
        %v4166 = vshrl.u32 %v4105, 16
        %v4168 = vrot.slane %v4166, 7
        %v4169 = vshll.u32 %v4105, 16
        %v4171 = vor.u32 %v4168, %v4169
        %v4172 = vsel %vm2430, %v4164, %v4171
        %v4174 = vshrl.u32 %v4106, 16
        %v4176 = vrot.slane %v4174, 7
        %v4177 = vrot.slane %v4176, 4
        %v4179 = vshrl.u32 %v4107, 16
        %v4181 = vrot.slane %v4179, 7
        %v4182 = vshll.u32 %v4107, 16
        %v4184 = vor.u32 %v4181, %v4182
        %v4185 = vsel %vm2430, %v4177, %v4184
        %v4186 = vrot.slane %v4181, 4
        %v4188 = vshrl.u32 %v4108, 16
        %v4190 = vrot.slane %v4188, 7
        %v4191 = vshll.u32 %v4108, 16
        %v4193 = vor.u32 %v4190, %v4191
        %v4194 = vsel %vm2430, %v4186, %v4193
        %v4196 = vshrl.u32 %v4109, 16
        %v4198 = vrot.slane %v4196, 7
        %v4199 = vrot.slane %v4198, 4
        %v4201 = vshrl.u32 %v4110, 16
        %v4203 = vrot.slane %v4201, 7
        %v4204 = vshll.u32 %v4110, 16
        %v4206 = vor.u32 %v4203, %v4204
        %v4207 = vsel %vm2430, %v4199, %v4206
        %v4208 = vrot.slane %v4203, 4
        %v4210 = vshrl.u32 %v4111, 16
        %v4212 = vrot.slane %v4210, 7
        %v4213 = vshll.u32 %v4111, 16
        %v4215 = vor.u32 %v4212, %v4213
        %v4216 = vsel %vm2430, %v4208, %v4215
        %v4218 = vshrl.u32 %v4112, 16
        %v4220 = vrot.slane %v4218, 7
        %v4221 = vrot.slane %v4220, 4
        %v4223 = vshrl.u32 %v4113, 16
        %v4225 = vrot.slane %v4223, 7
        %v4226 = vshll.u32 %v4113, 16
        %v4228 = vor.u32 %v4225, %v4226
        %v4229 = vsel %vm2430, %v4221, %v4228
        %v4230 = vrot.slane %v4225, 4
        %v4232 = vshrl.u32 %v4114, 16
        %v4234 = vrot.slane %v4232, 7
        %v4235 = vshll.u32 %v4114, 16
        %v4237 = vor.u32 %v4234, %v4235
        %v4238 = vsel %vm2430, %v4230, %v4237
        %v4240 = vshrl.u32 %v4115, 16
        %v4242 = vrot.slane %v4240, 7
        %v4243 = vrot.slane %v4242, 4
        %v4245 = vshrl.u32 %v4116, 16
        %v4247 = vrot.slane %v4245, 7
        %v4248 = vshll.u32 %v4116, 16
        %v4250 = vor.u32 %v4247, %v4248
        %v4251 = vsel %vm2430, %v4243, %v4250
        %v4252 = vrot.slane %v4247, 4
        %v4254 = vshrl.u32 %v4117, 16
        %v4256 = vrot.slane %v4254, 7
        %v4257 = vshll.u32 %v4117, 16
        %v4259 = vor.u32 %v4256, %v4257
        %v4260 = vsel %vm2430, %v4252, %v4259
        %v4262 = vshrl.u32 %v4118, 16
        %v4264 = vrot.slane %v4262, 7
        %v4265 = vrot.slane %v4264, 4
        %v4267 = vshrl.u32 %v4119, 16
        %v4269 = vrot.slane %v4267, 7
        %v4270 = vshll.u32 %v4119, 16
        %v4272 = vor.u32 %v4269, %v4270
        %v4273 = vsel %vm2430, %v4265, %v4272
        %v4274 = vrot.slane %v4269, 4
        %v4276 = vshrl.u32 %v4120, 16
        %v4278 = vrot.slane %v4276, 7
        %v4279 = vshll.u32 %v4120, 16
        %v4281 = vor.u32 %v4278, %v4279
        %v4282 = vsel %vm2430, %v4274, %v4281
        %v4284 = vshrl.u32 %v4121, 16
        %v4286 = vrot.slane %v4284, 7
        %v4287 = vrot.slane %v4286, 4
        %v4289 = vshrl.u32 %v4122, 16
        %v4291 = vrot.slane %v4289, 7
        %v4292 = vshll.u32 %v4122, 16
        %v4294 = vor.u32 %v4291, %v4292
        %v4295 = vsel %vm2430, %v4287, %v4294
        %v4296 = vrot.slane %v4291, 4
        %v4298 = vshrl.u32 %v4123, 16
        %v4300 = vrot.slane %v4298, 7
        %v4301 = vshll.u32 %v4123, 16
        %v4303 = vor.u32 %v4300, %v4301
        %v4304 = vsel %vm2430, %v4296, %v4303
        %v4306 = vshrl.u32 %v4124, 16
        %v4308 = vrot.slane %v4306, 7
        %v4309 = vrot.slane %v4308, 4
        %v4311 = vshrl.u32 %v4125, 16
        %v4313 = vrot.slane %v4311, 7
        %v4314 = vshll.u32 %v4125, 16
        %v4316 = vor.u32 %v4313, %v4314
        %v4317 = vsel %vm2430, %v4309, %v4316
        %v4318 = vrot.slane %v4313, 4
        %v4320 = vshrl.u32 %v4126, 16
        %v4322 = vrot.slane %v4320, 7
        %v4323 = vshll.u32 %v4126, 16
        %v4325 = vor.u32 %v4322, %v4323
        %v4326 = vsel %vm2430, %v4318, %v4325
        %v4328 = vshrl.u32 %v4127, 16
        %v4330 = vrot.slane %v4328, 7
        %v4331 = vrot.slane %v4330, 4
        %v4333 = vshrl.u32 %v4128, 16
        %v4335 = vrot.slane %v4333, 7
        %v4336 = vshll.u32 %v4128, 16
        %v4338 = vor.u32 %v4335, %v4336
        %v4339 = vsel %vm2430, %v4331, %v4338
        %v4340 = vrot.slane %v4335, 4
        %v4342 = vshrl.u32 %v4129, 16
        %v4344 = vrot.slane %v4342, 7
        %v4345 = vshll.u32 %v4129, 16
        %v4347 = vor.u32 %v4344, %v4345
        %v4348 = vsel %vm2430, %v4340, %v4347
        %v4350 = vshrl.u32 %v4130, 16
        %v4352 = vrot.slane %v4350, 7
        %v4353 = vrot.slane %v4352, 4
        %v4355 = vshrl.u32 %v4131, 16
        %v4357 = vrot.slane %v4355, 7
        %v4358 = vshll.u32 %v4131, 16
        %v4360 = vor.u32 %v4357, %v4358
        %v4361 = vsel %vm2430, %v4353, %v4360
        %v4362 = vrot.slane %v4357, 4
        %v4364 = vshrl.u32 %v4132, 16
        %v4366 = vrot.slane %v4364, 7
        %v4367 = vshll.u32 %v4132, 16
        %v4369 = vor.u32 %v4366, %v4367
        %v4370 = vsel %vm2430, %v4362, %v4369
        %v4372 = vshrl.u32 %v4133, 16
        %v4374 = vrot.slane %v4372, 7
        %v4375 = vrot.slane %v4374, 4
        %v4377 = vshrl.u32 %v4134, 16
        %v4379 = vrot.slane %v4377, 7
        %v4380 = vshll.u32 %v4134, 16
        %v4382 = vor.u32 %v4379, %v4380
        %v4383 = vsel %vm2430, %v4375, %v4382
        %v4384 = vrot.slane %v4379, 4
        %v4386 = vshrl.u32 %v4135, 16
        %v4388 = vrot.slane %v4386, 7
        %v4389 = vshll.u32 %v4135, 16
        %v4391 = vor.u32 %v4388, %v4389
        %v4392 = vsel %vm2430, %v4384, %v4391
        %v4394 = vshrl.u32 %v4136, 16
        %v4396 = vrot.slane %v4394, 7
        %v4397 = vrot.slane %v4396, 4
        %v4399 = vshrl.u32 %v4137, 16
        %v4401 = vrot.slane %v4399, 7
        %v4402 = vshll.u32 %v4137, 16
        %v4404 = vor.u32 %v4401, %v4402
        %v4405 = vsel %vm2430, %v4397, %v4404
        %v4406 = vrot.slane %v4401, 4
        %v4408 = vshrl.u32 %v4138, 16
        %v4410 = vrot.slane %v4408, 7
        %v4411 = vshll.u32 %v4138, 16
        %v4413 = vor.u32 %v4410, %v4411
        %v4414 = vsel %vm2430, %v4406, %v4413
        %v4416 = vshrl.u32 %v4139, 16
        %v4418 = vrot.slane %v4416, 7
        %v4419 = vrot.slane %v4418, 4
        %v4421 = vshrl.u32 %v4140, 16
        %v4423 = vrot.slane %v4421, 7
        %v4424 = vshll.u32 %v4140, 16
        %v4426 = vor.u32 %v4423, %v4424
        %v4427 = vsel %vm2430, %v4419, %v4426
        %v4428 = vrot.slane %v4423, 4
        %v4430 = vshrl.u32 %v4141, 16
        %v4432 = vrot.slane %v4430, 7
        %v4433 = vshll.u32 %v4141, 16
        %v4435 = vor.u32 %v4432, %v4433
        %v4436 = vsel %vm2430, %v4428, %v4435
        %v4438 = vshrl.u32 %v4142, 16
        %v4440 = vrot.slane %v4438, 7
        %v4441 = vrot.slane %v4440, 4
        %v4443 = vshrl.u32 %v4143, 16
        %v4445 = vrot.slane %v4443, 7
        %v4446 = vshll.u32 %v4143, 16
        %v4448 = vor.u32 %v4445, %v4446
        %v4449 = vsel %vm2430, %v4441, %v4448
        %v4450 = vrot.slane %v4445, 4
        %v4452 = vshrl.u32 %v4144, 16
        %v4454 = vrot.slane %v4452, 7
        %v4455 = vshll.u32 %v4144, 16
        %v4457 = vor.u32 %v4454, %v4455
        %v4458 = vsel %vm2430, %v4450, %v4457
        %v4460 = vshrl.u32 %v4145, 16
        %v4462 = vrot.slane %v4460, 7
        %v4463 = vrot.slane %v4462, 4
        %v4465 = vshrl.u32 %v4146, 16
        %v4467 = vrot.slane %v4465, 7
        %v4468 = vshll.u32 %v4146, 16
        %v4470 = vor.u32 %v4467, %v4468
        %v4471 = vsel %vm2430, %v4463, %v4470
        %v4472 = vrot.slane %v4467, 4
        %v4474 = vshrl.u32 %v4147, 16
        %v4476 = vrot.slane %v4474, 7
        %v4477 = vshll.u32 %v4147, 16
        %v4479 = vor.u32 %v4476, %v4477
        %v4480 = vsel %vm2430, %v4472, %v4479
        %v4482 = vshrl.u32 %v4148, 16
        %v4484 = vrot.slane %v4482, 7
        %v4485 = vrot.slane %v4484, 4
        %v4487 = vshrl.u32 %v4149, 16
        %v4489 = vrot.slane %v4487, 7
        %v4490 = vshll.u32 %v4149, 16
        %v4492 = vor.u32 %v4489, %v4490
        %v4493 = vsel %vm2430, %v4485, %v4492
        %v4494 = vrot.slane %v4489, 4
        %v4496 = vshrl.u32 %v4150, 16
        %v4498 = vrot.slane %v4496, 7
        %v4499 = vshll.u32 %v4150, 16
        %v4501 = vor.u32 %v4498, %v4499
        %v4502 = vsel %vm2430, %v4494, %v4501
        %s4503 = scalar_lea.vmem %s3, 48
        %v4504 = vld [vmem:[%s4503] sm:$0xf]
        %v4505 = vld [vmem:[%s4503 + $0x4] sm:$0xf]
        %v4506 = vld [vmem:[%s4503 + $0x8] sm:$0xf]
        %v4507 = vld [vmem:[%s4503 + $0xc] sm:$0xf]
        %v4508 = vunpack.c.l.b16 %v4163
        %v4509 = vunpack.c.l.b16 %v4172
        %v4510 = vunpack.c.l.b16 %v4185
        %v4511 = vunpack.c.l.b16 %v4194
        %v4512 = vunpack.c.l.b16 %v4207
        %v4513 = vunpack.c.l.b16 %v4216
        %v4514 = vunpack.c.l.b16 %v4229
        %v4515 = vunpack.c.l.b16 %v4238
        %v4516 = vunpack.c.l.b16 %v4251
        %v4517 = vunpack.c.l.b16 %v4260
        %v4518 = vunpack.c.l.b16 %v4273
        %v4519 = vunpack.c.l.b16 %v4282
        %v4520 = vunpack.c.l.b16 %v4295
        %v4521 = vunpack.c.l.b16 %v4304
        %v4522 = vunpack.c.l.b16 %v4317
        %v4523 = vunpack.c.l.b16 %v4326
        %v4524 = vunpack.c.l.b16 %v4339
        %v4525 = vunpack.c.l.b16 %v4348
        %v4526 = vunpack.c.l.b16 %v4361
        %v4527 = vunpack.c.l.b16 %v4370
        %v4528 = vunpack.c.l.b16 %v4383
        %v4529 = vunpack.c.l.b16 %v4392
        %v4530 = vunpack.c.l.b16 %v4405
        %v4531 = vunpack.c.l.b16 %v4414
        %v4532 = vunpack.c.l.b16 %v4427
        %v4533 = vunpack.c.l.b16 %v4436
        %v4534 = vunpack.c.l.b16 %v4449
        %v4535 = vunpack.c.l.b16 %v4458
        %v4536 = vunpack.c.l.b16 %v4471
        %v4537 = vunpack.c.l.b16 %v4480
        %v4538 = vunpack.c.l.b16 %v4493
        %v4539 = vunpack.c.l.b16 %v4502
        %v4540 = vpack.c.b16 %v4509, %v4508
        %v4541 = vpack.c.b16 %v4511, %v4510
        %v4542 = vpack.c.b16 %v4513, %v4512
        %v4543 = vpack.c.b16 %v4515, %v4514
        %v4544 = vpack.c.b16 %v4517, %v4516
        %v4545 = vpack.c.b16 %v4519, %v4518
        %v4546 = vpack.c.b16 %v4521, %v4520
        %v4547 = vpack.c.b16 %v4523, %v4522
        %v4548 = vpack.c.b16 %v4525, %v4524
        %v4549 = vpack.c.b16 %v4527, %v4526
        %v4550 = vpack.c.b16 %v4529, %v4528
        %v4551 = vpack.c.b16 %v4531, %v4530
        %v4552 = vpack.c.b16 %v4533, %v4532
        %v4553 = vpack.c.b16 %v4535, %v4534
        %v4554 = vpack.c.b16 %v4537, %v4536
        %v4555 = vpack.c.b16 %v4539, %v4538
        %v4560 = vunpack.c.l.b16 %v4504
        %v4561 = vunpack.c.l.b16 %v4505
        %v4562 = vunpack.c.l.b16 %v4506
        %v4563 = vunpack.c.l.b16 %v4507
        %v4564 = vpack.c.b16 %v4561, %v4560
        %v4565 = vpack.c.b16 %v4563, %v4562
        %v4569 = vsel %vm1994, %v4540, 0
        %v4572 = vsel %vm1994, %v4541, 0
        %v4575 = vsel %vm1994, %v4542, 0
        %v4578 = vsel %vm1994, %v4543, 0
        %v4581 = vsel %vm1994, %v4544, 0
        %v4584 = vsel %vm1994, %v4545, 0
        %v4587 = vsel %vm1994, %v4546, 0
        %v4590 = vsel %vm1994, %v4547, 0
        %v4593 = vsel %vm1994, %v4548, 0
        %v4596 = vsel %vm1994, %v4549, 0
        %v4599 = vsel %vm1994, %v4550, 0
        %v4602 = vsel %vm1994, %v4551, 0
        %v4605 = vsel %vm1994, %v4552, 0
        %v4608 = vsel %vm1994, %v4553, 0
        %v4611 = vsel %vm1994, %v4554, 0
        %v4614 = vsel %vm1994, %v4555, 0
        %4616 = vmatprep.subr.bf16.mxu0 0
        %4617 = vmatpush1.bf16.msra.mxu0 0
        %4618 = vmatprep.subr.bf16.mxu0 0
        %4619 = vmatpush1.bf16.msra.mxu0 0
        %4620 = vmatprep.subr.bf16.mxu0 0
        %4621 = vmatpush1.bf16.msra.mxu0 0
        %4622 = vmatprep.subr.bf16.mxu0 0
        %4623 = vmatpush1.bf16.msra.mxu0 0
        %4624 = vmatprep.subr.bf16.mxu0 0
        %4625 = vmatpush1.bf16.msra.mxu0 0
        %4626 = vmatprep.subr.bf16.mxu0 0
        %4627 = vmatpush1.bf16.msra.mxu0 0
        %4628 = vmatprep.subr.bf16.mxu0 0
        %4629 = vmatpush1.bf16.msra.mxu0 %v4565
        %4630 = vmatprep.subr.bf16.mxu0 0
        %4631 = vmatpush1.bf16.msra.mxu0 %v4564
        %4632 = vmatprep.subr.bf16.mxu0 0
        %4633 = vmatpush2.bf16.msra.mxu0 0
        %4634 = vmatprep.subr.bf16.mxu0 0
        %4635 = vmatpush2.bf16.msra.mxu0 0
        %4636 = vmatprep.subr.bf16.mxu0 0
        %4637 = vmatpush2.bf16.msra.mxu0 0
        %4638 = vmatprep.subr.bf16.mxu0 0
        %4639 = vmatpush2.bf16.msra.mxu0 0
        %4640 = vmatprep.subr.bf16.mxu0 0
        %4641 = vmatpush2.bf16.msra.mxu0 0
        %4642 = vmatprep.subr.bf16.mxu0 0
        %4643 = vmatpush2.bf16.msra.mxu0 0
        %4644 = vmatprep.subr.bf16.mxu0 0
        %4645 = vmatpush2.bf16.msra.mxu0 0
        %4646 = vmatprep.subr.bf16.mxu0 0
        %4647 = vmatpush2.bf16.msra.mxu0 0
        %4648 = vmatprep.mubr.bf16.mxu0 0
        %4649 = vmatmul.mubr.bf16.gmra.mxu0 %v4569
        %v4650 = vpop.f32.mrf.mxu0
        %v4651 = vadd.f32 0.0, %v4650
        %v4652 = vpop.f32.mrf.mxu0
        %v4653 = vpop.f32.mrf.mxu0
        %v4654 = vadd.f32 0.0, %v4653
        %v4655 = vpop.f32.mrf.mxu0
        %4656 = vmatprep.mubr.bf16.mxu0 0
        %4657 = vmatmul.mubr.bf16.gmra.mxu0 %v4572
        %v4658 = vpop.f32.mrf.mxu0
        %v4659 = vadd.f32 0.0, %v4658
        %v4660 = vpop.f32.mrf.mxu0
        %v4661 = vpop.f32.mrf.mxu0
        %v4662 = vadd.f32 0.0, %v4661
        %v4663 = vpop.f32.mrf.mxu0
        %4664 = vmatprep.mubr.bf16.mxu0 0
        %4665 = vmatmul.mubr.bf16.gmra.mxu0 %v4575
        %v4666 = vpop.f32.mrf.mxu0
        %v4667 = vadd.f32 0.0, %v4666
        %v4668 = vpop.f32.mrf.mxu0
        %v4669 = vpop.f32.mrf.mxu0
        %v4670 = vadd.f32 0.0, %v4669
        %v4671 = vpop.f32.mrf.mxu0
        %4672 = vmatprep.mubr.bf16.mxu0 0
        %4673 = vmatmul.mubr.bf16.gmra.mxu0 %v4578
        %v4674 = vpop.f32.mrf.mxu0
        %v4675 = vadd.f32 0.0, %v4674
        %v4676 = vpop.f32.mrf.mxu0
        %v4677 = vpop.f32.mrf.mxu0
        %v4678 = vadd.f32 0.0, %v4677
        %v4679 = vpop.f32.mrf.mxu0
        %4680 = vmatprep.mubr.bf16.mxu0 0
        %4681 = vmatmul.mubr.bf16.gmra.mxu0 %v4581
        %v4682 = vpop.f32.mrf.mxu0
        %v4683 = vadd.f32 0.0, %v4682
        %v4684 = vpop.f32.mrf.mxu0
        %v4685 = vpop.f32.mrf.mxu0
        %v4686 = vadd.f32 0.0, %v4685
        %v4687 = vpop.f32.mrf.mxu0
        %4688 = vmatprep.mubr.bf16.mxu0 0
        %4689 = vmatmul.mubr.bf16.gmra.mxu0 %v4584
        %v4690 = vpop.f32.mrf.mxu0
        %v4691 = vadd.f32 0.0, %v4690
        %v4692 = vpop.f32.mrf.mxu0
        %v4693 = vpop.f32.mrf.mxu0
        %v4694 = vadd.f32 0.0, %v4693
        %v4695 = vpop.f32.mrf.mxu0
        %4696 = vmatprep.mubr.bf16.mxu0 0
        %4697 = vmatmul.mubr.bf16.gmra.mxu0 %v4587
        %v4698 = vpop.f32.mrf.mxu0
        %v4699 = vadd.f32 0.0, %v4698
        %v4700 = vpop.f32.mrf.mxu0
        %v4701 = vpop.f32.mrf.mxu0
        %v4702 = vadd.f32 0.0, %v4701
        %v4703 = vpop.f32.mrf.mxu0
        %4704 = vmatprep.mubr.bf16.mxu0 0
        %4705 = vmatmul.mubr.bf16.gmra.mxu0 %v4590
        %v4706 = vpop.f32.mrf.mxu0
        %v4707 = vadd.f32 0.0, %v4706
        %v4708 = vpop.f32.mrf.mxu0
        %v4709 = vpop.f32.mrf.mxu0
        %v4710 = vadd.f32 0.0, %v4709
        %v4711 = vpop.f32.mrf.mxu0
        %4712 = vmatprep.mubr.bf16.mxu0 0
        %4713 = vmatmul.mubr.bf16.gmra.mxu0 %v4593
        %v4714 = vpop.f32.mrf.mxu0
        %v4715 = vadd.f32 0.0, %v4714
        %v4716 = vpop.f32.mrf.mxu0
        %v4717 = vpop.f32.mrf.mxu0
        %v4718 = vadd.f32 0.0, %v4717
        %v4719 = vpop.f32.mrf.mxu0
        %4720 = vmatprep.mubr.bf16.mxu0 0
        %4721 = vmatmul.mubr.bf16.gmra.mxu0 %v4596
        %v4722 = vpop.f32.mrf.mxu0
        %v4723 = vadd.f32 0.0, %v4722
        %v4724 = vpop.f32.mrf.mxu0
        %v4725 = vpop.f32.mrf.mxu0
        %v4726 = vadd.f32 0.0, %v4725
        %v4727 = vpop.f32.mrf.mxu0
        %4728 = vmatprep.mubr.bf16.mxu0 0
        %4729 = vmatmul.mubr.bf16.gmra.mxu0 %v4599
        %v4730 = vpop.f32.mrf.mxu0
        %v4731 = vadd.f32 0.0, %v4730
        %v4732 = vpop.f32.mrf.mxu0
        %v4733 = vpop.f32.mrf.mxu0
        %v4734 = vadd.f32 0.0, %v4733
        %v4735 = vpop.f32.mrf.mxu0
        %4736 = vmatprep.mubr.bf16.mxu0 0
        %4737 = vmatmul.mubr.bf16.gmra.mxu0 %v4602
        %v4738 = vpop.f32.mrf.mxu0
        %v4739 = vadd.f32 0.0, %v4738
        %v4740 = vpop.f32.mrf.mxu0
        %v4741 = vpop.f32.mrf.mxu0
        %v4742 = vadd.f32 0.0, %v4741
        %v4743 = vpop.f32.mrf.mxu0
        %4744 = vmatprep.mubr.bf16.mxu0 0
        %4745 = vmatmul.mubr.bf16.gmra.mxu0 %v4605
        %v4746 = vpop.f32.mrf.mxu0
        %v4747 = vadd.f32 0.0, %v4746
        %v4748 = vpop.f32.mrf.mxu0
        %v4749 = vpop.f32.mrf.mxu0
        %v4750 = vadd.f32 0.0, %v4749
        %v4751 = vpop.f32.mrf.mxu0
        %4752 = vmatprep.mubr.bf16.mxu0 0
        %4753 = vmatmul.mubr.bf16.gmra.mxu0 %v4608
        %v4754 = vpop.f32.mrf.mxu0
        %v4755 = vadd.f32 0.0, %v4754
        %v4756 = vpop.f32.mrf.mxu0
        %v4757 = vpop.f32.mrf.mxu0
        %v4758 = vadd.f32 0.0, %v4757
        %v4759 = vpop.f32.mrf.mxu0
        %4760 = vmatprep.mubr.bf16.mxu0 0
        %4761 = vmatmul.mubr.bf16.gmra.mxu0 %v4611
        %v4762 = vpop.f32.mrf.mxu0
        %v4763 = vadd.f32 0.0, %v4762
        %v4764 = vpop.f32.mrf.mxu0
        %v4765 = vpop.f32.mrf.mxu0
        %v4766 = vadd.f32 0.0, %v4765
        %v4767 = vpop.f32.mrf.mxu0
        %4768 = vmatprep.mubr.bf16.mxu0 0
        %4769 = vmatmul.mubr.bf16.gmra.mxu0 %v4614
        %v4770 = vpop.f32.mrf.mxu0
        %v4771 = vadd.f32 0.0, %v4770
        %v4772 = vpop.f32.mrf.mxu0
        %v4773 = vpop.f32.mrf.mxu0
        %v4774 = vadd.f32 0.0, %v4773
        %v4775 = vpop.f32.mrf.mxu0
        %4776 = vdwg.mxu0
        %v4777 = vadd.f32 %v4071, %v4651
        %v4778 = vadd.f32 %v4072, %v4654
        %v4779 = vadd.f32 %v4073, %v4659
        %v4780 = vadd.f32 %v4074, %v4662
        %v4781 = vadd.f32 %v4075, %v4667
        %v4782 = vadd.f32 %v4076, %v4670
        %v4783 = vadd.f32 %v4077, %v4675
        %v4784 = vadd.f32 %v4078, %v4678
        %v4785 = vadd.f32 %v4079, %v4683
        %v4786 = vadd.f32 %v4080, %v4686
        %v4787 = vadd.f32 %v4081, %v4691
        %v4788 = vadd.f32 %v4082, %v4694
        %v4789 = vadd.f32 %v4083, %v4699
        %v4790 = vadd.f32 %v4084, %v4702
        %v4791 = vadd.f32 %v4085, %v4707
        %v4792 = vadd.f32 %v4086, %v4710
        %v4793 = vadd.f32 %v4087, %v4715
        %v4794 = vadd.f32 %v4088, %v4718
        %v4795 = vadd.f32 %v4089, %v4723
        %v4796 = vadd.f32 %v4090, %v4726
        %v4797 = vadd.f32 %v4091, %v4731
        %v4798 = vadd.f32 %v4092, %v4734
        %v4799 = vadd.f32 %v4093, %v4739
        %v4800 = vadd.f32 %v4094, %v4742
        %v4801 = vadd.f32 %v4095, %v4747
        %v4802 = vadd.f32 %v4096, %v4750
        %v4803 = vadd.f32 %v4097, %v4755
        %v4804 = vadd.f32 %v4098, %v4758
        %v4805 = vadd.f32 %v4099, %v4763
        %v4806 = vadd.f32 %v4100, %v4766
        %v4807 = vadd.f32 %v4101, %v4771
        %v4808 = vadd.f32 %v4102, %v4774
        %s4809 = scalar_lea.vmem %s3, 64
        %v4810 = vld [vmem:[%s4809] sm:$0xf]
        %v4811 = vld [vmem:[%s4809 + $0x4] sm:$0xf]
        %v4812 = vld [vmem:[%s4809 + $0x8] sm:$0xf]
        %v4813 = vld [vmem:[%s4809 + $0xc] sm:$0xf]
        %v4846 = vunpack.c.l.b16 %v4104
        %v4847 = vunpack.c.l.b16 %v4105
        %v4848 = vunpack.c.l.b16 %v4107
        %v4849 = vunpack.c.l.b16 %v4108
        %v4850 = vunpack.c.l.b16 %v4110
        %v4851 = vunpack.c.l.b16 %v4111
        %v4852 = vunpack.c.l.b16 %v4113
        %v4853 = vunpack.c.l.b16 %v4114
        %v4854 = vunpack.c.l.b16 %v4116
        %v4855 = vunpack.c.l.b16 %v4117
        %v4856 = vunpack.c.l.b16 %v4119
        %v4857 = vunpack.c.l.b16 %v4120
        %v4858 = vunpack.c.l.b16 %v4122
        %v4859 = vunpack.c.l.b16 %v4123
        %v4860 = vunpack.c.l.b16 %v4125
        %v4861 = vunpack.c.l.b16 %v4126
        %v4862 = vunpack.c.l.b16 %v4128
        %v4863 = vunpack.c.l.b16 %v4129
        %v4864 = vunpack.c.l.b16 %v4131
        %v4865 = vunpack.c.l.b16 %v4132
        %v4866 = vunpack.c.l.b16 %v4134
        %v4867 = vunpack.c.l.b16 %v4135
        %v4868 = vunpack.c.l.b16 %v4137
        %v4869 = vunpack.c.l.b16 %v4138
        %v4870 = vunpack.c.l.b16 %v4140
        %v4871 = vunpack.c.l.b16 %v4141
        %v4872 = vunpack.c.l.b16 %v4143
        %v4873 = vunpack.c.l.b16 %v4144
        %v4874 = vunpack.c.l.b16 %v4146
        %v4875 = vunpack.c.l.b16 %v4147
        %v4876 = vunpack.c.l.b16 %v4149
        %v4877 = vunpack.c.l.b16 %v4150
        %v4878 = vpack.c.b16 %v4847, %v4846
        %v4879 = vpack.c.b16 %v4849, %v4848
        %v4880 = vpack.c.b16 %v4851, %v4850
        %v4881 = vpack.c.b16 %v4853, %v4852
        %v4882 = vpack.c.b16 %v4855, %v4854
        %v4883 = vpack.c.b16 %v4857, %v4856
        %v4884 = vpack.c.b16 %v4859, %v4858
        %v4885 = vpack.c.b16 %v4861, %v4860
        %v4886 = vpack.c.b16 %v4863, %v4862
        %v4887 = vpack.c.b16 %v4865, %v4864
        %v4888 = vpack.c.b16 %v4867, %v4866
        %v4889 = vpack.c.b16 %v4869, %v4868
        %v4890 = vpack.c.b16 %v4871, %v4870
        %v4891 = vpack.c.b16 %v4873, %v4872
        %v4892 = vpack.c.b16 %v4875, %v4874
        %v4893 = vpack.c.b16 %v4877, %v4876
        %v4898 = vunpack.c.l.b16 %v4810
        %v4899 = vunpack.c.l.b16 %v4811
        %v4900 = vunpack.c.l.b16 %v4812
        %v4901 = vunpack.c.l.b16 %v4813
        %v4902 = vpack.c.b16 %v4899, %v4898
        %v4903 = vpack.c.b16 %v4901, %v4900
        %v4907 = vsel %vm1994, %v4878, 0
        %v4910 = vsel %vm1994, %v4879, 0
        %v4913 = vsel %vm1994, %v4880, 0
        %v4916 = vsel %vm1994, %v4881, 0
        %v4919 = vsel %vm1994, %v4882, 0
        %v4922 = vsel %vm1994, %v4883, 0
        %v4925 = vsel %vm1994, %v4884, 0
        %v4928 = vsel %vm1994, %v4885, 0
        %v4931 = vsel %vm1994, %v4886, 0
        %v4934 = vsel %vm1994, %v4887, 0
        %v4937 = vsel %vm1994, %v4888, 0
        %v4940 = vsel %vm1994, %v4889, 0
        %v4943 = vsel %vm1994, %v4890, 0
        %v4946 = vsel %vm1994, %v4891, 0
        %v4949 = vsel %vm1994, %v4892, 0
        %v4952 = vsel %vm1994, %v4893, 0
        %4954 = vmatprep.subr.bf16.mxu0 0
        %4955 = vmatpush1.bf16.msra.mxu0 0
        %4956 = vmatprep.subr.bf16.mxu0 0
        %4957 = vmatpush1.bf16.msra.mxu0 0
        %4958 = vmatprep.subr.bf16.mxu0 0
        %4959 = vmatpush1.bf16.msra.mxu0 0
        %4960 = vmatprep.subr.bf16.mxu0 0
        %4961 = vmatpush1.bf16.msra.mxu0 0
        %4962 = vmatprep.subr.bf16.mxu0 0
        %4963 = vmatpush1.bf16.msra.mxu0 0
        %4964 = vmatprep.subr.bf16.mxu0 0
        %4965 = vmatpush1.bf16.msra.mxu0 0
        %4966 = vmatprep.subr.bf16.mxu0 0
        %4967 = vmatpush1.bf16.msra.mxu0 %v4903
        %4968 = vmatprep.subr.bf16.mxu0 0
        %4969 = vmatpush1.bf16.msra.mxu0 %v4902
        %4970 = vmatprep.subr.bf16.mxu0 0
        %4971 = vmatpush2.bf16.msra.mxu0 0
        %4972 = vmatprep.subr.bf16.mxu0 0
        %4973 = vmatpush2.bf16.msra.mxu0 0
        %4974 = vmatprep.subr.bf16.mxu0 0
        %4975 = vmatpush2.bf16.msra.mxu0 0
        %4976 = vmatprep.subr.bf16.mxu0 0
        %4977 = vmatpush2.bf16.msra.mxu0 0
        %4978 = vmatprep.subr.bf16.mxu0 0
        %4979 = vmatpush2.bf16.msra.mxu0 0
        %4980 = vmatprep.subr.bf16.mxu0 0
        %4981 = vmatpush2.bf16.msra.mxu0 0
        %4982 = vmatprep.subr.bf16.mxu0 0
        %4983 = vmatpush2.bf16.msra.mxu0 0
        %4984 = vmatprep.subr.bf16.mxu0 0
        %4985 = vmatpush2.bf16.msra.mxu0 0
        %4986 = vmatprep.mubr.bf16.mxu0 0
        %4987 = vmatmul.mubr.bf16.gmra.mxu0 %v4907
        %v4988 = vpop.f32.mrf.mxu0
        %v4989 = vadd.f32 0.0, %v4988
        %v4990 = vpop.f32.mrf.mxu0
        %v4991 = vpop.f32.mrf.mxu0
        %v4992 = vadd.f32 0.0, %v4991
        %v4993 = vpop.f32.mrf.mxu0
        %4994 = vmatprep.mubr.bf16.mxu0 0
        %4995 = vmatmul.mubr.bf16.gmra.mxu0 %v4910
        %v4996 = vpop.f32.mrf.mxu0
        %v4997 = vadd.f32 0.0, %v4996
        %v4998 = vpop.f32.mrf.mxu0
        %v4999 = vpop.f32.mrf.mxu0
        %v5000 = vadd.f32 0.0, %v4999
        %v5001 = vpop.f32.mrf.mxu0
        %5002 = vmatprep.mubr.bf16.mxu0 0
        %5003 = vmatmul.mubr.bf16.gmra.mxu0 %v4913
        %v5004 = vpop.f32.mrf.mxu0
        %v5005 = vadd.f32 0.0, %v5004
        %v5006 = vpop.f32.mrf.mxu0
        %v5007 = vpop.f32.mrf.mxu0
        %v5008 = vadd.f32 0.0, %v5007
        %v5009 = vpop.f32.mrf.mxu0
        %5010 = vmatprep.mubr.bf16.mxu0 0
        %5011 = vmatmul.mubr.bf16.gmra.mxu0 %v4916
        %v5012 = vpop.f32.mrf.mxu0
        %v5013 = vadd.f32 0.0, %v5012
        %v5014 = vpop.f32.mrf.mxu0
        %v5015 = vpop.f32.mrf.mxu0
        %v5016 = vadd.f32 0.0, %v5015
        %v5017 = vpop.f32.mrf.mxu0
        %5018 = vmatprep.mubr.bf16.mxu0 0
        %5019 = vmatmul.mubr.bf16.gmra.mxu0 %v4919
        %v5020 = vpop.f32.mrf.mxu0
        %v5021 = vadd.f32 0.0, %v5020
        %v5022 = vpop.f32.mrf.mxu0
        %v5023 = vpop.f32.mrf.mxu0
        %v5024 = vadd.f32 0.0, %v5023
        %v5025 = vpop.f32.mrf.mxu0
        %5026 = vmatprep.mubr.bf16.mxu0 0
        %5027 = vmatmul.mubr.bf16.gmra.mxu0 %v4922
        %v5028 = vpop.f32.mrf.mxu0
        %v5029 = vadd.f32 0.0, %v5028
        %v5030 = vpop.f32.mrf.mxu0
        %v5031 = vpop.f32.mrf.mxu0
        %v5032 = vadd.f32 0.0, %v5031
        %v5033 = vpop.f32.mrf.mxu0
        %5034 = vmatprep.mubr.bf16.mxu0 0
        %5035 = vmatmul.mubr.bf16.gmra.mxu0 %v4925
        %v5036 = vpop.f32.mrf.mxu0
        %v5037 = vadd.f32 0.0, %v5036
        %v5038 = vpop.f32.mrf.mxu0
        %v5039 = vpop.f32.mrf.mxu0
        %v5040 = vadd.f32 0.0, %v5039
        %v5041 = vpop.f32.mrf.mxu0
        %5042 = vmatprep.mubr.bf16.mxu0 0
        %5043 = vmatmul.mubr.bf16.gmra.mxu0 %v4928
        %v5044 = vpop.f32.mrf.mxu0
        %v5045 = vadd.f32 0.0, %v5044
        %v5046 = vpop.f32.mrf.mxu0
        %v5047 = vpop.f32.mrf.mxu0
        %v5048 = vadd.f32 0.0, %v5047
        %v5049 = vpop.f32.mrf.mxu0
        %5050 = vmatprep.mubr.bf16.mxu0 0
        %5051 = vmatmul.mubr.bf16.gmra.mxu0 %v4931
        %v5052 = vpop.f32.mrf.mxu0
        %v5053 = vadd.f32 0.0, %v5052
        %v5054 = vpop.f32.mrf.mxu0
        %v5055 = vpop.f32.mrf.mxu0
        %v5056 = vadd.f32 0.0, %v5055
        %v5057 = vpop.f32.mrf.mxu0
        %5058 = vmatprep.mubr.bf16.mxu0 0
        %5059 = vmatmul.mubr.bf16.gmra.mxu0 %v4934
        %v5060 = vpop.f32.mrf.mxu0
        %v5061 = vadd.f32 0.0, %v5060
        %v5062 = vpop.f32.mrf.mxu0
        %v5063 = vpop.f32.mrf.mxu0
        %v5064 = vadd.f32 0.0, %v5063
        %v5065 = vpop.f32.mrf.mxu0
        %5066 = vmatprep.mubr.bf16.mxu0 0
        %5067 = vmatmul.mubr.bf16.gmra.mxu0 %v4937
        %v5068 = vpop.f32.mrf.mxu0
        %v5069 = vadd.f32 0.0, %v5068
        %v5070 = vpop.f32.mrf.mxu0
        %v5071 = vpop.f32.mrf.mxu0
        %v5072 = vadd.f32 0.0, %v5071
        %v5073 = vpop.f32.mrf.mxu0
        %5074 = vmatprep.mubr.bf16.mxu0 0
        %5075 = vmatmul.mubr.bf16.gmra.mxu0 %v4940
        %v5076 = vpop.f32.mrf.mxu0
        %v5077 = vadd.f32 0.0, %v5076
        %v5078 = vpop.f32.mrf.mxu0
        %v5079 = vpop.f32.mrf.mxu0
        %v5080 = vadd.f32 0.0, %v5079
        %v5081 = vpop.f32.mrf.mxu0
        %5082 = vmatprep.mubr.bf16.mxu0 0
        %5083 = vmatmul.mubr.bf16.gmra.mxu0 %v4943
        %v5084 = vpop.f32.mrf.mxu0
        %v5085 = vadd.f32 0.0, %v5084
        %v5086 = vpop.f32.mrf.mxu0
        %v5087 = vpop.f32.mrf.mxu0
        %v5088 = vadd.f32 0.0, %v5087
        %v5089 = vpop.f32.mrf.mxu0
        %5090 = vmatprep.mubr.bf16.mxu0 0
        %5091 = vmatmul.mubr.bf16.gmra.mxu0 %v4946
        %v5092 = vpop.f32.mrf.mxu0
        %v5093 = vadd.f32 0.0, %v5092
        %v5094 = vpop.f32.mrf.mxu0
        %v5095 = vpop.f32.mrf.mxu0
        %v5096 = vadd.f32 0.0, %v5095
        %v5097 = vpop.f32.mrf.mxu0
        %5098 = vmatprep.mubr.bf16.mxu0 0
        %5099 = vmatmul.mubr.bf16.gmra.mxu0 %v4949
        %v5100 = vpop.f32.mrf.mxu0
        %v5101 = vadd.f32 0.0, %v5100
        %v5102 = vpop.f32.mrf.mxu0
        %v5103 = vpop.f32.mrf.mxu0
        %v5104 = vadd.f32 0.0, %v5103
        %v5105 = vpop.f32.mrf.mxu0
        %5106 = vmatprep.mubr.bf16.mxu0 0
        %5107 = vmatmul.mubr.bf16.gmra.mxu0 %v4952
        %v5108 = vpop.f32.mrf.mxu0
        %v5109 = vadd.f32 0.0, %v5108
        %v5110 = vpop.f32.mrf.mxu0
        %v5111 = vpop.f32.mrf.mxu0
        %v5112 = vadd.f32 0.0, %v5111
        %v5113 = vpop.f32.mrf.mxu0
        %5114 = vdwg.mxu0
        %v5115 = vadd.f32 %v4777, %v4989
        %v5116 = vadd.f32 %v4778, %v4992
        %v5117 = vadd.f32 %v4779, %v4997
        %v5118 = vadd.f32 %v4780, %v5000
        %v5119 = vadd.f32 %v4781, %v5005
        %v5120 = vadd.f32 %v4782, %v5008
        %v5121 = vadd.f32 %v4783, %v5013
        %v5122 = vadd.f32 %v4784, %v5016
        %v5123 = vadd.f32 %v4785, %v5021
        %v5124 = vadd.f32 %v4786, %v5024
        %v5125 = vadd.f32 %v4787, %v5029
        %v5126 = vadd.f32 %v4788, %v5032
        %v5127 = vadd.f32 %v4789, %v5037
        %v5128 = vadd.f32 %v4790, %v5040
        %v5129 = vadd.f32 %v4791, %v5045
        %v5130 = vadd.f32 %v4792, %v5048
        %v5131 = vadd.f32 %v4793, %v5053
        %v5132 = vadd.f32 %v4794, %v5056
        %v5133 = vadd.f32 %v4795, %v5061
        %v5134 = vadd.f32 %v4796, %v5064
        %v5135 = vadd.f32 %v4797, %v5069
        %v5136 = vadd.f32 %v4798, %v5072
        %v5137 = vadd.f32 %v4799, %v5077
        %v5138 = vadd.f32 %v4800, %v5080
        %v5139 = vadd.f32 %v4801, %v5085
        %v5140 = vadd.f32 %v4802, %v5088
        %v5141 = vadd.f32 %v4803, %v5093
        %v5142 = vadd.f32 %v4804, %v5096
        %v5143 = vadd.f32 %v4805, %v5101
        %v5144 = vadd.f32 %v4806, %v5104
        %v5145 = vadd.f32 %v4807, %v5109
        %v5146 = vadd.f32 %v4808, %v5112
        %v5147 = vld [vmem:[%s2346 + $0x4] sm:$0xf]
        %v5148 = vld [vmem:[%s2346 + $0x8] sm:$0xf]
        %v5149 = vld [vmem:[%s2346 + $0xc] sm:$0x1]
        %v5150 = vld [vmem:[%s2346 + $0x14] sm:$0xf]
        %v5151 = vld [vmem:[%s2346 + $0x18] sm:$0xf]
        %v5152 = vld [vmem:[%s2346 + $0x1c] sm:$0x1]
        %v5153 = vld [vmem:[%s2346 + $0x24] sm:$0xf]
        %v5154 = vld [vmem:[%s2346 + $0x28] sm:$0xf]
        %v5155 = vld [vmem:[%s2346 + $0x2c] sm:$0x1]
        %v5156 = vld [vmem:[%s2346 + $0x34] sm:$0xf]
        %v5157 = vld [vmem:[%s2346 + $0x38] sm:$0xf]
        %v5158 = vld [vmem:[%s2346 + $0x3c] sm:$0x1]
        %v5159 = vld [vmem:[%s2346 + $0x44] sm:$0xf]
        %v5160 = vld [vmem:[%s2346 + $0x48] sm:$0xf]
        %v5161 = vld [vmem:[%s2346 + $0x4c] sm:$0x1]
        %v5162 = vld [vmem:[%s2346 + $0x54] sm:$0xf]
        %v5163 = vld [vmem:[%s2346 + $0x58] sm:$0xf]
        %v5164 = vld [vmem:[%s2346 + $0x5c] sm:$0x1]
        %v5165 = vld [vmem:[%s2346 + $0x64] sm:$0xf]
        %v5166 = vld [vmem:[%s2346 + $0x68] sm:$0xf]
        %v5167 = vld [vmem:[%s2346 + $0x6c] sm:$0x1]
        %v5168 = vld [vmem:[%s2346 + $0x74] sm:$0xf]
        %v5169 = vld [vmem:[%s2346 + $0x78] sm:$0xf]
        %v5170 = vld [vmem:[%s2346 + $0x7c] sm:$0x1]
        %v5171 = vld [vmem:[%s2346 + $0x84] sm:$0xf]
        %v5172 = vld [vmem:[%s2346 + $0x88] sm:$0xf]
        %v5173 = vld [vmem:[%s2346 + $0x8c] sm:$0x1]
        %v5174 = vld [vmem:[%s2346 + $0x94] sm:$0xf]
        %v5175 = vld [vmem:[%s2346 + $0x98] sm:$0xf]
        %v5176 = vld [vmem:[%s2346 + $0x9c] sm:$0x1]
        %v5177 = vld [vmem:[%s2346 + $0xa4] sm:$0xf]
        %v5178 = vld [vmem:[%s2346 + $0xa8] sm:$0xf]
        %v5179 = vld [vmem:[%s2346 + $0xac] sm:$0x1]
        %v5180 = vld [vmem:[%s2346 + $0xb4] sm:$0xf]
        %v5181 = vld [vmem:[%s2346 + $0xb8] sm:$0xf]
        %v5182 = vld [vmem:[%s2346 + $0xbc] sm:$0x1]
        %v5183 = vld [vmem:[%s2346 + $0xc4] sm:$0xf]
        %v5184 = vld [vmem:[%s2346 + $0xc8] sm:$0xf]
        %v5185 = vld [vmem:[%s2346 + $0xcc] sm:$0x1]
        %v5186 = vld [vmem:[%s2346 + $0xd4] sm:$0xf]
        %v5187 = vld [vmem:[%s2346 + $0xd8] sm:$0xf]
        %v5188 = vld [vmem:[%s2346 + $0xdc] sm:$0x1]
        %v5189 = vld [vmem:[%s2346 + $0xe4] sm:$0xf]
        %v5190 = vld [vmem:[%s2346 + $0xe8] sm:$0xf]
        %v5191 = vld [vmem:[%s2346 + $0xec] sm:$0x1]
        %v5192 = vld [vmem:[%s2346 + $0xf4] sm:$0xf]
        %v5193 = vld [vmem:[%s2346 + $0xf8] sm:$0xf]
        %v5194 = vld [vmem:[%s2346 + $0xfc] sm:$0x1]
        %v5196 = vshrl.u32 %v5147, 16
        %v5198 = vrot.slane %v5196, 4
        %v5199 = vshll.u32 %v5147, 16
        %v5201 = vrot.slane %v5199, 5
        %v5202 = vor.u32 %v5198, %v5201
        %v5203 = vrot.slane %v5202, 4
        %v5205 = vshll.u32 %v5148, 16
        %v5207 = vrot.slane %v5205, 5
        %v5208 = vsel %vm3412, %v5203, %v5207
        %v5209 = vshrl.u32 %v5148, 16
        %v5211 = vrot.slane %v5209, 4
        %v5212 = vor.u32 %v5211, %v5207
        %v5213 = vrot.slane %v5212, 4
        %v5215 = vshll.u32 %v5149, 16
        %v5217 = vrot.slane %v5215, 5
        %v5218 = vsel %vm3412, %v5213, %v5217
        %v5220 = vshrl.u32 %v5150, 16
        %v5222 = vrot.slane %v5220, 4
        %v5223 = vshll.u32 %v5150, 16
        %v5225 = vrot.slane %v5223, 5
        %v5226 = vor.u32 %v5222, %v5225
        %v5227 = vrot.slane %v5226, 4
        %v5229 = vshll.u32 %v5151, 16
        %v5231 = vrot.slane %v5229, 5
        %v5232 = vsel %vm3412, %v5227, %v5231
        %v5233 = vshrl.u32 %v5151, 16
        %v5235 = vrot.slane %v5233, 4
        %v5236 = vor.u32 %v5235, %v5231
        %v5237 = vrot.slane %v5236, 4
        %v5239 = vshll.u32 %v5152, 16
        %v5241 = vrot.slane %v5239, 5
        %v5242 = vsel %vm3412, %v5237, %v5241
        %v5244 = vshrl.u32 %v5153, 16
        %v5246 = vrot.slane %v5244, 4
        %v5247 = vshll.u32 %v5153, 16
        %v5249 = vrot.slane %v5247, 5
        %v5250 = vor.u32 %v5246, %v5249
        %v5251 = vrot.slane %v5250, 4
        %v5253 = vshll.u32 %v5154, 16
        %v5255 = vrot.slane %v5253, 5
        %v5256 = vsel %vm3412, %v5251, %v5255
        %v5257 = vshrl.u32 %v5154, 16
        %v5259 = vrot.slane %v5257, 4
        %v5260 = vor.u32 %v5259, %v5255
        %v5261 = vrot.slane %v5260, 4
        %v5263 = vshll.u32 %v5155, 16
        %v5265 = vrot.slane %v5263, 5
        %v5266 = vsel %vm3412, %v5261, %v5265
        %v5268 = vshrl.u32 %v5156, 16
        %v5270 = vrot.slane %v5268, 4
        %v5271 = vshll.u32 %v5156, 16
        %v5273 = vrot.slane %v5271, 5
        %v5274 = vor.u32 %v5270, %v5273
        %v5275 = vrot.slane %v5274, 4
        %v5277 = vshll.u32 %v5157, 16
        %v5279 = vrot.slane %v5277, 5
        %v5280 = vsel %vm3412, %v5275, %v5279
        %v5281 = vshrl.u32 %v5157, 16
        %v5283 = vrot.slane %v5281, 4
        %v5284 = vor.u32 %v5283, %v5279
        %v5285 = vrot.slane %v5284, 4
        %v5287 = vshll.u32 %v5158, 16
        %v5289 = vrot.slane %v5287, 5
        %v5290 = vsel %vm3412, %v5285, %v5289
        %v5292 = vshrl.u32 %v5159, 16
        %v5294 = vrot.slane %v5292, 4
        %v5295 = vshll.u32 %v5159, 16
        %v5297 = vrot.slane %v5295, 5
        %v5298 = vor.u32 %v5294, %v5297
        %v5299 = vrot.slane %v5298, 4
        %v5301 = vshll.u32 %v5160, 16
        %v5303 = vrot.slane %v5301, 5
        %v5304 = vsel %vm3412, %v5299, %v5303
        %v5305 = vshrl.u32 %v5160, 16
        %v5307 = vrot.slane %v5305, 4
        %v5308 = vor.u32 %v5307, %v5303
        %v5309 = vrot.slane %v5308, 4
        %v5311 = vshll.u32 %v5161, 16
        %v5313 = vrot.slane %v5311, 5
        %v5314 = vsel %vm3412, %v5309, %v5313
        %v5316 = vshrl.u32 %v5162, 16
        %v5318 = vrot.slane %v5316, 4
        %v5319 = vshll.u32 %v5162, 16
        %v5321 = vrot.slane %v5319, 5
        %v5322 = vor.u32 %v5318, %v5321
        %v5323 = vrot.slane %v5322, 4
        %v5325 = vshll.u32 %v5163, 16
        %v5327 = vrot.slane %v5325, 5
        %v5328 = vsel %vm3412, %v5323, %v5327
        %v5329 = vshrl.u32 %v5163, 16
        %v5331 = vrot.slane %v5329, 4
        %v5332 = vor.u32 %v5331, %v5327
        %v5333 = vrot.slane %v5332, 4
        %v5335 = vshll.u32 %v5164, 16
        %v5337 = vrot.slane %v5335, 5
        %v5338 = vsel %vm3412, %v5333, %v5337
        %v5340 = vshrl.u32 %v5165, 16
        %v5342 = vrot.slane %v5340, 4
        %v5343 = vshll.u32 %v5165, 16
        %v5345 = vrot.slane %v5343, 5
        %v5346 = vor.u32 %v5342, %v5345
        %v5347 = vrot.slane %v5346, 4
        %v5349 = vshll.u32 %v5166, 16
        %v5351 = vrot.slane %v5349, 5
        %v5352 = vsel %vm3412, %v5347, %v5351
        %v5353 = vshrl.u32 %v5166, 16
        %v5355 = vrot.slane %v5353, 4
        %v5356 = vor.u32 %v5355, %v5351
        %v5357 = vrot.slane %v5356, 4
        %v5359 = vshll.u32 %v5167, 16
        %v5361 = vrot.slane %v5359, 5
        %v5362 = vsel %vm3412, %v5357, %v5361
        %v5364 = vshrl.u32 %v5168, 16
        %v5366 = vrot.slane %v5364, 4
        %v5367 = vshll.u32 %v5168, 16
        %v5369 = vrot.slane %v5367, 5
        %v5370 = vor.u32 %v5366, %v5369
        %v5371 = vrot.slane %v5370, 4
        %v5373 = vshll.u32 %v5169, 16
        %v5375 = vrot.slane %v5373, 5
        %v5376 = vsel %vm3412, %v5371, %v5375
        %v5377 = vshrl.u32 %v5169, 16
        %v5379 = vrot.slane %v5377, 4
        %v5380 = vor.u32 %v5379, %v5375
        %v5381 = vrot.slane %v5380, 4
        %v5383 = vshll.u32 %v5170, 16
        %v5385 = vrot.slane %v5383, 5
        %v5386 = vsel %vm3412, %v5381, %v5385
        %v5388 = vshrl.u32 %v5171, 16
        %v5390 = vrot.slane %v5388, 4
        %v5391 = vshll.u32 %v5171, 16
        %v5393 = vrot.slane %v5391, 5
        %v5394 = vor.u32 %v5390, %v5393
        %v5395 = vrot.slane %v5394, 4
        %v5397 = vshll.u32 %v5172, 16
        %v5399 = vrot.slane %v5397, 5
        %v5400 = vsel %vm3412, %v5395, %v5399
        %v5401 = vshrl.u32 %v5172, 16
        %v5403 = vrot.slane %v5401, 4
        %v5404 = vor.u32 %v5403, %v5399
        %v5405 = vrot.slane %v5404, 4
        %v5407 = vshll.u32 %v5173, 16
        %v5409 = vrot.slane %v5407, 5
        %v5410 = vsel %vm3412, %v5405, %v5409
        %v5412 = vshrl.u32 %v5174, 16
        %v5414 = vrot.slane %v5412, 4
        %v5415 = vshll.u32 %v5174, 16
        %v5417 = vrot.slane %v5415, 5
        %v5418 = vor.u32 %v5414, %v5417
        %v5419 = vrot.slane %v5418, 4
        %v5421 = vshll.u32 %v5175, 16
        %v5423 = vrot.slane %v5421, 5
        %v5424 = vsel %vm3412, %v5419, %v5423
        %v5425 = vshrl.u32 %v5175, 16
        %v5427 = vrot.slane %v5425, 4
        %v5428 = vor.u32 %v5427, %v5423
        %v5429 = vrot.slane %v5428, 4
        %v5431 = vshll.u32 %v5176, 16
        %v5433 = vrot.slane %v5431, 5
        %v5434 = vsel %vm3412, %v5429, %v5433
        %v5436 = vshrl.u32 %v5177, 16
        %v5438 = vrot.slane %v5436, 4
        %v5439 = vshll.u32 %v5177, 16
        %v5441 = vrot.slane %v5439, 5
        %v5442 = vor.u32 %v5438, %v5441
        %v5443 = vrot.slane %v5442, 4
        %v5445 = vshll.u32 %v5178, 16
        %v5447 = vrot.slane %v5445, 5
        %v5448 = vsel %vm3412, %v5443, %v5447
        %v5449 = vshrl.u32 %v5178, 16
        %v5451 = vrot.slane %v5449, 4
        %v5452 = vor.u32 %v5451, %v5447
        %v5453 = vrot.slane %v5452, 4
        %v5455 = vshll.u32 %v5179, 16
        %v5457 = vrot.slane %v5455, 5
        %v5458 = vsel %vm3412, %v5453, %v5457
        %v5460 = vshrl.u32 %v5180, 16
        %v5462 = vrot.slane %v5460, 4
        %v5463 = vshll.u32 %v5180, 16
        %v5465 = vrot.slane %v5463, 5
        %v5466 = vor.u32 %v5462, %v5465
        %v5467 = vrot.slane %v5466, 4
        %v5469 = vshll.u32 %v5181, 16
        %v5471 = vrot.slane %v5469, 5
        %v5472 = vsel %vm3412, %v5467, %v5471
        %v5473 = vshrl.u32 %v5181, 16
        %v5475 = vrot.slane %v5473, 4
        %v5476 = vor.u32 %v5475, %v5471
        %v5477 = vrot.slane %v5476, 4
        %v5479 = vshll.u32 %v5182, 16
        %v5481 = vrot.slane %v5479, 5
        %v5482 = vsel %vm3412, %v5477, %v5481
        %v5484 = vshrl.u32 %v5183, 16
        %v5486 = vrot.slane %v5484, 4
        %v5487 = vshll.u32 %v5183, 16
        %v5489 = vrot.slane %v5487, 5
        %v5490 = vor.u32 %v5486, %v5489
        %v5491 = vrot.slane %v5490, 4
        %v5493 = vshll.u32 %v5184, 16
        %v5495 = vrot.slane %v5493, 5
        %v5496 = vsel %vm3412, %v5491, %v5495
        %v5497 = vshrl.u32 %v5184, 16
        %v5499 = vrot.slane %v5497, 4
        %v5500 = vor.u32 %v5499, %v5495
        %v5501 = vrot.slane %v5500, 4
        %v5503 = vshll.u32 %v5185, 16
        %v5505 = vrot.slane %v5503, 5
        %v5506 = vsel %vm3412, %v5501, %v5505
        %v5508 = vshrl.u32 %v5186, 16
        %v5510 = vrot.slane %v5508, 4
        %v5511 = vshll.u32 %v5186, 16
        %v5513 = vrot.slane %v5511, 5
        %v5514 = vor.u32 %v5510, %v5513
        %v5515 = vrot.slane %v5514, 4
        %v5517 = vshll.u32 %v5187, 16
        %v5519 = vrot.slane %v5517, 5
        %v5520 = vsel %vm3412, %v5515, %v5519
        %v5521 = vshrl.u32 %v5187, 16
        %v5523 = vrot.slane %v5521, 4
        %v5524 = vor.u32 %v5523, %v5519
        %v5525 = vrot.slane %v5524, 4
        %v5527 = vshll.u32 %v5188, 16
        %v5529 = vrot.slane %v5527, 5
        %v5530 = vsel %vm3412, %v5525, %v5529
        %v5532 = vshrl.u32 %v5189, 16
        %v5534 = vrot.slane %v5532, 4
        %v5535 = vshll.u32 %v5189, 16
        %v5537 = vrot.slane %v5535, 5
        %v5538 = vor.u32 %v5534, %v5537
        %v5539 = vrot.slane %v5538, 4
        %v5541 = vshll.u32 %v5190, 16
        %v5543 = vrot.slane %v5541, 5
        %v5544 = vsel %vm3412, %v5539, %v5543
        %v5545 = vshrl.u32 %v5190, 16
        %v5547 = vrot.slane %v5545, 4
        %v5548 = vor.u32 %v5547, %v5543
        %v5549 = vrot.slane %v5548, 4
        %v5551 = vshll.u32 %v5191, 16
        %v5553 = vrot.slane %v5551, 5
        %v5554 = vsel %vm3412, %v5549, %v5553
        %v5556 = vshrl.u32 %v5192, 16
        %v5558 = vrot.slane %v5556, 4
        %v5559 = vshll.u32 %v5192, 16
        %v5561 = vrot.slane %v5559, 5
        %v5562 = vor.u32 %v5558, %v5561
        %v5563 = vrot.slane %v5562, 4
        %v5565 = vshll.u32 %v5193, 16
        %v5567 = vrot.slane %v5565, 5
        %v5568 = vsel %vm3412, %v5563, %v5567
        %v5569 = vshrl.u32 %v5193, 16
        %v5571 = vrot.slane %v5569, 4
        %v5572 = vor.u32 %v5571, %v5567
        %v5573 = vrot.slane %v5572, 4
        %v5575 = vshll.u32 %v5194, 16
        %v5577 = vrot.slane %v5575, 5
        %v5578 = vsel %vm3412, %v5573, %v5577
        %s5579 = scalar_lea.vmem %s3, 80
        %v5580 = vld [vmem:[%s5579] sm:$0xf]
        %v5581 = vld [vmem:[%s5579 + $0x4] sm:$0xf]
        %v5582 = vld [vmem:[%s5579 + $0x8] sm:$0xf]
        %v5583 = vld [vmem:[%s5579 + $0xc] sm:$0xf]
        %v5584 = vunpack.c.l.b16 %v5208
        %v5585 = vunpack.c.l.b16 %v5218
        %v5586 = vunpack.c.l.b16 %v5232
        %v5587 = vunpack.c.l.b16 %v5242
        %v5588 = vunpack.c.l.b16 %v5256
        %v5589 = vunpack.c.l.b16 %v5266
        %v5590 = vunpack.c.l.b16 %v5280
        %v5591 = vunpack.c.l.b16 %v5290
        %v5592 = vunpack.c.l.b16 %v5304
        %v5593 = vunpack.c.l.b16 %v5314
        %v5594 = vunpack.c.l.b16 %v5328
        %v5595 = vunpack.c.l.b16 %v5338
        %v5596 = vunpack.c.l.b16 %v5352
        %v5597 = vunpack.c.l.b16 %v5362
        %v5598 = vunpack.c.l.b16 %v5376
        %v5599 = vunpack.c.l.b16 %v5386
        %v5600 = vunpack.c.l.b16 %v5400
        %v5601 = vunpack.c.l.b16 %v5410
        %v5602 = vunpack.c.l.b16 %v5424
        %v5603 = vunpack.c.l.b16 %v5434
        %v5604 = vunpack.c.l.b16 %v5448
        %v5605 = vunpack.c.l.b16 %v5458
        %v5606 = vunpack.c.l.b16 %v5472
        %v5607 = vunpack.c.l.b16 %v5482
        %v5608 = vunpack.c.l.b16 %v5496
        %v5609 = vunpack.c.l.b16 %v5506
        %v5610 = vunpack.c.l.b16 %v5520
        %v5611 = vunpack.c.l.b16 %v5530
        %v5612 = vunpack.c.l.b16 %v5544
        %v5613 = vunpack.c.l.b16 %v5554
        %v5614 = vunpack.c.l.b16 %v5568
        %v5615 = vunpack.c.l.b16 %v5578
        %v5616 = vpack.c.b16 %v5585, %v5584
        %v5617 = vpack.c.b16 %v5587, %v5586
        %v5618 = vpack.c.b16 %v5589, %v5588
        %v5619 = vpack.c.b16 %v5591, %v5590
        %v5620 = vpack.c.b16 %v5593, %v5592
        %v5621 = vpack.c.b16 %v5595, %v5594
        %v5622 = vpack.c.b16 %v5597, %v5596
        %v5623 = vpack.c.b16 %v5599, %v5598
        %v5624 = vpack.c.b16 %v5601, %v5600
        %v5625 = vpack.c.b16 %v5603, %v5602
        %v5626 = vpack.c.b16 %v5605, %v5604
        %v5627 = vpack.c.b16 %v5607, %v5606
        %v5628 = vpack.c.b16 %v5609, %v5608
        %v5629 = vpack.c.b16 %v5611, %v5610
        %v5630 = vpack.c.b16 %v5613, %v5612
        %v5631 = vpack.c.b16 %v5615, %v5614
        %v5636 = vunpack.c.l.b16 %v5580
        %v5637 = vunpack.c.l.b16 %v5581
        %v5638 = vunpack.c.l.b16 %v5582
        %v5639 = vunpack.c.l.b16 %v5583
        %v5640 = vpack.c.b16 %v5637, %v5636
        %v5641 = vpack.c.b16 %v5639, %v5638
        %v5645 = vsel %vm1994, %v5616, 0
        %v5648 = vsel %vm1994, %v5617, 0
        %v5651 = vsel %vm1994, %v5618, 0
        %v5654 = vsel %vm1994, %v5619, 0
        %v5657 = vsel %vm1994, %v5620, 0
        %v5660 = vsel %vm1994, %v5621, 0
        %v5663 = vsel %vm1994, %v5622, 0
        %v5666 = vsel %vm1994, %v5623, 0
        %v5669 = vsel %vm1994, %v5624, 0
        %v5672 = vsel %vm1994, %v5625, 0
        %v5675 = vsel %vm1994, %v5626, 0
        %v5678 = vsel %vm1994, %v5627, 0
        %v5681 = vsel %vm1994, %v5628, 0
        %v5684 = vsel %vm1994, %v5629, 0
        %v5687 = vsel %vm1994, %v5630, 0
        %v5690 = vsel %vm1994, %v5631, 0
        %5692 = vmatprep.subr.bf16.mxu0 0
        %5693 = vmatpush1.bf16.msra.mxu0 0
        %5694 = vmatprep.subr.bf16.mxu0 0
        %5695 = vmatpush1.bf16.msra.mxu0 0
        %5696 = vmatprep.subr.bf16.mxu0 0
        %5697 = vmatpush1.bf16.msra.mxu0 0
        %5698 = vmatprep.subr.bf16.mxu0 0
        %5699 = vmatpush1.bf16.msra.mxu0 0
        %5700 = vmatprep.subr.bf16.mxu0 0
        %5701 = vmatpush1.bf16.msra.mxu0 0
        %5702 = vmatprep.subr.bf16.mxu0 0
        %5703 = vmatpush1.bf16.msra.mxu0 0
        %5704 = vmatprep.subr.bf16.mxu0 0
        %5705 = vmatpush1.bf16.msra.mxu0 %v5641
        %5706 = vmatprep.subr.bf16.mxu0 0
        %5707 = vmatpush1.bf16.msra.mxu0 %v5640
        %5708 = vmatprep.subr.bf16.mxu0 0
        %5709 = vmatpush2.bf16.msra.mxu0 0
        %5710 = vmatprep.subr.bf16.mxu0 0
        %5711 = vmatpush2.bf16.msra.mxu0 0
        %5712 = vmatprep.subr.bf16.mxu0 0
        %5713 = vmatpush2.bf16.msra.mxu0 0
        %5714 = vmatprep.subr.bf16.mxu0 0
        %5715 = vmatpush2.bf16.msra.mxu0 0
        %5716 = vmatprep.subr.bf16.mxu0 0
        %5717 = vmatpush2.bf16.msra.mxu0 0
        %5718 = vmatprep.subr.bf16.mxu0 0
        %5719 = vmatpush2.bf16.msra.mxu0 0
        %5720 = vmatprep.subr.bf16.mxu0 0
        %5721 = vmatpush2.bf16.msra.mxu0 0
        %5722 = vmatprep.subr.bf16.mxu0 0
        %5723 = vmatpush2.bf16.msra.mxu0 0
        %5724 = vmatprep.mubr.bf16.mxu0 0
        %5725 = vmatmul.mubr.bf16.gmra.mxu0 %v5645
        %v5726 = vpop.f32.mrf.mxu0
        %v5727 = vadd.f32 0.0, %v5726
        %v5728 = vpop.f32.mrf.mxu0
        %v5729 = vpop.f32.mrf.mxu0
        %v5730 = vadd.f32 0.0, %v5729
        %v5731 = vpop.f32.mrf.mxu0
        %5732 = vmatprep.mubr.bf16.mxu0 0
        %5733 = vmatmul.mubr.bf16.gmra.mxu0 %v5648
        %v5734 = vpop.f32.mrf.mxu0
        %v5735 = vadd.f32 0.0, %v5734
        %v5736 = vpop.f32.mrf.mxu0
        %v5737 = vpop.f32.mrf.mxu0
        %v5738 = vadd.f32 0.0, %v5737
        %v5739 = vpop.f32.mrf.mxu0
        %5740 = vmatprep.mubr.bf16.mxu0 0
        %5741 = vmatmul.mubr.bf16.gmra.mxu0 %v5651
        %v5742 = vpop.f32.mrf.mxu0
        %v5743 = vadd.f32 0.0, %v5742
        %v5744 = vpop.f32.mrf.mxu0
        %v5745 = vpop.f32.mrf.mxu0
        %v5746 = vadd.f32 0.0, %v5745
        %v5747 = vpop.f32.mrf.mxu0
        %5748 = vmatprep.mubr.bf16.mxu0 0
        %5749 = vmatmul.mubr.bf16.gmra.mxu0 %v5654
        %v5750 = vpop.f32.mrf.mxu0
        %v5751 = vadd.f32 0.0, %v5750
        %v5752 = vpop.f32.mrf.mxu0
        %v5753 = vpop.f32.mrf.mxu0
        %v5754 = vadd.f32 0.0, %v5753
        %v5755 = vpop.f32.mrf.mxu0
        %5756 = vmatprep.mubr.bf16.mxu0 0
        %5757 = vmatmul.mubr.bf16.gmra.mxu0 %v5657
        %v5758 = vpop.f32.mrf.mxu0
        %v5759 = vadd.f32 0.0, %v5758
        %v5760 = vpop.f32.mrf.mxu0
        %v5761 = vpop.f32.mrf.mxu0
        %v5762 = vadd.f32 0.0, %v5761
        %v5763 = vpop.f32.mrf.mxu0
        %5764 = vmatprep.mubr.bf16.mxu0 0
        %5765 = vmatmul.mubr.bf16.gmra.mxu0 %v5660
        %v5766 = vpop.f32.mrf.mxu0
        %v5767 = vadd.f32 0.0, %v5766
        %v5768 = vpop.f32.mrf.mxu0
        %v5769 = vpop.f32.mrf.mxu0
        %v5770 = vadd.f32 0.0, %v5769
        %v5771 = vpop.f32.mrf.mxu0
        %5772 = vmatprep.mubr.bf16.mxu0 0
        %5773 = vmatmul.mubr.bf16.gmra.mxu0 %v5663
        %v5774 = vpop.f32.mrf.mxu0
        %v5775 = vadd.f32 0.0, %v5774
        %v5776 = vpop.f32.mrf.mxu0
        %v5777 = vpop.f32.mrf.mxu0
        %v5778 = vadd.f32 0.0, %v5777
        %v5779 = vpop.f32.mrf.mxu0
        %5780 = vmatprep.mubr.bf16.mxu0 0
        %5781 = vmatmul.mubr.bf16.gmra.mxu0 %v5666
        %v5782 = vpop.f32.mrf.mxu0
        %v5783 = vadd.f32 0.0, %v5782
        %v5784 = vpop.f32.mrf.mxu0
        %v5785 = vpop.f32.mrf.mxu0
        %v5786 = vadd.f32 0.0, %v5785
        %v5787 = vpop.f32.mrf.mxu0
        %5788 = vmatprep.mubr.bf16.mxu0 0
        %5789 = vmatmul.mubr.bf16.gmra.mxu0 %v5669
        %v5790 = vpop.f32.mrf.mxu0
        %v5791 = vadd.f32 0.0, %v5790
        %v5792 = vpop.f32.mrf.mxu0
        %v5793 = vpop.f32.mrf.mxu0
        %v5794 = vadd.f32 0.0, %v5793
        %v5795 = vpop.f32.mrf.mxu0
        %5796 = vmatprep.mubr.bf16.mxu0 0
        %5797 = vmatmul.mubr.bf16.gmra.mxu0 %v5672
        %v5798 = vpop.f32.mrf.mxu0
        %v5799 = vadd.f32 0.0, %v5798
        %v5800 = vpop.f32.mrf.mxu0
        %v5801 = vpop.f32.mrf.mxu0
        %v5802 = vadd.f32 0.0, %v5801
        %v5803 = vpop.f32.mrf.mxu0
        %5804 = vmatprep.mubr.bf16.mxu0 0
        %5805 = vmatmul.mubr.bf16.gmra.mxu0 %v5675
        %v5806 = vpop.f32.mrf.mxu0
        %v5807 = vadd.f32 0.0, %v5806
        %v5808 = vpop.f32.mrf.mxu0
        %v5809 = vpop.f32.mrf.mxu0
        %v5810 = vadd.f32 0.0, %v5809
        %v5811 = vpop.f32.mrf.mxu0
        %5812 = vmatprep.mubr.bf16.mxu0 0
        %5813 = vmatmul.mubr.bf16.gmra.mxu0 %v5678
        %v5814 = vpop.f32.mrf.mxu0
        %v5815 = vadd.f32 0.0, %v5814
        %v5816 = vpop.f32.mrf.mxu0
        %v5817 = vpop.f32.mrf.mxu0
        %v5818 = vadd.f32 0.0, %v5817
        %v5819 = vpop.f32.mrf.mxu0
        %5820 = vmatprep.mubr.bf16.mxu0 0
        %5821 = vmatmul.mubr.bf16.gmra.mxu0 %v5681
        %v5822 = vpop.f32.mrf.mxu0
        %v5823 = vadd.f32 0.0, %v5822
        %v5824 = vpop.f32.mrf.mxu0
        %v5825 = vpop.f32.mrf.mxu0
        %v5826 = vadd.f32 0.0, %v5825
        %v5827 = vpop.f32.mrf.mxu0
        %5828 = vmatprep.mubr.bf16.mxu0 0
        %5829 = vmatmul.mubr.bf16.gmra.mxu0 %v5684
        %v5830 = vpop.f32.mrf.mxu0
        %v5831 = vadd.f32 0.0, %v5830
        %v5832 = vpop.f32.mrf.mxu0
        %v5833 = vpop.f32.mrf.mxu0
        %v5834 = vadd.f32 0.0, %v5833
        %v5835 = vpop.f32.mrf.mxu0
        %5836 = vmatprep.mubr.bf16.mxu0 0
        %5837 = vmatmul.mubr.bf16.gmra.mxu0 %v5687
        %v5838 = vpop.f32.mrf.mxu0
        %v5839 = vadd.f32 0.0, %v5838
        %v5840 = vpop.f32.mrf.mxu0
        %v5841 = vpop.f32.mrf.mxu0
        %v5842 = vadd.f32 0.0, %v5841
        %v5843 = vpop.f32.mrf.mxu0
        %5844 = vmatprep.mubr.bf16.mxu0 0
        %5845 = vmatmul.mubr.bf16.gmra.mxu0 %v5690
        %v5846 = vpop.f32.mrf.mxu0
        %v5847 = vadd.f32 0.0, %v5846
        %v5848 = vpop.f32.mrf.mxu0
        %v5849 = vpop.f32.mrf.mxu0
        %v5850 = vadd.f32 0.0, %v5849
        %v5851 = vpop.f32.mrf.mxu0
        %5852 = vdwg.mxu0
        %v5853 = vadd.f32 %v5115, %v5727
        %v5854 = vadd.f32 %v5116, %v5730
        %v5855 = vadd.f32 %v5117, %v5735
        %v5856 = vadd.f32 %v5118, %v5738
        %v5857 = vadd.f32 %v5119, %v5743
        %v5858 = vadd.f32 %v5120, %v5746
        %v5859 = vadd.f32 %v5121, %v5751
        %v5860 = vadd.f32 %v5122, %v5754
        %v5861 = vadd.f32 %v5123, %v5759
        %v5862 = vadd.f32 %v5124, %v5762
        %v5863 = vadd.f32 %v5125, %v5767
        %v5864 = vadd.f32 %v5126, %v5770
        %v5865 = vadd.f32 %v5127, %v5775
        %v5866 = vadd.f32 %v5128, %v5778
        %v5867 = vadd.f32 %v5129, %v5783
        %v5868 = vadd.f32 %v5130, %v5786
        %v5869 = vadd.f32 %v5131, %v5791
        %v5870 = vadd.f32 %v5132, %v5794
        %v5871 = vadd.f32 %v5133, %v5799
        %v5872 = vadd.f32 %v5134, %v5802
        %v5873 = vadd.f32 %v5135, %v5807
        %v5874 = vadd.f32 %v5136, %v5810
        %v5875 = vadd.f32 %v5137, %v5815
        %v5876 = vadd.f32 %v5138, %v5818
        %v5877 = vadd.f32 %v5139, %v5823
        %v5878 = vadd.f32 %v5140, %v5826
        %v5879 = vadd.f32 %v5141, %v5831
        %v5880 = vadd.f32 %v5142, %v5834
        %v5881 = vadd.f32 %v5143, %v5839
        %v5882 = vadd.f32 %v5144, %v5842
        %v5883 = vadd.f32 %v5145, %v5847
        %v5884 = vadd.f32 %v5146, %v5850
        %s5885 = scalar_lea.vmem [#allocation2], 144
        %v5886 = vld [vmem:[%s5885] sm:$0x8]
        %v5887 = vld [vmem:[%s5885 + $0x4] sm:$0xf]
        %v5888 = vld [vmem:[%s5885 + $0x8] sm:$0xf]
        %v5889 = vld [vmem:[%s5885 + $0x10] sm:$0x8]
        %v5890 = vld [vmem:[%s5885 + $0x14] sm:$0xf]
        %v5891 = vld [vmem:[%s5885 + $0x18] sm:$0xf]
        %v5892 = vld [vmem:[%s5885 + $0x20] sm:$0x8]
        %v5893 = vld [vmem:[%s5885 + $0x24] sm:$0xf]
        %v5894 = vld [vmem:[%s5885 + $0x28] sm:$0xf]
        %v5895 = vld [vmem:[%s5885 + $0x30] sm:$0x8]
        %v5896 = vld [vmem:[%s5885 + $0x34] sm:$0xf]
        %v5897 = vld [vmem:[%s5885 + $0x38] sm:$0xf]
        %v5898 = vld [vmem:[%s5885 + $0x40] sm:$0x8]
        %v5899 = vld [vmem:[%s5885 + $0x44] sm:$0xf]
        %v5900 = vld [vmem:[%s5885 + $0x48] sm:$0xf]
        %v5901 = vld [vmem:[%s5885 + $0x50] sm:$0x8]
        %v5902 = vld [vmem:[%s5885 + $0x54] sm:$0xf]
        %v5903 = vld [vmem:[%s5885 + $0x58] sm:$0xf]
        %v5904 = vld [vmem:[%s5885 + $0x60] sm:$0x8]
        %v5905 = vld [vmem:[%s5885 + $0x64] sm:$0xf]
        %v5906 = vld [vmem:[%s5885 + $0x68] sm:$0xf]
        %v5907 = vld [vmem:[%s5885 + $0x70] sm:$0x8]
        %v5908 = vld [vmem:[%s5885 + $0x74] sm:$0xf]
        %v5909 = vld [vmem:[%s5885 + $0x78] sm:$0xf]
        %v5910 = vld [vmem:[%s5885 + $0x80] sm:$0x8]
        %v5911 = vld [vmem:[%s5885 + $0x84] sm:$0xf]
        %v5912 = vld [vmem:[%s5885 + $0x88] sm:$0xf]
        %v5913 = vld [vmem:[%s5885 + $0x90] sm:$0x8]
        %v5914 = vld [vmem:[%s5885 + $0x94] sm:$0xf]
        %v5915 = vld [vmem:[%s5885 + $0x98] sm:$0xf]
        %v5916 = vld [vmem:[%s5885 + $0xa0] sm:$0x8]
        %v5917 = vld [vmem:[%s5885 + $0xa4] sm:$0xf]
        %v5918 = vld [vmem:[%s5885 + $0xa8] sm:$0xf]
        %v5919 = vld [vmem:[%s5885 + $0xb0] sm:$0x8]
        %v5920 = vld [vmem:[%s5885 + $0xb4] sm:$0xf]
        %v5921 = vld [vmem:[%s5885 + $0xb8] sm:$0xf]
        %v5922 = vld [vmem:[%s5885 + $0xc0] sm:$0x8]
        %v5923 = vld [vmem:[%s5885 + $0xc4] sm:$0xf]
        %v5924 = vld [vmem:[%s5885 + $0xc8] sm:$0xf]
        %v5925 = vld [vmem:[%s5885 + $0xd0] sm:$0x8]
        %v5926 = vld [vmem:[%s5885 + $0xd4] sm:$0xf]
        %v5927 = vld [vmem:[%s5885 + $0xd8] sm:$0xf]
        %v5928 = vld [vmem:[%s5885 + $0xe0] sm:$0x8]
        %v5929 = vld [vmem:[%s5885 + $0xe4] sm:$0xf]
        %v5930 = vld [vmem:[%s5885 + $0xe8] sm:$0xf]
        %v5931 = vld [vmem:[%s5885 + $0xf0] sm:$0x8]
        %v5932 = vld [vmem:[%s5885 + $0xf4] sm:$0xf]
        %v5933 = vld [vmem:[%s5885 + $0xf8] sm:$0xf]
        %v5935 = vshrl.u32 %v5886, 16
        %v5937 = vrot.slane %v5935, 7
        %v5938 = vrot.slane %v5937, 4
        %v5940 = vshrl.u32 %v5887, 16
        %v5942 = vrot.slane %v5940, 7
        %v5943 = vshll.u32 %v5887, 16
        %v5945 = vor.u32 %v5942, %v5943
        %v5946 = vsel %vm2430, %v5938, %v5945
        %v5947 = vrot.slane %v5942, 4
        %v5949 = vshrl.u32 %v5888, 16
        %v5951 = vrot.slane %v5949, 7
        %v5952 = vshll.u32 %v5888, 16
        %v5954 = vor.u32 %v5951, %v5952
        %v5955 = vsel %vm2430, %v5947, %v5954
        %v5957 = vshrl.u32 %v5889, 16
        %v5959 = vrot.slane %v5957, 7
        %v5960 = vrot.slane %v5959, 4
        %v5962 = vshrl.u32 %v5890, 16
        %v5964 = vrot.slane %v5962, 7
        %v5965 = vshll.u32 %v5890, 16
        %v5967 = vor.u32 %v5964, %v5965
        %v5968 = vsel %vm2430, %v5960, %v5967
        %v5969 = vrot.slane %v5964, 4
        %v5971 = vshrl.u32 %v5891, 16
        %v5973 = vrot.slane %v5971, 7
        %v5974 = vshll.u32 %v5891, 16
        %v5976 = vor.u32 %v5973, %v5974
        %v5977 = vsel %vm2430, %v5969, %v5976
        %v5979 = vshrl.u32 %v5892, 16
        %v5981 = vrot.slane %v5979, 7
        %v5982 = vrot.slane %v5981, 4
        %v5984 = vshrl.u32 %v5893, 16
        %v5986 = vrot.slane %v5984, 7
        %v5987 = vshll.u32 %v5893, 16
        %v5989 = vor.u32 %v5986, %v5987
        %v5990 = vsel %vm2430, %v5982, %v5989
        %v5991 = vrot.slane %v5986, 4
        %v5993 = vshrl.u32 %v5894, 16
        %v5995 = vrot.slane %v5993, 7
        %v5996 = vshll.u32 %v5894, 16
        %v5998 = vor.u32 %v5995, %v5996
        %v5999 = vsel %vm2430, %v5991, %v5998
        %v6001 = vshrl.u32 %v5895, 16
        %v6003 = vrot.slane %v6001, 7
        %v6004 = vrot.slane %v6003, 4
        %v6006 = vshrl.u32 %v5896, 16
        %v6008 = vrot.slane %v6006, 7
        %v6009 = vshll.u32 %v5896, 16
        %v6011 = vor.u32 %v6008, %v6009
        %v6012 = vsel %vm2430, %v6004, %v6011
        %v6013 = vrot.slane %v6008, 4
        %v6015 = vshrl.u32 %v5897, 16
        %v6017 = vrot.slane %v6015, 7
        %v6018 = vshll.u32 %v5897, 16
        %v6020 = vor.u32 %v6017, %v6018
        %v6021 = vsel %vm2430, %v6013, %v6020
        %v6023 = vshrl.u32 %v5898, 16
        %v6025 = vrot.slane %v6023, 7
        %v6026 = vrot.slane %v6025, 4
        %v6028 = vshrl.u32 %v5899, 16
        %v6030 = vrot.slane %v6028, 7
        %v6031 = vshll.u32 %v5899, 16
        %v6033 = vor.u32 %v6030, %v6031
        %v6034 = vsel %vm2430, %v6026, %v6033
        %v6035 = vrot.slane %v6030, 4
        %v6037 = vshrl.u32 %v5900, 16
        %v6039 = vrot.slane %v6037, 7
        %v6040 = vshll.u32 %v5900, 16
        %v6042 = vor.u32 %v6039, %v6040
        %v6043 = vsel %vm2430, %v6035, %v6042
        %v6045 = vshrl.u32 %v5901, 16
        %v6047 = vrot.slane %v6045, 7
        %v6048 = vrot.slane %v6047, 4
        %v6050 = vshrl.u32 %v5902, 16
        %v6052 = vrot.slane %v6050, 7
        %v6053 = vshll.u32 %v5902, 16
        %v6055 = vor.u32 %v6052, %v6053
        %v6056 = vsel %vm2430, %v6048, %v6055
        %v6057 = vrot.slane %v6052, 4
        %v6059 = vshrl.u32 %v5903, 16
        %v6061 = vrot.slane %v6059, 7
        %v6062 = vshll.u32 %v5903, 16
        %v6064 = vor.u32 %v6061, %v6062
        %v6065 = vsel %vm2430, %v6057, %v6064
        %v6067 = vshrl.u32 %v5904, 16
        %v6069 = vrot.slane %v6067, 7
        %v6070 = vrot.slane %v6069, 4
        %v6072 = vshrl.u32 %v5905, 16
        %v6074 = vrot.slane %v6072, 7
        %v6075 = vshll.u32 %v5905, 16
        %v6077 = vor.u32 %v6074, %v6075
        %v6078 = vsel %vm2430, %v6070, %v6077
        %v6079 = vrot.slane %v6074, 4
        %v6081 = vshrl.u32 %v5906, 16
        %v6083 = vrot.slane %v6081, 7
        %v6084 = vshll.u32 %v5906, 16
        %v6086 = vor.u32 %v6083, %v6084
        %v6087 = vsel %vm2430, %v6079, %v6086
        %v6089 = vshrl.u32 %v5907, 16
        %v6091 = vrot.slane %v6089, 7
        %v6092 = vrot.slane %v6091, 4
        %v6094 = vshrl.u32 %v5908, 16
        %v6096 = vrot.slane %v6094, 7
        %v6097 = vshll.u32 %v5908, 16
        %v6099 = vor.u32 %v6096, %v6097
        %v6100 = vsel %vm2430, %v6092, %v6099
        %v6101 = vrot.slane %v6096, 4
        %v6103 = vshrl.u32 %v5909, 16
        %v6105 = vrot.slane %v6103, 7
        %v6106 = vshll.u32 %v5909, 16
        %v6108 = vor.u32 %v6105, %v6106
        %v6109 = vsel %vm2430, %v6101, %v6108
        %v6111 = vshrl.u32 %v5910, 16
        %v6113 = vrot.slane %v6111, 7
        %v6114 = vrot.slane %v6113, 4
        %v6116 = vshrl.u32 %v5911, 16
        %v6118 = vrot.slane %v6116, 7
        %v6119 = vshll.u32 %v5911, 16
        %v6121 = vor.u32 %v6118, %v6119
        %v6122 = vsel %vm2430, %v6114, %v6121
        %v6123 = vrot.slane %v6118, 4
        %v6125 = vshrl.u32 %v5912, 16
        %v6127 = vrot.slane %v6125, 7
        %v6128 = vshll.u32 %v5912, 16
        %v6130 = vor.u32 %v6127, %v6128
        %v6131 = vsel %vm2430, %v6123, %v6130
        %v6133 = vshrl.u32 %v5913, 16
        %v6135 = vrot.slane %v6133, 7
        %v6136 = vrot.slane %v6135, 4
        %v6138 = vshrl.u32 %v5914, 16
        %v6140 = vrot.slane %v6138, 7
        %v6141 = vshll.u32 %v5914, 16
        %v6143 = vor.u32 %v6140, %v6141
        %v6144 = vsel %vm2430, %v6136, %v6143
        %v6145 = vrot.slane %v6140, 4
        %v6147 = vshrl.u32 %v5915, 16
        %v6149 = vrot.slane %v6147, 7
        %v6150 = vshll.u32 %v5915, 16
        %v6152 = vor.u32 %v6149, %v6150
        %v6153 = vsel %vm2430, %v6145, %v6152
        %v6155 = vshrl.u32 %v5916, 16
        %v6157 = vrot.slane %v6155, 7
        %v6158 = vrot.slane %v6157, 4
        %v6160 = vshrl.u32 %v5917, 16
        %v6162 = vrot.slane %v6160, 7
        %v6163 = vshll.u32 %v5917, 16
        %v6165 = vor.u32 %v6162, %v6163
        %v6166 = vsel %vm2430, %v6158, %v6165
        %v6167 = vrot.slane %v6162, 4
        %v6169 = vshrl.u32 %v5918, 16
        %v6171 = vrot.slane %v6169, 7
        %v6172 = vshll.u32 %v5918, 16
        %v6174 = vor.u32 %v6171, %v6172
        %v6175 = vsel %vm2430, %v6167, %v6174
        %v6177 = vshrl.u32 %v5919, 16
        %v6179 = vrot.slane %v6177, 7
        %v6180 = vrot.slane %v6179, 4
        %v6182 = vshrl.u32 %v5920, 16
        %v6184 = vrot.slane %v6182, 7
        %v6185 = vshll.u32 %v5920, 16
        %v6187 = vor.u32 %v6184, %v6185
        %v6188 = vsel %vm2430, %v6180, %v6187
        %v6189 = vrot.slane %v6184, 4
        %v6191 = vshrl.u32 %v5921, 16
        %v6193 = vrot.slane %v6191, 7
        %v6194 = vshll.u32 %v5921, 16
        %v6196 = vor.u32 %v6193, %v6194
        %v6197 = vsel %vm2430, %v6189, %v6196
        %v6199 = vshrl.u32 %v5922, 16
        %v6201 = vrot.slane %v6199, 7
        %v6202 = vrot.slane %v6201, 4
        %v6204 = vshrl.u32 %v5923, 16
        %v6206 = vrot.slane %v6204, 7
        %v6207 = vshll.u32 %v5923, 16
        %v6209 = vor.u32 %v6206, %v6207
        %v6210 = vsel %vm2430, %v6202, %v6209
        %v6211 = vrot.slane %v6206, 4
        %v6213 = vshrl.u32 %v5924, 16
        %v6215 = vrot.slane %v6213, 7
        %v6216 = vshll.u32 %v5924, 16
        %v6218 = vor.u32 %v6215, %v6216
        %v6219 = vsel %vm2430, %v6211, %v6218
        %v6221 = vshrl.u32 %v5925, 16
        %v6223 = vrot.slane %v6221, 7
        %v6224 = vrot.slane %v6223, 4
        %v6226 = vshrl.u32 %v5926, 16
        %v6228 = vrot.slane %v6226, 7
        %v6229 = vshll.u32 %v5926, 16
        %v6231 = vor.u32 %v6228, %v6229
        %v6232 = vsel %vm2430, %v6224, %v6231
        %v6233 = vrot.slane %v6228, 4
        %v6235 = vshrl.u32 %v5927, 16
        %v6237 = vrot.slane %v6235, 7
        %v6238 = vshll.u32 %v5927, 16
        %v6240 = vor.u32 %v6237, %v6238
        %v6241 = vsel %vm2430, %v6233, %v6240
        %v6243 = vshrl.u32 %v5928, 16
        %v6245 = vrot.slane %v6243, 7
        %v6246 = vrot.slane %v6245, 4
        %v6248 = vshrl.u32 %v5929, 16
        %v6250 = vrot.slane %v6248, 7
        %v6251 = vshll.u32 %v5929, 16
        %v6253 = vor.u32 %v6250, %v6251
        %v6254 = vsel %vm2430, %v6246, %v6253
        %v6255 = vrot.slane %v6250, 4
        %v6257 = vshrl.u32 %v5930, 16
        %v6259 = vrot.slane %v6257, 7
        %v6260 = vshll.u32 %v5930, 16
        %v6262 = vor.u32 %v6259, %v6260
        %v6263 = vsel %vm2430, %v6255, %v6262
        %v6265 = vshrl.u32 %v5931, 16
        %v6267 = vrot.slane %v6265, 7
        %v6268 = vrot.slane %v6267, 4
        %v6270 = vshrl.u32 %v5932, 16
        %v6272 = vrot.slane %v6270, 7
        %v6273 = vshll.u32 %v5932, 16
        %v6275 = vor.u32 %v6272, %v6273
        %v6276 = vsel %vm2430, %v6268, %v6275
        %v6277 = vrot.slane %v6272, 4
        %v6279 = vshrl.u32 %v5933, 16
        %v6281 = vrot.slane %v6279, 7
        %v6282 = vshll.u32 %v5933, 16
        %v6284 = vor.u32 %v6281, %v6282
        %v6285 = vsel %vm2430, %v6277, %v6284
        %s6286 = scalar_lea.vmem %s3, 96
        %v6287 = vld [vmem:[%s6286] sm:$0xf]
        %v6288 = vld [vmem:[%s6286 + $0x4] sm:$0xf]
        %v6289 = vld [vmem:[%s6286 + $0x8] sm:$0xf]
        %v6290 = vld [vmem:[%s6286 + $0xc] sm:$0xf]
        %v6291 = vunpack.c.l.b16 %v5946
        %v6292 = vunpack.c.l.b16 %v5955
        %v6293 = vunpack.c.l.b16 %v5968
        %v6294 = vunpack.c.l.b16 %v5977
        %v6295 = vunpack.c.l.b16 %v5990
        %v6296 = vunpack.c.l.b16 %v5999
        %v6297 = vunpack.c.l.b16 %v6012
        %v6298 = vunpack.c.l.b16 %v6021
        %v6299 = vunpack.c.l.b16 %v6034
        %v6300 = vunpack.c.l.b16 %v6043
        %v6301 = vunpack.c.l.b16 %v6056
        %v6302 = vunpack.c.l.b16 %v6065
        %v6303 = vunpack.c.l.b16 %v6078
        %v6304 = vunpack.c.l.b16 %v6087
        %v6305 = vunpack.c.l.b16 %v6100
        %v6306 = vunpack.c.l.b16 %v6109
        %v6307 = vunpack.c.l.b16 %v6122
        %v6308 = vunpack.c.l.b16 %v6131
        %v6309 = vunpack.c.l.b16 %v6144
        %v6310 = vunpack.c.l.b16 %v6153
        %v6311 = vunpack.c.l.b16 %v6166
        %v6312 = vunpack.c.l.b16 %v6175
        %v6313 = vunpack.c.l.b16 %v6188
        %v6314 = vunpack.c.l.b16 %v6197
        %v6315 = vunpack.c.l.b16 %v6210
        %v6316 = vunpack.c.l.b16 %v6219
        %v6317 = vunpack.c.l.b16 %v6232
        %v6318 = vunpack.c.l.b16 %v6241
        %v6319 = vunpack.c.l.b16 %v6254
        %v6320 = vunpack.c.l.b16 %v6263
        %v6321 = vunpack.c.l.b16 %v6276
        %v6322 = vunpack.c.l.b16 %v6285
        %v6323 = vpack.c.b16 %v6292, %v6291
        %v6324 = vpack.c.b16 %v6294, %v6293
        %v6325 = vpack.c.b16 %v6296, %v6295
        %v6326 = vpack.c.b16 %v6298, %v6297
        %v6327 = vpack.c.b16 %v6300, %v6299
        %v6328 = vpack.c.b16 %v6302, %v6301
        %v6329 = vpack.c.b16 %v6304, %v6303
        %v6330 = vpack.c.b16 %v6306, %v6305
        %v6331 = vpack.c.b16 %v6308, %v6307
        %v6332 = vpack.c.b16 %v6310, %v6309
        %v6333 = vpack.c.b16 %v6312, %v6311
        %v6334 = vpack.c.b16 %v6314, %v6313
        %v6335 = vpack.c.b16 %v6316, %v6315
        %v6336 = vpack.c.b16 %v6318, %v6317
        %v6337 = vpack.c.b16 %v6320, %v6319
        %v6338 = vpack.c.b16 %v6322, %v6321
        %v6343 = vunpack.c.l.b16 %v6287
        %v6344 = vunpack.c.l.b16 %v6288
        %v6345 = vunpack.c.l.b16 %v6289
        %v6346 = vunpack.c.l.b16 %v6290
        %v6347 = vpack.c.b16 %v6344, %v6343
        %v6348 = vpack.c.b16 %v6346, %v6345
        %v6352 = vsel %vm1994, %v6323, 0
        %v6355 = vsel %vm1994, %v6324, 0
        %v6358 = vsel %vm1994, %v6325, 0
        %v6361 = vsel %vm1994, %v6326, 0
        %v6364 = vsel %vm1994, %v6327, 0
        %v6367 = vsel %vm1994, %v6328, 0
        %v6370 = vsel %vm1994, %v6329, 0
        %v6373 = vsel %vm1994, %v6330, 0
        %v6376 = vsel %vm1994, %v6331, 0
        %v6379 = vsel %vm1994, %v6332, 0
        %v6382 = vsel %vm1994, %v6333, 0
        %v6385 = vsel %vm1994, %v6334, 0
        %v6388 = vsel %vm1994, %v6335, 0
        %v6391 = vsel %vm1994, %v6336, 0
        %v6394 = vsel %vm1994, %v6337, 0
        %v6397 = vsel %vm1994, %v6338, 0
        %6399 = vmatprep.subr.bf16.mxu0 0
        %6400 = vmatpush1.bf16.msra.mxu0 0
        %6401 = vmatprep.subr.bf16.mxu0 0
        %6402 = vmatpush1.bf16.msra.mxu0 0
        %6403 = vmatprep.subr.bf16.mxu0 0
        %6404 = vmatpush1.bf16.msra.mxu0 0
        %6405 = vmatprep.subr.bf16.mxu0 0
        %6406 = vmatpush1.bf16.msra.mxu0 0
        %6407 = vmatprep.subr.bf16.mxu0 0
        %6408 = vmatpush1.bf16.msra.mxu0 0
        %6409 = vmatprep.subr.bf16.mxu0 0
        %6410 = vmatpush1.bf16.msra.mxu0 0
        %6411 = vmatprep.subr.bf16.mxu0 0
        %6412 = vmatpush1.bf16.msra.mxu0 %v6348
        %6413 = vmatprep.subr.bf16.mxu0 0
        %6414 = vmatpush1.bf16.msra.mxu0 %v6347
        %6415 = vmatprep.subr.bf16.mxu0 0
        %6416 = vmatpush2.bf16.msra.mxu0 0
        %6417 = vmatprep.subr.bf16.mxu0 0
        %6418 = vmatpush2.bf16.msra.mxu0 0
        %6419 = vmatprep.subr.bf16.mxu0 0
        %6420 = vmatpush2.bf16.msra.mxu0 0
        %6421 = vmatprep.subr.bf16.mxu0 0
        %6422 = vmatpush2.bf16.msra.mxu0 0
        %6423 = vmatprep.subr.bf16.mxu0 0
        %6424 = vmatpush2.bf16.msra.mxu0 0
        %6425 = vmatprep.subr.bf16.mxu0 0
        %6426 = vmatpush2.bf16.msra.mxu0 0
        %6427 = vmatprep.subr.bf16.mxu0 0
        %6428 = vmatpush2.bf16.msra.mxu0 0
        %6429 = vmatprep.subr.bf16.mxu0 0
        %6430 = vmatpush2.bf16.msra.mxu0 0
        %6431 = vmatprep.mubr.bf16.mxu0 0
        %6432 = vmatmul.mubr.bf16.gmra.mxu0 %v6352
        %v6433 = vpop.f32.mrf.mxu0
        %v6434 = vadd.f32 0.0, %v6433
        %v6435 = vpop.f32.mrf.mxu0
        %v6436 = vpop.f32.mrf.mxu0
        %v6437 = vadd.f32 0.0, %v6436
        %v6438 = vpop.f32.mrf.mxu0
        %6439 = vmatprep.mubr.bf16.mxu0 0
        %6440 = vmatmul.mubr.bf16.gmra.mxu0 %v6355
        %v6441 = vpop.f32.mrf.mxu0
        %v6442 = vadd.f32 0.0, %v6441
        %v6443 = vpop.f32.mrf.mxu0
        %v6444 = vpop.f32.mrf.mxu0
        %v6445 = vadd.f32 0.0, %v6444
        %v6446 = vpop.f32.mrf.mxu0
        %6447 = vmatprep.mubr.bf16.mxu0 0
        %6448 = vmatmul.mubr.bf16.gmra.mxu0 %v6358
        %v6449 = vpop.f32.mrf.mxu0
        %v6450 = vadd.f32 0.0, %v6449
        %v6451 = vpop.f32.mrf.mxu0
        %v6452 = vpop.f32.mrf.mxu0
        %v6453 = vadd.f32 0.0, %v6452
        %v6454 = vpop.f32.mrf.mxu0
        %6455 = vmatprep.mubr.bf16.mxu0 0
        %6456 = vmatmul.mubr.bf16.gmra.mxu0 %v6361
        %v6457 = vpop.f32.mrf.mxu0
        %v6458 = vadd.f32 0.0, %v6457
        %v6459 = vpop.f32.mrf.mxu0
        %v6460 = vpop.f32.mrf.mxu0
        %v6461 = vadd.f32 0.0, %v6460
        %v6462 = vpop.f32.mrf.mxu0
        %6463 = vmatprep.mubr.bf16.mxu0 0
        %6464 = vmatmul.mubr.bf16.gmra.mxu0 %v6364
        %v6465 = vpop.f32.mrf.mxu0
        %v6466 = vadd.f32 0.0, %v6465
        %v6467 = vpop.f32.mrf.mxu0
        %v6468 = vpop.f32.mrf.mxu0
        %v6469 = vadd.f32 0.0, %v6468
        %v6470 = vpop.f32.mrf.mxu0
        %6471 = vmatprep.mubr.bf16.mxu0 0
        %6472 = vmatmul.mubr.bf16.gmra.mxu0 %v6367
        %v6473 = vpop.f32.mrf.mxu0
        %v6474 = vadd.f32 0.0, %v6473
        %v6475 = vpop.f32.mrf.mxu0
        %v6476 = vpop.f32.mrf.mxu0
        %v6477 = vadd.f32 0.0, %v6476
        %v6478 = vpop.f32.mrf.mxu0
        %6479 = vmatprep.mubr.bf16.mxu0 0
        %6480 = vmatmul.mubr.bf16.gmra.mxu0 %v6370
        %v6481 = vpop.f32.mrf.mxu0
        %v6482 = vadd.f32 0.0, %v6481
        %v6483 = vpop.f32.mrf.mxu0
        %v6484 = vpop.f32.mrf.mxu0
        %v6485 = vadd.f32 0.0, %v6484
        %v6486 = vpop.f32.mrf.mxu0
        %6487 = vmatprep.mubr.bf16.mxu0 0
        %6488 = vmatmul.mubr.bf16.gmra.mxu0 %v6373
        %v6489 = vpop.f32.mrf.mxu0
        %v6490 = vadd.f32 0.0, %v6489
        %v6491 = vpop.f32.mrf.mxu0
        %v6492 = vpop.f32.mrf.mxu0
        %v6493 = vadd.f32 0.0, %v6492
        %v6494 = vpop.f32.mrf.mxu0
        %6495 = vmatprep.mubr.bf16.mxu0 0
        %6496 = vmatmul.mubr.bf16.gmra.mxu0 %v6376
        %v6497 = vpop.f32.mrf.mxu0
        %v6498 = vadd.f32 0.0, %v6497
        %v6499 = vpop.f32.mrf.mxu0
        %v6500 = vpop.f32.mrf.mxu0
        %v6501 = vadd.f32 0.0, %v6500
        %v6502 = vpop.f32.mrf.mxu0
        %6503 = vmatprep.mubr.bf16.mxu0 0
        %6504 = vmatmul.mubr.bf16.gmra.mxu0 %v6379
        %v6505 = vpop.f32.mrf.mxu0
        %v6506 = vadd.f32 0.0, %v6505
        %v6507 = vpop.f32.mrf.mxu0
        %v6508 = vpop.f32.mrf.mxu0
        %v6509 = vadd.f32 0.0, %v6508
        %v6510 = vpop.f32.mrf.mxu0
        %6511 = vmatprep.mubr.bf16.mxu0 0
        %6512 = vmatmul.mubr.bf16.gmra.mxu0 %v6382
        %v6513 = vpop.f32.mrf.mxu0
        %v6514 = vadd.f32 0.0, %v6513
        %v6515 = vpop.f32.mrf.mxu0
        %v6516 = vpop.f32.mrf.mxu0
        %v6517 = vadd.f32 0.0, %v6516
        %v6518 = vpop.f32.mrf.mxu0
        %6519 = vmatprep.mubr.bf16.mxu0 0
        %6520 = vmatmul.mubr.bf16.gmra.mxu0 %v6385
        %v6521 = vpop.f32.mrf.mxu0
        %v6522 = vadd.f32 0.0, %v6521
        %v6523 = vpop.f32.mrf.mxu0
        %v6524 = vpop.f32.mrf.mxu0
        %v6525 = vadd.f32 0.0, %v6524
        %v6526 = vpop.f32.mrf.mxu0
        %6527 = vmatprep.mubr.bf16.mxu0 0
        %6528 = vmatmul.mubr.bf16.gmra.mxu0 %v6388
        %v6529 = vpop.f32.mrf.mxu0
        %v6530 = vadd.f32 0.0, %v6529
        %v6531 = vpop.f32.mrf.mxu0
        %v6532 = vpop.f32.mrf.mxu0
        %v6533 = vadd.f32 0.0, %v6532
        %v6534 = vpop.f32.mrf.mxu0
        %6535 = vmatprep.mubr.bf16.mxu0 0
        %6536 = vmatmul.mubr.bf16.gmra.mxu0 %v6391
        %v6537 = vpop.f32.mrf.mxu0
        %v6538 = vadd.f32 0.0, %v6537
        %v6539 = vpop.f32.mrf.mxu0
        %v6540 = vpop.f32.mrf.mxu0
        %v6541 = vadd.f32 0.0, %v6540
        %v6542 = vpop.f32.mrf.mxu0
        %6543 = vmatprep.mubr.bf16.mxu0 0
        %6544 = vmatmul.mubr.bf16.gmra.mxu0 %v6394
        %v6545 = vpop.f32.mrf.mxu0
        %v6546 = vadd.f32 0.0, %v6545
        %v6547 = vpop.f32.mrf.mxu0
        %v6548 = vpop.f32.mrf.mxu0
        %v6549 = vadd.f32 0.0, %v6548
        %v6550 = vpop.f32.mrf.mxu0
        %6551 = vmatprep.mubr.bf16.mxu0 0
        %6552 = vmatmul.mubr.bf16.gmra.mxu0 %v6397
        %v6553 = vpop.f32.mrf.mxu0
        %v6554 = vadd.f32 0.0, %v6553
        %v6555 = vpop.f32.mrf.mxu0
        %v6556 = vpop.f32.mrf.mxu0
        %v6557 = vadd.f32 0.0, %v6556
        %v6558 = vpop.f32.mrf.mxu0
        %6559 = vdwg.mxu0
        %v6560 = vadd.f32 %v5853, %v6434
        %v6561 = vadd.f32 %v5854, %v6437
        %v6562 = vadd.f32 %v5855, %v6442
        %v6563 = vadd.f32 %v5856, %v6445
        %v6564 = vadd.f32 %v5857, %v6450
        %v6565 = vadd.f32 %v5858, %v6453
        %v6566 = vadd.f32 %v5859, %v6458
        %v6567 = vadd.f32 %v5860, %v6461
        %v6568 = vadd.f32 %v5861, %v6466
        %v6569 = vadd.f32 %v5862, %v6469
        %v6570 = vadd.f32 %v5863, %v6474
        %v6571 = vadd.f32 %v5864, %v6477
        %v6572 = vadd.f32 %v5865, %v6482
        %v6573 = vadd.f32 %v5866, %v6485
        %v6574 = vadd.f32 %v5867, %v6490
        %v6575 = vadd.f32 %v5868, %v6493
        %v6576 = vadd.f32 %v5869, %v6498
        %v6577 = vadd.f32 %v5870, %v6501
        %v6578 = vadd.f32 %v5871, %v6506
        %v6579 = vadd.f32 %v5872, %v6509
        %v6580 = vadd.f32 %v5873, %v6514
        %v6581 = vadd.f32 %v5874, %v6517
        %v6582 = vadd.f32 %v5875, %v6522
        %v6583 = vadd.f32 %v5876, %v6525
        %v6584 = vadd.f32 %v5877, %v6530
        %v6585 = vadd.f32 %v5878, %v6533
        %v6586 = vadd.f32 %v5879, %v6538
        %v6587 = vadd.f32 %v5880, %v6541
        %v6588 = vadd.f32 %v5881, %v6546
        %v6589 = vadd.f32 %v5882, %v6549
        %v6590 = vadd.f32 %v5883, %v6554
        %v6591 = vadd.f32 %v5884, %v6557
        %s6592 = scalar_lea.vmem %s3, 112
        %v6593 = vld [vmem:[%s6592] sm:$0xf]
        %v6594 = vld [vmem:[%s6592 + $0x4] sm:$0xf]
        %v6595 = vld [vmem:[%s6592 + $0x8] sm:$0xf]
        %v6596 = vld [vmem:[%s6592 + $0xc] sm:$0xf]
        %v6629 = vunpack.c.l.b16 %v5887
        %v6630 = vunpack.c.l.b16 %v5888
        %v6631 = vunpack.c.l.b16 %v5890
        %v6632 = vunpack.c.l.b16 %v5891
        %v6633 = vunpack.c.l.b16 %v5893
        %v6634 = vunpack.c.l.b16 %v5894
        %v6635 = vunpack.c.l.b16 %v5896
        %v6636 = vunpack.c.l.b16 %v5897
        %v6637 = vunpack.c.l.b16 %v5899
        %v6638 = vunpack.c.l.b16 %v5900
        %v6639 = vunpack.c.l.b16 %v5902
        %v6640 = vunpack.c.l.b16 %v5903
        %v6641 = vunpack.c.l.b16 %v5905
        %v6642 = vunpack.c.l.b16 %v5906
        %v6643 = vunpack.c.l.b16 %v5908
        %v6644 = vunpack.c.l.b16 %v5909
        %v6645 = vunpack.c.l.b16 %v5911
        %v6646 = vunpack.c.l.b16 %v5912
        %v6647 = vunpack.c.l.b16 %v5914
        %v6648 = vunpack.c.l.b16 %v5915
        %v6649 = vunpack.c.l.b16 %v5917
        %v6650 = vunpack.c.l.b16 %v5918
        %v6651 = vunpack.c.l.b16 %v5920
        %v6652 = vunpack.c.l.b16 %v5921
        %v6653 = vunpack.c.l.b16 %v5923
        %v6654 = vunpack.c.l.b16 %v5924
        %v6655 = vunpack.c.l.b16 %v5926
        %v6656 = vunpack.c.l.b16 %v5927
        %v6657 = vunpack.c.l.b16 %v5929
        %v6658 = vunpack.c.l.b16 %v5930
        %v6659 = vunpack.c.l.b16 %v5932
        %v6660 = vunpack.c.l.b16 %v5933
        %v6661 = vpack.c.b16 %v6630, %v6629
        %v6662 = vpack.c.b16 %v6632, %v6631
        %v6663 = vpack.c.b16 %v6634, %v6633
        %v6664 = vpack.c.b16 %v6636, %v6635
        %v6665 = vpack.c.b16 %v6638, %v6637
        %v6666 = vpack.c.b16 %v6640, %v6639
        %v6667 = vpack.c.b16 %v6642, %v6641
        %v6668 = vpack.c.b16 %v6644, %v6643
        %v6669 = vpack.c.b16 %v6646, %v6645
        %v6670 = vpack.c.b16 %v6648, %v6647
        %v6671 = vpack.c.b16 %v6650, %v6649
        %v6672 = vpack.c.b16 %v6652, %v6651
        %v6673 = vpack.c.b16 %v6654, %v6653
        %v6674 = vpack.c.b16 %v6656, %v6655
        %v6675 = vpack.c.b16 %v6658, %v6657
        %v6676 = vpack.c.b16 %v6660, %v6659
        %v6681 = vunpack.c.l.b16 %v6593
        %v6682 = vunpack.c.l.b16 %v6594
        %v6683 = vunpack.c.l.b16 %v6595
        %v6684 = vunpack.c.l.b16 %v6596
        %v6685 = vpack.c.b16 %v6682, %v6681
        %v6686 = vpack.c.b16 %v6684, %v6683
        %v6690 = vsel %vm1994, %v6661, 0
        %v6693 = vsel %vm1994, %v6662, 0
        %v6696 = vsel %vm1994, %v6663, 0
        %v6699 = vsel %vm1994, %v6664, 0
        %v6702 = vsel %vm1994, %v6665, 0
        %v6705 = vsel %vm1994, %v6666, 0
        %v6708 = vsel %vm1994, %v6667, 0
        %v6711 = vsel %vm1994, %v6668, 0
        %v6714 = vsel %vm1994, %v6669, 0
        %v6717 = vsel %vm1994, %v6670, 0
        %v6720 = vsel %vm1994, %v6671, 0
        %v6723 = vsel %vm1994, %v6672, 0
        %v6726 = vsel %vm1994, %v6673, 0
        %v6729 = vsel %vm1994, %v6674, 0
        %v6732 = vsel %vm1994, %v6675, 0
        %v6735 = vsel %vm1994, %v6676, 0
        %6737 = vmatprep.subr.bf16.mxu0 0
        %6738 = vmatpush1.bf16.msra.mxu0 0
        %6739 = vmatprep.subr.bf16.mxu0 0
        %6740 = vmatpush1.bf16.msra.mxu0 0
        %6741 = vmatprep.subr.bf16.mxu0 0
        %6742 = vmatpush1.bf16.msra.mxu0 0
        %6743 = vmatprep.subr.bf16.mxu0 0
        %6744 = vmatpush1.bf16.msra.mxu0 0
        %6745 = vmatprep.subr.bf16.mxu0 0
        %6746 = vmatpush1.bf16.msra.mxu0 0
        %6747 = vmatprep.subr.bf16.mxu0 0
        %6748 = vmatpush1.bf16.msra.mxu0 0
        %6749 = vmatprep.subr.bf16.mxu0 0
        %6750 = vmatpush1.bf16.msra.mxu0 %v6686
        %6751 = vmatprep.subr.bf16.mxu0 0
        %6752 = vmatpush1.bf16.msra.mxu0 %v6685
        %6753 = vmatprep.subr.bf16.mxu0 0
        %6754 = vmatpush2.bf16.msra.mxu0 0
        %6755 = vmatprep.subr.bf16.mxu0 0
        %6756 = vmatpush2.bf16.msra.mxu0 0
        %6757 = vmatprep.subr.bf16.mxu0 0
        %6758 = vmatpush2.bf16.msra.mxu0 0
        %6759 = vmatprep.subr.bf16.mxu0 0
        %6760 = vmatpush2.bf16.msra.mxu0 0
        %6761 = vmatprep.subr.bf16.mxu0 0
        %6762 = vmatpush2.bf16.msra.mxu0 0
        %6763 = vmatprep.subr.bf16.mxu0 0
        %6764 = vmatpush2.bf16.msra.mxu0 0
        %6765 = vmatprep.subr.bf16.mxu0 0
        %6766 = vmatpush2.bf16.msra.mxu0 0
        %6767 = vmatprep.subr.bf16.mxu0 0
        %6768 = vmatpush2.bf16.msra.mxu0 0
        %6769 = vmatprep.mubr.bf16.mxu0 0
        %6770 = vmatmul.mubr.bf16.gmra.mxu0 %v6690
        %v6771 = vpop.f32.mrf.mxu0
        %v6772 = vadd.f32 0.0, %v6771
        %v6773 = vpop.f32.mrf.mxu0
        %v6774 = vpop.f32.mrf.mxu0
        %v6775 = vadd.f32 0.0, %v6774
        %v6776 = vpop.f32.mrf.mxu0
        %6777 = vmatprep.mubr.bf16.mxu0 0
        %6778 = vmatmul.mubr.bf16.gmra.mxu0 %v6693
        %v6779 = vpop.f32.mrf.mxu0
        %v6780 = vadd.f32 0.0, %v6779
        %v6781 = vpop.f32.mrf.mxu0
        %v6782 = vpop.f32.mrf.mxu0
        %v6783 = vadd.f32 0.0, %v6782
        %v6784 = vpop.f32.mrf.mxu0
        %6785 = vmatprep.mubr.bf16.mxu0 0
        %6786 = vmatmul.mubr.bf16.gmra.mxu0 %v6696
        %v6787 = vpop.f32.mrf.mxu0
        %v6788 = vadd.f32 0.0, %v6787
        %v6789 = vpop.f32.mrf.mxu0
        %v6790 = vpop.f32.mrf.mxu0
        %v6791 = vadd.f32 0.0, %v6790
        %v6792 = vpop.f32.mrf.mxu0
        %6793 = vmatprep.mubr.bf16.mxu0 0
        %6794 = vmatmul.mubr.bf16.gmra.mxu0 %v6699
        %v6795 = vpop.f32.mrf.mxu0
        %v6796 = vadd.f32 0.0, %v6795
        %v6797 = vpop.f32.mrf.mxu0
        %v6798 = vpop.f32.mrf.mxu0
        %v6799 = vadd.f32 0.0, %v6798
        %v6800 = vpop.f32.mrf.mxu0
        %6801 = vmatprep.mubr.bf16.mxu0 0
        %6802 = vmatmul.mubr.bf16.gmra.mxu0 %v6702
        %v6803 = vpop.f32.mrf.mxu0
        %v6804 = vadd.f32 0.0, %v6803
        %v6805 = vpop.f32.mrf.mxu0
        %v6806 = vpop.f32.mrf.mxu0
        %v6807 = vadd.f32 0.0, %v6806
        %v6808 = vpop.f32.mrf.mxu0
        %6809 = vmatprep.mubr.bf16.mxu0 0
        %6810 = vmatmul.mubr.bf16.gmra.mxu0 %v6705
        %v6811 = vpop.f32.mrf.mxu0
        %v6812 = vadd.f32 0.0, %v6811
        %v6813 = vpop.f32.mrf.mxu0
        %v6814 = vpop.f32.mrf.mxu0
        %v6815 = vadd.f32 0.0, %v6814
        %v6816 = vpop.f32.mrf.mxu0
        %6817 = vmatprep.mubr.bf16.mxu0 0
        %6818 = vmatmul.mubr.bf16.gmra.mxu0 %v6708
        %v6819 = vpop.f32.mrf.mxu0
        %v6820 = vadd.f32 0.0, %v6819
        %v6821 = vpop.f32.mrf.mxu0
        %v6822 = vpop.f32.mrf.mxu0
        %v6823 = vadd.f32 0.0, %v6822
        %v6824 = vpop.f32.mrf.mxu0
        %6825 = vmatprep.mubr.bf16.mxu0 0
        %6826 = vmatmul.mubr.bf16.gmra.mxu0 %v6711
        %v6827 = vpop.f32.mrf.mxu0
        %v6828 = vadd.f32 0.0, %v6827
        %v6829 = vpop.f32.mrf.mxu0
        %v6830 = vpop.f32.mrf.mxu0
        %v6831 = vadd.f32 0.0, %v6830
        %v6832 = vpop.f32.mrf.mxu0
        %6833 = vmatprep.mubr.bf16.mxu0 0
        %6834 = vmatmul.mubr.bf16.gmra.mxu0 %v6714
        %v6835 = vpop.f32.mrf.mxu0
        %v6836 = vadd.f32 0.0, %v6835
        %v6837 = vpop.f32.mrf.mxu0
        %v6838 = vpop.f32.mrf.mxu0
        %v6839 = vadd.f32 0.0, %v6838
        %v6840 = vpop.f32.mrf.mxu0
        %6841 = vmatprep.mubr.bf16.mxu0 0
        %6842 = vmatmul.mubr.bf16.gmra.mxu0 %v6717
        %v6843 = vpop.f32.mrf.mxu0
        %v6844 = vadd.f32 0.0, %v6843
        %v6845 = vpop.f32.mrf.mxu0
        %v6846 = vpop.f32.mrf.mxu0
        %v6847 = vadd.f32 0.0, %v6846
        %v6848 = vpop.f32.mrf.mxu0
        %6849 = vmatprep.mubr.bf16.mxu0 0
        %6850 = vmatmul.mubr.bf16.gmra.mxu0 %v6720
        %v6851 = vpop.f32.mrf.mxu0
        %v6852 = vadd.f32 0.0, %v6851
        %v6853 = vpop.f32.mrf.mxu0
        %v6854 = vpop.f32.mrf.mxu0
        %v6855 = vadd.f32 0.0, %v6854
        %v6856 = vpop.f32.mrf.mxu0
        %6857 = vmatprep.mubr.bf16.mxu0 0
        %6858 = vmatmul.mubr.bf16.gmra.mxu0 %v6723
        %v6859 = vpop.f32.mrf.mxu0
        %v6860 = vadd.f32 0.0, %v6859
        %v6861 = vpop.f32.mrf.mxu0
        %v6862 = vpop.f32.mrf.mxu0
        %v6863 = vadd.f32 0.0, %v6862
        %v6864 = vpop.f32.mrf.mxu0
        %6865 = vmatprep.mubr.bf16.mxu0 0
        %6866 = vmatmul.mubr.bf16.gmra.mxu0 %v6726
        %v6867 = vpop.f32.mrf.mxu0
        %v6868 = vadd.f32 0.0, %v6867
        %v6869 = vpop.f32.mrf.mxu0
        %v6870 = vpop.f32.mrf.mxu0
        %v6871 = vadd.f32 0.0, %v6870
        %v6872 = vpop.f32.mrf.mxu0
        %6873 = vmatprep.mubr.bf16.mxu0 0
        %6874 = vmatmul.mubr.bf16.gmra.mxu0 %v6729
        %v6875 = vpop.f32.mrf.mxu0
        %v6876 = vadd.f32 0.0, %v6875
        %v6877 = vpop.f32.mrf.mxu0
        %v6878 = vpop.f32.mrf.mxu0
        %v6879 = vadd.f32 0.0, %v6878
        %v6880 = vpop.f32.mrf.mxu0
        %6881 = vmatprep.mubr.bf16.mxu0 0
        %6882 = vmatmul.mubr.bf16.gmra.mxu0 %v6732
        %v6883 = vpop.f32.mrf.mxu0
        %v6884 = vadd.f32 0.0, %v6883
        %v6885 = vpop.f32.mrf.mxu0
        %v6886 = vpop.f32.mrf.mxu0
        %v6887 = vadd.f32 0.0, %v6886
        %v6888 = vpop.f32.mrf.mxu0
        %6889 = vmatprep.mubr.bf16.mxu0 0
        %6890 = vmatmul.mubr.bf16.gmra.mxu0 %v6735
        %v6891 = vpop.f32.mrf.mxu0
        %v6892 = vadd.f32 0.0, %v6891
        %v6893 = vpop.f32.mrf.mxu0
        %v6894 = vpop.f32.mrf.mxu0
        %v6895 = vadd.f32 0.0, %v6894
        %v6896 = vpop.f32.mrf.mxu0
        %6897 = vdwg.mxu0
        %v6898 = vadd.f32 %v6560, %v6772
        %v6899 = vadd.f32 %v6561, %v6775
        %v6900 = vadd.f32 %v6562, %v6780
        %v6901 = vadd.f32 %v6563, %v6783
        %v6902 = vadd.f32 %v6564, %v6788
        %v6903 = vadd.f32 %v6565, %v6791
        %v6904 = vadd.f32 %v6566, %v6796
        %v6905 = vadd.f32 %v6567, %v6799
        %v6906 = vadd.f32 %v6568, %v6804
        %v6907 = vadd.f32 %v6569, %v6807
        %v6908 = vadd.f32 %v6570, %v6812
        %v6909 = vadd.f32 %v6571, %v6815
        %v6910 = vadd.f32 %v6572, %v6820
        %v6911 = vadd.f32 %v6573, %v6823
        %v6912 = vadd.f32 %v6574, %v6828
        %v6913 = vadd.f32 %v6575, %v6831
        %v6914 = vadd.f32 %v6576, %v6836
        %v6915 = vadd.f32 %v6577, %v6839
        %v6916 = vadd.f32 %v6578, %v6844
        %v6917 = vadd.f32 %v6579, %v6847
        %v6918 = vadd.f32 %v6580, %v6852
        %v6919 = vadd.f32 %v6581, %v6855
        %v6920 = vadd.f32 %v6582, %v6860
        %v6921 = vadd.f32 %v6583, %v6863
        %v6922 = vadd.f32 %v6584, %v6868
        %v6923 = vadd.f32 %v6585, %v6871
        %v6924 = vadd.f32 %v6586, %v6876
        %v6925 = vadd.f32 %v6587, %v6879
        %v6926 = vadd.f32 %v6588, %v6884
        %v6927 = vadd.f32 %v6589, %v6887
        %v6928 = vadd.f32 %v6590, %v6892
        %v6929 = vadd.f32 %v6591, %v6895
        %v6930 = vld [vmem:[%s5885 + $0x4] sm:$0xf]
        %v6931 = vld [vmem:[%s5885 + $0x8] sm:$0xf]
        %v6932 = vld [vmem:[%s5885 + $0xc] sm:$0x1]
        %v6933 = vld [vmem:[%s5885 + $0x14] sm:$0xf]
        %v6934 = vld [vmem:[%s5885 + $0x18] sm:$0xf]
        %v6935 = vld [vmem:[%s5885 + $0x1c] sm:$0x1]
        %v6936 = vld [vmem:[%s5885 + $0x24] sm:$0xf]
        %v6937 = vld [vmem:[%s5885 + $0x28] sm:$0xf]
        %v6938 = vld [vmem:[%s5885 + $0x2c] sm:$0x1]
        %v6939 = vld [vmem:[%s5885 + $0x34] sm:$0xf]
        %v6940 = vld [vmem:[%s5885 + $0x38] sm:$0xf]
        %v6941 = vld [vmem:[%s5885 + $0x3c] sm:$0x1]
        %v6942 = vld [vmem:[%s5885 + $0x44] sm:$0xf]
        %v6943 = vld [vmem:[%s5885 + $0x48] sm:$0xf]
        %v6944 = vld [vmem:[%s5885 + $0x4c] sm:$0x1]
        %v6945 = vld [vmem:[%s5885 + $0x54] sm:$0xf]
        %v6946 = vld [vmem:[%s5885 + $0x58] sm:$0xf]
        %v6947 = vld [vmem:[%s5885 + $0x5c] sm:$0x1]
        %v6948 = vld [vmem:[%s5885 + $0x64] sm:$0xf]
        %v6949 = vld [vmem:[%s5885 + $0x68] sm:$0xf]
        %v6950 = vld [vmem:[%s5885 + $0x6c] sm:$0x1]
        %v6951 = vld [vmem:[%s5885 + $0x74] sm:$0xf]
        %v6952 = vld [vmem:[%s5885 + $0x78] sm:$0xf]
        %v6953 = vld [vmem:[%s5885 + $0x7c] sm:$0x1]
        %v6954 = vld [vmem:[%s5885 + $0x84] sm:$0xf]
        %v6955 = vld [vmem:[%s5885 + $0x88] sm:$0xf]
        %v6956 = vld [vmem:[%s5885 + $0x8c] sm:$0x1]
        %v6957 = vld [vmem:[%s5885 + $0x94] sm:$0xf]
        %v6958 = vld [vmem:[%s5885 + $0x98] sm:$0xf]
        %v6959 = vld [vmem:[%s5885 + $0x9c] sm:$0x1]
        %v6960 = vld [vmem:[%s5885 + $0xa4] sm:$0xf]
        %v6961 = vld [vmem:[%s5885 + $0xa8] sm:$0xf]
        %v6962 = vld [vmem:[%s5885 + $0xac] sm:$0x1]
        %v6963 = vld [vmem:[%s5885 + $0xb4] sm:$0xf]
        %v6964 = vld [vmem:[%s5885 + $0xb8] sm:$0xf]
        %v6965 = vld [vmem:[%s5885 + $0xbc] sm:$0x1]
        %v6966 = vld [vmem:[%s5885 + $0xc4] sm:$0xf]
        %v6967 = vld [vmem:[%s5885 + $0xc8] sm:$0xf]
        %v6968 = vld [vmem:[%s5885 + $0xcc] sm:$0x1]
        %v6969 = vld [vmem:[%s5885 + $0xd4] sm:$0xf]
        %v6970 = vld [vmem:[%s5885 + $0xd8] sm:$0xf]
        %v6971 = vld [vmem:[%s5885 + $0xdc] sm:$0x1]
        %v6972 = vld [vmem:[%s5885 + $0xe4] sm:$0xf]
        %v6973 = vld [vmem:[%s5885 + $0xe8] sm:$0xf]
        %v6974 = vld [vmem:[%s5885 + $0xec] sm:$0x1]
        %v6975 = vld [vmem:[%s5885 + $0xf4] sm:$0xf]
        %v6976 = vld [vmem:[%s5885 + $0xf8] sm:$0xf]
        %v6977 = vld [vmem:[%s5885 + $0xfc] sm:$0x1]
        %v6979 = vshrl.u32 %v6930, 16
        %v6981 = vrot.slane %v6979, 4
        %v6982 = vshll.u32 %v6930, 16
        %v6984 = vrot.slane %v6982, 5
        %v6985 = vor.u32 %v6981, %v6984
        %v6986 = vrot.slane %v6985, 4
        %v6988 = vshll.u32 %v6931, 16
        %v6990 = vrot.slane %v6988, 5
        %v6991 = vsel %vm3412, %v6986, %v6990
        %v6992 = vshrl.u32 %v6931, 16
        %v6994 = vrot.slane %v6992, 4
        %v6995 = vor.u32 %v6994, %v6990
        %v6996 = vrot.slane %v6995, 4
        %v6998 = vshll.u32 %v6932, 16
        %v7000 = vrot.slane %v6998, 5
        %v7001 = vsel %vm3412, %v6996, %v7000
        %v7003 = vshrl.u32 %v6933, 16
        %v7005 = vrot.slane %v7003, 4
        %v7006 = vshll.u32 %v6933, 16
        %v7008 = vrot.slane %v7006, 5
        %v7009 = vor.u32 %v7005, %v7008
        %v7010 = vrot.slane %v7009, 4
        %v7012 = vshll.u32 %v6934, 16
        %v7014 = vrot.slane %v7012, 5
        %v7015 = vsel %vm3412, %v7010, %v7014
        %v7016 = vshrl.u32 %v6934, 16
        %v7018 = vrot.slane %v7016, 4
        %v7019 = vor.u32 %v7018, %v7014
        %v7020 = vrot.slane %v7019, 4
        %v7022 = vshll.u32 %v6935, 16
        %v7024 = vrot.slane %v7022, 5
        %v7025 = vsel %vm3412, %v7020, %v7024
        %v7027 = vshrl.u32 %v6936, 16
        %v7029 = vrot.slane %v7027, 4
        %v7030 = vshll.u32 %v6936, 16
        %v7032 = vrot.slane %v7030, 5
        %v7033 = vor.u32 %v7029, %v7032
        %v7034 = vrot.slane %v7033, 4
        %v7036 = vshll.u32 %v6937, 16
        %v7038 = vrot.slane %v7036, 5
        %v7039 = vsel %vm3412, %v7034, %v7038
        %v7040 = vshrl.u32 %v6937, 16
        %v7042 = vrot.slane %v7040, 4
        %v7043 = vor.u32 %v7042, %v7038
        %v7044 = vrot.slane %v7043, 4
        %v7046 = vshll.u32 %v6938, 16
        %v7048 = vrot.slane %v7046, 5
        %v7049 = vsel %vm3412, %v7044, %v7048
        %v7051 = vshrl.u32 %v6939, 16
        %v7053 = vrot.slane %v7051, 4
        %v7054 = vshll.u32 %v6939, 16
        %v7056 = vrot.slane %v7054, 5
        %v7057 = vor.u32 %v7053, %v7056
        %v7058 = vrot.slane %v7057, 4
        %v7060 = vshll.u32 %v6940, 16
        %v7062 = vrot.slane %v7060, 5
        %v7063 = vsel %vm3412, %v7058, %v7062
        %v7064 = vshrl.u32 %v6940, 16
        %v7066 = vrot.slane %v7064, 4
        %v7067 = vor.u32 %v7066, %v7062
        %v7068 = vrot.slane %v7067, 4
        %v7070 = vshll.u32 %v6941, 16
        %v7072 = vrot.slane %v7070, 5
        %v7073 = vsel %vm3412, %v7068, %v7072
        %v7075 = vshrl.u32 %v6942, 16
        %v7077 = vrot.slane %v7075, 4
        %v7078 = vshll.u32 %v6942, 16
        %v7080 = vrot.slane %v7078, 5
        %v7081 = vor.u32 %v7077, %v7080
        %v7082 = vrot.slane %v7081, 4
        %v7084 = vshll.u32 %v6943, 16
        %v7086 = vrot.slane %v7084, 5
        %v7087 = vsel %vm3412, %v7082, %v7086
        %v7088 = vshrl.u32 %v6943, 16
        %v7090 = vrot.slane %v7088, 4
        %v7091 = vor.u32 %v7090, %v7086
        %v7092 = vrot.slane %v7091, 4
        %v7094 = vshll.u32 %v6944, 16
        %v7096 = vrot.slane %v7094, 5
        %v7097 = vsel %vm3412, %v7092, %v7096
        %v7099 = vshrl.u32 %v6945, 16
        %v7101 = vrot.slane %v7099, 4
        %v7102 = vshll.u32 %v6945, 16
        %v7104 = vrot.slane %v7102, 5
        %v7105 = vor.u32 %v7101, %v7104
        %v7106 = vrot.slane %v7105, 4
        %v7108 = vshll.u32 %v6946, 16
        %v7110 = vrot.slane %v7108, 5
        %v7111 = vsel %vm3412, %v7106, %v7110
        %v7112 = vshrl.u32 %v6946, 16
        %v7114 = vrot.slane %v7112, 4
        %v7115 = vor.u32 %v7114, %v7110
        %v7116 = vrot.slane %v7115, 4
        %v7118 = vshll.u32 %v6947, 16
        %v7120 = vrot.slane %v7118, 5
        %v7121 = vsel %vm3412, %v7116, %v7120
        %v7123 = vshrl.u32 %v6948, 16
        %v7125 = vrot.slane %v7123, 4
        %v7126 = vshll.u32 %v6948, 16
        %v7128 = vrot.slane %v7126, 5
        %v7129 = vor.u32 %v7125, %v7128
        %v7130 = vrot.slane %v7129, 4
        %v7132 = vshll.u32 %v6949, 16
        %v7134 = vrot.slane %v7132, 5
        %v7135 = vsel %vm3412, %v7130, %v7134
        %v7136 = vshrl.u32 %v6949, 16
        %v7138 = vrot.slane %v7136, 4
        %v7139 = vor.u32 %v7138, %v7134
        %v7140 = vrot.slane %v7139, 4
        %v7142 = vshll.u32 %v6950, 16
        %v7144 = vrot.slane %v7142, 5
        %v7145 = vsel %vm3412, %v7140, %v7144
        %v7147 = vshrl.u32 %v6951, 16
        %v7149 = vrot.slane %v7147, 4
        %v7150 = vshll.u32 %v6951, 16
        %v7152 = vrot.slane %v7150, 5
        %v7153 = vor.u32 %v7149, %v7152
        %v7154 = vrot.slane %v7153, 4
        %v7156 = vshll.u32 %v6952, 16
        %v7158 = vrot.slane %v7156, 5
        %v7159 = vsel %vm3412, %v7154, %v7158
        %v7160 = vshrl.u32 %v6952, 16
        %v7162 = vrot.slane %v7160, 4
        %v7163 = vor.u32 %v7162, %v7158
        %v7164 = vrot.slane %v7163, 4
        %v7166 = vshll.u32 %v6953, 16
        %v7168 = vrot.slane %v7166, 5
        %v7169 = vsel %vm3412, %v7164, %v7168
        %v7171 = vshrl.u32 %v6954, 16
        %v7173 = vrot.slane %v7171, 4
        %v7174 = vshll.u32 %v6954, 16
        %v7176 = vrot.slane %v7174, 5
        %v7177 = vor.u32 %v7173, %v7176
        %v7178 = vrot.slane %v7177, 4
        %v7180 = vshll.u32 %v6955, 16
        %v7182 = vrot.slane %v7180, 5
        %v7183 = vsel %vm3412, %v7178, %v7182
        %v7184 = vshrl.u32 %v6955, 16
        %v7186 = vrot.slane %v7184, 4
        %v7187 = vor.u32 %v7186, %v7182
        %v7188 = vrot.slane %v7187, 4
        %v7190 = vshll.u32 %v6956, 16
        %v7192 = vrot.slane %v7190, 5
        %v7193 = vsel %vm3412, %v7188, %v7192
        %v7195 = vshrl.u32 %v6957, 16
        %v7197 = vrot.slane %v7195, 4
        %v7198 = vshll.u32 %v6957, 16
        %v7200 = vrot.slane %v7198, 5
        %v7201 = vor.u32 %v7197, %v7200
        %v7202 = vrot.slane %v7201, 4
        %v7204 = vshll.u32 %v6958, 16
        %v7206 = vrot.slane %v7204, 5
        %v7207 = vsel %vm3412, %v7202, %v7206
        %v7208 = vshrl.u32 %v6958, 16
        %v7210 = vrot.slane %v7208, 4
        %v7211 = vor.u32 %v7210, %v7206
        %v7212 = vrot.slane %v7211, 4
        %v7214 = vshll.u32 %v6959, 16
        %v7216 = vrot.slane %v7214, 5
        %v7217 = vsel %vm3412, %v7212, %v7216
        %v7219 = vshrl.u32 %v6960, 16
        %v7221 = vrot.slane %v7219, 4
        %v7222 = vshll.u32 %v6960, 16
        %v7224 = vrot.slane %v7222, 5
        %v7225 = vor.u32 %v7221, %v7224
        %v7226 = vrot.slane %v7225, 4
        %v7228 = vshll.u32 %v6961, 16
        %v7230 = vrot.slane %v7228, 5
        %v7231 = vsel %vm3412, %v7226, %v7230
        %v7232 = vshrl.u32 %v6961, 16
        %v7234 = vrot.slane %v7232, 4
        %v7235 = vor.u32 %v7234, %v7230
        %v7236 = vrot.slane %v7235, 4
        %v7238 = vshll.u32 %v6962, 16
        %v7240 = vrot.slane %v7238, 5
        %v7241 = vsel %vm3412, %v7236, %v7240
        %v7243 = vshrl.u32 %v6963, 16
        %v7245 = vrot.slane %v7243, 4
        %v7246 = vshll.u32 %v6963, 16
        %v7248 = vrot.slane %v7246, 5
        %v7249 = vor.u32 %v7245, %v7248
        %v7250 = vrot.slane %v7249, 4
        %v7252 = vshll.u32 %v6964, 16
        %v7254 = vrot.slane %v7252, 5
        %v7255 = vsel %vm3412, %v7250, %v7254
        %v7256 = vshrl.u32 %v6964, 16
        %v7258 = vrot.slane %v7256, 4
        %v7259 = vor.u32 %v7258, %v7254
        %v7260 = vrot.slane %v7259, 4
        %v7262 = vshll.u32 %v6965, 16
        %v7264 = vrot.slane %v7262, 5
        %v7265 = vsel %vm3412, %v7260, %v7264
        %v7267 = vshrl.u32 %v6966, 16
        %v7269 = vrot.slane %v7267, 4
        %v7270 = vshll.u32 %v6966, 16
        %v7272 = vrot.slane %v7270, 5
        %v7273 = vor.u32 %v7269, %v7272
        %v7274 = vrot.slane %v7273, 4
        %v7276 = vshll.u32 %v6967, 16
        %v7278 = vrot.slane %v7276, 5
        %v7279 = vsel %vm3412, %v7274, %v7278
        %v7280 = vshrl.u32 %v6967, 16
        %v7282 = vrot.slane %v7280, 4
        %v7283 = vor.u32 %v7282, %v7278
        %v7284 = vrot.slane %v7283, 4
        %v7286 = vshll.u32 %v6968, 16
        %v7288 = vrot.slane %v7286, 5
        %v7289 = vsel %vm3412, %v7284, %v7288
        %v7291 = vshrl.u32 %v6969, 16
        %v7293 = vrot.slane %v7291, 4
        %v7294 = vshll.u32 %v6969, 16
        %v7296 = vrot.slane %v7294, 5
        %v7297 = vor.u32 %v7293, %v7296
        %v7298 = vrot.slane %v7297, 4
        %v7300 = vshll.u32 %v6970, 16
        %v7302 = vrot.slane %v7300, 5
        %v7303 = vsel %vm3412, %v7298, %v7302
        %v7304 = vshrl.u32 %v6970, 16
        %v7306 = vrot.slane %v7304, 4
        %v7307 = vor.u32 %v7306, %v7302
        %v7308 = vrot.slane %v7307, 4
        %v7310 = vshll.u32 %v6971, 16
        %v7312 = vrot.slane %v7310, 5
        %v7313 = vsel %vm3412, %v7308, %v7312
        %v7315 = vshrl.u32 %v6972, 16
        %v7317 = vrot.slane %v7315, 4
        %v7318 = vshll.u32 %v6972, 16
        %v7320 = vrot.slane %v7318, 5
        %v7321 = vor.u32 %v7317, %v7320
        %v7322 = vrot.slane %v7321, 4
        %v7324 = vshll.u32 %v6973, 16
        %v7326 = vrot.slane %v7324, 5
        %v7327 = vsel %vm3412, %v7322, %v7326
        %v7328 = vshrl.u32 %v6973, 16
        %v7330 = vrot.slane %v7328, 4
        %v7331 = vor.u32 %v7330, %v7326
        %v7332 = vrot.slane %v7331, 4
        %v7334 = vshll.u32 %v6974, 16
        %v7336 = vrot.slane %v7334, 5
        %v7337 = vsel %vm3412, %v7332, %v7336
        %v7339 = vshrl.u32 %v6975, 16
        %v7341 = vrot.slane %v7339, 4
        %v7342 = vshll.u32 %v6975, 16
        %v7344 = vrot.slane %v7342, 5
        %v7345 = vor.u32 %v7341, %v7344
        %v7346 = vrot.slane %v7345, 4
        %v7348 = vshll.u32 %v6976, 16
        %v7350 = vrot.slane %v7348, 5
        %v7351 = vsel %vm3412, %v7346, %v7350
        %v7352 = vshrl.u32 %v6976, 16
        %v7354 = vrot.slane %v7352, 4
        %v7355 = vor.u32 %v7354, %v7350
        %v7356 = vrot.slane %v7355, 4
        %v7358 = vshll.u32 %v6977, 16
        %v7360 = vrot.slane %v7358, 5
        %v7361 = vsel %vm3412, %v7356, %v7360
        %s7362 = scalar_lea.vmem %s3, 128
        %v7363 = vld [vmem:[%s7362] sm:$0xf]
        %v7364 = vld [vmem:[%s7362 + $0x4] sm:$0xf]
        %v7365 = vld [vmem:[%s7362 + $0x8] sm:$0xf]
        %v7366 = vld [vmem:[%s7362 + $0xc] sm:$0xf]
        %v7367 = vunpack.c.l.b16 %v6991
        %v7368 = vunpack.c.l.b16 %v7001
        %v7369 = vunpack.c.l.b16 %v7015
        %v7370 = vunpack.c.l.b16 %v7025
        %v7371 = vunpack.c.l.b16 %v7039
        %v7372 = vunpack.c.l.b16 %v7049
        %v7373 = vunpack.c.l.b16 %v7063
        %v7374 = vunpack.c.l.b16 %v7073
        %v7375 = vunpack.c.l.b16 %v7087
        %v7376 = vunpack.c.l.b16 %v7097
        %v7377 = vunpack.c.l.b16 %v7111
        %v7378 = vunpack.c.l.b16 %v7121
        %v7379 = vunpack.c.l.b16 %v7135
        %v7380 = vunpack.c.l.b16 %v7145
        %v7381 = vunpack.c.l.b16 %v7159
        %v7382 = vunpack.c.l.b16 %v7169
        %v7383 = vunpack.c.l.b16 %v7183
        %v7384 = vunpack.c.l.b16 %v7193
        %v7385 = vunpack.c.l.b16 %v7207
        %v7386 = vunpack.c.l.b16 %v7217
        %v7387 = vunpack.c.l.b16 %v7231
        %v7388 = vunpack.c.l.b16 %v7241
        %v7389 = vunpack.c.l.b16 %v7255
        %v7390 = vunpack.c.l.b16 %v7265
        %v7391 = vunpack.c.l.b16 %v7279
        %v7392 = vunpack.c.l.b16 %v7289
        %v7393 = vunpack.c.l.b16 %v7303
        %v7394 = vunpack.c.l.b16 %v7313
        %v7395 = vunpack.c.l.b16 %v7327
        %v7396 = vunpack.c.l.b16 %v7337
        %v7397 = vunpack.c.l.b16 %v7351
        %v7398 = vunpack.c.l.b16 %v7361
        %v7399 = vpack.c.b16 %v7368, %v7367
        %v7400 = vpack.c.b16 %v7370, %v7369
        %v7401 = vpack.c.b16 %v7372, %v7371
        %v7402 = vpack.c.b16 %v7374, %v7373
        %v7403 = vpack.c.b16 %v7376, %v7375
        %v7404 = vpack.c.b16 %v7378, %v7377
        %v7405 = vpack.c.b16 %v7380, %v7379
        %v7406 = vpack.c.b16 %v7382, %v7381
        %v7407 = vpack.c.b16 %v7384, %v7383
        %v7408 = vpack.c.b16 %v7386, %v7385
        %v7409 = vpack.c.b16 %v7388, %v7387
        %v7410 = vpack.c.b16 %v7390, %v7389
        %v7411 = vpack.c.b16 %v7392, %v7391
        %v7412 = vpack.c.b16 %v7394, %v7393
        %v7413 = vpack.c.b16 %v7396, %v7395
        %v7414 = vpack.c.b16 %v7398, %v7397
        %v7419 = vunpack.c.l.b16 %v7363
        %v7420 = vunpack.c.l.b16 %v7364
        %v7421 = vunpack.c.l.b16 %v7365
        %v7422 = vunpack.c.l.b16 %v7366
        %v7423 = vpack.c.b16 %v7420, %v7419
        %v7424 = vpack.c.b16 %v7422, %v7421
        %v7428 = vsel %vm1994, %v7399, 0
        %v7431 = vsel %vm1994, %v7400, 0
        %v7434 = vsel %vm1994, %v7401, 0
        %v7437 = vsel %vm1994, %v7402, 0
        %v7440 = vsel %vm1994, %v7403, 0
        %v7443 = vsel %vm1994, %v7404, 0
        %v7446 = vsel %vm1994, %v7405, 0
        %v7449 = vsel %vm1994, %v7406, 0
        %v7452 = vsel %vm1994, %v7407, 0
        %v7455 = vsel %vm1994, %v7408, 0
        %v7458 = vsel %vm1994, %v7409, 0
        %v7461 = vsel %vm1994, %v7410, 0
        %v7464 = vsel %vm1994, %v7411, 0
        %v7467 = vsel %vm1994, %v7412, 0
        %v7470 = vsel %vm1994, %v7413, 0
        %v7473 = vsel %vm1994, %v7414, 0
        %7475 = vmatprep.subr.bf16.mxu0 0
        %7476 = vmatpush1.bf16.msra.mxu0 0
        %7477 = vmatprep.subr.bf16.mxu0 0
        %7478 = vmatpush1.bf16.msra.mxu0 0
        %7479 = vmatprep.subr.bf16.mxu0 0
        %7480 = vmatpush1.bf16.msra.mxu0 0
        %7481 = vmatprep.subr.bf16.mxu0 0
        %7482 = vmatpush1.bf16.msra.mxu0 0
        %7483 = vmatprep.subr.bf16.mxu0 0
        %7484 = vmatpush1.bf16.msra.mxu0 0
        %7485 = vmatprep.subr.bf16.mxu0 0
        %7486 = vmatpush1.bf16.msra.mxu0 0
        %7487 = vmatprep.subr.bf16.mxu0 0
        %7488 = vmatpush1.bf16.msra.mxu0 %v7424
        %7489 = vmatprep.subr.bf16.mxu0 0
        %7490 = vmatpush1.bf16.msra.mxu0 %v7423
        %7491 = vmatprep.subr.bf16.mxu0 0
        %7492 = vmatpush2.bf16.msra.mxu0 0
        %7493 = vmatprep.subr.bf16.mxu0 0
        %7494 = vmatpush2.bf16.msra.mxu0 0
        %7495 = vmatprep.subr.bf16.mxu0 0
        %7496 = vmatpush2.bf16.msra.mxu0 0
        %7497 = vmatprep.subr.bf16.mxu0 0
        %7498 = vmatpush2.bf16.msra.mxu0 0
        %7499 = vmatprep.subr.bf16.mxu0 0
        %7500 = vmatpush2.bf16.msra.mxu0 0
        %7501 = vmatprep.subr.bf16.mxu0 0
        %7502 = vmatpush2.bf16.msra.mxu0 0
        %7503 = vmatprep.subr.bf16.mxu0 0
        %7504 = vmatpush2.bf16.msra.mxu0 0
        %7505 = vmatprep.subr.bf16.mxu0 0
        %7506 = vmatpush2.bf16.msra.mxu0 0
        %7507 = vmatprep.mubr.bf16.mxu0 0
        %7508 = vmatmul.mubr.bf16.gmra.mxu0 %v7428
        %v7509 = vpop.f32.mrf.mxu0
        %v7510 = vadd.f32 0.0, %v7509
        %v7511 = vpop.f32.mrf.mxu0
        %v7512 = vpop.f32.mrf.mxu0
        %v7513 = vadd.f32 0.0, %v7512
        %v7514 = vpop.f32.mrf.mxu0
        %7515 = vmatprep.mubr.bf16.mxu0 0
        %7516 = vmatmul.mubr.bf16.gmra.mxu0 %v7431
        %v7517 = vpop.f32.mrf.mxu0
        %v7518 = vadd.f32 0.0, %v7517
        %v7519 = vpop.f32.mrf.mxu0
        %v7520 = vpop.f32.mrf.mxu0
        %v7521 = vadd.f32 0.0, %v7520
        %v7522 = vpop.f32.mrf.mxu0
        %7523 = vmatprep.mubr.bf16.mxu0 0
        %7524 = vmatmul.mubr.bf16.gmra.mxu0 %v7434
        %v7525 = vpop.f32.mrf.mxu0
        %v7526 = vadd.f32 0.0, %v7525
        %v7527 = vpop.f32.mrf.mxu0
        %v7528 = vpop.f32.mrf.mxu0
        %v7529 = vadd.f32 0.0, %v7528
        %v7530 = vpop.f32.mrf.mxu0
        %7531 = vmatprep.mubr.bf16.mxu0 0
        %7532 = vmatmul.mubr.bf16.gmra.mxu0 %v7437
        %v7533 = vpop.f32.mrf.mxu0
        %v7534 = vadd.f32 0.0, %v7533
        %v7535 = vpop.f32.mrf.mxu0
        %v7536 = vpop.f32.mrf.mxu0
        %v7537 = vadd.f32 0.0, %v7536
        %v7538 = vpop.f32.mrf.mxu0
        %7539 = vmatprep.mubr.bf16.mxu0 0
        %7540 = vmatmul.mubr.bf16.gmra.mxu0 %v7440
        %v7541 = vpop.f32.mrf.mxu0
        %v7542 = vadd.f32 0.0, %v7541
        %v7543 = vpop.f32.mrf.mxu0
        %v7544 = vpop.f32.mrf.mxu0
        %v7545 = vadd.f32 0.0, %v7544
        %v7546 = vpop.f32.mrf.mxu0
        %7547 = vmatprep.mubr.bf16.mxu0 0
        %7548 = vmatmul.mubr.bf16.gmra.mxu0 %v7443
        %v7549 = vpop.f32.mrf.mxu0
        %v7550 = vadd.f32 0.0, %v7549
        %v7551 = vpop.f32.mrf.mxu0
        %v7552 = vpop.f32.mrf.mxu0
        %v7553 = vadd.f32 0.0, %v7552
        %v7554 = vpop.f32.mrf.mxu0
        %7555 = vmatprep.mubr.bf16.mxu0 0
        %7556 = vmatmul.mubr.bf16.gmra.mxu0 %v7446
        %v7557 = vpop.f32.mrf.mxu0
        %v7558 = vadd.f32 0.0, %v7557
        %v7559 = vpop.f32.mrf.mxu0
        %v7560 = vpop.f32.mrf.mxu0
        %v7561 = vadd.f32 0.0, %v7560
        %v7562 = vpop.f32.mrf.mxu0
        %7563 = vmatprep.mubr.bf16.mxu0 0
        %7564 = vmatmul.mubr.bf16.gmra.mxu0 %v7449
        %v7565 = vpop.f32.mrf.mxu0
        %v7566 = vadd.f32 0.0, %v7565
        %v7567 = vpop.f32.mrf.mxu0
        %v7568 = vpop.f32.mrf.mxu0
        %v7569 = vadd.f32 0.0, %v7568
        %v7570 = vpop.f32.mrf.mxu0
        %7571 = vmatprep.mubr.bf16.mxu0 0
        %7572 = vmatmul.mubr.bf16.gmra.mxu0 %v7452
        %v7573 = vpop.f32.mrf.mxu0
        %v7574 = vadd.f32 0.0, %v7573
        %v7575 = vpop.f32.mrf.mxu0
        %v7576 = vpop.f32.mrf.mxu0
        %v7577 = vadd.f32 0.0, %v7576
        %v7578 = vpop.f32.mrf.mxu0
        %7579 = vmatprep.mubr.bf16.mxu0 0
        %7580 = vmatmul.mubr.bf16.gmra.mxu0 %v7455
        %v7581 = vpop.f32.mrf.mxu0
        %v7582 = vadd.f32 0.0, %v7581
        %v7583 = vpop.f32.mrf.mxu0
        %v7584 = vpop.f32.mrf.mxu0
        %v7585 = vadd.f32 0.0, %v7584
        %v7586 = vpop.f32.mrf.mxu0
        %7587 = vmatprep.mubr.bf16.mxu0 0
        %7588 = vmatmul.mubr.bf16.gmra.mxu0 %v7458
        %v7589 = vpop.f32.mrf.mxu0
        %v7590 = vadd.f32 0.0, %v7589
        %v7591 = vpop.f32.mrf.mxu0
        %v7592 = vpop.f32.mrf.mxu0
        %v7593 = vadd.f32 0.0, %v7592
        %v7594 = vpop.f32.mrf.mxu0
        %7595 = vmatprep.mubr.bf16.mxu0 0
        %7596 = vmatmul.mubr.bf16.gmra.mxu0 %v7461
        %v7597 = vpop.f32.mrf.mxu0
        %v7598 = vadd.f32 0.0, %v7597
        %v7599 = vpop.f32.mrf.mxu0
        %v7600 = vpop.f32.mrf.mxu0
        %v7601 = vadd.f32 0.0, %v7600
        %v7602 = vpop.f32.mrf.mxu0
        %7603 = vmatprep.mubr.bf16.mxu0 0
        %7604 = vmatmul.mubr.bf16.gmra.mxu0 %v7464
        %v7605 = vpop.f32.mrf.mxu0
        %v7606 = vadd.f32 0.0, %v7605
        %v7607 = vpop.f32.mrf.mxu0
        %v7608 = vpop.f32.mrf.mxu0
        %v7609 = vadd.f32 0.0, %v7608
        %v7610 = vpop.f32.mrf.mxu0
        %7611 = vmatprep.mubr.bf16.mxu0 0
        %7612 = vmatmul.mubr.bf16.gmra.mxu0 %v7467
        %v7613 = vpop.f32.mrf.mxu0
        %v7614 = vadd.f32 0.0, %v7613
        %v7615 = vpop.f32.mrf.mxu0
        %v7616 = vpop.f32.mrf.mxu0
        %v7617 = vadd.f32 0.0, %v7616
        %v7618 = vpop.f32.mrf.mxu0
        %7619 = vmatprep.mubr.bf16.mxu0 0
        %7620 = vmatmul.mubr.bf16.gmra.mxu0 %v7470
        %v7621 = vpop.f32.mrf.mxu0
        %v7622 = vadd.f32 0.0, %v7621
        %v7623 = vpop.f32.mrf.mxu0
        %v7624 = vpop.f32.mrf.mxu0
        %v7625 = vadd.f32 0.0, %v7624
        %v7626 = vpop.f32.mrf.mxu0
        %7627 = vmatprep.mubr.bf16.mxu0 0
        %7628 = vmatmul.mubr.bf16.gmra.mxu0 %v7473
        %v7629 = vpop.f32.mrf.mxu0
        %v7630 = vadd.f32 0.0, %v7629
        %v7631 = vpop.f32.mrf.mxu0
        %v7632 = vpop.f32.mrf.mxu0
        %v7633 = vadd.f32 0.0, %v7632
        %v7634 = vpop.f32.mrf.mxu0
        %7635 = vdwg.mxu0
        %v7636 = vadd.f32 %v6898, %v7510
        %v7637 = vadd.f32 %v6899, %v7513
        %v7638 = vadd.f32 %v6900, %v7518
        %v7639 = vadd.f32 %v6901, %v7521
        %v7640 = vadd.f32 %v6902, %v7526
        %v7641 = vadd.f32 %v6903, %v7529
        %v7642 = vadd.f32 %v6904, %v7534
        %v7643 = vadd.f32 %v6905, %v7537
        %v7644 = vadd.f32 %v6906, %v7542
        %v7645 = vadd.f32 %v6907, %v7545
        %v7646 = vadd.f32 %v6908, %v7550
        %v7647 = vadd.f32 %v6909, %v7553
        %v7648 = vadd.f32 %v6910, %v7558
        %v7649 = vadd.f32 %v6911, %v7561
        %v7650 = vadd.f32 %v6912, %v7566
        %v7651 = vadd.f32 %v6913, %v7569
        %v7652 = vadd.f32 %v6914, %v7574
        %v7653 = vadd.f32 %v6915, %v7577
        %v7654 = vadd.f32 %v6916, %v7582
        %v7655 = vadd.f32 %v6917, %v7585
        %v7656 = vadd.f32 %v6918, %v7590
        %v7657 = vadd.f32 %v6919, %v7593
        %v7658 = vadd.f32 %v6920, %v7598
        %v7659 = vadd.f32 %v6921, %v7601
        %v7660 = vadd.f32 %v6922, %v7606
        %v7661 = vadd.f32 %v6923, %v7609
        %v7662 = vadd.f32 %v6924, %v7614
        %v7663 = vadd.f32 %v6925, %v7617
        %v7664 = vadd.f32 %v6926, %v7622
        %v7665 = vadd.f32 %v6927, %v7625
        %v7666 = vadd.f32 %v6928, %v7630
        %v7667 = vadd.f32 %v6929, %v7633
        %v7668 = vld [vmem:[%s4] sm:$0x1]
        %v7670 = vlaneseq
        %v7671 = vshrl.u32 %v7670, 7
        %v7672 = vsub.s32 0, %v7671
        %v7673 = vrot.slane %v7668, %v7672
        %v7675 = vadd.f32 %v7636, %v7673
        %v7676 = vadd.f32 %v7637, %v7673
        %v7677 = vadd.f32 %v7638, %v7673
        %v7678 = vadd.f32 %v7639, %v7673
        %v7679 = vadd.f32 %v7640, %v7673
        %v7680 = vadd.f32 %v7641, %v7673
        %v7681 = vadd.f32 %v7642, %v7673
        %v7682 = vadd.f32 %v7643, %v7673
        %v7683 = vadd.f32 %v7644, %v7673
        %v7684 = vadd.f32 %v7645, %v7673
        %v7685 = vadd.f32 %v7646, %v7673
        %v7686 = vadd.f32 %v7647, %v7673
        %v7687 = vadd.f32 %v7648, %v7673
        %v7688 = vadd.f32 %v7649, %v7673
        %v7689 = vadd.f32 %v7650, %v7673
        %v7690 = vadd.f32 %v7651, %v7673
        %v7691 = vadd.f32 %v7652, %v7673
        %v7692 = vadd.f32 %v7653, %v7673
        %v7693 = vadd.f32 %v7654, %v7673
        %v7694 = vadd.f32 %v7655, %v7673
        %v7695 = vadd.f32 %v7656, %v7673
        %v7696 = vadd.f32 %v7657, %v7673
        %v7697 = vadd.f32 %v7658, %v7673
        %v7698 = vadd.f32 %v7659, %v7673
        %v7699 = vadd.f32 %v7660, %v7673
        %v7700 = vadd.f32 %v7661, %v7673
        %v7701 = vadd.f32 %v7662, %v7673
        %v7702 = vadd.f32 %v7663, %v7673
        %v7703 = vadd.f32 %v7664, %v7673
        %v7704 = vadd.f32 %v7665, %v7673
        %v7705 = vadd.f32 %v7666, %v7673
        %v7706 = vadd.f32 %v7667, %v7673
        %v7707 = vmax.f32 %v7675, 0.0
        %v7708 = vmax.f32 %v7676, 0.0
        %v7709 = vmax.f32 %v7677, 0.0
        %v7710 = vmax.f32 %v7678, 0.0
        %v7711 = vmax.f32 %v7679, 0.0
        %v7712 = vmax.f32 %v7680, 0.0
        %v7713 = vmax.f32 %v7681, 0.0
        %v7714 = vmax.f32 %v7682, 0.0
        %v7715 = vmax.f32 %v7683, 0.0
        %v7716 = vmax.f32 %v7684, 0.0
        %v7717 = vmax.f32 %v7685, 0.0
        %v7718 = vmax.f32 %v7686, 0.0
        %v7719 = vmax.f32 %v7687, 0.0
        %v7720 = vmax.f32 %v7688, 0.0
        %v7721 = vmax.f32 %v7689, 0.0
        %v7722 = vmax.f32 %v7690, 0.0
        %v7723 = vmax.f32 %v7691, 0.0
        %v7724 = vmax.f32 %v7692, 0.0
        %v7725 = vmax.f32 %v7693, 0.0
        %v7726 = vmax.f32 %v7694, 0.0
        %v7727 = vmax.f32 %v7695, 0.0
        %v7728 = vmax.f32 %v7696, 0.0
        %v7729 = vmax.f32 %v7697, 0.0
        %v7730 = vmax.f32 %v7698, 0.0
        %v7731 = vmax.f32 %v7699, 0.0
        %v7732 = vmax.f32 %v7700, 0.0
        %v7733 = vmax.f32 %v7701, 0.0
        %v7734 = vmax.f32 %v7702, 0.0
        %v7735 = vmax.f32 %v7703, 0.0
        %v7736 = vmax.f32 %v7704, 0.0
        %v7737 = vmax.f32 %v7705, 0.0
        %v7738 = vmax.f32 %v7706, 0.0
        %v7739 = vmax.f32 %v7707, %v7709
        %v7740 = vmax.f32 %v7708, %v7710
        %v7741 = vmax.f32 %v7711, %v7713
        %v7742 = vmax.f32 %v7712, %v7714
        %v7743 = vmax.f32 %v7715, %v7717
        %v7744 = vmax.f32 %v7716, %v7718
        %v7745 = vmax.f32 %v7719, %v7721
        %v7746 = vmax.f32 %v7720, %v7722
        %v7747 = vmax.f32 %v7723, %v7725
        %v7748 = vmax.f32 %v7724, %v7726
        %v7749 = vmax.f32 %v7727, %v7729
        %v7750 = vmax.f32 %v7728, %v7730
        %v7751 = vmax.f32 %v7731, %v7733
        %v7752 = vmax.f32 %v7732, %v7734
        %v7753 = vmax.f32 %v7735, %v7737
        %v7754 = vmax.f32 %v7736, %v7738
        %vm7755 = vcmask 523264
        %7756 = vst.msk [vmem:[#allocation5] sm:$0xff] %vm7755, %v7739
        %7757 = vst.msk [vmem:[#allocation5 + $0x8] sm:$0xff] %vm7755, %v7740
        %7758 = vst.msk [vmem:[#allocation5 + $0x10] sm:$0xff] %vm7755, %v7741
        %7759 = vst.msk [vmem:[#allocation5 + $0x18] sm:$0xff] %vm7755, %v7742
        %7760 = vst.msk [vmem:[#allocation5 + $0x20] sm:$0xff] %vm7755, %v7743
        %7761 = vst.msk [vmem:[#allocation5 + $0x28] sm:$0xff] %vm7755, %v7744
        %7762 = vst.msk [vmem:[#allocation5 + $0x30] sm:$0xff] %vm7755, %v7745
        %7763 = vst.msk [vmem:[#allocation5 + $0x38] sm:$0xff] %vm7755, %v7746
        %7764 = vst.msk [vmem:[#allocation5 + $0x40] sm:$0xff] %vm7755, %v7747
        %7765 = vst.msk [vmem:[#allocation5 + $0x48] sm:$0xff] %vm7755, %v7748
        %7766 = vst.msk [vmem:[#allocation5 + $0x50] sm:$0xff] %vm7755, %v7749
        %7767 = vst.msk [vmem:[#allocation5 + $0x58] sm:$0xff] %vm7755, %v7750
        %7768 = vst.msk [vmem:[#allocation5 + $0x60] sm:$0xff] %vm7755, %v7751
        %7769 = vst.msk [vmem:[#allocation5 + $0x68] sm:$0xff] %vm7755, %v7752
        %7770 = vst.msk [vmem:[#allocation5 + $0x70] sm:$0xff] %vm7755, %v7753
        %7771 = vst.msk [vmem:[#allocation5 + $0x78] sm:$0xff] %vm7755, %v7754
        %v7772 = vld [vmem:[#allocation5] ss:$2 sm:$0xff]
        %s7773 = scalar_lea.vmem [#allocation5], 16
        %v7774 = vld [vmem:[%s7773] ss:$2 sm:$0xff]
        %s7775 = scalar_lea.vmem [#allocation5], 32
        %v7776 = vld [vmem:[%s7775] ss:$2 sm:$0xff]
        %s7777 = scalar_lea.vmem [#allocation5], 48
        %v7778 = vld [vmem:[%s7777] ss:$2 sm:$0xff]
        %s7779 = scalar_lea.vmem [#allocation5], 64
        %v7780 = vld [vmem:[%s7779] ss:$2 sm:$0xff]
        %s7781 = scalar_lea.vmem [#allocation5], 80
        %v7782 = vld [vmem:[%s7781] ss:$2 sm:$0xff]
        %s7783 = scalar_lea.vmem [#allocation5], 96
        %v7784 = vld [vmem:[%s7783] ss:$2 sm:$0xff]
        %s7785 = scalar_lea.vmem [#allocation5], 112
        %v7786 = vld [vmem:[%s7785] ss:$2 sm:$0xff]
        %s7787 = scalar_lea.vmem [#allocation5], 1
        %v7788 = vld [vmem:[%s7787] ss:$2 sm:$0xff]
        %s7789 = scalar_lea.vmem [#allocation5], 17
        %v7790 = vld [vmem:[%s7789] ss:$2 sm:$0xff]
        %s7791 = scalar_lea.vmem [#allocation5], 33
        %v7792 = vld [vmem:[%s7791] ss:$2 sm:$0xff]
        %s7793 = scalar_lea.vmem [#allocation5], 49
        %v7794 = vld [vmem:[%s7793] ss:$2 sm:$0xff]
        %s7795 = scalar_lea.vmem [#allocation5], 65
        %v7796 = vld [vmem:[%s7795] ss:$2 sm:$0xff]
        %s7797 = scalar_lea.vmem [#allocation5], 81
        %v7798 = vld [vmem:[%s7797] ss:$2 sm:$0xff]
        %s7799 = scalar_lea.vmem [#allocation5], 97
        %v7800 = vld [vmem:[%s7799] ss:$2 sm:$0xff]
        %s7801 = scalar_lea.vmem [#allocation5], 113
        %v7802 = vld [vmem:[%s7801] ss:$2 sm:$0xff]
        %v7803 = vmax.f32 %v7772, %v7788
        %v7804 = vmax.f32 %v7774, %v7790
        %v7805 = vmax.f32 %v7776, %v7792
        %v7806 = vmax.f32 %v7778, %v7794
        %v7807 = vmax.f32 %v7780, %v7796
        %v7808 = vmax.f32 %v7782, %v7798
        %v7809 = vmax.f32 %v7784, %v7800
        %v7810 = vmax.f32 %v7786, %v7802
        %v7811 = vpack.c.bf16 %v7803, %v7803
        %v7812 = vpack.c.bf16 %v7804, %v7804
        %v7813 = vpack.c.bf16 %v7805, %v7805
        %v7814 = vpack.c.bf16 %v7806, %v7806
        %v7815 = vpack.c.bf16 %v7807, %v7807
        %v7816 = vpack.c.bf16 %v7808, %v7808
        %v7817 = vpack.c.bf16 %v7809, %v7809
        %v7818 = vpack.c.bf16 %v7810, %v7810
        %s7819 = scalar_lea.vmem [#allocation3], 96
        %7820 = vst.msk [vmem:[%s7819 + $0x4] sm:$0xf] %vm514, %v7811
        %7821 = vst.msk [vmem:[%s7819 + $0x10] sm:$0xf] %vm514, %v7812
        %7822 = vst.msk [vmem:[%s7819 + $0x1c] sm:$0xf] %vm514, %v7813
        %7823 = vst.msk [vmem:[%s7819 + $0x28] sm:$0xf] %vm514, %v7814
        %7824 = vst.msk [vmem:[%s7819 + $0x34] sm:$0xf] %vm514, %v7815
        %7825 = vst.msk [vmem:[%s7819 + $0x40] sm:$0xf] %vm514, %v7816
        %7826 = vst.msk [vmem:[%s7819 + $0x4c] sm:$0xf] %vm514, %v7817
        %7827 = vst.msk [vmem:[%s7819 + $0x58] sm:$0xf] %vm514, %v7818
        %s7828 = scalar_lea.vmem [#allocation3], 84
        %v7829 = vld [vmem:[%s7828] sm:$0x8]
        %v7830 = vld [vmem:[%s7828 + $0x4] sm:$0xf]
        %v7831 = vld [vmem:[%s7828 + $0xc] sm:$0x8]
        %v7832 = vld [vmem:[%s7828 + $0x10] sm:$0xf]
        %v7833 = vld [vmem:[%s7828 + $0x18] sm:$0x8]
        %v7834 = vld [vmem:[%s7828 + $0x1c] sm:$0xf]
        %v7835 = vld [vmem:[%s7828 + $0x24] sm:$0x8]
        %v7836 = vld [vmem:[%s7828 + $0x28] sm:$0xf]
        %v7837 = vld [vmem:[%s7828 + $0x30] sm:$0x8]
        %v7838 = vld [vmem:[%s7828 + $0x34] sm:$0xf]
        %v7839 = vld [vmem:[%s7828 + $0x3c] sm:$0x8]
        %v7840 = vld [vmem:[%s7828 + $0x40] sm:$0xf]
        %v7841 = vld [vmem:[%s7828 + $0x48] sm:$0x8]
        %v7842 = vld [vmem:[%s7828 + $0x4c] sm:$0xf]
        %v7843 = vld [vmem:[%s7828 + $0x54] sm:$0x8]
        %v7844 = vld [vmem:[%s7828 + $0x58] sm:$0xf]
        %v7846 = vshrl.u32 %v7829, 16
        %v7848 = vrot.slane %v7846, 7
        %v7849 = vrot.slane %v7848, 4
        %v7851 = vshrl.u32 %v7830, 16
        %v7853 = vrot.slane %v7851, 7
        %v7854 = vshll.u32 %v7830, 16
        %v7856 = vor.u32 %v7853, %v7854
        %v7857 = vsel %vm2430, %v7849, %v7856
        %v7859 = vshrl.u32 %v7831, 16
        %v7861 = vrot.slane %v7859, 7
        %v7862 = vrot.slane %v7861, 4
        %v7864 = vshrl.u32 %v7832, 16
        %v7866 = vrot.slane %v7864, 7
        %v7867 = vshll.u32 %v7832, 16
        %v7869 = vor.u32 %v7866, %v7867
        %v7870 = vsel %vm2430, %v7862, %v7869
        %v7872 = vshrl.u32 %v7833, 16
        %v7874 = vrot.slane %v7872, 7
        %v7875 = vrot.slane %v7874, 4
        %v7877 = vshrl.u32 %v7834, 16
        %v7879 = vrot.slane %v7877, 7
        %v7880 = vshll.u32 %v7834, 16
        %v7882 = vor.u32 %v7879, %v7880
        %v7883 = vsel %vm2430, %v7875, %v7882
        %v7885 = vshrl.u32 %v7835, 16
        %v7887 = vrot.slane %v7885, 7
        %v7888 = vrot.slane %v7887, 4
        %v7890 = vshrl.u32 %v7836, 16
        %v7892 = vrot.slane %v7890, 7
        %v7893 = vshll.u32 %v7836, 16
        %v7895 = vor.u32 %v7892, %v7893
        %v7896 = vsel %vm2430, %v7888, %v7895
        %v7898 = vshrl.u32 %v7837, 16
        %v7900 = vrot.slane %v7898, 7
        %v7901 = vrot.slane %v7900, 4
        %v7903 = vshrl.u32 %v7838, 16
        %v7905 = vrot.slane %v7903, 7
        %v7906 = vshll.u32 %v7838, 16
        %v7908 = vor.u32 %v7905, %v7906
        %v7909 = vsel %vm2430, %v7901, %v7908
        %v7911 = vshrl.u32 %v7839, 16
        %v7913 = vrot.slane %v7911, 7
        %v7914 = vrot.slane %v7913, 4
        %v7916 = vshrl.u32 %v7840, 16
        %v7918 = vrot.slane %v7916, 7
        %v7919 = vshll.u32 %v7840, 16
        %v7921 = vor.u32 %v7918, %v7919
        %v7922 = vsel %vm2430, %v7914, %v7921
        %v7924 = vshrl.u32 %v7841, 16
        %v7926 = vrot.slane %v7924, 7
        %v7927 = vrot.slane %v7926, 4
        %v7929 = vshrl.u32 %v7842, 16
        %v7931 = vrot.slane %v7929, 7
        %v7932 = vshll.u32 %v7842, 16
        %v7934 = vor.u32 %v7931, %v7932
        %v7935 = vsel %vm2430, %v7927, %v7934
        %v7937 = vshrl.u32 %v7843, 16
        %v7939 = vrot.slane %v7937, 7
        %v7940 = vrot.slane %v7939, 4
        %v7942 = vshrl.u32 %v7844, 16
        %v7944 = vrot.slane %v7942, 7
        %v7945 = vshll.u32 %v7844, 16
        %v7947 = vor.u32 %v7944, %v7945
        %v7948 = vsel %vm2430, %v7940, %v7947
        %v7949 = vld [vmem:[%s5] sm:$0xf]
        %v7950 = vld [vmem:[%s5 + $0x4] sm:$0xf]
        %v7951 = vld [vmem:[%s5 + $0x8] sm:$0xf]
        %v7952 = vld [vmem:[%s5 + $0xc] sm:$0xf]
        %v7953 = vld [vmem:[%s5 + $0x10] sm:$0xf]
        %v7954 = vld [vmem:[%s5 + $0x14] sm:$0xf]
        %v7955 = vld [vmem:[%s5 + $0x18] sm:$0xf]
        %v7956 = vld [vmem:[%s5 + $0x1c] sm:$0xf]
        %s7957 = scalar_lea.vmem %s5, 32
        %v7958 = vld [vmem:[%s7957] sm:$0xf]
        %v7959 = vld [vmem:[%s7957 + $0x4] sm:$0xf]
        %v7960 = vld [vmem:[%s7957 + $0x8] sm:$0xf]
        %v7961 = vld [vmem:[%s7957 + $0xc] sm:$0xf]
        %v7962 = vld [vmem:[%s7957 + $0x10] sm:$0xf]
        %v7963 = vld [vmem:[%s7957 + $0x14] sm:$0xf]
        %v7964 = vld [vmem:[%s7957 + $0x18] sm:$0xf]
        %v7965 = vld [vmem:[%s7957 + $0x1c] sm:$0xf]
        %v7974 = vunpack.c.l.b16 %v7830
        %v7975 = vunpack.c.l.b16 %v7832
        %v7976 = vunpack.c.l.b16 %v7834
        %v7977 = vunpack.c.l.b16 %v7836
        %v7978 = vunpack.c.l.b16 %v7838
        %v7979 = vunpack.c.l.b16 %v7840
        %v7980 = vunpack.c.l.b16 %v7842
        %v7981 = vunpack.c.l.b16 %v7844
        %v7982 = vpack.c.b16 %v7975, %v7974
        %v7983 = vpack.c.b16 %v7977, %v7976
        %v7984 = vpack.c.b16 %v7979, %v7978
        %v7985 = vpack.c.b16 %v7981, %v7980
        %v7994 = vunpack.c.l.b16 %v7958
        %v7995 = vunpack.c.l.b16 %v7959
        %v7996 = vunpack.c.l.b16 %v7960
        %v7997 = vunpack.c.l.b16 %v7961
        %v7998 = vunpack.c.l.b16 %v7962
        %v7999 = vunpack.c.l.b16 %v7963
        %v8000 = vunpack.c.l.b16 %v7964
        %v8001 = vunpack.c.l.b16 %v7965
        %v8002 = vpack.c.b16 %v7995, %v7994
        %v8003 = vpack.c.b16 %v7997, %v7996
        %v8004 = vpack.c.b16 %v7999, %v7998
        %v8005 = vpack.c.b16 %v8001, %v8000
        %v8011 = vsel %vm7755, %v7982, 0
        %v8014 = vsel %vm7755, %v7983, 0
        %v8017 = vsel %vm7755, %v7984, 0
        %v8020 = vsel %vm7755, %v7985, 0
        %8022 = vmatprep.subr.bf16.mxu0 0
        %8023 = vmatpush1.bf16.msra.mxu0 0
        %8024 = vmatprep.subr.bf16.mxu0 0
        %8025 = vmatpush1.bf16.msra.mxu0 0
        %8026 = vmatprep.subr.bf16.mxu0 0
        %8027 = vmatpush1.bf16.msra.mxu0 0
        %8028 = vmatprep.subr.bf16.mxu0 0
        %8029 = vmatpush1.bf16.msra.mxu0 0
        %8030 = vmatprep.subr.bf16.mxu0 0
        %8031 = vmatpush1.bf16.msra.mxu0 %v8005
        %8032 = vmatprep.subr.bf16.mxu0 0
        %8033 = vmatpush1.bf16.msra.mxu0 %v8004
        %8034 = vmatprep.subr.bf16.mxu0 0
        %8035 = vmatpush1.bf16.msra.mxu0 %v8003
        %8036 = vmatprep.subr.bf16.mxu0 0
        %8037 = vmatpush1.bf16.msra.mxu0 %v8002
        %8038 = vmatprep.subr.bf16.mxu0 0
        %8039 = vmatpush2.bf16.msra.mxu0 0
        %8040 = vmatprep.subr.bf16.mxu0 0
        %8041 = vmatpush2.bf16.msra.mxu0 0
        %8042 = vmatprep.subr.bf16.mxu0 0
        %8043 = vmatpush2.bf16.msra.mxu0 0
        %8044 = vmatprep.subr.bf16.mxu0 0
        %8045 = vmatpush2.bf16.msra.mxu0 0
        %8046 = vmatprep.subr.bf16.mxu0 0
        %8047 = vmatpush2.bf16.msra.mxu0 0
        %8048 = vmatprep.subr.bf16.mxu0 0
        %8049 = vmatpush2.bf16.msra.mxu0 0
        %8050 = vmatprep.subr.bf16.mxu0 0
        %8051 = vmatpush2.bf16.msra.mxu0 0
        %8052 = vmatprep.subr.bf16.mxu0 0
        %8053 = vmatpush2.bf16.msra.mxu0 0
        %8054 = vmatprep.mubr.bf16.mxu0 0
        %8055 = vmatmul.mubr.bf16.gmra.mxu0 %v8011
        %v8056 = vpop.f32.mrf.mxu0
        %v8057 = vadd.f32 0.0, %v8056
        %v8058 = vpop.f32.mrf.mxu0
        %v8059 = vpop.f32.mrf.mxu0
        %v8060 = vadd.f32 0.0, %v8059
        %v8061 = vpop.f32.mrf.mxu0
        %8062 = vmatprep.mubr.bf16.mxu0 0
        %8063 = vmatmul.mubr.bf16.gmra.mxu0 %v8014
        %v8064 = vpop.f32.mrf.mxu0
        %v8065 = vadd.f32 0.0, %v8064
        %v8066 = vpop.f32.mrf.mxu0
        %v8067 = vpop.f32.mrf.mxu0
        %v8068 = vadd.f32 0.0, %v8067
        %v8069 = vpop.f32.mrf.mxu0
        %8070 = vmatprep.mubr.bf16.mxu0 0
        %8071 = vmatmul.mubr.bf16.gmra.mxu0 %v8017
        %v8072 = vpop.f32.mrf.mxu0
        %v8073 = vadd.f32 0.0, %v8072
        %v8074 = vpop.f32.mrf.mxu0
        %v8075 = vpop.f32.mrf.mxu0
        %v8076 = vadd.f32 0.0, %v8075
        %v8077 = vpop.f32.mrf.mxu0
        %8078 = vmatprep.mubr.bf16.mxu0 0
        %8079 = vmatmul.mubr.bf16.gmra.mxu0 %v8020
        %v8080 = vpop.f32.mrf.mxu0
        %v8081 = vadd.f32 0.0, %v8080
        %v8082 = vpop.f32.mrf.mxu0
        %v8083 = vpop.f32.mrf.mxu0
        %v8084 = vadd.f32 0.0, %v8083
        %v8085 = vpop.f32.mrf.mxu0
        %8086 = vdwg.mxu0
        %v8087 = vunpack.c.l.b16 %v7857
        %v8088 = vunpack.c.l.b16 %v7870
        %v8089 = vunpack.c.l.b16 %v7883
        %v8090 = vunpack.c.l.b16 %v7896
        %v8091 = vunpack.c.l.b16 %v7909
        %v8092 = vunpack.c.l.b16 %v7922
        %v8093 = vunpack.c.l.b16 %v7935
        %v8094 = vunpack.c.l.b16 %v7948
        %v8095 = vpack.c.b16 %v8088, %v8087
        %v8096 = vpack.c.b16 %v8090, %v8089
        %v8097 = vpack.c.b16 %v8092, %v8091
        %v8098 = vpack.c.b16 %v8094, %v8093
        %v8107 = vunpack.c.l.b16 %v7949
        %v8108 = vunpack.c.l.b16 %v7950
        %v8109 = vunpack.c.l.b16 %v7951
        %v8110 = vunpack.c.l.b16 %v7952
        %v8111 = vunpack.c.l.b16 %v7953
        %v8112 = vunpack.c.l.b16 %v7954
        %v8113 = vunpack.c.l.b16 %v7955
        %v8114 = vunpack.c.l.b16 %v7956
        %v8115 = vpack.c.b16 %v8108, %v8107
        %v8116 = vpack.c.b16 %v8110, %v8109
        %v8117 = vpack.c.b16 %v8112, %v8111
        %v8118 = vpack.c.b16 %v8114, %v8113
        %v8124 = vsel %vm7755, %v8095, 0
        %v8127 = vsel %vm7755, %v8096, 0
        %v8130 = vsel %vm7755, %v8097, 0
        %v8133 = vsel %vm7755, %v8098, 0
        %8135 = vmatprep.subr.bf16.mxu0 0
        %8136 = vmatpush1.bf16.msra.mxu0 0
        %8137 = vmatprep.subr.bf16.mxu0 0
        %8138 = vmatpush1.bf16.msra.mxu0 0
        %8139 = vmatprep.subr.bf16.mxu0 0
        %8140 = vmatpush1.bf16.msra.mxu0 0
        %8141 = vmatprep.subr.bf16.mxu0 0
        %8142 = vmatpush1.bf16.msra.mxu0 0
        %8143 = vmatprep.subr.bf16.mxu0 0
        %8144 = vmatpush1.bf16.msra.mxu0 %v8118
        %8145 = vmatprep.subr.bf16.mxu0 0
        %8146 = vmatpush1.bf16.msra.mxu0 %v8117
        %8147 = vmatprep.subr.bf16.mxu0 0
        %8148 = vmatpush1.bf16.msra.mxu0 %v8116
        %8149 = vmatprep.subr.bf16.mxu0 0
        %8150 = vmatpush1.bf16.msra.mxu0 %v8115
        %8151 = vmatprep.subr.bf16.mxu0 0
        %8152 = vmatpush2.bf16.msra.mxu0 0
        %8153 = vmatprep.subr.bf16.mxu0 0
        %8154 = vmatpush2.bf16.msra.mxu0 0
        %8155 = vmatprep.subr.bf16.mxu0 0
        %8156 = vmatpush2.bf16.msra.mxu0 0
        %8157 = vmatprep.subr.bf16.mxu0 0
        %8158 = vmatpush2.bf16.msra.mxu0 0
        %8159 = vmatprep.subr.bf16.mxu0 0
        %8160 = vmatpush2.bf16.msra.mxu0 0
        %8161 = vmatprep.subr.bf16.mxu0 0
        %8162 = vmatpush2.bf16.msra.mxu0 0
        %8163 = vmatprep.subr.bf16.mxu0 0
        %8164 = vmatpush2.bf16.msra.mxu0 0
        %8165 = vmatprep.subr.bf16.mxu0 0
        %8166 = vmatpush2.bf16.msra.mxu0 0
        %8167 = vmatprep.mubr.bf16.mxu0 0
        %8168 = vmatmul.mubr.bf16.gmra.mxu0 %v8124
        %v8169 = vpop.f32.mrf.mxu0
        %v8170 = vadd.f32 %v8057, %v8169
        %v8171 = vpop.f32.mrf.mxu0
        %v8172 = vpop.f32.mrf.mxu0
        %v8173 = vadd.f32 %v8060, %v8172
        %v8174 = vpop.f32.mrf.mxu0
        %8175 = vmatprep.mubr.bf16.mxu0 0
        %8176 = vmatmul.mubr.bf16.gmra.mxu0 %v8127
        %v8177 = vpop.f32.mrf.mxu0
        %v8178 = vadd.f32 %v8065, %v8177
        %v8179 = vpop.f32.mrf.mxu0
        %v8180 = vpop.f32.mrf.mxu0
        %v8181 = vadd.f32 %v8068, %v8180
        %v8182 = vpop.f32.mrf.mxu0
        %8183 = vmatprep.mubr.bf16.mxu0 0
        %8184 = vmatmul.mubr.bf16.gmra.mxu0 %v8130
        %v8185 = vpop.f32.mrf.mxu0
        %v8186 = vadd.f32 %v8073, %v8185
        %v8187 = vpop.f32.mrf.mxu0
        %v8188 = vpop.f32.mrf.mxu0
        %v8189 = vadd.f32 %v8076, %v8188
        %v8190 = vpop.f32.mrf.mxu0
        %8191 = vmatprep.mubr.bf16.mxu0 0
        %8192 = vmatmul.mubr.bf16.gmra.mxu0 %v8133
        %v8193 = vpop.f32.mrf.mxu0
        %v8194 = vadd.f32 %v8081, %v8193
        %v8195 = vpop.f32.mrf.mxu0
        %v8196 = vpop.f32.mrf.mxu0
        %v8197 = vadd.f32 %v8084, %v8196
        %v8198 = vpop.f32.mrf.mxu0
        %8199 = vdwg.mxu0
        %v8200 = vld [vmem:[%s7828 + $0x4] sm:$0xf]
        %v8201 = vld [vmem:[%s7828 + $0x8] sm:$0x1]
        %v8202 = vld [vmem:[%s7828 + $0x10] sm:$0xf]
        %v8203 = vld [vmem:[%s7828 + $0x14] sm:$0x1]
        %v8204 = vld [vmem:[%s7828 + $0x1c] sm:$0xf]
        %v8205 = vld [vmem:[%s7828 + $0x20] sm:$0x1]
        %v8206 = vld [vmem:[%s7828 + $0x28] sm:$0xf]
        %v8207 = vld [vmem:[%s7828 + $0x2c] sm:$0x1]
        %v8208 = vld [vmem:[%s7828 + $0x34] sm:$0xf]
        %v8209 = vld [vmem:[%s7828 + $0x38] sm:$0x1]
        %v8210 = vld [vmem:[%s7828 + $0x40] sm:$0xf]
        %v8211 = vld [vmem:[%s7828 + $0x44] sm:$0x1]
        %v8212 = vld [vmem:[%s7828 + $0x4c] sm:$0xf]
        %v8213 = vld [vmem:[%s7828 + $0x50] sm:$0x1]
        %v8214 = vld [vmem:[%s7828 + $0x58] sm:$0xf]
        %v8215 = vld [vmem:[%s7828 + $0x5c] sm:$0x1]
        %v8217 = vshrl.u32 %v8200, 16
        %v8219 = vrot.slane %v8217, 4
        %v8220 = vshll.u32 %v8200, 16
        %v8222 = vrot.slane %v8220, 5
        %v8223 = vor.u32 %v8219, %v8222
        %v8224 = vrot.slane %v8223, 4
        %v8226 = vshll.u32 %v8201, 16
        %v8228 = vrot.slane %v8226, 5
        %v8229 = vsel %vm3412, %v8224, %v8228
        %v8231 = vshrl.u32 %v8202, 16
        %v8233 = vrot.slane %v8231, 4
        %v8234 = vshll.u32 %v8202, 16
        %v8236 = vrot.slane %v8234, 5
        %v8237 = vor.u32 %v8233, %v8236
        %v8238 = vrot.slane %v8237, 4
        %v8240 = vshll.u32 %v8203, 16
        %v8242 = vrot.slane %v8240, 5
        %v8243 = vsel %vm3412, %v8238, %v8242
        %v8245 = vshrl.u32 %v8204, 16
        %v8247 = vrot.slane %v8245, 4
        %v8248 = vshll.u32 %v8204, 16
        %v8250 = vrot.slane %v8248, 5
        %v8251 = vor.u32 %v8247, %v8250
        %v8252 = vrot.slane %v8251, 4
        %v8254 = vshll.u32 %v8205, 16
        %v8256 = vrot.slane %v8254, 5
        %v8257 = vsel %vm3412, %v8252, %v8256
        %v8259 = vshrl.u32 %v8206, 16
        %v8261 = vrot.slane %v8259, 4
        %v8262 = vshll.u32 %v8206, 16
        %v8264 = vrot.slane %v8262, 5
        %v8265 = vor.u32 %v8261, %v8264
        %v8266 = vrot.slane %v8265, 4
        %v8268 = vshll.u32 %v8207, 16
        %v8270 = vrot.slane %v8268, 5
        %v8271 = vsel %vm3412, %v8266, %v8270
        %v8273 = vshrl.u32 %v8208, 16
        %v8275 = vrot.slane %v8273, 4
        %v8276 = vshll.u32 %v8208, 16
        %v8278 = vrot.slane %v8276, 5
        %v8279 = vor.u32 %v8275, %v8278
        %v8280 = vrot.slane %v8279, 4
        %v8282 = vshll.u32 %v8209, 16
        %v8284 = vrot.slane %v8282, 5
        %v8285 = vsel %vm3412, %v8280, %v8284
        %v8287 = vshrl.u32 %v8210, 16
        %v8289 = vrot.slane %v8287, 4
        %v8290 = vshll.u32 %v8210, 16
        %v8292 = vrot.slane %v8290, 5
        %v8293 = vor.u32 %v8289, %v8292
        %v8294 = vrot.slane %v8293, 4
        %v8296 = vshll.u32 %v8211, 16
        %v8298 = vrot.slane %v8296, 5
        %v8299 = vsel %vm3412, %v8294, %v8298
        %v8301 = vshrl.u32 %v8212, 16
        %v8303 = vrot.slane %v8301, 4
        %v8304 = vshll.u32 %v8212, 16
        %v8306 = vrot.slane %v8304, 5
        %v8307 = vor.u32 %v8303, %v8306
        %v8308 = vrot.slane %v8307, 4
        %v8310 = vshll.u32 %v8213, 16
        %v8312 = vrot.slane %v8310, 5
        %v8313 = vsel %vm3412, %v8308, %v8312
        %v8315 = vshrl.u32 %v8214, 16
        %v8317 = vrot.slane %v8315, 4
        %v8318 = vshll.u32 %v8214, 16
        %v8320 = vrot.slane %v8318, 5
        %v8321 = vor.u32 %v8317, %v8320
        %v8322 = vrot.slane %v8321, 4
        %v8324 = vshll.u32 %v8215, 16
        %v8326 = vrot.slane %v8324, 5
        %v8327 = vsel %vm3412, %v8322, %v8326
        %s8328 = scalar_lea.vmem %s5, 64
        %v8329 = vld [vmem:[%s8328] sm:$0xf]
        %v8330 = vld [vmem:[%s8328 + $0x4] sm:$0xf]
        %v8331 = vld [vmem:[%s8328 + $0x8] sm:$0xf]
        %v8332 = vld [vmem:[%s8328 + $0xc] sm:$0xf]
        %v8333 = vld [vmem:[%s8328 + $0x10] sm:$0xf]
        %v8334 = vld [vmem:[%s8328 + $0x14] sm:$0xf]
        %v8335 = vld [vmem:[%s8328 + $0x18] sm:$0xf]
        %v8336 = vld [vmem:[%s8328 + $0x1c] sm:$0xf]
        %v8337 = vunpack.c.l.b16 %v8229
        %v8338 = vunpack.c.l.b16 %v8243
        %v8339 = vunpack.c.l.b16 %v8257
        %v8340 = vunpack.c.l.b16 %v8271
        %v8341 = vunpack.c.l.b16 %v8285
        %v8342 = vunpack.c.l.b16 %v8299
        %v8343 = vunpack.c.l.b16 %v8313
        %v8344 = vunpack.c.l.b16 %v8327
        %v8345 = vpack.c.b16 %v8338, %v8337
        %v8346 = vpack.c.b16 %v8340, %v8339
        %v8347 = vpack.c.b16 %v8342, %v8341
        %v8348 = vpack.c.b16 %v8344, %v8343
        %v8357 = vunpack.c.l.b16 %v8329
        %v8358 = vunpack.c.l.b16 %v8330
        %v8359 = vunpack.c.l.b16 %v8331
        %v8360 = vunpack.c.l.b16 %v8332
        %v8361 = vunpack.c.l.b16 %v8333
        %v8362 = vunpack.c.l.b16 %v8334
        %v8363 = vunpack.c.l.b16 %v8335
        %v8364 = vunpack.c.l.b16 %v8336
        %v8365 = vpack.c.b16 %v8358, %v8357
        %v8366 = vpack.c.b16 %v8360, %v8359
        %v8367 = vpack.c.b16 %v8362, %v8361
        %v8368 = vpack.c.b16 %v8364, %v8363
        %v8374 = vsel %vm7755, %v8345, 0
        %v8377 = vsel %vm7755, %v8346, 0
        %v8380 = vsel %vm7755, %v8347, 0
        %v8383 = vsel %vm7755, %v8348, 0
        %8385 = vmatprep.subr.bf16.mxu0 0
        %8386 = vmatpush1.bf16.msra.mxu0 0
        %8387 = vmatprep.subr.bf16.mxu0 0
        %8388 = vmatpush1.bf16.msra.mxu0 0
        %8389 = vmatprep.subr.bf16.mxu0 0
        %8390 = vmatpush1.bf16.msra.mxu0 0
        %8391 = vmatprep.subr.bf16.mxu0 0
        %8392 = vmatpush1.bf16.msra.mxu0 0
        %8393 = vmatprep.subr.bf16.mxu0 0
        %8394 = vmatpush1.bf16.msra.mxu0 %v8368
        %8395 = vmatprep.subr.bf16.mxu0 0
        %8396 = vmatpush1.bf16.msra.mxu0 %v8367
        %8397 = vmatprep.subr.bf16.mxu0 0
        %8398 = vmatpush1.bf16.msra.mxu0 %v8366
        %8399 = vmatprep.subr.bf16.mxu0 0
        %8400 = vmatpush1.bf16.msra.mxu0 %v8365
        %8401 = vmatprep.subr.bf16.mxu0 0
        %8402 = vmatpush2.bf16.msra.mxu0 0
        %8403 = vmatprep.subr.bf16.mxu0 0
        %8404 = vmatpush2.bf16.msra.mxu0 0
        %8405 = vmatprep.subr.bf16.mxu0 0
        %8406 = vmatpush2.bf16.msra.mxu0 0
        %8407 = vmatprep.subr.bf16.mxu0 0
        %8408 = vmatpush2.bf16.msra.mxu0 0
        %8409 = vmatprep.subr.bf16.mxu0 0
        %8410 = vmatpush2.bf16.msra.mxu0 0
        %8411 = vmatprep.subr.bf16.mxu0 0
        %8412 = vmatpush2.bf16.msra.mxu0 0
        %8413 = vmatprep.subr.bf16.mxu0 0
        %8414 = vmatpush2.bf16.msra.mxu0 0
        %8415 = vmatprep.subr.bf16.mxu0 0
        %8416 = vmatpush2.bf16.msra.mxu0 0
        %8417 = vmatprep.mubr.bf16.mxu0 0
        %8418 = vmatmul.mubr.bf16.gmra.mxu0 %v8374
        %v8419 = vpop.f32.mrf.mxu0
        %v8420 = vadd.f32 0.0, %v8419
        %v8421 = vpop.f32.mrf.mxu0
        %v8422 = vpop.f32.mrf.mxu0
        %v8423 = vadd.f32 0.0, %v8422
        %v8424 = vpop.f32.mrf.mxu0
        %8425 = vmatprep.mubr.bf16.mxu0 0
        %8426 = vmatmul.mubr.bf16.gmra.mxu0 %v8377
        %v8427 = vpop.f32.mrf.mxu0
        %v8428 = vadd.f32 0.0, %v8427
        %v8429 = vpop.f32.mrf.mxu0
        %v8430 = vpop.f32.mrf.mxu0
        %v8431 = vadd.f32 0.0, %v8430
        %v8432 = vpop.f32.mrf.mxu0
        %8433 = vmatprep.mubr.bf16.mxu0 0
        %8434 = vmatmul.mubr.bf16.gmra.mxu0 %v8380
        %v8435 = vpop.f32.mrf.mxu0
        %v8436 = vadd.f32 0.0, %v8435
        %v8437 = vpop.f32.mrf.mxu0
        %v8438 = vpop.f32.mrf.mxu0
        %v8439 = vadd.f32 0.0, %v8438
        %v8440 = vpop.f32.mrf.mxu0
        %8441 = vmatprep.mubr.bf16.mxu0 0
        %8442 = vmatmul.mubr.bf16.gmra.mxu0 %v8383
        %v8443 = vpop.f32.mrf.mxu0
        %v8444 = vadd.f32 0.0, %v8443
        %v8445 = vpop.f32.mrf.mxu0
        %v8446 = vpop.f32.mrf.mxu0
        %v8447 = vadd.f32 0.0, %v8446
        %v8448 = vpop.f32.mrf.mxu0
        %8449 = vdwg.mxu0
        %v8450 = vadd.f32 %v8170, %v8420
        %v8451 = vadd.f32 %v8173, %v8423
        %v8452 = vadd.f32 %v8178, %v8428
        %v8453 = vadd.f32 %v8181, %v8431
        %v8454 = vadd.f32 %v8186, %v8436
        %v8455 = vadd.f32 %v8189, %v8439
        %v8456 = vadd.f32 %v8194, %v8444
        %v8457 = vadd.f32 %v8197, %v8447
        %v8458 = vld [vmem:[%s7819] sm:$0x8]
        %v8459 = vld [vmem:[%s7819 + $0x4] sm:$0xf]
        %v8460 = vld [vmem:[%s7819 + $0xc] sm:$0x8]
        %v8461 = vld [vmem:[%s7819 + $0x10] sm:$0xf]
        %v8462 = vld [vmem:[%s7819 + $0x18] sm:$0x8]
        %v8463 = vld [vmem:[%s7819 + $0x1c] sm:$0xf]
        %v8464 = vld [vmem:[%s7819 + $0x24] sm:$0x8]
        %v8465 = vld [vmem:[%s7819 + $0x28] sm:$0xf]
        %v8466 = vld [vmem:[%s7819 + $0x30] sm:$0x8]
        %v8467 = vld [vmem:[%s7819 + $0x34] sm:$0xf]
        %v8468 = vld [vmem:[%s7819 + $0x3c] sm:$0x8]
        %v8469 = vld [vmem:[%s7819 + $0x40] sm:$0xf]
        %v8470 = vld [vmem:[%s7819 + $0x48] sm:$0x8]
        %v8471 = vld [vmem:[%s7819 + $0x4c] sm:$0xf]
        %v8472 = vld [vmem:[%s7819 + $0x54] sm:$0x8]
        %v8473 = vld [vmem:[%s7819 + $0x58] sm:$0xf]
        %v8475 = vshrl.u32 %v8458, 16
        %v8477 = vrot.slane %v8475, 7
        %v8478 = vrot.slane %v8477, 4
        %v8480 = vshrl.u32 %v8459, 16
        %v8482 = vrot.slane %v8480, 7
        %v8483 = vshll.u32 %v8459, 16
        %v8485 = vor.u32 %v8482, %v8483
        %v8486 = vsel %vm2430, %v8478, %v8485
        %v8488 = vshrl.u32 %v8460, 16
        %v8490 = vrot.slane %v8488, 7
        %v8491 = vrot.slane %v8490, 4
        %v8493 = vshrl.u32 %v8461, 16
        %v8495 = vrot.slane %v8493, 7
        %v8496 = vshll.u32 %v8461, 16
        %v8498 = vor.u32 %v8495, %v8496
        %v8499 = vsel %vm2430, %v8491, %v8498
        %v8501 = vshrl.u32 %v8462, 16
        %v8503 = vrot.slane %v8501, 7
        %v8504 = vrot.slane %v8503, 4
        %v8506 = vshrl.u32 %v8463, 16
        %v8508 = vrot.slane %v8506, 7
        %v8509 = vshll.u32 %v8463, 16
        %v8511 = vor.u32 %v8508, %v8509
        %v8512 = vsel %vm2430, %v8504, %v8511
        %v8514 = vshrl.u32 %v8464, 16
        %v8516 = vrot.slane %v8514, 7
        %v8517 = vrot.slane %v8516, 4
        %v8519 = vshrl.u32 %v8465, 16
        %v8521 = vrot.slane %v8519, 7
        %v8522 = vshll.u32 %v8465, 16
        %v8524 = vor.u32 %v8521, %v8522
        %v8525 = vsel %vm2430, %v8517, %v8524
        %v8527 = vshrl.u32 %v8466, 16
        %v8529 = vrot.slane %v8527, 7
        %v8530 = vrot.slane %v8529, 4
        %v8532 = vshrl.u32 %v8467, 16
        %v8534 = vrot.slane %v8532, 7
        %v8535 = vshll.u32 %v8467, 16
        %v8537 = vor.u32 %v8534, %v8535
        %v8538 = vsel %vm2430, %v8530, %v8537
        %v8540 = vshrl.u32 %v8468, 16
        %v8542 = vrot.slane %v8540, 7
        %v8543 = vrot.slane %v8542, 4
        %v8545 = vshrl.u32 %v8469, 16
        %v8547 = vrot.slane %v8545, 7
        %v8548 = vshll.u32 %v8469, 16
        %v8550 = vor.u32 %v8547, %v8548
        %v8551 = vsel %vm2430, %v8543, %v8550
        %v8553 = vshrl.u32 %v8470, 16
        %v8555 = vrot.slane %v8553, 7
        %v8556 = vrot.slane %v8555, 4
        %v8558 = vshrl.u32 %v8471, 16
        %v8560 = vrot.slane %v8558, 7
        %v8561 = vshll.u32 %v8471, 16
        %v8563 = vor.u32 %v8560, %v8561
        %v8564 = vsel %vm2430, %v8556, %v8563
        %v8566 = vshrl.u32 %v8472, 16
        %v8568 = vrot.slane %v8566, 7
        %v8569 = vrot.slane %v8568, 4
        %v8571 = vshrl.u32 %v8473, 16
        %v8573 = vrot.slane %v8571, 7
        %v8574 = vshll.u32 %v8473, 16
        %v8576 = vor.u32 %v8573, %v8574
        %v8577 = vsel %vm2430, %v8569, %v8576
        %s8578 = scalar_lea.vmem %s5, 96
        %v8579 = vld [vmem:[%s8578] sm:$0xf]
        %v8580 = vld [vmem:[%s8578 + $0x4] sm:$0xf]
        %v8581 = vld [vmem:[%s8578 + $0x8] sm:$0xf]
        %v8582 = vld [vmem:[%s8578 + $0xc] sm:$0xf]
        %v8583 = vld [vmem:[%s8578 + $0x10] sm:$0xf]
        %v8584 = vld [vmem:[%s8578 + $0x14] sm:$0xf]
        %v8585 = vld [vmem:[%s8578 + $0x18] sm:$0xf]
        %v8586 = vld [vmem:[%s8578 + $0x1c] sm:$0xf]
        %v8587 = vunpack.c.l.b16 %v8486
        %v8588 = vunpack.c.l.b16 %v8499
        %v8589 = vunpack.c.l.b16 %v8512
        %v8590 = vunpack.c.l.b16 %v8525
        %v8591 = vunpack.c.l.b16 %v8538
        %v8592 = vunpack.c.l.b16 %v8551
        %v8593 = vunpack.c.l.b16 %v8564
        %v8594 = vunpack.c.l.b16 %v8577
        %v8595 = vpack.c.b16 %v8588, %v8587
        %v8596 = vpack.c.b16 %v8590, %v8589
        %v8597 = vpack.c.b16 %v8592, %v8591
        %v8598 = vpack.c.b16 %v8594, %v8593
        %v8607 = vunpack.c.l.b16 %v8579
        %v8608 = vunpack.c.l.b16 %v8580
        %v8609 = vunpack.c.l.b16 %v8581
        %v8610 = vunpack.c.l.b16 %v8582
        %v8611 = vunpack.c.l.b16 %v8583
        %v8612 = vunpack.c.l.b16 %v8584
        %v8613 = vunpack.c.l.b16 %v8585
        %v8614 = vunpack.c.l.b16 %v8586
        %v8615 = vpack.c.b16 %v8608, %v8607
        %v8616 = vpack.c.b16 %v8610, %v8609
        %v8617 = vpack.c.b16 %v8612, %v8611
        %v8618 = vpack.c.b16 %v8614, %v8613
        %v8624 = vsel %vm7755, %v8595, 0
        %v8627 = vsel %vm7755, %v8596, 0
        %v8630 = vsel %vm7755, %v8597, 0
        %v8633 = vsel %vm7755, %v8598, 0
        %8635 = vmatprep.subr.bf16.mxu0 0
        %8636 = vmatpush1.bf16.msra.mxu0 0
        %8637 = vmatprep.subr.bf16.mxu0 0
        %8638 = vmatpush1.bf16.msra.mxu0 0
        %8639 = vmatprep.subr.bf16.mxu0 0
        %8640 = vmatpush1.bf16.msra.mxu0 0
        %8641 = vmatprep.subr.bf16.mxu0 0
        %8642 = vmatpush1.bf16.msra.mxu0 0
        %8643 = vmatprep.subr.bf16.mxu0 0
        %8644 = vmatpush1.bf16.msra.mxu0 %v8618
        %8645 = vmatprep.subr.bf16.mxu0 0
        %8646 = vmatpush1.bf16.msra.mxu0 %v8617
        %8647 = vmatprep.subr.bf16.mxu0 0
        %8648 = vmatpush1.bf16.msra.mxu0 %v8616
        %8649 = vmatprep.subr.bf16.mxu0 0
        %8650 = vmatpush1.bf16.msra.mxu0 %v8615
        %8651 = vmatprep.subr.bf16.mxu0 0
        %8652 = vmatpush2.bf16.msra.mxu0 0
        %8653 = vmatprep.subr.bf16.mxu0 0
        %8654 = vmatpush2.bf16.msra.mxu0 0
        %8655 = vmatprep.subr.bf16.mxu0 0
        %8656 = vmatpush2.bf16.msra.mxu0 0
        %8657 = vmatprep.subr.bf16.mxu0 0
        %8658 = vmatpush2.bf16.msra.mxu0 0
        %8659 = vmatprep.subr.bf16.mxu0 0
        %8660 = vmatpush2.bf16.msra.mxu0 0
        %8661 = vmatprep.subr.bf16.mxu0 0
        %8662 = vmatpush2.bf16.msra.mxu0 0
        %8663 = vmatprep.subr.bf16.mxu0 0
        %8664 = vmatpush2.bf16.msra.mxu0 0
        %8665 = vmatprep.subr.bf16.mxu0 0
        %8666 = vmatpush2.bf16.msra.mxu0 0
        %8667 = vmatprep.mubr.bf16.mxu0 0
        %8668 = vmatmul.mubr.bf16.gmra.mxu0 %v8624
        %v8669 = vpop.f32.mrf.mxu0
        %v8670 = vadd.f32 0.0, %v8669
        %v8671 = vpop.f32.mrf.mxu0
        %v8672 = vpop.f32.mrf.mxu0
        %v8673 = vadd.f32 0.0, %v8672
        %v8674 = vpop.f32.mrf.mxu0
        %8675 = vmatprep.mubr.bf16.mxu0 0
        %8676 = vmatmul.mubr.bf16.gmra.mxu0 %v8627
        %v8677 = vpop.f32.mrf.mxu0
        %v8678 = vadd.f32 0.0, %v8677
        %v8679 = vpop.f32.mrf.mxu0
        %v8680 = vpop.f32.mrf.mxu0
        %v8681 = vadd.f32 0.0, %v8680
        %v8682 = vpop.f32.mrf.mxu0
        %8683 = vmatprep.mubr.bf16.mxu0 0
        %8684 = vmatmul.mubr.bf16.gmra.mxu0 %v8630
        %v8685 = vpop.f32.mrf.mxu0
        %v8686 = vadd.f32 0.0, %v8685
        %v8687 = vpop.f32.mrf.mxu0
        %v8688 = vpop.f32.mrf.mxu0
        %v8689 = vadd.f32 0.0, %v8688
        %v8690 = vpop.f32.mrf.mxu0
        %8691 = vmatprep.mubr.bf16.mxu0 0
        %8692 = vmatmul.mubr.bf16.gmra.mxu0 %v8633
        %v8693 = vpop.f32.mrf.mxu0
        %v8694 = vadd.f32 0.0, %v8693
        %v8695 = vpop.f32.mrf.mxu0
        %v8696 = vpop.f32.mrf.mxu0
        %v8697 = vadd.f32 0.0, %v8696
        %v8698 = vpop.f32.mrf.mxu0
        %8699 = vdwg.mxu0
        %v8700 = vadd.f32 %v8450, %v8670
        %v8701 = vadd.f32 %v8451, %v8673
        %v8702 = vadd.f32 %v8452, %v8678
        %v8703 = vadd.f32 %v8453, %v8681
        %v8704 = vadd.f32 %v8454, %v8686
        %v8705 = vadd.f32 %v8455, %v8689
        %v8706 = vadd.f32 %v8456, %v8694
        %v8707 = vadd.f32 %v8457, %v8697
        %s8708 = scalar_lea.vmem %s5, 128
        %v8709 = vld [vmem:[%s8708] sm:$0xf]
        %v8710 = vld [vmem:[%s8708 + $0x4] sm:$0xf]
        %v8711 = vld [vmem:[%s8708 + $0x8] sm:$0xf]
        %v8712 = vld [vmem:[%s8708 + $0xc] sm:$0xf]
        %v8713 = vld [vmem:[%s8708 + $0x10] sm:$0xf]
        %v8714 = vld [vmem:[%s8708 + $0x14] sm:$0xf]
        %v8715 = vld [vmem:[%s8708 + $0x18] sm:$0xf]
        %v8716 = vld [vmem:[%s8708 + $0x1c] sm:$0xf]
        %v8725 = vunpack.c.l.b16 %v8459
        %v8726 = vunpack.c.l.b16 %v8461
        %v8727 = vunpack.c.l.b16 %v8463
        %v8728 = vunpack.c.l.b16 %v8465
        %v8729 = vunpack.c.l.b16 %v8467
        %v8730 = vunpack.c.l.b16 %v8469
        %v8731 = vunpack.c.l.b16 %v8471
        %v8732 = vunpack.c.l.b16 %v8473
        %v8733 = vpack.c.b16 %v8726, %v8725
        %v8734 = vpack.c.b16 %v8728, %v8727
        %v8735 = vpack.c.b16 %v8730, %v8729
        %v8736 = vpack.c.b16 %v8732, %v8731
        %v8745 = vunpack.c.l.b16 %v8709
        %v8746 = vunpack.c.l.b16 %v8710
        %v8747 = vunpack.c.l.b16 %v8711
        %v8748 = vunpack.c.l.b16 %v8712
        %v8749 = vunpack.c.l.b16 %v8713
        %v8750 = vunpack.c.l.b16 %v8714
        %v8751 = vunpack.c.l.b16 %v8715
        %v8752 = vunpack.c.l.b16 %v8716
        %v8753 = vpack.c.b16 %v8746, %v8745
        %v8754 = vpack.c.b16 %v8748, %v8747
        %v8755 = vpack.c.b16 %v8750, %v8749
        %v8756 = vpack.c.b16 %v8752, %v8751
        %v8762 = vsel %vm7755, %v8733, 0
        %v8765 = vsel %vm7755, %v8734, 0
        %v8768 = vsel %vm7755, %v8735, 0
        %v8771 = vsel %vm7755, %v8736, 0
        %8773 = vmatprep.subr.bf16.mxu0 0
        %8774 = vmatpush1.bf16.msra.mxu0 0
        %8775 = vmatprep.subr.bf16.mxu0 0
        %8776 = vmatpush1.bf16.msra.mxu0 0
        %8777 = vmatprep.subr.bf16.mxu0 0
        %8778 = vmatpush1.bf16.msra.mxu0 0
        %8779 = vmatprep.subr.bf16.mxu0 0
        %8780 = vmatpush1.bf16.msra.mxu0 0
        %8781 = vmatprep.subr.bf16.mxu0 0
        %8782 = vmatpush1.bf16.msra.mxu0 %v8756
        %8783 = vmatprep.subr.bf16.mxu0 0
        %8784 = vmatpush1.bf16.msra.mxu0 %v8755
        %8785 = vmatprep.subr.bf16.mxu0 0
        %8786 = vmatpush1.bf16.msra.mxu0 %v8754
        %8787 = vmatprep.subr.bf16.mxu0 0
        %8788 = vmatpush1.bf16.msra.mxu0 %v8753
        %8789 = vmatprep.subr.bf16.mxu0 0
        %8790 = vmatpush2.bf16.msra.mxu0 0
        %8791 = vmatprep.subr.bf16.mxu0 0
        %8792 = vmatpush2.bf16.msra.mxu0 0
        %8793 = vmatprep.subr.bf16.mxu0 0
        %8794 = vmatpush2.bf16.msra.mxu0 0
        %8795 = vmatprep.subr.bf16.mxu0 0
        %8796 = vmatpush2.bf16.msra.mxu0 0
        %8797 = vmatprep.subr.bf16.mxu0 0
        %8798 = vmatpush2.bf16.msra.mxu0 0
        %8799 = vmatprep.subr.bf16.mxu0 0
        %8800 = vmatpush2.bf16.msra.mxu0 0
        %8801 = vmatprep.subr.bf16.mxu0 0
        %8802 = vmatpush2.bf16.msra.mxu0 0
        %8803 = vmatprep.subr.bf16.mxu0 0
        %8804 = vmatpush2.bf16.msra.mxu0 0
        %8805 = vmatprep.mubr.bf16.mxu0 0
        %8806 = vmatmul.mubr.bf16.gmra.mxu0 %v8762
        %v8807 = vpop.f32.mrf.mxu0
        %v8808 = vadd.f32 0.0, %v8807
        %v8809 = vpop.f32.mrf.mxu0
        %v8810 = vpop.f32.mrf.mxu0
        %v8811 = vadd.f32 0.0, %v8810
        %v8812 = vpop.f32.mrf.mxu0
        %8813 = vmatprep.mubr.bf16.mxu0 0
        %8814 = vmatmul.mubr.bf16.gmra.mxu0 %v8765
        %v8815 = vpop.f32.mrf.mxu0
        %v8816 = vadd.f32 0.0, %v8815
        %v8817 = vpop.f32.mrf.mxu0
        %v8818 = vpop.f32.mrf.mxu0
        %v8819 = vadd.f32 0.0, %v8818
        %v8820 = vpop.f32.mrf.mxu0
        %8821 = vmatprep.mubr.bf16.mxu0 0
        %8822 = vmatmul.mubr.bf16.gmra.mxu0 %v8768
        %v8823 = vpop.f32.mrf.mxu0
        %v8824 = vadd.f32 0.0, %v8823
        %v8825 = vpop.f32.mrf.mxu0
        %v8826 = vpop.f32.mrf.mxu0
        %v8827 = vadd.f32 0.0, %v8826
        %v8828 = vpop.f32.mrf.mxu0
        %8829 = vmatprep.mubr.bf16.mxu0 0
        %8830 = vmatmul.mubr.bf16.gmra.mxu0 %v8771
        %v8831 = vpop.f32.mrf.mxu0
        %v8832 = vadd.f32 0.0, %v8831
        %v8833 = vpop.f32.mrf.mxu0
        %v8834 = vpop.f32.mrf.mxu0
        %v8835 = vadd.f32 0.0, %v8834
        %v8836 = vpop.f32.mrf.mxu0
        %8837 = vdwg.mxu0
        %v8838 = vadd.f32 %v8700, %v8808
        %v8839 = vadd.f32 %v8701, %v8811
        %v8840 = vadd.f32 %v8702, %v8816
        %v8841 = vadd.f32 %v8703, %v8819
        %v8842 = vadd.f32 %v8704, %v8824
        %v8843 = vadd.f32 %v8705, %v8827
        %v8844 = vadd.f32 %v8706, %v8832
        %v8845 = vadd.f32 %v8707, %v8835
        %v8846 = vld [vmem:[%s7819 + $0x4] sm:$0xf]
        %v8847 = vld [vmem:[%s7819 + $0x8] sm:$0x1]
        %v8848 = vld [vmem:[%s7819 + $0x10] sm:$0xf]
        %v8849 = vld [vmem:[%s7819 + $0x14] sm:$0x1]
        %v8850 = vld [vmem:[%s7819 + $0x1c] sm:$0xf]
        %v8851 = vld [vmem:[%s7819 + $0x20] sm:$0x1]
        %v8852 = vld [vmem:[%s7819 + $0x28] sm:$0xf]
        %v8853 = vld [vmem:[%s7819 + $0x2c] sm:$0x1]
        %v8854 = vld [vmem:[%s7819 + $0x34] sm:$0xf]
        %v8855 = vld [vmem:[%s7819 + $0x38] sm:$0x1]
        %v8856 = vld [vmem:[%s7819 + $0x40] sm:$0xf]
        %v8857 = vld [vmem:[%s7819 + $0x44] sm:$0x1]
        %v8858 = vld [vmem:[%s7819 + $0x4c] sm:$0xf]
        %v8859 = vld [vmem:[%s7819 + $0x50] sm:$0x1]
        %v8860 = vld [vmem:[%s7819 + $0x58] sm:$0xf]
        %v8861 = vld [vmem:[%s7819 + $0x5c] sm:$0x1]
        %v8863 = vshrl.u32 %v8846, 16
        %v8865 = vrot.slane %v8863, 4
        %v8866 = vshll.u32 %v8846, 16
        %v8868 = vrot.slane %v8866, 5
        %v8869 = vor.u32 %v8865, %v8868
        %v8870 = vrot.slane %v8869, 4
        %v8872 = vshll.u32 %v8847, 16
        %v8874 = vrot.slane %v8872, 5
        %v8875 = vsel %vm3412, %v8870, %v8874
        %v8877 = vshrl.u32 %v8848, 16
        %v8879 = vrot.slane %v8877, 4
        %v8880 = vshll.u32 %v8848, 16
        %v8882 = vrot.slane %v8880, 5
        %v8883 = vor.u32 %v8879, %v8882
        %v8884 = vrot.slane %v8883, 4
        %v8886 = vshll.u32 %v8849, 16
        %v8888 = vrot.slane %v8886, 5
        %v8889 = vsel %vm3412, %v8884, %v8888
        %v8891 = vshrl.u32 %v8850, 16
        %v8893 = vrot.slane %v8891, 4
        %v8894 = vshll.u32 %v8850, 16
        %v8896 = vrot.slane %v8894, 5
        %v8897 = vor.u32 %v8893, %v8896
        %v8898 = vrot.slane %v8897, 4
        %v8900 = vshll.u32 %v8851, 16
        %v8902 = vrot.slane %v8900, 5
        %v8903 = vsel %vm3412, %v8898, %v8902
        %v8905 = vshrl.u32 %v8852, 16
        %v8907 = vrot.slane %v8905, 4
        %v8908 = vshll.u32 %v8852, 16
        %v8910 = vrot.slane %v8908, 5
        %v8911 = vor.u32 %v8907, %v8910
        %v8912 = vrot.slane %v8911, 4
        %v8914 = vshll.u32 %v8853, 16
        %v8916 = vrot.slane %v8914, 5
        %v8917 = vsel %vm3412, %v8912, %v8916
        %v8919 = vshrl.u32 %v8854, 16
        %v8921 = vrot.slane %v8919, 4
        %v8922 = vshll.u32 %v8854, 16
        %v8924 = vrot.slane %v8922, 5
        %v8925 = vor.u32 %v8921, %v8924
        %v8926 = vrot.slane %v8925, 4
        %v8928 = vshll.u32 %v8855, 16
        %v8930 = vrot.slane %v8928, 5
        %v8931 = vsel %vm3412, %v8926, %v8930
        %v8933 = vshrl.u32 %v8856, 16
        %v8935 = vrot.slane %v8933, 4
        %v8936 = vshll.u32 %v8856, 16
        %v8938 = vrot.slane %v8936, 5
        %v8939 = vor.u32 %v8935, %v8938
        %v8940 = vrot.slane %v8939, 4
        %v8942 = vshll.u32 %v8857, 16
        %v8944 = vrot.slane %v8942, 5
        %v8945 = vsel %vm3412, %v8940, %v8944
        %v8947 = vshrl.u32 %v8858, 16
        %v8949 = vrot.slane %v8947, 4
        %v8950 = vshll.u32 %v8858, 16
        %v8952 = vrot.slane %v8950, 5
        %v8953 = vor.u32 %v8949, %v8952
        %v8954 = vrot.slane %v8953, 4
        %v8956 = vshll.u32 %v8859, 16
        %v8958 = vrot.slane %v8956, 5
        %v8959 = vsel %vm3412, %v8954, %v8958
        %v8961 = vshrl.u32 %v8860, 16
        %v8963 = vrot.slane %v8961, 4
        %v8964 = vshll.u32 %v8860, 16
        %v8966 = vrot.slane %v8964, 5
        %v8967 = vor.u32 %v8963, %v8966
        %v8968 = vrot.slane %v8967, 4
        %v8970 = vshll.u32 %v8861, 16
        %v8972 = vrot.slane %v8970, 5
        %v8973 = vsel %vm3412, %v8968, %v8972
        %s8974 = scalar_lea.vmem %s5, 160
        %v8975 = vld [vmem:[%s8974] sm:$0xf]
        %v8976 = vld [vmem:[%s8974 + $0x4] sm:$0xf]
        %v8977 = vld [vmem:[%s8974 + $0x8] sm:$0xf]
        %v8978 = vld [vmem:[%s8974 + $0xc] sm:$0xf]
        %v8979 = vld [vmem:[%s8974 + $0x10] sm:$0xf]
        %v8980 = vld [vmem:[%s8974 + $0x14] sm:$0xf]
        %v8981 = vld [vmem:[%s8974 + $0x18] sm:$0xf]
        %v8982 = vld [vmem:[%s8974 + $0x1c] sm:$0xf]
        %v8983 = vunpack.c.l.b16 %v8875
        %v8984 = vunpack.c.l.b16 %v8889
        %v8985 = vunpack.c.l.b16 %v8903
        %v8986 = vunpack.c.l.b16 %v8917
        %v8987 = vunpack.c.l.b16 %v8931
        %v8988 = vunpack.c.l.b16 %v8945
        %v8989 = vunpack.c.l.b16 %v8959
        %v8990 = vunpack.c.l.b16 %v8973
        %v8991 = vpack.c.b16 %v8984, %v8983
        %v8992 = vpack.c.b16 %v8986, %v8985
        %v8993 = vpack.c.b16 %v8988, %v8987
        %v8994 = vpack.c.b16 %v8990, %v8989
        %v9003 = vunpack.c.l.b16 %v8975
        %v9004 = vunpack.c.l.b16 %v8976
        %v9005 = vunpack.c.l.b16 %v8977
        %v9006 = vunpack.c.l.b16 %v8978
        %v9007 = vunpack.c.l.b16 %v8979
        %v9008 = vunpack.c.l.b16 %v8980
        %v9009 = vunpack.c.l.b16 %v8981
        %v9010 = vunpack.c.l.b16 %v8982
        %v9011 = vpack.c.b16 %v9004, %v9003
        %v9012 = vpack.c.b16 %v9006, %v9005
        %v9013 = vpack.c.b16 %v9008, %v9007
        %v9014 = vpack.c.b16 %v9010, %v9009
        %v9020 = vsel %vm7755, %v8991, 0
        %v9023 = vsel %vm7755, %v8992, 0
        %v9026 = vsel %vm7755, %v8993, 0
        %v9029 = vsel %vm7755, %v8994, 0
        %9031 = vmatprep.subr.bf16.mxu0 0
        %9032 = vmatpush1.bf16.msra.mxu0 0
        %9033 = vmatprep.subr.bf16.mxu0 0
        %9034 = vmatpush1.bf16.msra.mxu0 0
        %9035 = vmatprep.subr.bf16.mxu0 0
        %9036 = vmatpush1.bf16.msra.mxu0 0
        %9037 = vmatprep.subr.bf16.mxu0 0
        %9038 = vmatpush1.bf16.msra.mxu0 0
        %9039 = vmatprep.subr.bf16.mxu0 0
        %9040 = vmatpush1.bf16.msra.mxu0 %v9014
        %9041 = vmatprep.subr.bf16.mxu0 0
        %9042 = vmatpush1.bf16.msra.mxu0 %v9013
        %9043 = vmatprep.subr.bf16.mxu0 0
        %9044 = vmatpush1.bf16.msra.mxu0 %v9012
        %9045 = vmatprep.subr.bf16.mxu0 0
        %9046 = vmatpush1.bf16.msra.mxu0 %v9011
        %9047 = vmatprep.subr.bf16.mxu0 0
        %9048 = vmatpush2.bf16.msra.mxu0 0
        %9049 = vmatprep.subr.bf16.mxu0 0
        %9050 = vmatpush2.bf16.msra.mxu0 0
        %9051 = vmatprep.subr.bf16.mxu0 0
        %9052 = vmatpush2.bf16.msra.mxu0 0
        %9053 = vmatprep.subr.bf16.mxu0 0
        %9054 = vmatpush2.bf16.msra.mxu0 0
        %9055 = vmatprep.subr.bf16.mxu0 0
        %9056 = vmatpush2.bf16.msra.mxu0 0
        %9057 = vmatprep.subr.bf16.mxu0 0
        %9058 = vmatpush2.bf16.msra.mxu0 0
        %9059 = vmatprep.subr.bf16.mxu0 0
        %9060 = vmatpush2.bf16.msra.mxu0 0
        %9061 = vmatprep.subr.bf16.mxu0 0
        %9062 = vmatpush2.bf16.msra.mxu0 0
        %9063 = vmatprep.mubr.bf16.mxu0 0
        %9064 = vmatmul.mubr.bf16.gmra.mxu0 %v9020
        %v9065 = vpop.f32.mrf.mxu0
        %v9066 = vadd.f32 0.0, %v9065
        %v9067 = vpop.f32.mrf.mxu0
        %v9068 = vpop.f32.mrf.mxu0
        %v9069 = vadd.f32 0.0, %v9068
        %v9070 = vpop.f32.mrf.mxu0
        %9071 = vmatprep.mubr.bf16.mxu0 0
        %9072 = vmatmul.mubr.bf16.gmra.mxu0 %v9023
        %v9073 = vpop.f32.mrf.mxu0
        %v9074 = vadd.f32 0.0, %v9073
        %v9075 = vpop.f32.mrf.mxu0
        %v9076 = vpop.f32.mrf.mxu0
        %v9077 = vadd.f32 0.0, %v9076
        %v9078 = vpop.f32.mrf.mxu0
        %9079 = vmatprep.mubr.bf16.mxu0 0
        %9080 = vmatmul.mubr.bf16.gmra.mxu0 %v9026
        %v9081 = vpop.f32.mrf.mxu0
        %v9082 = vadd.f32 0.0, %v9081
        %v9083 = vpop.f32.mrf.mxu0
        %v9084 = vpop.f32.mrf.mxu0
        %v9085 = vadd.f32 0.0, %v9084
        %v9086 = vpop.f32.mrf.mxu0
        %9087 = vmatprep.mubr.bf16.mxu0 0
        %9088 = vmatmul.mubr.bf16.gmra.mxu0 %v9029
        %v9089 = vpop.f32.mrf.mxu0
        %v9090 = vadd.f32 0.0, %v9089
        %v9091 = vpop.f32.mrf.mxu0
        %v9092 = vpop.f32.mrf.mxu0
        %v9093 = vadd.f32 0.0, %v9092
        %v9094 = vpop.f32.mrf.mxu0
        %9095 = vdwg.mxu0
        %v9096 = vadd.f32 %v8838, %v9066
        %v9097 = vadd.f32 %v8839, %v9069
        %v9098 = vadd.f32 %v8840, %v9074
        %v9099 = vadd.f32 %v8841, %v9077
        %v9100 = vadd.f32 %v8842, %v9082
        %v9101 = vadd.f32 %v8843, %v9085
        %v9102 = vadd.f32 %v8844, %v9090
        %v9103 = vadd.f32 %v8845, %v9093
        %s9104 = scalar_lea.vmem [#allocation3], 108
        %v9105 = vld [vmem:[%s9104] sm:$0x8]
        %v9106 = vld [vmem:[%s9104 + $0x4] sm:$0xf]
        %v9107 = vld [vmem:[%s9104 + $0xc] sm:$0x8]
        %v9108 = vld [vmem:[%s9104 + $0x10] sm:$0xf]
        %v9109 = vld [vmem:[%s9104 + $0x18] sm:$0x8]
        %v9110 = vld [vmem:[%s9104 + $0x1c] sm:$0xf]
        %v9111 = vld [vmem:[%s9104 + $0x24] sm:$0x8]
        %v9112 = vld [vmem:[%s9104 + $0x28] sm:$0xf]
        %v9113 = vld [vmem:[%s9104 + $0x30] sm:$0x8]
        %v9114 = vld [vmem:[%s9104 + $0x34] sm:$0xf]
        %v9115 = vld [vmem:[%s9104 + $0x3c] sm:$0x8]
        %v9116 = vld [vmem:[%s9104 + $0x40] sm:$0xf]
        %v9117 = vld [vmem:[%s9104 + $0x48] sm:$0x8]
        %v9118 = vld [vmem:[%s9104 + $0x4c] sm:$0xf]
        %v9119 = vld [vmem:[%s9104 + $0x54] sm:$0x8]
        %v9120 = vld [vmem:[%s9104 + $0x58] sm:$0xf]
        %v9122 = vshrl.u32 %v9105, 16
        %v9124 = vrot.slane %v9122, 7
        %v9125 = vrot.slane %v9124, 4
        %v9127 = vshrl.u32 %v9106, 16
        %v9129 = vrot.slane %v9127, 7
        %v9130 = vshll.u32 %v9106, 16
        %v9132 = vor.u32 %v9129, %v9130
        %v9133 = vsel %vm2430, %v9125, %v9132
        %v9135 = vshrl.u32 %v9107, 16
        %v9137 = vrot.slane %v9135, 7
        %v9138 = vrot.slane %v9137, 4
        %v9140 = vshrl.u32 %v9108, 16
        %v9142 = vrot.slane %v9140, 7
        %v9143 = vshll.u32 %v9108, 16
        %v9145 = vor.u32 %v9142, %v9143
        %v9146 = vsel %vm2430, %v9138, %v9145
        %v9148 = vshrl.u32 %v9109, 16
        %v9150 = vrot.slane %v9148, 7
        %v9151 = vrot.slane %v9150, 4
        %v9153 = vshrl.u32 %v9110, 16
        %v9155 = vrot.slane %v9153, 7
        %v9156 = vshll.u32 %v9110, 16
        %v9158 = vor.u32 %v9155, %v9156
        %v9159 = vsel %vm2430, %v9151, %v9158
        %v9161 = vshrl.u32 %v9111, 16
        %v9163 = vrot.slane %v9161, 7
        %v9164 = vrot.slane %v9163, 4
        %v9166 = vshrl.u32 %v9112, 16
        %v9168 = vrot.slane %v9166, 7
        %v9169 = vshll.u32 %v9112, 16
        %v9171 = vor.u32 %v9168, %v9169
        %v9172 = vsel %vm2430, %v9164, %v9171
        %v9174 = vshrl.u32 %v9113, 16
        %v9176 = vrot.slane %v9174, 7
        %v9177 = vrot.slane %v9176, 4
        %v9179 = vshrl.u32 %v9114, 16
        %v9181 = vrot.slane %v9179, 7
        %v9182 = vshll.u32 %v9114, 16
        %v9184 = vor.u32 %v9181, %v9182
        %v9185 = vsel %vm2430, %v9177, %v9184
        %v9187 = vshrl.u32 %v9115, 16
        %v9189 = vrot.slane %v9187, 7
        %v9190 = vrot.slane %v9189, 4
        %v9192 = vshrl.u32 %v9116, 16
        %v9194 = vrot.slane %v9192, 7
        %v9195 = vshll.u32 %v9116, 16
        %v9197 = vor.u32 %v9194, %v9195
        %v9198 = vsel %vm2430, %v9190, %v9197
        %v9200 = vshrl.u32 %v9117, 16
        %v9202 = vrot.slane %v9200, 7
        %v9203 = vrot.slane %v9202, 4
        %v9205 = vshrl.u32 %v9118, 16
        %v9207 = vrot.slane %v9205, 7
        %v9208 = vshll.u32 %v9118, 16
        %v9210 = vor.u32 %v9207, %v9208
        %v9211 = vsel %vm2430, %v9203, %v9210
        %v9213 = vshrl.u32 %v9119, 16
        %v9215 = vrot.slane %v9213, 7
        %v9216 = vrot.slane %v9215, 4
        %v9218 = vshrl.u32 %v9120, 16
        %v9220 = vrot.slane %v9218, 7
        %v9221 = vshll.u32 %v9120, 16
        %v9223 = vor.u32 %v9220, %v9221
        %v9224 = vsel %vm2430, %v9216, %v9223
        %s9225 = scalar_lea.vmem %s5, 192
        %v9226 = vld [vmem:[%s9225] sm:$0xf]
        %v9227 = vld [vmem:[%s9225 + $0x4] sm:$0xf]
        %v9228 = vld [vmem:[%s9225 + $0x8] sm:$0xf]
        %v9229 = vld [vmem:[%s9225 + $0xc] sm:$0xf]
        %v9230 = vld [vmem:[%s9225 + $0x10] sm:$0xf]
        %v9231 = vld [vmem:[%s9225 + $0x14] sm:$0xf]
        %v9232 = vld [vmem:[%s9225 + $0x18] sm:$0xf]
        %v9233 = vld [vmem:[%s9225 + $0x1c] sm:$0xf]
        %v9234 = vunpack.c.l.b16 %v9133
        %v9235 = vunpack.c.l.b16 %v9146
        %v9236 = vunpack.c.l.b16 %v9159
        %v9237 = vunpack.c.l.b16 %v9172
        %v9238 = vunpack.c.l.b16 %v9185
        %v9239 = vunpack.c.l.b16 %v9198
        %v9240 = vunpack.c.l.b16 %v9211
        %v9241 = vunpack.c.l.b16 %v9224
        %v9242 = vpack.c.b16 %v9235, %v9234
        %v9243 = vpack.c.b16 %v9237, %v9236
        %v9244 = vpack.c.b16 %v9239, %v9238
        %v9245 = vpack.c.b16 %v9241, %v9240
        %v9254 = vunpack.c.l.b16 %v9226
        %v9255 = vunpack.c.l.b16 %v9227
        %v9256 = vunpack.c.l.b16 %v9228
        %v9257 = vunpack.c.l.b16 %v9229
        %v9258 = vunpack.c.l.b16 %v9230
        %v9259 = vunpack.c.l.b16 %v9231
        %v9260 = vunpack.c.l.b16 %v9232
        %v9261 = vunpack.c.l.b16 %v9233
        %v9262 = vpack.c.b16 %v9255, %v9254
        %v9263 = vpack.c.b16 %v9257, %v9256
        %v9264 = vpack.c.b16 %v9259, %v9258
        %v9265 = vpack.c.b16 %v9261, %v9260
        %v9271 = vsel %vm7755, %v9242, 0
        %v9274 = vsel %vm7755, %v9243, 0
        %v9277 = vsel %vm7755, %v9244, 0
        %v9280 = vsel %vm7755, %v9245, 0
        %9282 = vmatprep.subr.bf16.mxu0 0
        %9283 = vmatpush1.bf16.msra.mxu0 0
        %9284 = vmatprep.subr.bf16.mxu0 0
        %9285 = vmatpush1.bf16.msra.mxu0 0
        %9286 = vmatprep.subr.bf16.mxu0 0
        %9287 = vmatpush1.bf16.msra.mxu0 0
        %9288 = vmatprep.subr.bf16.mxu0 0
        %9289 = vmatpush1.bf16.msra.mxu0 0
        %9290 = vmatprep.subr.bf16.mxu0 0
        %9291 = vmatpush1.bf16.msra.mxu0 %v9265
        %9292 = vmatprep.subr.bf16.mxu0 0
        %9293 = vmatpush1.bf16.msra.mxu0 %v9264
        %9294 = vmatprep.subr.bf16.mxu0 0
        %9295 = vmatpush1.bf16.msra.mxu0 %v9263
        %9296 = vmatprep.subr.bf16.mxu0 0
        %9297 = vmatpush1.bf16.msra.mxu0 %v9262
        %9298 = vmatprep.subr.bf16.mxu0 0
        %9299 = vmatpush2.bf16.msra.mxu0 0
        %9300 = vmatprep.subr.bf16.mxu0 0
        %9301 = vmatpush2.bf16.msra.mxu0 0
        %9302 = vmatprep.subr.bf16.mxu0 0
        %9303 = vmatpush2.bf16.msra.mxu0 0
        %9304 = vmatprep.subr.bf16.mxu0 0
        %9305 = vmatpush2.bf16.msra.mxu0 0
        %9306 = vmatprep.subr.bf16.mxu0 0
        %9307 = vmatpush2.bf16.msra.mxu0 0
        %9308 = vmatprep.subr.bf16.mxu0 0
        %9309 = vmatpush2.bf16.msra.mxu0 0
        %9310 = vmatprep.subr.bf16.mxu0 0
        %9311 = vmatpush2.bf16.msra.mxu0 0
        %9312 = vmatprep.subr.bf16.mxu0 0
        %9313 = vmatpush2.bf16.msra.mxu0 0
        %9314 = vmatprep.mubr.bf16.mxu0 0
        %9315 = vmatmul.mubr.bf16.gmra.mxu0 %v9271
        %v9316 = vpop.f32.mrf.mxu0
        %v9317 = vadd.f32 0.0, %v9316
        %v9318 = vpop.f32.mrf.mxu0
        %v9319 = vpop.f32.mrf.mxu0
        %v9320 = vadd.f32 0.0, %v9319
        %v9321 = vpop.f32.mrf.mxu0
        %9322 = vmatprep.mubr.bf16.mxu0 0
        %9323 = vmatmul.mubr.bf16.gmra.mxu0 %v9274
        %v9324 = vpop.f32.mrf.mxu0
        %v9325 = vadd.f32 0.0, %v9324
        %v9326 = vpop.f32.mrf.mxu0
        %v9327 = vpop.f32.mrf.mxu0
        %v9328 = vadd.f32 0.0, %v9327
        %v9329 = vpop.f32.mrf.mxu0
        %9330 = vmatprep.mubr.bf16.mxu0 0
        %9331 = vmatmul.mubr.bf16.gmra.mxu0 %v9277
        %v9332 = vpop.f32.mrf.mxu0
        %v9333 = vadd.f32 0.0, %v9332
        %v9334 = vpop.f32.mrf.mxu0
        %v9335 = vpop.f32.mrf.mxu0
        %v9336 = vadd.f32 0.0, %v9335
        %v9337 = vpop.f32.mrf.mxu0
        %9338 = vmatprep.mubr.bf16.mxu0 0
        %9339 = vmatmul.mubr.bf16.gmra.mxu0 %v9280
        %v9340 = vpop.f32.mrf.mxu0
        %v9341 = vadd.f32 0.0, %v9340
        %v9342 = vpop.f32.mrf.mxu0
        %v9343 = vpop.f32.mrf.mxu0
        %v9344 = vadd.f32 0.0, %v9343
        %v9345 = vpop.f32.mrf.mxu0
        %9346 = vdwg.mxu0
        %v9347 = vadd.f32 %v9096, %v9317
        %v9348 = vadd.f32 %v9097, %v9320
        %v9349 = vadd.f32 %v9098, %v9325
        %v9350 = vadd.f32 %v9099, %v9328
        %v9351 = vadd.f32 %v9100, %v9333
        %v9352 = vadd.f32 %v9101, %v9336
        %v9353 = vadd.f32 %v9102, %v9341
        %v9354 = vadd.f32 %v9103, %v9344
        %s9355 = scalar_lea.vmem %s5, 224
        %v9356 = vld [vmem:[%s9355] sm:$0xf]
        %v9357 = vld [vmem:[%s9355 + $0x4] sm:$0xf]
        %v9358 = vld [vmem:[%s9355 + $0x8] sm:$0xf]
        %v9359 = vld [vmem:[%s9355 + $0xc] sm:$0xf]
        %v9360 = vld [vmem:[%s9355 + $0x10] sm:$0xf]
        %v9361 = vld [vmem:[%s9355 + $0x14] sm:$0xf]
        %v9362 = vld [vmem:[%s9355 + $0x18] sm:$0xf]
        %v9363 = vld [vmem:[%s9355 + $0x1c] sm:$0xf]
        %v9372 = vunpack.c.l.b16 %v9106
        %v9373 = vunpack.c.l.b16 %v9108
        %v9374 = vunpack.c.l.b16 %v9110
        %v9375 = vunpack.c.l.b16 %v9112
        %v9376 = vunpack.c.l.b16 %v9114
        %v9377 = vunpack.c.l.b16 %v9116
        %v9378 = vunpack.c.l.b16 %v9118
        %v9379 = vunpack.c.l.b16 %v9120
        %v9380 = vpack.c.b16 %v9373, %v9372
        %v9381 = vpack.c.b16 %v9375, %v9374
        %v9382 = vpack.c.b16 %v9377, %v9376
        %v9383 = vpack.c.b16 %v9379, %v9378
        %v9392 = vunpack.c.l.b16 %v9356
        %v9393 = vunpack.c.l.b16 %v9357
        %v9394 = vunpack.c.l.b16 %v9358
        %v9395 = vunpack.c.l.b16 %v9359
        %v9396 = vunpack.c.l.b16 %v9360
        %v9397 = vunpack.c.l.b16 %v9361
        %v9398 = vunpack.c.l.b16 %v9362
        %v9399 = vunpack.c.l.b16 %v9363
        %v9400 = vpack.c.b16 %v9393, %v9392
        %v9401 = vpack.c.b16 %v9395, %v9394
        %v9402 = vpack.c.b16 %v9397, %v9396
        %v9403 = vpack.c.b16 %v9399, %v9398
        %v9409 = vsel %vm7755, %v9380, 0
        %v9412 = vsel %vm7755, %v9381, 0
        %v9415 = vsel %vm7755, %v9382, 0
        %v9418 = vsel %vm7755, %v9383, 0
        %9420 = vmatprep.subr.bf16.mxu0 0
        %9421 = vmatpush1.bf16.msra.mxu0 0
        %9422 = vmatprep.subr.bf16.mxu0 0
        %9423 = vmatpush1.bf16.msra.mxu0 0
        %9424 = vmatprep.subr.bf16.mxu0 0
        %9425 = vmatpush1.bf16.msra.mxu0 0
        %9426 = vmatprep.subr.bf16.mxu0 0
        %9427 = vmatpush1.bf16.msra.mxu0 0
        %9428 = vmatprep.subr.bf16.mxu0 0
        %9429 = vmatpush1.bf16.msra.mxu0 %v9403
        %9430 = vmatprep.subr.bf16.mxu0 0
        %9431 = vmatpush1.bf16.msra.mxu0 %v9402
        %9432 = vmatprep.subr.bf16.mxu0 0
        %9433 = vmatpush1.bf16.msra.mxu0 %v9401
        %9434 = vmatprep.subr.bf16.mxu0 0
        %9435 = vmatpush1.bf16.msra.mxu0 %v9400
        %9436 = vmatprep.subr.bf16.mxu0 0
        %9437 = vmatpush2.bf16.msra.mxu0 0
        %9438 = vmatprep.subr.bf16.mxu0 0
        %9439 = vmatpush2.bf16.msra.mxu0 0
        %9440 = vmatprep.subr.bf16.mxu0 0
        %9441 = vmatpush2.bf16.msra.mxu0 0
        %9442 = vmatprep.subr.bf16.mxu0 0
        %9443 = vmatpush2.bf16.msra.mxu0 0
        %9444 = vmatprep.subr.bf16.mxu0 0
        %9445 = vmatpush2.bf16.msra.mxu0 0
        %9446 = vmatprep.subr.bf16.mxu0 0
        %9447 = vmatpush2.bf16.msra.mxu0 0
        %9448 = vmatprep.subr.bf16.mxu0 0
        %9449 = vmatpush2.bf16.msra.mxu0 0
        %9450 = vmatprep.subr.bf16.mxu0 0
        %9451 = vmatpush2.bf16.msra.mxu0 0
        %9452 = vmatprep.mubr.bf16.mxu0 0
        %9453 = vmatmul.mubr.bf16.gmra.mxu0 %v9409
        %v9454 = vpop.f32.mrf.mxu0
        %v9455 = vadd.f32 0.0, %v9454
        %v9456 = vpop.f32.mrf.mxu0
        %v9457 = vpop.f32.mrf.mxu0
        %v9458 = vadd.f32 0.0, %v9457
        %v9459 = vpop.f32.mrf.mxu0
        %9460 = vmatprep.mubr.bf16.mxu0 0
        %9461 = vmatmul.mubr.bf16.gmra.mxu0 %v9412
        %v9462 = vpop.f32.mrf.mxu0
        %v9463 = vadd.f32 0.0, %v9462
        %v9464 = vpop.f32.mrf.mxu0
        %v9465 = vpop.f32.mrf.mxu0
        %v9466 = vadd.f32 0.0, %v9465
        %v9467 = vpop.f32.mrf.mxu0
        %9468 = vmatprep.mubr.bf16.mxu0 0
        %9469 = vmatmul.mubr.bf16.gmra.mxu0 %v9415
        %v9470 = vpop.f32.mrf.mxu0
        %v9471 = vadd.f32 0.0, %v9470
        %v9472 = vpop.f32.mrf.mxu0
        %v9473 = vpop.f32.mrf.mxu0
        %v9474 = vadd.f32 0.0, %v9473
        %v9475 = vpop.f32.mrf.mxu0
        %9476 = vmatprep.mubr.bf16.mxu0 0
        %9477 = vmatmul.mubr.bf16.gmra.mxu0 %v9418
        %v9478 = vpop.f32.mrf.mxu0
        %v9479 = vadd.f32 0.0, %v9478
        %v9480 = vpop.f32.mrf.mxu0
        %v9481 = vpop.f32.mrf.mxu0
        %v9482 = vadd.f32 0.0, %v9481
        %v9483 = vpop.f32.mrf.mxu0
        %9484 = vdwg.mxu0
        %v9485 = vadd.f32 %v9347, %v9455
        %v9486 = vadd.f32 %v9348, %v9458
        %v9487 = vadd.f32 %v9349, %v9463
        %v9488 = vadd.f32 %v9350, %v9466
        %v9489 = vadd.f32 %v9351, %v9471
        %v9490 = vadd.f32 %v9352, %v9474
        %v9491 = vadd.f32 %v9353, %v9479
        %v9492 = vadd.f32 %v9354, %v9482
        %v9493 = vld [vmem:[%s9104 + $0x4] sm:$0xf]
        %v9494 = vld [vmem:[%s9104 + $0x8] sm:$0x1]
        %v9495 = vld [vmem:[%s9104 + $0x10] sm:$0xf]
        %v9496 = vld [vmem:[%s9104 + $0x14] sm:$0x1]
        %v9497 = vld [vmem:[%s9104 + $0x1c] sm:$0xf]
        %v9498 = vld [vmem:[%s9104 + $0x20] sm:$0x1]
        %v9499 = vld [vmem:[%s9104 + $0x28] sm:$0xf]
        %v9500 = vld [vmem:[%s9104 + $0x2c] sm:$0x1]
        %v9501 = vld [vmem:[%s9104 + $0x34] sm:$0xf]
        %v9502 = vld [vmem:[%s9104 + $0x38] sm:$0x1]
        %v9503 = vld [vmem:[%s9104 + $0x40] sm:$0xf]
        %v9504 = vld [vmem:[%s9104 + $0x44] sm:$0x1]
        %v9505 = vld [vmem:[%s9104 + $0x4c] sm:$0xf]
        %v9506 = vld [vmem:[%s9104 + $0x50] sm:$0x1]
        %v9507 = vld [vmem:[%s9104 + $0x58] sm:$0xf]
        %v9508 = vld [vmem:[%s9104 + $0x5c] sm:$0x1]
        %v9510 = vshrl.u32 %v9493, 16
        %v9512 = vrot.slane %v9510, 4
        %v9513 = vshll.u32 %v9493, 16
        %v9515 = vrot.slane %v9513, 5
        %v9516 = vor.u32 %v9512, %v9515
        %v9517 = vrot.slane %v9516, 4
        %v9519 = vshll.u32 %v9494, 16
        %v9521 = vrot.slane %v9519, 5
        %v9522 = vsel %vm3412, %v9517, %v9521
        %v9524 = vshrl.u32 %v9495, 16
        %v9526 = vrot.slane %v9524, 4
        %v9527 = vshll.u32 %v9495, 16
        %v9529 = vrot.slane %v9527, 5
        %v9530 = vor.u32 %v9526, %v9529
        %v9531 = vrot.slane %v9530, 4
        %v9533 = vshll.u32 %v9496, 16
        %v9535 = vrot.slane %v9533, 5
        %v9536 = vsel %vm3412, %v9531, %v9535
        %v9538 = vshrl.u32 %v9497, 16
        %v9540 = vrot.slane %v9538, 4
        %v9541 = vshll.u32 %v9497, 16
        %v9543 = vrot.slane %v9541, 5
        %v9544 = vor.u32 %v9540, %v9543
        %v9545 = vrot.slane %v9544, 4
        %v9547 = vshll.u32 %v9498, 16
        %v9549 = vrot.slane %v9547, 5
        %v9550 = vsel %vm3412, %v9545, %v9549
        %v9552 = vshrl.u32 %v9499, 16
        %v9554 = vrot.slane %v9552, 4
        %v9555 = vshll.u32 %v9499, 16
        %v9557 = vrot.slane %v9555, 5
        %v9558 = vor.u32 %v9554, %v9557
        %v9559 = vrot.slane %v9558, 4
        %v9561 = vshll.u32 %v9500, 16
        %v9563 = vrot.slane %v9561, 5
        %v9564 = vsel %vm3412, %v9559, %v9563
        %v9566 = vshrl.u32 %v9501, 16
        %v9568 = vrot.slane %v9566, 4
        %v9569 = vshll.u32 %v9501, 16
        %v9571 = vrot.slane %v9569, 5
        %v9572 = vor.u32 %v9568, %v9571
        %v9573 = vrot.slane %v9572, 4
        %v9575 = vshll.u32 %v9502, 16
        %v9577 = vrot.slane %v9575, 5
        %v9578 = vsel %vm3412, %v9573, %v9577
        %v9580 = vshrl.u32 %v9503, 16
        %v9582 = vrot.slane %v9580, 4
        %v9583 = vshll.u32 %v9503, 16
        %v9585 = vrot.slane %v9583, 5
        %v9586 = vor.u32 %v9582, %v9585
        %v9587 = vrot.slane %v9586, 4
        %v9589 = vshll.u32 %v9504, 16
        %v9591 = vrot.slane %v9589, 5
        %v9592 = vsel %vm3412, %v9587, %v9591
        %v9594 = vshrl.u32 %v9505, 16
        %v9596 = vrot.slane %v9594, 4
        %v9597 = vshll.u32 %v9505, 16
        %v9599 = vrot.slane %v9597, 5
        %v9600 = vor.u32 %v9596, %v9599
        %v9601 = vrot.slane %v9600, 4
        %v9603 = vshll.u32 %v9506, 16
        %v9605 = vrot.slane %v9603, 5
        %v9606 = vsel %vm3412, %v9601, %v9605
        %v9608 = vshrl.u32 %v9507, 16
        %v9610 = vrot.slane %v9608, 4
        %v9611 = vshll.u32 %v9507, 16
        %v9613 = vrot.slane %v9611, 5
        %v9614 = vor.u32 %v9610, %v9613
        %v9615 = vrot.slane %v9614, 4
        %v9617 = vshll.u32 %v9508, 16
        %v9619 = vrot.slane %v9617, 5
        %v9620 = vsel %vm3412, %v9615, %v9619
        %s9621 = scalar_lea.vmem %s5, 256
        %v9622 = vld [vmem:[%s9621] sm:$0xf]
        %v9623 = vld [vmem:[%s9621 + $0x4] sm:$0xf]
        %v9624 = vld [vmem:[%s9621 + $0x8] sm:$0xf]
        %v9625 = vld [vmem:[%s9621 + $0xc] sm:$0xf]
        %v9626 = vld [vmem:[%s9621 + $0x10] sm:$0xf]
        %v9627 = vld [vmem:[%s9621 + $0x14] sm:$0xf]
        %v9628 = vld [vmem:[%s9621 + $0x18] sm:$0xf]
        %v9629 = vld [vmem:[%s9621 + $0x1c] sm:$0xf]
        %v9630 = vunpack.c.l.b16 %v9522
        %v9631 = vunpack.c.l.b16 %v9536
        %v9632 = vunpack.c.l.b16 %v9550
        %v9633 = vunpack.c.l.b16 %v9564
        %v9634 = vunpack.c.l.b16 %v9578
        %v9635 = vunpack.c.l.b16 %v9592
        %v9636 = vunpack.c.l.b16 %v9606
        %v9637 = vunpack.c.l.b16 %v9620
        %v9638 = vpack.c.b16 %v9631, %v9630
        %v9639 = vpack.c.b16 %v9633, %v9632
        %v9640 = vpack.c.b16 %v9635, %v9634
        %v9641 = vpack.c.b16 %v9637, %v9636
        %v9650 = vunpack.c.l.b16 %v9622
        %v9651 = vunpack.c.l.b16 %v9623
        %v9652 = vunpack.c.l.b16 %v9624
        %v9653 = vunpack.c.l.b16 %v9625
        %v9654 = vunpack.c.l.b16 %v9626
        %v9655 = vunpack.c.l.b16 %v9627
        %v9656 = vunpack.c.l.b16 %v9628
        %v9657 = vunpack.c.l.b16 %v9629
        %v9658 = vpack.c.b16 %v9651, %v9650
        %v9659 = vpack.c.b16 %v9653, %v9652
        %v9660 = vpack.c.b16 %v9655, %v9654
        %v9661 = vpack.c.b16 %v9657, %v9656
        %v9667 = vsel %vm7755, %v9638, 0
        %v9670 = vsel %vm7755, %v9639, 0
        %v9673 = vsel %vm7755, %v9640, 0
        %v9676 = vsel %vm7755, %v9641, 0
        %9678 = vmatprep.subr.bf16.mxu0 0
        %9679 = vmatpush1.bf16.msra.mxu0 0
        %9680 = vmatprep.subr.bf16.mxu0 0
        %9681 = vmatpush1.bf16.msra.mxu0 0
        %9682 = vmatprep.subr.bf16.mxu0 0
        %9683 = vmatpush1.bf16.msra.mxu0 0
        %9684 = vmatprep.subr.bf16.mxu0 0
        %9685 = vmatpush1.bf16.msra.mxu0 0
        %9686 = vmatprep.subr.bf16.mxu0 0
        %9687 = vmatpush1.bf16.msra.mxu0 %v9661
        %9688 = vmatprep.subr.bf16.mxu0 0
        %9689 = vmatpush1.bf16.msra.mxu0 %v9660
        %9690 = vmatprep.subr.bf16.mxu0 0
        %9691 = vmatpush1.bf16.msra.mxu0 %v9659
        %9692 = vmatprep.subr.bf16.mxu0 0
        %9693 = vmatpush1.bf16.msra.mxu0 %v9658
        %9694 = vmatprep.subr.bf16.mxu0 0
        %9695 = vmatpush2.bf16.msra.mxu0 0
        %9696 = vmatprep.subr.bf16.mxu0 0
        %9697 = vmatpush2.bf16.msra.mxu0 0
        %9698 = vmatprep.subr.bf16.mxu0 0
        %9699 = vmatpush2.bf16.msra.mxu0 0
        %9700 = vmatprep.subr.bf16.mxu0 0
        %9701 = vmatpush2.bf16.msra.mxu0 0
        %9702 = vmatprep.subr.bf16.mxu0 0
        %9703 = vmatpush2.bf16.msra.mxu0 0
        %9704 = vmatprep.subr.bf16.mxu0 0
        %9705 = vmatpush2.bf16.msra.mxu0 0
        %9706 = vmatprep.subr.bf16.mxu0 0
        %9707 = vmatpush2.bf16.msra.mxu0 0
        %9708 = vmatprep.subr.bf16.mxu0 0
        %9709 = vmatpush2.bf16.msra.mxu0 0
        %9710 = vmatprep.mubr.bf16.mxu0 0
        %9711 = vmatmul.mubr.bf16.gmra.mxu0 %v9667
        %v9712 = vpop.f32.mrf.mxu0
        %v9713 = vadd.f32 0.0, %v9712
        %v9714 = vpop.f32.mrf.mxu0
        %v9715 = vpop.f32.mrf.mxu0
        %v9716 = vadd.f32 0.0, %v9715
        %v9717 = vpop.f32.mrf.mxu0
        %9718 = vmatprep.mubr.bf16.mxu0 0
        %9719 = vmatmul.mubr.bf16.gmra.mxu0 %v9670
        %v9720 = vpop.f32.mrf.mxu0
        %v9721 = vadd.f32 0.0, %v9720
        %v9722 = vpop.f32.mrf.mxu0
        %v9723 = vpop.f32.mrf.mxu0
        %v9724 = vadd.f32 0.0, %v9723
        %v9725 = vpop.f32.mrf.mxu0
        %9726 = vmatprep.mubr.bf16.mxu0 0
        %9727 = vmatmul.mubr.bf16.gmra.mxu0 %v9673
        %v9728 = vpop.f32.mrf.mxu0
        %v9729 = vadd.f32 0.0, %v9728
        %v9730 = vpop.f32.mrf.mxu0
        %v9731 = vpop.f32.mrf.mxu0
        %v9732 = vadd.f32 0.0, %v9731
        %v9733 = vpop.f32.mrf.mxu0
        %9734 = vmatprep.mubr.bf16.mxu0 0
        %9735 = vmatmul.mubr.bf16.gmra.mxu0 %v9676
        %v9736 = vpop.f32.mrf.mxu0
        %v9737 = vadd.f32 0.0, %v9736
        %v9738 = vpop.f32.mrf.mxu0
        %v9739 = vpop.f32.mrf.mxu0
        %v9740 = vadd.f32 0.0, %v9739
        %v9741 = vpop.f32.mrf.mxu0
        %9742 = vdwg.mxu0
        %v9743 = vadd.f32 %v9485, %v9713
        %v9744 = vadd.f32 %v9486, %v9716
        %v9745 = vadd.f32 %v9487, %v9721
        %v9746 = vadd.f32 %v9488, %v9724
        %v9747 = vadd.f32 %v9489, %v9729
        %v9748 = vadd.f32 %v9490, %v9732
        %v9749 = vadd.f32 %v9491, %v9737
        %v9750 = vadd.f32 %v9492, %v9740
        %v9751 = vld [vmem:[%s6] sm:$0x1]
        %v9753 = vlaneseq
        %v9754 = vshrl.u32 %v9753, 7
        %v9755 = vsub.s32 0, %v9754
        %v9756 = vrot.slane %v9751, %v9755
        %v9758 = vadd.f32 %v9743, %v9756
        %v9759 = vadd.f32 %v9744, %v9756
        %v9760 = vadd.f32 %v9745, %v9756
        %v9761 = vadd.f32 %v9746, %v9756
        %v9762 = vadd.f32 %v9747, %v9756
        %v9763 = vadd.f32 %v9748, %v9756
        %v9764 = vadd.f32 %v9749, %v9756
        %v9765 = vadd.f32 %v9750, %v9756
        %v9766 = vmax.f32 %v9758, 0.0
        %v9767 = vmax.f32 %v9759, 0.0
        %v9768 = vmax.f32 %v9760, 0.0
        %v9769 = vmax.f32 %v9761, 0.0
        %v9770 = vmax.f32 %v9762, 0.0
        %v9771 = vmax.f32 %v9763, 0.0
        %v9772 = vmax.f32 %v9764, 0.0
        %v9773 = vmax.f32 %v9765, 0.0
        %v9774 = vmax.f32 %v9766, %v9767
        %v9775 = vmax.f32 %v9768, %v9769
        %v9776 = vmax.f32 %v9770, %v9771
        %v9777 = vmax.f32 %v9772, %v9773
        %9778 = vst [vmem:[#allocation6] sm:$0xff] %v9774
        %9779 = vst [vmem:[#allocation6 + $0x8] sm:$0xff] %v9775
        %9780 = vst [vmem:[#allocation6 + $0x10] sm:$0xff] %v9776
        %9781 = vst [vmem:[#allocation6 + $0x18] sm:$0xff] %v9777
        %v9782 = vld [vmem:[#allocation6] sm:$0x1]
        %v9783 = vld [vmem:[#allocation6 + $0x1] sm:$0x1]
        %v9784 = vmax.f32 %v9782, %v9783
        %v9785 = vpack.c.bf16 %v9784, %v9784
        %vm9786 = vcmask 1040384
        %vm9787 = vmand %vm9786, %vm2428
        %v9788 = vld [vmem:[#allocation7] sm:$0x1]
        %v9789 = vsel %vm9787, %v9785, %v9788
        %9790 = vst [vmem:[#allocation7] sm:$0x1] %v9789
        %v9791 = vld [vmem:[#allocation6 + $0x2] sm:$0x1]
        %v9792 = vld [vmem:[#allocation6 + $0x3] sm:$0x1]
        %v9793 = vmax.f32 %v9791, %v9792
        %v9794 = vpack.c.bf16 %v9793, %v9793
        %v9795 = vld [vmem:[#allocation7 + $0x1] sm:$0x1]
        %v9796 = vsel %vm9787, %v9794, %v9795
        %9797 = vst [vmem:[#allocation7 + $0x1] sm:$0x1] %v9796
        %v9798 = vld [vmem:[#allocation6 + $0x4] sm:$0x1]
        %v9799 = vld [vmem:[#allocation6 + $0x5] sm:$0x1]
        %v9800 = vmax.f32 %v9798, %v9799
        %v9801 = vpack.c.bf16 %v9800, %v9800
        %v9802 = vld [vmem:[#allocation7 + $0x2] sm:$0x1]
        %v9803 = vsel %vm9787, %v9801, %v9802
        %9804 = vst [vmem:[#allocation7 + $0x2] sm:$0x1] %v9803
        %v9805 = vld [vmem:[#allocation6 + $0x6] sm:$0x1]
        %v9806 = vld [vmem:[#allocation6 + $0x7] sm:$0x1]
        %v9807 = vmax.f32 %v9805, %v9806
        %v9808 = vpack.c.bf16 %v9807, %v9807
        %v9809 = vld [vmem:[#allocation7 + $0x3] sm:$0x1]
        %v9810 = vsel %vm9787, %v9808, %v9809
        %9811 = vst [vmem:[#allocation7 + $0x3] sm:$0x1] %v9810
        %v9812 = vld [vmem:[#allocation6 + $0x8] sm:$0x1]
        %v9813 = vld [vmem:[#allocation6 + $0x9] sm:$0x1]
        %v9814 = vmax.f32 %v9812, %v9813
        %v9815 = vpack.c.bf16 %v9814, %v9814
        %v9816 = vld [vmem:[#allocation7 + $0x4] sm:$0x1]
        %v9817 = vsel %vm9787, %v9815, %v9816
        %9818 = vst [vmem:[#allocation7 + $0x4] sm:$0x1] %v9817
        %v9819 = vld [vmem:[#allocation6 + $0xa] sm:$0x1]
        %v9820 = vld [vmem:[#allocation6 + $0xb] sm:$0x1]
        %v9821 = vmax.f32 %v9819, %v9820
        %v9822 = vpack.c.bf16 %v9821, %v9821
        %v9823 = vld [vmem:[#allocation7 + $0x5] sm:$0x1]
        %v9824 = vsel %vm9787, %v9822, %v9823
        %9825 = vst [vmem:[#allocation7 + $0x5] sm:$0x1] %v9824
        %v9826 = vld [vmem:[#allocation6 + $0xc] sm:$0x1]
        %v9827 = vld [vmem:[#allocation6 + $0xd] sm:$0x1]
        %v9828 = vmax.f32 %v9826, %v9827
        %v9829 = vpack.c.bf16 %v9828, %v9828
        %v9830 = vld [vmem:[#allocation7 + $0x6] sm:$0x1]
        %v9831 = vsel %vm9787, %v9829, %v9830
        %9832 = vst [vmem:[#allocation7 + $0x6] sm:$0x1] %v9831
        %v9833 = vld [vmem:[#allocation6 + $0xe] sm:$0x1]
        %v9834 = vld [vmem:[#allocation6 + $0xf] sm:$0x1]
        %v9835 = vmax.f32 %v9833, %v9834
        %v9836 = vpack.c.bf16 %v9835, %v9835
        %v9837 = vld [vmem:[#allocation7 + $0x7] sm:$0x1]
        %v9838 = vsel %vm9787, %v9836, %v9837
        %9839 = vst [vmem:[#allocation7 + $0x7] sm:$0x1] %v9838
        %v9840 = vld [vmem:[#allocation6 + $0x10] sm:$0x1]
        %v9841 = vld [vmem:[#allocation6 + $0x11] sm:$0x1]
        %v9842 = vmax.f32 %v9840, %v9841
        %v9843 = vpack.c.bf16 %v9842, %v9842
        %v9844 = vld [vmem:[#allocation7 + $0x8] sm:$0x1]
        %v9845 = vsel %vm9787, %v9843, %v9844
        %9846 = vst [vmem:[#allocation7 + $0x8] sm:$0x1] %v9845
        %v9847 = vld [vmem:[#allocation6 + $0x12] sm:$0x1]
        %v9848 = vld [vmem:[#allocation6 + $0x13] sm:$0x1]
        %v9849 = vmax.f32 %v9847, %v9848
        %v9850 = vpack.c.bf16 %v9849, %v9849
        %v9851 = vld [vmem:[#allocation7 + $0x9] sm:$0x1]
        %v9852 = vsel %vm9787, %v9850, %v9851
        %9853 = vst [vmem:[#allocation7 + $0x9] sm:$0x1] %v9852
        %v9854 = vld [vmem:[#allocation6 + $0x14] sm:$0x1]
        %v9855 = vld [vmem:[#allocation6 + $0x15] sm:$0x1]
        %v9856 = vmax.f32 %v9854, %v9855
        %v9857 = vpack.c.bf16 %v9856, %v9856
        %v9858 = vld [vmem:[#allocation7 + $0xa] sm:$0x1]
        %v9859 = vsel %vm9787, %v9857, %v9858
        %9860 = vst [vmem:[#allocation7 + $0xa] sm:$0x1] %v9859
        %v9861 = vld [vmem:[#allocation6 + $0x16] sm:$0x1]
        %v9862 = vld [vmem:[#allocation6 + $0x17] sm:$0x1]
        %v9863 = vmax.f32 %v9861, %v9862
        %v9864 = vpack.c.bf16 %v9863, %v9863
        %v9865 = vld [vmem:[#allocation7 + $0xb] sm:$0x1]
        %v9866 = vsel %vm9787, %v9864, %v9865
        %9867 = vst [vmem:[#allocation7 + $0xb] sm:$0x1] %v9866
        %v9868 = vld [vmem:[#allocation6 + $0x18] sm:$0x1]
        %v9869 = vld [vmem:[#allocation6 + $0x19] sm:$0x1]
        %v9870 = vmax.f32 %v9868, %v9869
        %v9871 = vpack.c.bf16 %v9870, %v9870
        %v9872 = vld [vmem:[#allocation7 + $0xc] sm:$0x1]
        %v9873 = vsel %vm9787, %v9871, %v9872
        %9874 = vst [vmem:[#allocation7 + $0xc] sm:$0x1] %v9873
        %v9875 = vld [vmem:[#allocation6 + $0x1a] sm:$0x1]
        %v9876 = vld [vmem:[#allocation6 + $0x1b] sm:$0x1]
        %v9877 = vmax.f32 %v9875, %v9876
        %v9878 = vpack.c.bf16 %v9877, %v9877
        %v9879 = vld [vmem:[#allocation7 + $0xd] sm:$0x1]
        %v9880 = vsel %vm9787, %v9878, %v9879
        %9881 = vst [vmem:[#allocation7 + $0xd] sm:$0x1] %v9880
        %v9882 = vld [vmem:[#allocation6 + $0x1c] sm:$0x1]
        %v9883 = vld [vmem:[#allocation6 + $0x1d] sm:$0x1]
        %v9884 = vmax.f32 %v9882, %v9883
        %v9885 = vpack.c.bf16 %v9884, %v9884
        %v9886 = vld [vmem:[#allocation7 + $0xe] sm:$0x1]
        %v9887 = vsel %vm9787, %v9885, %v9886
        %9888 = vst [vmem:[#allocation7 + $0xe] sm:$0x1] %v9887
        %v9889 = vld [vmem:[#allocation6 + $0x1e] sm:$0x1]
        %v9890 = vld [vmem:[#allocation6 + $0x1f] sm:$0x1]
        %v9891 = vmax.f32 %v9889, %v9890
        %v9892 = vpack.c.bf16 %v9891, %v9891
        %v9893 = vld [vmem:[#allocation7 + $0xf] sm:$0x1]
        %v9894 = vsel %vm9787, %v9892, %v9893
        %9895 = vst [vmem:[#allocation7 + $0xf] sm:$0x1] %v9894
        %v9896 = vld [vmem:[#allocation7] sm:$0xff]
        %v9897 = vld [vmem:[#allocation7 + $0x8] sm:$0xff]
        %v9898 = vld [vmem:[%s7] sm:$0xf]
        %v9899 = vld [vmem:[%s7 + $0x4] sm:$0xf]
        %v9900 = vld [vmem:[%s7 + $0x8] sm:$0xf]
        %v9901 = vld [vmem:[%s7 + $0xc] sm:$0xf]
        %v9902 = vld [vmem:[%s7 + $0x10] sm:$0xf]
        %v9903 = vld [vmem:[%s7 + $0x14] sm:$0xf]
        %v9904 = vld [vmem:[%s7 + $0x18] sm:$0xf]
        %v9905 = vld [vmem:[%s7 + $0x1c] sm:$0xf]
        %v9906 = vld [vmem:[%s7 + $0x20] sm:$0xf]
        %v9907 = vld [vmem:[%s7 + $0x24] sm:$0xf]
        %v9908 = vld [vmem:[%s7 + $0x28] sm:$0xf]
        %v9909 = vld [vmem:[%s7 + $0x2c] sm:$0xf]
        %v9910 = vld [vmem:[%s7 + $0x30] sm:$0xf]
        %v9911 = vld [vmem:[%s7 + $0x34] sm:$0xf]
        %v9912 = vld [vmem:[%s7 + $0x38] sm:$0xf]
        %v9913 = vld [vmem:[%s7 + $0x3c] sm:$0xf]
        %v9914 = vld [vmem:[%s7 + $0x40] sm:$0xf]
        %v9915 = vld [vmem:[%s7 + $0x44] sm:$0xf]
        %v9916 = vld [vmem:[%s7 + $0x48] sm:$0xf]
        %v9917 = vld [vmem:[%s7 + $0x4c] sm:$0xf]
        %v9918 = vld [vmem:[%s7 + $0x50] sm:$0xf]
        %v9919 = vld [vmem:[%s7 + $0x54] sm:$0xf]
        %v9920 = vld [vmem:[%s7 + $0x58] sm:$0xf]
        %v9921 = vld [vmem:[%s7 + $0x5c] sm:$0xf]
        %v9922 = vld [vmem:[%s7 + $0x60] sm:$0xf]
        %v9923 = vld [vmem:[%s7 + $0x64] sm:$0xf]
        %v9924 = vld [vmem:[%s7 + $0x68] sm:$0xf]
        %v9925 = vld [vmem:[%s7 + $0x6c] sm:$0xf]
        %v9926 = vld [vmem:[%s7 + $0x70] sm:$0xf]
        %v9927 = vld [vmem:[%s7 + $0x74] sm:$0xf]
        %v9928 = vld [vmem:[%s7 + $0x78] sm:$0xf]
        %v9929 = vld [vmem:[%s7 + $0x7c] sm:$0xf]
        %v9930 = vld [vmem:[%s7 + $0x80] sm:$0xf]
        %v9931 = vld [vmem:[%s7 + $0x84] sm:$0xf]
        %v9932 = vld [vmem:[%s7 + $0x88] sm:$0xf]
        %v9933 = vld [vmem:[%s7 + $0x8c] sm:$0xf]
        %v9934 = vld [vmem:[%s7 + $0x90] sm:$0xf]
        %v9935 = vld [vmem:[%s7 + $0x94] sm:$0xf]
        %v9936 = vld [vmem:[%s7 + $0x98] sm:$0xf]
        %v9937 = vld [vmem:[%s7 + $0x9c] sm:$0xf]
        %v9938 = vld [vmem:[%s7 + $0xa0] sm:$0xf]
        %v9939 = vld [vmem:[%s7 + $0xa4] sm:$0xf]
        %v9940 = vld [vmem:[%s7 + $0xa8] sm:$0xf]
        %v9941 = vld [vmem:[%s7 + $0xac] sm:$0xf]
        %v9942 = vld [vmem:[%s7 + $0xb0] sm:$0xf]
        %v9943 = vld [vmem:[%s7 + $0xb4] sm:$0xf]
        %v9944 = vld [vmem:[%s7 + $0xb8] sm:$0xf]
        %v9945 = vld [vmem:[%s7 + $0xbc] sm:$0xf]
        %v9946 = vld [vmem:[%s7 + $0xc0] sm:$0xf]
        %v9947 = vld [vmem:[%s7 + $0xc4] sm:$0xf]
        %v9948 = vld [vmem:[%s7 + $0xc8] sm:$0xf]
        %v9949 = vld [vmem:[%s7 + $0xcc] sm:$0xf]
        %v9950 = vld [vmem:[%s7 + $0xd0] sm:$0xf]
        %v9951 = vld [vmem:[%s7 + $0xd4] sm:$0xf]
        %v9952 = vld [vmem:[%s7 + $0xd8] sm:$0xf]
        %v9953 = vld [vmem:[%s7 + $0xdc] sm:$0xf]
        %v9954 = vld [vmem:[%s7 + $0xe0] sm:$0xf]
        %v9955 = vld [vmem:[%s7 + $0xe4] sm:$0xf]
        %v9956 = vld [vmem:[%s7 + $0xe8] sm:$0xf]
        %v9957 = vld [vmem:[%s7 + $0xec] sm:$0xf]
        %v9958 = vld [vmem:[%s7 + $0xf0] sm:$0xf]
        %v9959 = vld [vmem:[%s7 + $0xf4] sm:$0xf]
        %v9960 = vld [vmem:[%s7 + $0xf8] sm:$0xf]
        %v9961 = vld [vmem:[%s7 + $0xfc] sm:$0xf]
        %v9962 = vld [vmem:[%s7 + $0x100] sm:$0xf]
        %v9963 = vld [vmem:[%s7 + $0x104] sm:$0xf]
        %v9964 = vld [vmem:[%s7 + $0x108] sm:$0xf]
        %v9965 = vld [vmem:[%s7 + $0x10c] sm:$0xf]
        %v9966 = vld [vmem:[%s7 + $0x110] sm:$0xf]
        %v9967 = vld [vmem:[%s7 + $0x114] sm:$0xf]
        %v9968 = vld [vmem:[%s7 + $0x118] sm:$0xf]
        %v9969 = vld [vmem:[%s7 + $0x11c] sm:$0xf]
        %v9970 = vld [vmem:[%s7 + $0x120] sm:$0xf]
        %v9971 = vld [vmem:[%s7 + $0x124] sm:$0xf]
        %v9972 = vld [vmem:[%s7 + $0x128] sm:$0xf]
        %v9973 = vld [vmem:[%s7 + $0x12c] sm:$0xf]
        %v9974 = vld [vmem:[%s7 + $0x130] sm:$0xf]
        %v9975 = vld [vmem:[%s7 + $0x134] sm:$0xf]
        %v9976 = vld [vmem:[%s7 + $0x138] sm:$0xf]
        %v9977 = vld [vmem:[%s7 + $0x13c] sm:$0xf]
        %v9978 = vld [vmem:[%s7 + $0x140] sm:$0xf]
        %v9979 = vld [vmem:[%s7 + $0x144] sm:$0xf]
        %v9980 = vld [vmem:[%s7 + $0x148] sm:$0xf]
        %v9981 = vld [vmem:[%s7 + $0x14c] sm:$0xf]
        %v9982 = vld [vmem:[%s7 + $0x150] sm:$0xf]
        %v9983 = vld [vmem:[%s7 + $0x154] sm:$0xf]
        %v9984 = vld [vmem:[%s7 + $0x158] sm:$0xf]
        %v9985 = vld [vmem:[%s7 + $0x15c] sm:$0xf]
        %v9986 = vld [vmem:[%s7 + $0x160] sm:$0xf]
        %v9987 = vld [vmem:[%s7 + $0x164] sm:$0xf]
        %v9988 = vld [vmem:[%s7 + $0x168] sm:$0xf]
        %v9989 = vld [vmem:[%s7 + $0x16c] sm:$0xf]
        %v9990 = vld [vmem:[%s7 + $0x170] sm:$0xf]
        %v9991 = vld [vmem:[%s7 + $0x174] sm:$0xf]
        %v9992 = vld [vmem:[%s7 + $0x178] sm:$0xf]
        %v9993 = vld [vmem:[%s7 + $0x17c] sm:$0xf]
        %v9994 = vld [vmem:[%s7 + $0x180] sm:$0xf]
        %v9995 = vld [vmem:[%s7 + $0x184] sm:$0xf]
        %v9996 = vld [vmem:[%s7 + $0x188] sm:$0xf]
        %v9997 = vld [vmem:[%s7 + $0x18c] sm:$0xf]
        %v9998 = vld [vmem:[%s7 + $0x190] sm:$0xf]
        %v9999 = vld [vmem:[%s7 + $0x194] sm:$0xf]
        %v10000 = vld [vmem:[%s7 + $0x198] sm:$0xf]
        %v10001 = vld [vmem:[%s7 + $0x19c] sm:$0xf]
        %v10002 = vld [vmem:[%s7 + $0x1a0] sm:$0xf]
        %v10003 = vld [vmem:[%s7 + $0x1a4] sm:$0xf]
        %v10004 = vld [vmem:[%s7 + $0x1a8] sm:$0xf]
        %v10005 = vld [vmem:[%s7 + $0x1ac] sm:$0xf]
        %v10006 = vld [vmem:[%s7 + $0x1b0] sm:$0xf]
        %v10007 = vld [vmem:[%s7 + $0x1b4] sm:$0xf]
        %v10008 = vld [vmem:[%s7 + $0x1b8] sm:$0xf]
        %v10009 = vld [vmem:[%s7 + $0x1bc] sm:$0xf]
        %v10010 = vld [vmem:[%s7 + $0x1c0] sm:$0xf]
        %v10011 = vld [vmem:[%s7 + $0x1c4] sm:$0xf]
        %v10012 = vld [vmem:[%s7 + $0x1c8] sm:$0xf]
        %v10013 = vld [vmem:[%s7 + $0x1cc] sm:$0xf]
        %v10014 = vld [vmem:[%s7 + $0x1d0] sm:$0xf]
        %v10015 = vld [vmem:[%s7 + $0x1d4] sm:$0xf]
        %v10016 = vld [vmem:[%s7 + $0x1d8] sm:$0xf]
        %v10017 = vld [vmem:[%s7 + $0x1dc] sm:$0xf]
        %v10018 = vld [vmem:[%s7 + $0x1e0] sm:$0xf]
        %v10019 = vld [vmem:[%s7 + $0x1e4] sm:$0xf]
        %v10020 = vld [vmem:[%s7 + $0x1e8] sm:$0xf]
        %v10021 = vld [vmem:[%s7 + $0x1ec] sm:$0xf]
        %v10022 = vld [vmem:[%s7 + $0x1f0] sm:$0xf]
        %v10023 = vld [vmem:[%s7 + $0x1f4] sm:$0xf]
        %v10024 = vld [vmem:[%s7 + $0x1f8] sm:$0xf]
        %v10025 = vld [vmem:[%s7 + $0x1fc] sm:$0xf]
        %v10026 = vld [vmem:[%s7 + $0x200] sm:$0xf]
        %v10027 = vld [vmem:[%s7 + $0x204] sm:$0xf]
        %v10028 = vld [vmem:[%s7 + $0x208] sm:$0xf]
        %v10029 = vld [vmem:[%s7 + $0x20c] sm:$0xf]
        %v10030 = vld [vmem:[%s7 + $0x210] sm:$0xf]
        %v10031 = vld [vmem:[%s7 + $0x214] sm:$0xf]
        %v10032 = vld [vmem:[%s7 + $0x218] sm:$0xf]
        %v10033 = vld [vmem:[%s7 + $0x21c] sm:$0xf]
        %v10034 = vld [vmem:[%s7 + $0x220] sm:$0xf]
        %v10035 = vld [vmem:[%s7 + $0x224] sm:$0xf]
        %v10036 = vld [vmem:[%s7 + $0x228] sm:$0xf]
        %v10037 = vld [vmem:[%s7 + $0x22c] sm:$0xf]
        %v10038 = vld [vmem:[%s7 + $0x230] sm:$0xf]
        %v10039 = vld [vmem:[%s7 + $0x234] sm:$0xf]
        %v10040 = vld [vmem:[%s7 + $0x238] sm:$0xf]
        %v10041 = vld [vmem:[%s7 + $0x23c] sm:$0xf]
        %v10042 = vld [vmem:[%s7 + $0x240] sm:$0xf]
        %v10043 = vld [vmem:[%s7 + $0x244] sm:$0xf]
        %v10044 = vld [vmem:[%s7 + $0x248] sm:$0xf]
        %v10045 = vld [vmem:[%s7 + $0x24c] sm:$0xf]
        %v10046 = vld [vmem:[%s7 + $0x250] sm:$0xf]
        %v10047 = vld [vmem:[%s7 + $0x254] sm:$0xf]
        %v10048 = vld [vmem:[%s7 + $0x258] sm:$0xf]
        %v10049 = vld [vmem:[%s7 + $0x25c] sm:$0xf]
        %v10050 = vld [vmem:[%s7 + $0x260] sm:$0xf]
        %v10051 = vld [vmem:[%s7 + $0x264] sm:$0xf]
        %v10052 = vld [vmem:[%s7 + $0x268] sm:$0xf]
        %v10053 = vld [vmem:[%s7 + $0x26c] sm:$0xf]
        %v10054 = vld [vmem:[%s7 + $0x270] sm:$0xf]
        %v10055 = vld [vmem:[%s7 + $0x274] sm:$0xf]
        %v10056 = vld [vmem:[%s7 + $0x278] sm:$0xf]
        %v10057 = vld [vmem:[%s7 + $0x27c] sm:$0xf]
        %v10058 = vld [vmem:[%s7 + $0x280] sm:$0xf]
        %v10059 = vld [vmem:[%s7 + $0x284] sm:$0xf]
        %v10060 = vld [vmem:[%s7 + $0x288] sm:$0xf]
        %v10061 = vld [vmem:[%s7 + $0x28c] sm:$0xf]
        %v10062 = vld [vmem:[%s7 + $0x290] sm:$0xf]
        %v10063 = vld [vmem:[%s7 + $0x294] sm:$0xf]
        %v10064 = vld [vmem:[%s7 + $0x298] sm:$0xf]
        %v10065 = vld [vmem:[%s7 + $0x29c] sm:$0xf]
        %v10066 = vld [vmem:[%s7 + $0x2a0] sm:$0xf]
        %v10067 = vld [vmem:[%s7 + $0x2a4] sm:$0xf]
        %v10068 = vld [vmem:[%s7 + $0x2a8] sm:$0xf]
        %v10069 = vld [vmem:[%s7 + $0x2ac] sm:$0xf]
        %v10070 = vld [vmem:[%s7 + $0x2b0] sm:$0xf]
        %v10071 = vld [vmem:[%s7 + $0x2b4] sm:$0xf]
        %v10072 = vld [vmem:[%s7 + $0x2b8] sm:$0xf]
        %v10073 = vld [vmem:[%s7 + $0x2bc] sm:$0xf]
        %v10074 = vld [vmem:[%s7 + $0x2c0] sm:$0xf]
        %v10075 = vld [vmem:[%s7 + $0x2c4] sm:$0xf]
        %v10076 = vld [vmem:[%s7 + $0x2c8] sm:$0xf]
        %v10077 = vld [vmem:[%s7 + $0x2cc] sm:$0xf]
        %v10078 = vld [vmem:[%s7 + $0x2d0] sm:$0xf]
        %v10079 = vld [vmem:[%s7 + $0x2d4] sm:$0xf]
        %v10080 = vld [vmem:[%s7 + $0x2d8] sm:$0xf]
        %v10081 = vld [vmem:[%s7 + $0x2dc] sm:$0xf]
        %v10082 = vld [vmem:[%s7 + $0x2e0] sm:$0xf]
        %v10083 = vld [vmem:[%s7 + $0x2e4] sm:$0xf]
        %v10084 = vld [vmem:[%s7 + $0x2e8] sm:$0xf]
        %v10085 = vld [vmem:[%s7 + $0x2ec] sm:$0xf]
        %v10086 = vld [vmem:[%s7 + $0x2f0] sm:$0xf]
        %v10087 = vld [vmem:[%s7 + $0x2f4] sm:$0xf]
        %v10088 = vld [vmem:[%s7 + $0x2f8] sm:$0xf]
        %v10089 = vld [vmem:[%s7 + $0x2fc] sm:$0xf]
        %v10090 = vld [vmem:[%s7 + $0x300] sm:$0xf]
        %v10091 = vld [vmem:[%s7 + $0x304] sm:$0xf]
        %v10092 = vld [vmem:[%s7 + $0x308] sm:$0xf]
        %v10093 = vld [vmem:[%s7 + $0x30c] sm:$0xf]
        %v10094 = vld [vmem:[%s7 + $0x310] sm:$0xf]
        %v10095 = vld [vmem:[%s7 + $0x314] sm:$0xf]
        %v10096 = vld [vmem:[%s7 + $0x318] sm:$0xf]
        %v10097 = vld [vmem:[%s7 + $0x31c] sm:$0xf]
        %v10098 = vld [vmem:[%s7 + $0x320] sm:$0xf]
        %v10099 = vld [vmem:[%s7 + $0x324] sm:$0xf]
        %v10100 = vld [vmem:[%s7 + $0x328] sm:$0xf]
        %v10101 = vld [vmem:[%s7 + $0x32c] sm:$0xf]
        %v10102 = vld [vmem:[%s7 + $0x330] sm:$0xf]
        %v10103 = vld [vmem:[%s7 + $0x334] sm:$0xf]
        %v10104 = vld [vmem:[%s7 + $0x338] sm:$0xf]
        %v10105 = vld [vmem:[%s7 + $0x33c] sm:$0xf]
        %v10106 = vld [vmem:[%s7 + $0x340] sm:$0xf]
        %v10107 = vld [vmem:[%s7 + $0x344] sm:$0xf]
        %v10108 = vld [vmem:[%s7 + $0x348] sm:$0xf]
        %v10109 = vld [vmem:[%s7 + $0x34c] sm:$0xf]
        %v10110 = vld [vmem:[%s7 + $0x350] sm:$0xf]
        %v10111 = vld [vmem:[%s7 + $0x354] sm:$0xf]
        %v10112 = vld [vmem:[%s7 + $0x358] sm:$0xf]
        %v10113 = vld [vmem:[%s7 + $0x35c] sm:$0xf]
        %v10114 = vld [vmem:[%s7 + $0x360] sm:$0xf]
        %v10115 = vld [vmem:[%s7 + $0x364] sm:$0xf]
        %v10116 = vld [vmem:[%s7 + $0x368] sm:$0xf]
        %v10117 = vld [vmem:[%s7 + $0x36c] sm:$0xf]
        %v10118 = vld [vmem:[%s7 + $0x370] sm:$0xf]
        %v10119 = vld [vmem:[%s7 + $0x374] sm:$0xf]
        %v10120 = vld [vmem:[%s7 + $0x378] sm:$0xf]
        %v10121 = vld [vmem:[%s7 + $0x37c] sm:$0xf]
        %v10122 = vld [vmem:[%s7 + $0x380] sm:$0xf]
        %v10123 = vld [vmem:[%s7 + $0x384] sm:$0xf]
        %v10124 = vld [vmem:[%s7 + $0x388] sm:$0xf]
        %v10125 = vld [vmem:[%s7 + $0x38c] sm:$0xf]
        %v10126 = vld [vmem:[%s7 + $0x390] sm:$0xf]
        %v10127 = vld [vmem:[%s7 + $0x394] sm:$0xf]
        %v10128 = vld [vmem:[%s7 + $0x398] sm:$0xf]
        %v10129 = vld [vmem:[%s7 + $0x39c] sm:$0xf]
        %v10130 = vld [vmem:[%s7 + $0x3a0] sm:$0xf]
        %v10131 = vld [vmem:[%s7 + $0x3a4] sm:$0xf]
        %v10132 = vld [vmem:[%s7 + $0x3a8] sm:$0xf]
        %v10133 = vld [vmem:[%s7 + $0x3ac] sm:$0xf]
        %v10134 = vld [vmem:[%s7 + $0x3b0] sm:$0xf]
        %v10135 = vld [vmem:[%s7 + $0x3b4] sm:$0xf]
        %v10136 = vld [vmem:[%s7 + $0x3b8] sm:$0xf]
        %v10137 = vld [vmem:[%s7 + $0x3bc] sm:$0xf]
        %v10138 = vld [vmem:[%s7 + $0x3c0] sm:$0xf]
        %v10139 = vld [vmem:[%s7 + $0x3c4] sm:$0xf]
        %v10140 = vld [vmem:[%s7 + $0x3c8] sm:$0xf]
        %v10141 = vld [vmem:[%s7 + $0x3cc] sm:$0xf]
        %v10142 = vld [vmem:[%s7 + $0x3d0] sm:$0xf]
        %v10143 = vld [vmem:[%s7 + $0x3d4] sm:$0xf]
        %v10144 = vld [vmem:[%s7 + $0x3d8] sm:$0xf]
        %v10145 = vld [vmem:[%s7 + $0x3dc] sm:$0xf]
        %v10146 = vld [vmem:[%s7 + $0x3e0] sm:$0xf]
        %v10147 = vld [vmem:[%s7 + $0x3e4] sm:$0xf]
        %v10148 = vld [vmem:[%s7 + $0x3e8] sm:$0xf]
        %v10149 = vld [vmem:[%s7 + $0x3ec] sm:$0xf]
        %v10150 = vld [vmem:[%s7 + $0x3f0] sm:$0xf]
        %v10151 = vld [vmem:[%s7 + $0x3f4] sm:$0xf]
        %v10152 = vld [vmem:[%s7 + $0x3f8] sm:$0xf]
        %v10153 = vld [vmem:[%s7 + $0x3fc] sm:$0xf]
        %v10154 = vld [vmem:[%s8] sm:$0x1]
        %v10157 = vcombine.high %v9896, %v9896
        %v10159 = vunpack.c.l.s4 1966171168
        %v10160 = vunpack.c.0.s8 %v10159
        %v10161 = vlaneseq
        %v10162 = vshrl.u32 %v10161, 7
        %v10163 = vsub.s32 %v10160, %v10162
        %v10164 = vrot.slane %v9896, %v10163
        %v10166 = vunpack.c.l.s4 1966171168
        %v10167 = vunpack.c.0.s8 %v10166
        %v10168 = vlaneseq
        %v10169 = vshrl.u32 %v10168, 7
        %v10170 = vsub.s32 %v10167, %v10169
        %v10171 = vrot.slane %v10157, %v10170
        %v10172 = vcombine.high %v10164, %v10164
        %v10173 = vcombine.high %v10171, %v10171
        %v10175 = vunpack.c.l.s4 1966171168
        %v10176 = vunpack.c.0.s8 %v10175
        %v10177 = vlaneseq
        %v10178 = vshrl.u32 %v10177, 7
        %v10179 = vsub.s32 %v10176, %v10178
        %v10180 = vrot.slane %v10164, %v10179
        %v10182 = vunpack.c.l.s4 1966171168
        %v10183 = vunpack.c.0.s8 %v10182
        %v10184 = vlaneseq
        %v10185 = vshrl.u32 %v10184, 7
        %v10186 = vsub.s32 %v10183, %v10185
        %v10187 = vrot.slane %v10171, %v10186
        %v10189 = vunpack.c.l.s4 1966171168
        %v10190 = vunpack.c.0.s8 %v10189
        %v10191 = vlaneseq
        %v10192 = vshrl.u32 %v10191, 7
        %v10193 = vsub.s32 %v10190, %v10192
        %v10194 = vrot.slane %v10172, %v10193
        %v10196 = vunpack.c.l.s4 1966171168
        %v10197 = vunpack.c.0.s8 %v10196
        %v10198 = vlaneseq
        %v10199 = vshrl.u32 %v10198, 7
        %v10200 = vsub.s32 %v10197, %v10199
        %v10201 = vrot.slane %v10173, %v10200
        %v10202 = vcombine.high %v10180, %v10180
        %v10203 = vcombine.high %v10187, %v10187
        %v10204 = vcombine.high %v10194, %v10194
        %v10205 = vcombine.high %v10201, %v10201
        %v10206 = vcombine.high %v9897, %v9897
        %v10208 = vunpack.c.l.s4 1966171168
        %v10209 = vunpack.c.0.s8 %v10208
        %v10210 = vlaneseq
        %v10211 = vshrl.u32 %v10210, 7
        %v10212 = vsub.s32 %v10209, %v10211
        %v10213 = vrot.slane %v9897, %v10212
        %v10215 = vunpack.c.l.s4 1966171168
        %v10216 = vunpack.c.0.s8 %v10215
        %v10217 = vlaneseq
        %v10218 = vshrl.u32 %v10217, 7
        %v10219 = vsub.s32 %v10216, %v10218
        %v10220 = vrot.slane %v10206, %v10219
        %v10221 = vcombine.high %v10213, %v10213
        %v10222 = vcombine.high %v10220, %v10220
        %v10224 = vunpack.c.l.s4 1966171168
        %v10225 = vunpack.c.0.s8 %v10224
        %v10226 = vlaneseq
        %v10227 = vshrl.u32 %v10226, 7
        %v10228 = vsub.s32 %v10225, %v10227
        %v10229 = vrot.slane %v10213, %v10228
        %v10231 = vunpack.c.l.s4 1966171168
        %v10232 = vunpack.c.0.s8 %v10231
        %v10233 = vlaneseq
        %v10234 = vshrl.u32 %v10233, 7
        %v10235 = vsub.s32 %v10232, %v10234
        %v10236 = vrot.slane %v10220, %v10235
        %v10238 = vunpack.c.l.s4 1966171168
        %v10239 = vunpack.c.0.s8 %v10238
        %v10240 = vlaneseq
        %v10241 = vshrl.u32 %v10240, 7
        %v10242 = vsub.s32 %v10239, %v10241
        %v10243 = vrot.slane %v10221, %v10242
        %v10245 = vunpack.c.l.s4 1966171168
        %v10246 = vunpack.c.0.s8 %v10245
        %v10247 = vlaneseq
        %v10248 = vshrl.u32 %v10247, 7
        %v10249 = vsub.s32 %v10246, %v10248
        %v10250 = vrot.slane %v10222, %v10249
        %v10251 = vcombine.high %v10229, %v10229
        %v10252 = vcombine.high %v10236, %v10236
        %v10253 = vcombine.high %v10243, %v10243
        %v10254 = vcombine.high %v10250, %v10250
        %v10527 = vunpack.c.l.b16 %v9898
        %v10528 = vunpack.c.l.b16 %v9899
        %v10529 = vunpack.c.l.b16 %v9900
        %v10530 = vunpack.c.l.b16 %v9901
        %v10531 = vunpack.c.l.b16 %v9902
        %v10532 = vunpack.c.l.b16 %v9903
        %v10533 = vunpack.c.l.b16 %v9904
        %v10534 = vunpack.c.l.b16 %v9905
        %v10535 = vunpack.c.l.b16 %v9906
        %v10536 = vunpack.c.l.b16 %v9907
        %v10537 = vunpack.c.l.b16 %v9908
        %v10538 = vunpack.c.l.b16 %v9909
        %v10539 = vunpack.c.l.b16 %v9910
        %v10540 = vunpack.c.l.b16 %v9911
        %v10541 = vunpack.c.l.b16 %v9912
        %v10542 = vunpack.c.l.b16 %v9913
        %v10543 = vunpack.c.l.b16 %v9914
        %v10544 = vunpack.c.l.b16 %v9915
        %v10545 = vunpack.c.l.b16 %v9916
        %v10546 = vunpack.c.l.b16 %v9917
        %v10547 = vunpack.c.l.b16 %v9918
        %v10548 = vunpack.c.l.b16 %v9919
        %v10549 = vunpack.c.l.b16 %v9920
        %v10550 = vunpack.c.l.b16 %v9921
        %v10551 = vunpack.c.l.b16 %v9922
        %v10552 = vunpack.c.l.b16 %v9923
        %v10553 = vunpack.c.l.b16 %v9924
        %v10554 = vunpack.c.l.b16 %v9925
        %v10555 = vunpack.c.l.b16 %v9926
        %v10556 = vunpack.c.l.b16 %v9927
        %v10557 = vunpack.c.l.b16 %v9928
        %v10558 = vunpack.c.l.b16 %v9929
        %v10559 = vunpack.c.l.b16 %v9930
        %v10560 = vunpack.c.l.b16 %v9931
        %v10561 = vunpack.c.l.b16 %v9932
        %v10562 = vunpack.c.l.b16 %v9933
        %v10563 = vunpack.c.l.b16 %v9934
        %v10564 = vunpack.c.l.b16 %v9935
        %v10565 = vunpack.c.l.b16 %v9936
        %v10566 = vunpack.c.l.b16 %v9937
        %v10567 = vunpack.c.l.b16 %v9938
        %v10568 = vunpack.c.l.b16 %v9939
        %v10569 = vunpack.c.l.b16 %v9940
        %v10570 = vunpack.c.l.b16 %v9941
        %v10571 = vunpack.c.l.b16 %v9942
        %v10572 = vunpack.c.l.b16 %v9943
        %v10573 = vunpack.c.l.b16 %v9944
        %v10574 = vunpack.c.l.b16 %v9945
        %v10575 = vunpack.c.l.b16 %v9946
        %v10576 = vunpack.c.l.b16 %v9947
        %v10577 = vunpack.c.l.b16 %v9948
        %v10578 = vunpack.c.l.b16 %v9949
        %v10579 = vunpack.c.l.b16 %v9950
        %v10580 = vunpack.c.l.b16 %v9951
        %v10581 = vunpack.c.l.b16 %v9952
        %v10582 = vunpack.c.l.b16 %v9953
        %v10583 = vunpack.c.l.b16 %v9954
        %v10584 = vunpack.c.l.b16 %v9955
        %v10585 = vunpack.c.l.b16 %v9956
        %v10586 = vunpack.c.l.b16 %v9957
        %v10587 = vunpack.c.l.b16 %v9958
        %v10588 = vunpack.c.l.b16 %v9959
        %v10589 = vunpack.c.l.b16 %v9960
        %v10590 = vunpack.c.l.b16 %v9961
        %v10591 = vunpack.c.l.b16 %v9962
        %v10592 = vunpack.c.l.b16 %v9963
        %v10593 = vunpack.c.l.b16 %v9964
        %v10594 = vunpack.c.l.b16 %v9965
        %v10595 = vunpack.c.l.b16 %v9966
        %v10596 = vunpack.c.l.b16 %v9967
        %v10597 = vunpack.c.l.b16 %v9968
        %v10598 = vunpack.c.l.b16 %v9969
        %v10599 = vunpack.c.l.b16 %v9970
        %v10600 = vunpack.c.l.b16 %v9971
        %v10601 = vunpack.c.l.b16 %v9972
        %v10602 = vunpack.c.l.b16 %v9973
        %v10603 = vunpack.c.l.b16 %v9974
        %v10604 = vunpack.c.l.b16 %v9975
        %v10605 = vunpack.c.l.b16 %v9976
        %v10606 = vunpack.c.l.b16 %v9977
        %v10607 = vunpack.c.l.b16 %v9978
        %v10608 = vunpack.c.l.b16 %v9979
        %v10609 = vunpack.c.l.b16 %v9980
        %v10610 = vunpack.c.l.b16 %v9981
        %v10611 = vunpack.c.l.b16 %v9982
        %v10612 = vunpack.c.l.b16 %v9983
        %v10613 = vunpack.c.l.b16 %v9984
        %v10614 = vunpack.c.l.b16 %v9985
        %v10615 = vunpack.c.l.b16 %v9986
        %v10616 = vunpack.c.l.b16 %v9987
        %v10617 = vunpack.c.l.b16 %v9988
        %v10618 = vunpack.c.l.b16 %v9989
        %v10619 = vunpack.c.l.b16 %v9990
        %v10620 = vunpack.c.l.b16 %v9991
        %v10621 = vunpack.c.l.b16 %v9992
        %v10622 = vunpack.c.l.b16 %v9993
        %v10623 = vunpack.c.l.b16 %v9994
        %v10624 = vunpack.c.l.b16 %v9995
        %v10625 = vunpack.c.l.b16 %v9996
        %v10626 = vunpack.c.l.b16 %v9997
        %v10627 = vunpack.c.l.b16 %v9998
        %v10628 = vunpack.c.l.b16 %v9999
        %v10629 = vunpack.c.l.b16 %v10000
        %v10630 = vunpack.c.l.b16 %v10001
        %v10631 = vunpack.c.l.b16 %v10002
        %v10632 = vunpack.c.l.b16 %v10003
        %v10633 = vunpack.c.l.b16 %v10004
        %v10634 = vunpack.c.l.b16 %v10005
        %v10635 = vunpack.c.l.b16 %v10006
        %v10636 = vunpack.c.l.b16 %v10007
        %v10637 = vunpack.c.l.b16 %v10008
        %v10638 = vunpack.c.l.b16 %v10009
        %v10639 = vunpack.c.l.b16 %v10010
        %v10640 = vunpack.c.l.b16 %v10011
        %v10641 = vunpack.c.l.b16 %v10012
        %v10642 = vunpack.c.l.b16 %v10013
        %v10643 = vunpack.c.l.b16 %v10014
        %v10644 = vunpack.c.l.b16 %v10015
        %v10645 = vunpack.c.l.b16 %v10016
        %v10646 = vunpack.c.l.b16 %v10017
        %v10647 = vunpack.c.l.b16 %v10018
        %v10648 = vunpack.c.l.b16 %v10019
        %v10649 = vunpack.c.l.b16 %v10020
        %v10650 = vunpack.c.l.b16 %v10021
        %v10651 = vunpack.c.l.b16 %v10022
        %v10652 = vunpack.c.l.b16 %v10023
        %v10653 = vunpack.c.l.b16 %v10024
        %v10654 = vunpack.c.l.b16 %v10025
        %v10655 = vunpack.c.l.b16 %v10026
        %v10656 = vunpack.c.l.b16 %v10027
        %v10657 = vunpack.c.l.b16 %v10028
        %v10658 = vunpack.c.l.b16 %v10029
        %v10659 = vunpack.c.l.b16 %v10030
        %v10660 = vunpack.c.l.b16 %v10031
        %v10661 = vunpack.c.l.b16 %v10032
        %v10662 = vunpack.c.l.b16 %v10033
        %v10663 = vunpack.c.l.b16 %v10034
        %v10664 = vunpack.c.l.b16 %v10035
        %v10665 = vunpack.c.l.b16 %v10036
        %v10666 = vunpack.c.l.b16 %v10037
        %v10667 = vunpack.c.l.b16 %v10038
        %v10668 = vunpack.c.l.b16 %v10039
        %v10669 = vunpack.c.l.b16 %v10040
        %v10670 = vunpack.c.l.b16 %v10041
        %v10671 = vunpack.c.l.b16 %v10042
        %v10672 = vunpack.c.l.b16 %v10043
        %v10673 = vunpack.c.l.b16 %v10044
        %v10674 = vunpack.c.l.b16 %v10045
        %v10675 = vunpack.c.l.b16 %v10046
        %v10676 = vunpack.c.l.b16 %v10047
        %v10677 = vunpack.c.l.b16 %v10048
        %v10678 = vunpack.c.l.b16 %v10049
        %v10679 = vunpack.c.l.b16 %v10050
        %v10680 = vunpack.c.l.b16 %v10051
        %v10681 = vunpack.c.l.b16 %v10052
        %v10682 = vunpack.c.l.b16 %v10053
        %v10683 = vunpack.c.l.b16 %v10054
        %v10684 = vunpack.c.l.b16 %v10055
        %v10685 = vunpack.c.l.b16 %v10056
        %v10686 = vunpack.c.l.b16 %v10057
        %v10687 = vunpack.c.l.b16 %v10058
        %v10688 = vunpack.c.l.b16 %v10059
        %v10689 = vunpack.c.l.b16 %v10060
        %v10690 = vunpack.c.l.b16 %v10061
        %v10691 = vunpack.c.l.b16 %v10062
        %v10692 = vunpack.c.l.b16 %v10063
        %v10693 = vunpack.c.l.b16 %v10064
        %v10694 = vunpack.c.l.b16 %v10065
        %v10695 = vunpack.c.l.b16 %v10066
        %v10696 = vunpack.c.l.b16 %v10067
        %v10697 = vunpack.c.l.b16 %v10068
        %v10698 = vunpack.c.l.b16 %v10069
        %v10699 = vunpack.c.l.b16 %v10070
        %v10700 = vunpack.c.l.b16 %v10071
        %v10701 = vunpack.c.l.b16 %v10072
        %v10702 = vunpack.c.l.b16 %v10073
        %v10703 = vunpack.c.l.b16 %v10074
        %v10704 = vunpack.c.l.b16 %v10075
        %v10705 = vunpack.c.l.b16 %v10076
        %v10706 = vunpack.c.l.b16 %v10077
        %v10707 = vunpack.c.l.b16 %v10078
        %v10708 = vunpack.c.l.b16 %v10079
        %v10709 = vunpack.c.l.b16 %v10080
        %v10710 = vunpack.c.l.b16 %v10081
        %v10711 = vunpack.c.l.b16 %v10082
        %v10712 = vunpack.c.l.b16 %v10083
        %v10713 = vunpack.c.l.b16 %v10084
        %v10714 = vunpack.c.l.b16 %v10085
        %v10715 = vunpack.c.l.b16 %v10086
        %v10716 = vunpack.c.l.b16 %v10087
        %v10717 = vunpack.c.l.b16 %v10088
        %v10718 = vunpack.c.l.b16 %v10089
        %v10719 = vunpack.c.l.b16 %v10090
        %v10720 = vunpack.c.l.b16 %v10091
        %v10721 = vunpack.c.l.b16 %v10092
        %v10722 = vunpack.c.l.b16 %v10093
        %v10723 = vunpack.c.l.b16 %v10094
        %v10724 = vunpack.c.l.b16 %v10095
        %v10725 = vunpack.c.l.b16 %v10096
        %v10726 = vunpack.c.l.b16 %v10097
        %v10727 = vunpack.c.l.b16 %v10098
        %v10728 = vunpack.c.l.b16 %v10099
        %v10729 = vunpack.c.l.b16 %v10100
        %v10730 = vunpack.c.l.b16 %v10101
        %v10731 = vunpack.c.l.b16 %v10102
        %v10732 = vunpack.c.l.b16 %v10103
        %v10733 = vunpack.c.l.b16 %v10104
        %v10734 = vunpack.c.l.b16 %v10105
        %v10735 = vunpack.c.l.b16 %v10106
        %v10736 = vunpack.c.l.b16 %v10107
        %v10737 = vunpack.c.l.b16 %v10108
        %v10738 = vunpack.c.l.b16 %v10109
        %v10739 = vunpack.c.l.b16 %v10110
        %v10740 = vunpack.c.l.b16 %v10111
        %v10741 = vunpack.c.l.b16 %v10112
        %v10742 = vunpack.c.l.b16 %v10113
        %v10743 = vunpack.c.l.b16 %v10114
        %v10744 = vunpack.c.l.b16 %v10115
        %v10745 = vunpack.c.l.b16 %v10116
        %v10746 = vunpack.c.l.b16 %v10117
        %v10747 = vunpack.c.l.b16 %v10118
        %v10748 = vunpack.c.l.b16 %v10119
        %v10749 = vunpack.c.l.b16 %v10120
        %v10750 = vunpack.c.l.b16 %v10121
        %v10751 = vunpack.c.l.b16 %v10122
        %v10752 = vunpack.c.l.b16 %v10123
        %v10753 = vunpack.c.l.b16 %v10124
        %v10754 = vunpack.c.l.b16 %v10125
        %v10755 = vunpack.c.l.b16 %v10126
        %v10756 = vunpack.c.l.b16 %v10127
        %v10757 = vunpack.c.l.b16 %v10128
        %v10758 = vunpack.c.l.b16 %v10129
        %v10759 = vunpack.c.l.b16 %v10130
        %v10760 = vunpack.c.l.b16 %v10131
        %v10761 = vunpack.c.l.b16 %v10132
        %v10762 = vunpack.c.l.b16 %v10133
        %v10763 = vunpack.c.l.b16 %v10134
        %v10764 = vunpack.c.l.b16 %v10135
        %v10765 = vunpack.c.l.b16 %v10136
        %v10766 = vunpack.c.l.b16 %v10137
        %v10767 = vunpack.c.l.b16 %v10138
        %v10768 = vunpack.c.l.b16 %v10139
        %v10769 = vunpack.c.l.b16 %v10140
        %v10770 = vunpack.c.l.b16 %v10141
        %v10771 = vunpack.c.l.b16 %v10142
        %v10772 = vunpack.c.l.b16 %v10143
        %v10773 = vunpack.c.l.b16 %v10144
        %v10774 = vunpack.c.l.b16 %v10145
        %v10775 = vunpack.c.l.b16 %v10146
        %v10776 = vunpack.c.l.b16 %v10147
        %v10777 = vunpack.c.l.b16 %v10148
        %v10778 = vunpack.c.l.b16 %v10149
        %v10779 = vunpack.c.l.b16 %v10150
        %v10780 = vunpack.c.l.b16 %v10151
        %v10781 = vunpack.c.l.b16 %v10152
        %v10782 = vunpack.c.l.b16 %v10153
        %v10783 = vpack.c.b16 %v10528, %v10527
        %v10784 = vpack.c.b16 %v10530, %v10529
        %v10785 = vpack.c.b16 %v10532, %v10531
        %v10786 = vpack.c.b16 %v10534, %v10533
        %v10787 = vpack.c.b16 %v10536, %v10535
        %v10788 = vpack.c.b16 %v10538, %v10537
        %v10789 = vpack.c.b16 %v10540, %v10539
        %v10790 = vpack.c.b16 %v10542, %v10541
        %v10791 = vpack.c.b16 %v10544, %v10543
        %v10792 = vpack.c.b16 %v10546, %v10545
        %v10793 = vpack.c.b16 %v10548, %v10547
        %v10794 = vpack.c.b16 %v10550, %v10549
        %v10795 = vpack.c.b16 %v10552, %v10551
        %v10796 = vpack.c.b16 %v10554, %v10553
        %v10797 = vpack.c.b16 %v10556, %v10555
        %v10798 = vpack.c.b16 %v10558, %v10557
        %v10799 = vpack.c.b16 %v10560, %v10559
        %v10800 = vpack.c.b16 %v10562, %v10561
        %v10801 = vpack.c.b16 %v10564, %v10563
        %v10802 = vpack.c.b16 %v10566, %v10565
        %v10803 = vpack.c.b16 %v10568, %v10567
        %v10804 = vpack.c.b16 %v10570, %v10569
        %v10805 = vpack.c.b16 %v10572, %v10571
        %v10806 = vpack.c.b16 %v10574, %v10573
        %v10807 = vpack.c.b16 %v10576, %v10575
        %v10808 = vpack.c.b16 %v10578, %v10577
        %v10809 = vpack.c.b16 %v10580, %v10579
        %v10810 = vpack.c.b16 %v10582, %v10581
        %v10811 = vpack.c.b16 %v10584, %v10583
        %v10812 = vpack.c.b16 %v10586, %v10585
        %v10813 = vpack.c.b16 %v10588, %v10587
        %v10814 = vpack.c.b16 %v10590, %v10589
        %v10815 = vpack.c.b16 %v10592, %v10591
        %v10816 = vpack.c.b16 %v10594, %v10593
        %v10817 = vpack.c.b16 %v10596, %v10595
        %v10818 = vpack.c.b16 %v10598, %v10597
        %v10819 = vpack.c.b16 %v10600, %v10599
        %v10820 = vpack.c.b16 %v10602, %v10601
        %v10821 = vpack.c.b16 %v10604, %v10603
        %v10822 = vpack.c.b16 %v10606, %v10605
        %v10823 = vpack.c.b16 %v10608, %v10607
        %v10824 = vpack.c.b16 %v10610, %v10609
        %v10825 = vpack.c.b16 %v10612, %v10611
        %v10826 = vpack.c.b16 %v10614, %v10613
        %v10827 = vpack.c.b16 %v10616, %v10615
        %v10828 = vpack.c.b16 %v10618, %v10617
        %v10829 = vpack.c.b16 %v10620, %v10619
        %v10830 = vpack.c.b16 %v10622, %v10621
        %v10831 = vpack.c.b16 %v10624, %v10623
        %v10832 = vpack.c.b16 %v10626, %v10625
        %v10833 = vpack.c.b16 %v10628, %v10627
        %v10834 = vpack.c.b16 %v10630, %v10629
        %v10835 = vpack.c.b16 %v10632, %v10631
        %v10836 = vpack.c.b16 %v10634, %v10633
        %v10837 = vpack.c.b16 %v10636, %v10635
        %v10838 = vpack.c.b16 %v10638, %v10637
        %v10839 = vpack.c.b16 %v10640, %v10639
        %v10840 = vpack.c.b16 %v10642, %v10641
        %v10841 = vpack.c.b16 %v10644, %v10643
        %v10842 = vpack.c.b16 %v10646, %v10645
        %v10843 = vpack.c.b16 %v10648, %v10647
        %v10844 = vpack.c.b16 %v10650, %v10649
        %v10845 = vpack.c.b16 %v10652, %v10651
        %v10846 = vpack.c.b16 %v10654, %v10653
        %v10847 = vpack.c.b16 %v10656, %v10655
        %v10848 = vpack.c.b16 %v10658, %v10657
        %v10849 = vpack.c.b16 %v10660, %v10659
        %v10850 = vpack.c.b16 %v10662, %v10661
        %v10851 = vpack.c.b16 %v10664, %v10663
        %v10852 = vpack.c.b16 %v10666, %v10665
        %v10853 = vpack.c.b16 %v10668, %v10667
        %v10854 = vpack.c.b16 %v10670, %v10669
        %v10855 = vpack.c.b16 %v10672, %v10671
        %v10856 = vpack.c.b16 %v10674, %v10673
        %v10857 = vpack.c.b16 %v10676, %v10675
        %v10858 = vpack.c.b16 %v10678, %v10677
        %v10859 = vpack.c.b16 %v10680, %v10679
        %v10860 = vpack.c.b16 %v10682, %v10681
        %v10861 = vpack.c.b16 %v10684, %v10683
        %v10862 = vpack.c.b16 %v10686, %v10685
        %v10863 = vpack.c.b16 %v10688, %v10687
        %v10864 = vpack.c.b16 %v10690, %v10689
        %v10865 = vpack.c.b16 %v10692, %v10691
        %v10866 = vpack.c.b16 %v10694, %v10693
        %v10867 = vpack.c.b16 %v10696, %v10695
        %v10868 = vpack.c.b16 %v10698, %v10697
        %v10869 = vpack.c.b16 %v10700, %v10699
        %v10870 = vpack.c.b16 %v10702, %v10701
        %v10871 = vpack.c.b16 %v10704, %v10703
        %v10872 = vpack.c.b16 %v10706, %v10705
        %v10873 = vpack.c.b16 %v10708, %v10707
        %v10874 = vpack.c.b16 %v10710, %v10709
        %v10875 = vpack.c.b16 %v10712, %v10711
        %v10876 = vpack.c.b16 %v10714, %v10713
        %v10877 = vpack.c.b16 %v10716, %v10715
        %v10878 = vpack.c.b16 %v10718, %v10717
        %v10879 = vpack.c.b16 %v10720, %v10719
        %v10880 = vpack.c.b16 %v10722, %v10721
        %v10881 = vpack.c.b16 %v10724, %v10723
        %v10882 = vpack.c.b16 %v10726, %v10725
        %v10883 = vpack.c.b16 %v10728, %v10727
        %v10884 = vpack.c.b16 %v10730, %v10729
        %v10885 = vpack.c.b16 %v10732, %v10731
        %v10886 = vpack.c.b16 %v10734, %v10733
        %v10887 = vpack.c.b16 %v10736, %v10735
        %v10888 = vpack.c.b16 %v10738, %v10737
        %v10889 = vpack.c.b16 %v10740, %v10739
        %v10890 = vpack.c.b16 %v10742, %v10741
        %v10891 = vpack.c.b16 %v10744, %v10743
        %v10892 = vpack.c.b16 %v10746, %v10745
        %v10893 = vpack.c.b16 %v10748, %v10747
        %v10894 = vpack.c.b16 %v10750, %v10749
        %v10895 = vpack.c.b16 %v10752, %v10751
        %v10896 = vpack.c.b16 %v10754, %v10753
        %v10897 = vpack.c.b16 %v10756, %v10755
        %v10898 = vpack.c.b16 %v10758, %v10757
        %v10899 = vpack.c.b16 %v10760, %v10759
        %v10900 = vpack.c.b16 %v10762, %v10761
        %v10901 = vpack.c.b16 %v10764, %v10763
        %v10902 = vpack.c.b16 %v10766, %v10765
        %v10903 = vpack.c.b16 %v10768, %v10767
        %v10904 = vpack.c.b16 %v10770, %v10769
        %v10905 = vpack.c.b16 %v10772, %v10771
        %v10906 = vpack.c.b16 %v10774, %v10773
        %v10907 = vpack.c.b16 %v10776, %v10775
        %v10908 = vpack.c.b16 %v10778, %v10777
        %v10909 = vpack.c.b16 %v10780, %v10779
        %v10910 = vpack.c.b16 %v10782, %v10781
        %11039 = vmatprep.subr.bf16.mxu0 0
        %11040 = vmatpush1.bf16.msra.mxu0 %v10790
        %11041 = vmatprep.subr.bf16.mxu0 0
        %11042 = vmatpush1.bf16.msra.mxu0 %v10789
        %11043 = vmatprep.subr.bf16.mxu0 0
        %11044 = vmatpush1.bf16.msra.mxu0 %v10788
        %11045 = vmatprep.subr.bf16.mxu0 0
        %11046 = vmatpush1.bf16.msra.mxu0 %v10787
        %11047 = vmatprep.subr.bf16.mxu0 0
        %11048 = vmatpush1.bf16.msra.mxu0 %v10786
        %11049 = vmatprep.subr.bf16.mxu0 0
        %11050 = vmatpush1.bf16.msra.mxu0 %v10785
        %11051 = vmatprep.subr.bf16.mxu0 0
        %11052 = vmatpush1.bf16.msra.mxu0 %v10784
        %11053 = vmatprep.subr.bf16.mxu0 0
        %11054 = vmatpush1.bf16.msra.mxu0 %v10783
        %11055 = vmatprep.subr.bf16.mxu0 0
        %11056 = vmatpush2.bf16.msra.mxu0 %v10798
        %11057 = vmatprep.subr.bf16.mxu0 0
        %11058 = vmatpush2.bf16.msra.mxu0 %v10797
        %11059 = vmatprep.subr.bf16.mxu0 0
        %11060 = vmatpush2.bf16.msra.mxu0 %v10796
        %11061 = vmatprep.subr.bf16.mxu0 0
        %11062 = vmatpush2.bf16.msra.mxu0 %v10795
        %11063 = vmatprep.subr.bf16.mxu0 0
        %11064 = vmatpush2.bf16.msra.mxu0 %v10794
        %11065 = vmatprep.subr.bf16.mxu0 0
        %11066 = vmatpush2.bf16.msra.mxu0 %v10793
        %11067 = vmatprep.subr.bf16.mxu0 0
        %11068 = vmatpush2.bf16.msra.mxu0 %v10792
        %11069 = vmatprep.subr.bf16.mxu0 0
        %11070 = vmatpush2.bf16.msra.mxu0 %v10791
        %11071 = vmatprep.mubr.bf16.mxu0 %v10194
        %11072 = vmatmul.mubr.bf16.gmra.mxu0 %v10180
        %v11073 = vpop.f32.mrf.mxu0
        %v11074 = vadd.f32 %v10154, %v11073
        %v11075 = vpop.f32.mrf.mxu0
        %v11076 = vpop.f32.mrf.mxu0
        %v11077 = vpop.f32.mrf.mxu0
        %11078 = vdwg.mxu0
        %11079 = vmatprep.subr.bf16.mxu0 0
        %11080 = vmatpush1.bf16.msra.mxu0 %v10806
        %11081 = vmatprep.subr.bf16.mxu0 0
        %11082 = vmatpush1.bf16.msra.mxu0 %v10805
        %11083 = vmatprep.subr.bf16.mxu0 0
        %11084 = vmatpush1.bf16.msra.mxu0 %v10804
        %11085 = vmatprep.subr.bf16.mxu0 0
        %11086 = vmatpush1.bf16.msra.mxu0 %v10803
        %11087 = vmatprep.subr.bf16.mxu0 0
        %11088 = vmatpush1.bf16.msra.mxu0 %v10802
        %11089 = vmatprep.subr.bf16.mxu0 0
        %11090 = vmatpush1.bf16.msra.mxu0 %v10801
        %11091 = vmatprep.subr.bf16.mxu0 0
        %11092 = vmatpush1.bf16.msra.mxu0 %v10800
        %11093 = vmatprep.subr.bf16.mxu0 0
        %11094 = vmatpush1.bf16.msra.mxu0 %v10799
        %11095 = vmatprep.subr.bf16.mxu0 0
        %11096 = vmatpush2.bf16.msra.mxu0 %v10814
        %11097 = vmatprep.subr.bf16.mxu0 0
        %11098 = vmatpush2.bf16.msra.mxu0 %v10813
        %11099 = vmatprep.subr.bf16.mxu0 0
        %11100 = vmatpush2.bf16.msra.mxu0 %v10812
        %11101 = vmatprep.subr.bf16.mxu0 0
        %11102 = vmatpush2.bf16.msra.mxu0 %v10811
        %11103 = vmatprep.subr.bf16.mxu0 0
        %11104 = vmatpush2.bf16.msra.mxu0 %v10810
        %11105 = vmatprep.subr.bf16.mxu0 0
        %11106 = vmatpush2.bf16.msra.mxu0 %v10809
        %11107 = vmatprep.subr.bf16.mxu0 0
        %11108 = vmatpush2.bf16.msra.mxu0 %v10808
        %11109 = vmatprep.subr.bf16.mxu0 0
        %11110 = vmatpush2.bf16.msra.mxu0 %v10807
        %11111 = vmatprep.mubr.bf16.mxu0 %v10204
        %11112 = vmatmul.mubr.bf16.gmra.mxu0 %v10202
        %v11113 = vpop.f32.mrf.mxu0
        %v11114 = vadd.f32 %v11074, %v11113
        %v11115 = vpop.f32.mrf.mxu0
        %v11116 = vpop.f32.mrf.mxu0
        %v11117 = vpop.f32.mrf.mxu0
        %11118 = vdwg.mxu0
        %11119 = vmatprep.subr.bf16.mxu0 0
        %11120 = vmatpush1.bf16.msra.mxu0 %v10822
        %11121 = vmatprep.subr.bf16.mxu0 0
        %11122 = vmatpush1.bf16.msra.mxu0 %v10821
        %11123 = vmatprep.subr.bf16.mxu0 0
        %11124 = vmatpush1.bf16.msra.mxu0 %v10820
        %11125 = vmatprep.subr.bf16.mxu0 0
        %11126 = vmatpush1.bf16.msra.mxu0 %v10819
        %11127 = vmatprep.subr.bf16.mxu0 0
        %11128 = vmatpush1.bf16.msra.mxu0 %v10818
        %11129 = vmatprep.subr.bf16.mxu0 0
        %11130 = vmatpush1.bf16.msra.mxu0 %v10817
        %11131 = vmatprep.subr.bf16.mxu0 0
        %11132 = vmatpush1.bf16.msra.mxu0 %v10816
        %11133 = vmatprep.subr.bf16.mxu0 0
        %11134 = vmatpush1.bf16.msra.mxu0 %v10815
        %11135 = vmatprep.subr.bf16.mxu0 0
        %11136 = vmatpush2.bf16.msra.mxu0 %v10830
        %11137 = vmatprep.subr.bf16.mxu0 0
        %11138 = vmatpush2.bf16.msra.mxu0 %v10829
        %11139 = vmatprep.subr.bf16.mxu0 0
        %11140 = vmatpush2.bf16.msra.mxu0 %v10828
        %11141 = vmatprep.subr.bf16.mxu0 0
        %11142 = vmatpush2.bf16.msra.mxu0 %v10827
        %11143 = vmatprep.subr.bf16.mxu0 0
        %11144 = vmatpush2.bf16.msra.mxu0 %v10826
        %11145 = vmatprep.subr.bf16.mxu0 0
        %11146 = vmatpush2.bf16.msra.mxu0 %v10825
        %11147 = vmatprep.subr.bf16.mxu0 0
        %11148 = vmatpush2.bf16.msra.mxu0 %v10824
        %11149 = vmatprep.subr.bf16.mxu0 0
        %11150 = vmatpush2.bf16.msra.mxu0 %v10823
        %11151 = vmatprep.mubr.bf16.mxu0 %v10201
        %11152 = vmatmul.mubr.bf16.gmra.mxu0 %v10187
        %v11153 = vpop.f32.mrf.mxu0
        %v11154 = vadd.f32 %v11114, %v11153
        %v11155 = vpop.f32.mrf.mxu0
        %v11156 = vpop.f32.mrf.mxu0
        %v11157 = vpop.f32.mrf.mxu0
        %11158 = vdwg.mxu0
        %11159 = vmatprep.subr.bf16.mxu0 0
        %11160 = vmatpush1.bf16.msra.mxu0 %v10838
        %11161 = vmatprep.subr.bf16.mxu0 0
        %11162 = vmatpush1.bf16.msra.mxu0 %v10837
        %11163 = vmatprep.subr.bf16.mxu0 0
        %11164 = vmatpush1.bf16.msra.mxu0 %v10836
        %11165 = vmatprep.subr.bf16.mxu0 0
        %11166 = vmatpush1.bf16.msra.mxu0 %v10835
        %11167 = vmatprep.subr.bf16.mxu0 0
        %11168 = vmatpush1.bf16.msra.mxu0 %v10834
        %11169 = vmatprep.subr.bf16.mxu0 0
        %11170 = vmatpush1.bf16.msra.mxu0 %v10833
        %11171 = vmatprep.subr.bf16.mxu0 0
        %11172 = vmatpush1.bf16.msra.mxu0 %v10832
        %11173 = vmatprep.subr.bf16.mxu0 0
        %11174 = vmatpush1.bf16.msra.mxu0 %v10831
        %11175 = vmatprep.subr.bf16.mxu0 0
        %11176 = vmatpush2.bf16.msra.mxu0 %v10846
        %11177 = vmatprep.subr.bf16.mxu0 0
        %11178 = vmatpush2.bf16.msra.mxu0 %v10845
        %11179 = vmatprep.subr.bf16.mxu0 0
        %11180 = vmatpush2.bf16.msra.mxu0 %v10844
        %11181 = vmatprep.subr.bf16.mxu0 0
        %11182 = vmatpush2.bf16.msra.mxu0 %v10843
        %11183 = vmatprep.subr.bf16.mxu0 0
        %11184 = vmatpush2.bf16.msra.mxu0 %v10842
        %11185 = vmatprep.subr.bf16.mxu0 0
        %11186 = vmatpush2.bf16.msra.mxu0 %v10841
        %11187 = vmatprep.subr.bf16.mxu0 0
        %11188 = vmatpush2.bf16.msra.mxu0 %v10840
        %11189 = vmatprep.subr.bf16.mxu0 0
        %11190 = vmatpush2.bf16.msra.mxu0 %v10839
        %11191 = vmatprep.mubr.bf16.mxu0 %v10205
        %11192 = vmatmul.mubr.bf16.gmra.mxu0 %v10203
        %v11193 = vpop.f32.mrf.mxu0
        %v11194 = vadd.f32 %v11154, %v11193
        %v11195 = vpop.f32.mrf.mxu0
        %v11196 = vpop.f32.mrf.mxu0
        %v11197 = vpop.f32.mrf.mxu0
        %11198 = vdwg.mxu0
        %11199 = vmatprep.subr.bf16.mxu0 0
        %11200 = vmatpush1.bf16.msra.mxu0 %v10854
        %11201 = vmatprep.subr.bf16.mxu0 0
        %11202 = vmatpush1.bf16.msra.mxu0 %v10853
        %11203 = vmatprep.subr.bf16.mxu0 0
        %11204 = vmatpush1.bf16.msra.mxu0 %v10852
        %11205 = vmatprep.subr.bf16.mxu0 0
        %11206 = vmatpush1.bf16.msra.mxu0 %v10851
        %11207 = vmatprep.subr.bf16.mxu0 0
        %11208 = vmatpush1.bf16.msra.mxu0 %v10850
        %11209 = vmatprep.subr.bf16.mxu0 0
        %11210 = vmatpush1.bf16.msra.mxu0 %v10849
        %11211 = vmatprep.subr.bf16.mxu0 0
        %11212 = vmatpush1.bf16.msra.mxu0 %v10848
        %11213 = vmatprep.subr.bf16.mxu0 0
        %11214 = vmatpush1.bf16.msra.mxu0 %v10847
        %11215 = vmatprep.subr.bf16.mxu0 0
        %11216 = vmatpush2.bf16.msra.mxu0 %v10862
        %11217 = vmatprep.subr.bf16.mxu0 0
        %11218 = vmatpush2.bf16.msra.mxu0 %v10861
        %11219 = vmatprep.subr.bf16.mxu0 0
        %11220 = vmatpush2.bf16.msra.mxu0 %v10860
        %11221 = vmatprep.subr.bf16.mxu0 0
        %11222 = vmatpush2.bf16.msra.mxu0 %v10859
        %11223 = vmatprep.subr.bf16.mxu0 0
        %11224 = vmatpush2.bf16.msra.mxu0 %v10858
        %11225 = vmatprep.subr.bf16.mxu0 0
        %11226 = vmatpush2.bf16.msra.mxu0 %v10857
        %11227 = vmatprep.subr.bf16.mxu0 0
        %11228 = vmatpush2.bf16.msra.mxu0 %v10856
        %11229 = vmatprep.subr.bf16.mxu0 0
        %11230 = vmatpush2.bf16.msra.mxu0 %v10855
        %11231 = vmatprep.mubr.bf16.mxu0 %v10243
        %11232 = vmatmul.mubr.bf16.gmra.mxu0 %v10229
        %v11233 = vpop.f32.mrf.mxu0
        %v11234 = vadd.f32 %v11194, %v11233
        %v11235 = vpop.f32.mrf.mxu0
        %v11236 = vpop.f32.mrf.mxu0
        %v11237 = vpop.f32.mrf.mxu0
        %11238 = vdwg.mxu0
        %11239 = vmatprep.subr.bf16.mxu0 0
        %11240 = vmatpush1.bf16.msra.mxu0 %v10870
        %11241 = vmatprep.subr.bf16.mxu0 0
        %11242 = vmatpush1.bf16.msra.mxu0 %v10869
        %11243 = vmatprep.subr.bf16.mxu0 0
        %11244 = vmatpush1.bf16.msra.mxu0 %v10868
        %11245 = vmatprep.subr.bf16.mxu0 0
        %11246 = vmatpush1.bf16.msra.mxu0 %v10867
        %11247 = vmatprep.subr.bf16.mxu0 0
        %11248 = vmatpush1.bf16.msra.mxu0 %v10866
        %11249 = vmatprep.subr.bf16.mxu0 0
        %11250 = vmatpush1.bf16.msra.mxu0 %v10865
        %11251 = vmatprep.subr.bf16.mxu0 0
        %11252 = vmatpush1.bf16.msra.mxu0 %v10864
        %11253 = vmatprep.subr.bf16.mxu0 0
        %11254 = vmatpush1.bf16.msra.mxu0 %v10863
        %11255 = vmatprep.subr.bf16.mxu0 0
        %11256 = vmatpush2.bf16.msra.mxu0 %v10878
        %11257 = vmatprep.subr.bf16.mxu0 0
        %11258 = vmatpush2.bf16.msra.mxu0 %v10877
        %11259 = vmatprep.subr.bf16.mxu0 0
        %11260 = vmatpush2.bf16.msra.mxu0 %v10876
        %11261 = vmatprep.subr.bf16.mxu0 0
        %11262 = vmatpush2.bf16.msra.mxu0 %v10875
        %11263 = vmatprep.subr.bf16.mxu0 0
        %11264 = vmatpush2.bf16.msra.mxu0 %v10874
        %11265 = vmatprep.subr.bf16.mxu0 0
        %11266 = vmatpush2.bf16.msra.mxu0 %v10873
        %11267 = vmatprep.subr.bf16.mxu0 0
        %11268 = vmatpush2.bf16.msra.mxu0 %v10872
        %11269 = vmatprep.subr.bf16.mxu0 0
        %11270 = vmatpush2.bf16.msra.mxu0 %v10871
        %11271 = vmatprep.mubr.bf16.mxu0 %v10253
        %11272 = vmatmul.mubr.bf16.gmra.mxu0 %v10251
        %v11273 = vpop.f32.mrf.mxu0
        %v11274 = vadd.f32 %v11234, %v11273
        %v11275 = vpop.f32.mrf.mxu0
        %v11276 = vpop.f32.mrf.mxu0
        %v11277 = vpop.f32.mrf.mxu0
        %11278 = vdwg.mxu0
        %11279 = vmatprep.subr.bf16.mxu0 0
        %11280 = vmatpush1.bf16.msra.mxu0 %v10886
        %11281 = vmatprep.subr.bf16.mxu0 0
        %11282 = vmatpush1.bf16.msra.mxu0 %v10885
        %11283 = vmatprep.subr.bf16.mxu0 0
        %11284 = vmatpush1.bf16.msra.mxu0 %v10884
        %11285 = vmatprep.subr.bf16.mxu0 0
        %11286 = vmatpush1.bf16.msra.mxu0 %v10883
        %11287 = vmatprep.subr.bf16.mxu0 0
        %11288 = vmatpush1.bf16.msra.mxu0 %v10882
        %11289 = vmatprep.subr.bf16.mxu0 0
        %11290 = vmatpush1.bf16.msra.mxu0 %v10881
        %11291 = vmatprep.subr.bf16.mxu0 0
        %11292 = vmatpush1.bf16.msra.mxu0 %v10880
        %11293 = vmatprep.subr.bf16.mxu0 0
        %11294 = vmatpush1.bf16.msra.mxu0 %v10879
        %11295 = vmatprep.subr.bf16.mxu0 0
        %11296 = vmatpush2.bf16.msra.mxu0 %v10894
        %11297 = vmatprep.subr.bf16.mxu0 0
        %11298 = vmatpush2.bf16.msra.mxu0 %v10893
        %11299 = vmatprep.subr.bf16.mxu0 0
        %11300 = vmatpush2.bf16.msra.mxu0 %v10892
        %11301 = vmatprep.subr.bf16.mxu0 0
        %11302 = vmatpush2.bf16.msra.mxu0 %v10891
        %11303 = vmatprep.subr.bf16.mxu0 0
        %11304 = vmatpush2.bf16.msra.mxu0 %v10890
        %11305 = vmatprep.subr.bf16.mxu0 0
        %11306 = vmatpush2.bf16.msra.mxu0 %v10889
        %11307 = vmatprep.subr.bf16.mxu0 0
        %11308 = vmatpush2.bf16.msra.mxu0 %v10888
        %11309 = vmatprep.subr.bf16.mxu0 0
        %11310 = vmatpush2.bf16.msra.mxu0 %v10887
        %11311 = vmatprep.mubr.bf16.mxu0 %v10250
        %11312 = vmatmul.mubr.bf16.gmra.mxu0 %v10236
        %v11313 = vpop.f32.mrf.mxu0
        %v11314 = vadd.f32 %v11274, %v11313
        %v11315 = vpop.f32.mrf.mxu0
        %v11316 = vpop.f32.mrf.mxu0
        %v11317 = vpop.f32.mrf.mxu0
        %11318 = vdwg.mxu0
        %11319 = vmatprep.subr.bf16.mxu0 0
        %11320 = vmatpush1.bf16.msra.mxu0 %v10902
        %11321 = vmatprep.subr.bf16.mxu0 0
        %11322 = vmatpush1.bf16.msra.mxu0 %v10901
        %11323 = vmatprep.subr.bf16.mxu0 0
        %11324 = vmatpush1.bf16.msra.mxu0 %v10900
        %11325 = vmatprep.subr.bf16.mxu0 0
        %11326 = vmatpush1.bf16.msra.mxu0 %v10899
        %11327 = vmatprep.subr.bf16.mxu0 0
        %11328 = vmatpush1.bf16.msra.mxu0 %v10898
        %11329 = vmatprep.subr.bf16.mxu0 0
        %11330 = vmatpush1.bf16.msra.mxu0 %v10897
        %11331 = vmatprep.subr.bf16.mxu0 0
        %11332 = vmatpush1.bf16.msra.mxu0 %v10896
        %11333 = vmatprep.subr.bf16.mxu0 0
        %11334 = vmatpush1.bf16.msra.mxu0 %v10895
        %11335 = vmatprep.subr.bf16.mxu0 0
        %11336 = vmatpush2.bf16.msra.mxu0 %v10910
        %11337 = vmatprep.subr.bf16.mxu0 0
        %11338 = vmatpush2.bf16.msra.mxu0 %v10909
        %11339 = vmatprep.subr.bf16.mxu0 0
        %11340 = vmatpush2.bf16.msra.mxu0 %v10908
        %11341 = vmatprep.subr.bf16.mxu0 0
        %11342 = vmatpush2.bf16.msra.mxu0 %v10907
        %11343 = vmatprep.subr.bf16.mxu0 0
        %11344 = vmatpush2.bf16.msra.mxu0 %v10906
        %11345 = vmatprep.subr.bf16.mxu0 0
        %11346 = vmatpush2.bf16.msra.mxu0 %v10905
        %11347 = vmatprep.subr.bf16.mxu0 0
        %11348 = vmatpush2.bf16.msra.mxu0 %v10904
        %11349 = vmatprep.subr.bf16.mxu0 0
        %11350 = vmatpush2.bf16.msra.mxu0 %v10903
        %11351 = vmatprep.mubr.bf16.mxu0 %v10254
        %11352 = vmatmul.mubr.bf16.gmra.mxu0 %v10252
        %v11353 = vpop.f32.mrf.mxu0
        %v11354 = vadd.f32 %v11314, %v11353
        %v11355 = vpop.f32.mrf.mxu0
        %v11356 = vpop.f32.mrf.mxu0
        %v11357 = vpop.f32.mrf.mxu0
        %11358 = vdwg.mxu0
        %v11359 = vmax.f32 %v11354, 0.0
        %v11360 = vpack.c.bf16 %v11359, %v11359
        %v11361 = vld [vmem:[%s9] sm:$0xf]
        %v11362 = vld [vmem:[%s9 + $0x4] sm:$0xf]
        %v11363 = vld [vmem:[%s9 + $0x8] sm:$0xf]
        %v11364 = vld [vmem:[%s9 + $0xc] sm:$0xf]
        %v11365 = vld [vmem:[%s9 + $0x10] sm:$0xf]
        %v11366 = vld [vmem:[%s9 + $0x14] sm:$0xf]
        %v11367 = vld [vmem:[%s9 + $0x18] sm:$0xf]
        %v11368 = vld [vmem:[%s9 + $0x1c] sm:$0xf]
        %v11369 = vld [vmem:[%s9 + $0x20] sm:$0xf]
        %v11370 = vld [vmem:[%s9 + $0x24] sm:$0xf]
        %v11371 = vld [vmem:[%s9 + $0x28] sm:$0xf]
        %v11372 = vld [vmem:[%s9 + $0x2c] sm:$0xf]
        %v11373 = vld [vmem:[%s9 + $0x30] sm:$0xf]
        %v11374 = vld [vmem:[%s9 + $0x34] sm:$0xf]
        %v11375 = vld [vmem:[%s9 + $0x38] sm:$0xf]
        %v11376 = vld [vmem:[%s9 + $0x3c] sm:$0xf]
        %v11377 = vld [vmem:[%s10] sm:$0x1]
        %v11394 = vunpack.c.l.b16 %v11361
        %v11395 = vunpack.c.l.b16 %v11362
        %v11396 = vunpack.c.l.b16 %v11363
        %v11397 = vunpack.c.l.b16 %v11364
        %v11398 = vunpack.c.l.b16 %v11365
        %v11399 = vunpack.c.l.b16 %v11366
        %v11400 = vunpack.c.l.b16 %v11367
        %v11401 = vunpack.c.l.b16 %v11368
        %v11402 = vunpack.c.l.b16 %v11369
        %v11403 = vunpack.c.l.b16 %v11370
        %v11404 = vunpack.c.l.b16 %v11371
        %v11405 = vunpack.c.l.b16 %v11372
        %v11406 = vunpack.c.l.b16 %v11373
        %v11407 = vunpack.c.l.b16 %v11374
        %v11408 = vunpack.c.l.b16 %v11375
        %v11409 = vunpack.c.l.b16 %v11376
        %v11410 = vpack.c.b16 %v11395, %v11394
        %v11411 = vpack.c.b16 %v11397, %v11396
        %v11412 = vpack.c.b16 %v11399, %v11398
        %v11413 = vpack.c.b16 %v11401, %v11400
        %v11414 = vpack.c.b16 %v11403, %v11402
        %v11415 = vpack.c.b16 %v11405, %v11404
        %v11416 = vpack.c.b16 %v11407, %v11406
        %v11417 = vpack.c.b16 %v11409, %v11408
        %11426 = vmatprep.subr.bf16.mxu0 0
        %11427 = vmatpush1.bf16.msra.mxu0 %v11417
        %11428 = vmatprep.subr.bf16.mxu0 0
        %11429 = vmatpush1.bf16.msra.mxu0 %v11416
        %11430 = vmatprep.subr.bf16.mxu0 0
        %11431 = vmatpush1.bf16.msra.mxu0 %v11415
        %11432 = vmatprep.subr.bf16.mxu0 0
        %11433 = vmatpush1.bf16.msra.mxu0 %v11414
        %11434 = vmatprep.subr.bf16.mxu0 0
        %11435 = vmatpush1.bf16.msra.mxu0 %v11413
        %11436 = vmatprep.subr.bf16.mxu0 0
        %11437 = vmatpush1.bf16.msra.mxu0 %v11412
        %11438 = vmatprep.subr.bf16.mxu0 0
        %11439 = vmatpush1.bf16.msra.mxu0 %v11411
        %11440 = vmatprep.subr.bf16.mxu0 0
        %11441 = vmatpush1.bf16.msra.mxu0 %v11410
        %11442 = vmatprep.subr.bf16.mxu0 0
        %11443 = vmatpush2.bf16.msra.mxu0 0
        %11444 = vmatprep.subr.bf16.mxu0 0
        %11445 = vmatpush2.bf16.msra.mxu0 0
        %11446 = vmatprep.subr.bf16.mxu0 0
        %11447 = vmatpush2.bf16.msra.mxu0 0
        %11448 = vmatprep.subr.bf16.mxu0 0
        %11449 = vmatpush2.bf16.msra.mxu0 0
        %11450 = vmatprep.subr.bf16.mxu0 0
        %11451 = vmatpush2.bf16.msra.mxu0 0
        %11452 = vmatprep.subr.bf16.mxu0 0
        %11453 = vmatpush2.bf16.msra.mxu0 0
        %11454 = vmatprep.subr.bf16.mxu0 0
        %11455 = vmatpush2.bf16.msra.mxu0 0
        %11456 = vmatprep.subr.bf16.mxu0 0
        %11457 = vmatpush2.bf16.msra.mxu0 0
        %11458 = vmatprep.mubr.bf16.mxu0 0
        %11459 = vmatmul.mubr.bf16.gmra.mxu0 %v11360
        %v11460 = vpop.f32.mrf.mxu0
        %v11461 = vadd.f32 %v11377, %v11460
        %v11462 = vpop.f32.mrf.mxu0
        %v11463 = vpop.f32.mrf.mxu0
        %v11464 = vpop.f32.mrf.mxu0
        %11465 = vdwg.mxu0
        %vm11466 = vcmask 8192
        %11467 = vst.msk [vmem:[%s378] sm:$0x1] %vm11466, %v11461
        %s11468 = sand.u32 %s269, 1
        %s11469 = scalar_lea.sflag [#allocation9], %s11468
        %s11470 = sand.u32 %s269, 1
        %s11471 = scalar_lea.vmem [#allocation8], %s11470
        // Predicated region
        $region65: #{forward.1} parent=63 // pred_check
          %p11472 = pneg %p279
        $region66: #{forward.1} parent=63 // pred_check_branch
          %11474 = sbr.rel (%p11472) target = $region68
        $region67: #{forward.1} parent=63 // pred_region
          %s11476 = ssub.s32 16, 16
          %11477 = vsyncadd %s11469, %s11476
          %s11478 = smul.addr %s25, 16
          %s11479 = scalar_lea.hbm %s11, %s11478
          %s11481 = sshll.u32 %s11471, 4
          %s11482 = int_to_ptr.vmem [resolvable:$true] %s11481
          %11484 = dma.vmem_to_hbm [thread:$0]  %s11482, 16, %s11479, %s11469
        $region68: #{forward.1} parent=63 // pred_fallthru
          _
      $region64: #{forward.1} parent=5 // pred_fallthru
        _
      %p11485 = scmp.le.s32.totalorder 2, %s20
      // Predicated region
      $region69: #{forward.1} parent=5 // pred_check
        %p11486 = pneg %p11485
      $region70: #{forward.1} parent=5 // pred_check_branch
        %11488 = sbr.rel (%p11486) target = $region72
      $region71: #{forward.1} parent=5 // pred_region
        %s11489 = ssub.s32 %s20, 2
        // Predicated region
        $region73: #{forward.1} parent=71 // pred_check
          %p11490 = pneg %p285
        $region74: #{forward.1} parent=71 // pred_check_branch
          %11492 = sbr.rel (%p11490) target = $region76
        $region75: #{forward.1} parent=71 // pred_region
          %s11493 = sand.u32 %s270, 1
          %s11494 = scalar_lea.sflag [#allocation9], %s11493
          %s11495 = sand.u32 %s270, 1
          %s11496 = scalar_lea.vmem [#allocation8], %s11495
          %11497 = dma.done %s11494, 16
        $region76: #{forward.1} parent=71 // pred_fallthru
          _
      $region72: #{forward.1} parent=5 // pred_fallthru
        _
    $region6: #{forward.1} parent=1 // loop_footer
      %s24 = sadd.s32 1, %s20
    $region7: #{forward.1} parent=1 // loop_footer_branch
      %19 = sbr.rel target = $region3
    $region8: #{forward.1} parent=1 // loop_exit
      _
    %11498 = vsyncpa [#allocation9], 1
    %s11499 = scalar_lea.sflag [#allocation9], 1
    %11500 = vsyncpa %s11499, 1

</llo_original>
